<compile_context>
chip_gen: v7x
topology: tpu7x:2x2x1
jax: 0.10.0
libtpu: 0.0.40
codegen_flags: <defaults>
</compile_context>

<pallas_src>
import functools

import jax
import jax.numpy as jnp
from jax.experimental import pallas as pl
from jax.experimental.pallas import tpu as pltpu


_VMEM_LIMIT = 48 * 1024 * 1024  # <= v7x's 64 MiB physical VMEM, safe on v5e/v6e

# Kernel taps used by each output parity of a k=4, s=2, p=1 transposed conv:
#   even output rows use taps (3, 1), odd output rows use taps (2, 0)
# (local window index 0 = lower input index).  Same along width.
_KT = ((3, 1), (2, 0))


def _round_up(x, m):
    return ((x + m - 1) // m) * m


def _cparams(n_axes):
    return pltpu.CompilerParams(
        dimension_semantics=("parallel",) * n_axes,
        vmem_limit_bytes=_VMEM_LIMIT,
    )


# ----------------------------------------------------------------------------
# Pallas kernels (hot path: bf16 matmul on MXU + BN statistics + activations)
# ----------------------------------------------------------------------------
def _matmul_stats_kernel(p_ref, w_ref, y_ref, s_ref):
    """y = patches @ W (bf16 -> f32 acc); also emit per-tile sum / sum-of-squares."""
    y = jnp.dot(p_ref[...], w_ref[...], preferred_element_type=jnp.float32)
    y_ref[...] = y
    ssum = jnp.sum(y, axis=0, keepdims=True)       # (1, Cpad)
    ssq = jnp.sum(y * y, axis=0, keepdims=True)    # (1, Cpad)
    s_ref[...] = jnp.concatenate([ssum, ssq], axis=0)[None, :, :]


def _bn_relu_kernel(y_ref, a_ref, b_ref, o_ref):
    """Elementwise normalize (y*scale + shift) + ReLU on a lane-dense tile."""
    o_ref[...] = jnp.maximum(y_ref[...] * a_ref[...] + b_ref[...], jnp.float32(0.0))


def _matmul_sigmoid_kernel(p_ref, w_ref, o_ref):
    y = jnp.dot(p_ref[...], w_ref[...], preferred_element_type=jnp.float32)
    o_ref[...] = jax.nn.sigmoid(y)


# ----------------------------------------------------------------------------
# Phase decomposition of ConvTranspose2d(k=4, s=2, p=1)
#   out[n, 2m+rh, 2w+rw, :] = sum_{lh,lw} x_pad[n, m+rh+lh, w+rw+lw, :] @ W[rh,rw,lh,lw]
# ----------------------------------------------------------------------------
def _phase_patches_all(x):
    """x: (N, H, W, C) f32 -> (4, N*H*W, 4*C) bf16 (phase-major, (lh, lw, c) cols)."""
    n, h, w, c = x.shape
    xp = jnp.pad(x, ((0, 0), (1, 1), (1, 1), (0, 0)))
    phases = []
    for rh in (0, 1):
        for rw in (0, 1):
            cols = [xp[:, rh + lh:rh + lh + h, rw + lw:rw + lw + w, :]
                    for lh in (0, 1) for lw in (0, 1)]
            p = jnp.stack(cols, axis=3)                     # (N, H, W, 4, C)
            phases.append(p.reshape(n * h * w, 4 * c))
    return jnp.stack(phases, axis=0).astype(jnp.bfloat16)   # (4, M, 4C)


def _phase_weight_matrices(w, cpad):
    """PyTorch ConvT weight (Cin, Cout, 4, 4) -> (4, 4*Cin, Cpad) bf16 phase matrices."""
    cin, cout = w.shape[0], w.shape[1]
    wt = jnp.transpose(w, (2, 3, 0, 1))                      # (kh, kw, Cin, Cout)
    mats = []
    for rh in (0, 1):
        for rw in (0, 1):
            sub = wt[jnp.array(_KT[rh]), :, :, :][:, jnp.array(_KT[rw]), :, :]
            mat = sub.reshape(4 * cin, cout)                 # rows ordered (lh, lw, ci)
            mats.append(jnp.pad(mat, ((0, 0), (0, cpad - cout))))
    return jnp.stack(mats, axis=0).astype(jnp.bfloat16)      # (4, 4*Cin, Cpad)


def _interleave_phases(y, n, h, w, c):
    """(4, N*H*W, C) phase-major -> (N, 2H, 2W, C)."""
    y = y.reshape(2, 2, n, h, w, c)
    y = jnp.transpose(y, (2, 3, 0, 4, 1, 5))
    return y.reshape(n, 2 * h, 2 * w, c)


def _prep_phase_patches(x, tm_want):
    n, h, w, _ = x.shape
    m = n * h * w
    patches = _phase_patches_all(x)                          # (4, M, 4C) bf16
    tm = min(tm_want, _round_up(m, 8))
    mp = _round_up(m, tm)
    if mp != m:                                              # masked-tail handling via zero pad
        patches = jnp.pad(patches, ((0, 0), (0, mp - m), (0, 0)))
    return patches, m, mp, tm


# ----------------------------------------------------------------------------
# Layer wrappers
# ----------------------------------------------------------------------------
def _convt_bn_relu_s2(x, wph, gamma, beta, tm_want=1024):
    """Phase-decomposed ConvT(k=4,s=2,p=1) + BatchNorm(train) + ReLU, NHWC in/out."""
    n, h, w, _ = x.shape
    cout = gamma.shape[0]
    kdim, cpad = wph.shape[1], wph.shape[2]
    patches, m, mp, tm = _prep_phase_patches(x, tm_want)
    n_mt = mp // tm
    grid = (4, n_mt)

    y, psums = pl.pallas_call(
        _matmul_stats_kernel,
        out_shape=(jax.ShapeDtypeStruct((4, mp, cpad), jnp.float32),
                   jax.ShapeDtypeStruct((4 * n_mt, 2, cpad), jnp.float32)),
        grid=grid,
        in_specs=[pl.BlockSpec((None, tm, kdim), lambda p, i: (p, i, 0)),
                  pl.BlockSpec((None, kdim, cpad), lambda p, i: (p, 0, 0))],
        out_specs=(pl.BlockSpec((None, tm, cpad), lambda p, i: (p, i, 0)),
                   pl.BlockSpec((1, 2, cpad),
                                lambda p, i, _n=n_mt: (p * _n + i, 0, 0))),
        compiler_params=_cparams(2),
    )(patches, wph)

    # Global batch statistics (PyTorch train-mode BN: biased variance, eps=1e-5).
    # Zero-padded rows/channels contribute 0 to the sums; divide by the real count.
    count = jnp.float32(4 * m)                               # N * (2H) * (2W)
    tot = jnp.sum(psums, axis=0)                             # (2, Cpad)
    mean = tot[0] / count
    var = jnp.maximum(tot[1] / count - mean * mean, 0.0)     # clamp E[y^2]-E[y]^2 form
    inv = jax.lax.rsqrt(var + jnp.float32(1e-5))
    g = jnp.pad(gamma, (0, cpad - cout))
    b = jnp.pad(beta, (0, cpad - cout))
    scale = (g * inv).reshape(1, cpad)
    shift = (b - mean * g * inv).reshape(1, cpad)

    out = pl.pallas_call(
        _bn_relu_kernel,
        out_shape=jax.ShapeDtypeStruct((4, mp, cpad), jnp.float32),
        grid=grid,
        in_specs=[pl.BlockSpec((None, tm, cpad), lambda p, i: (p, i, 0)),
                  pl.BlockSpec((1, cpad), lambda p, i: (0, 0)),
                  pl.BlockSpec((1, cpad), lambda p, i: (0, 0))],
        out_specs=pl.BlockSpec((None, tm, cpad), lambda p, i: (p, i, 0)),
        compiler_params=_cparams(2),
    )(y, scale, shift)

    return _interleave_phases(out[:, :m, :cout], n, h, w, cout)


def _convt_sigmoid_s2(x, wph, cout, tm_want=2048):
    """Phase-decomposed ConvT(k=4,s=2,p=1) + Sigmoid, NHWC in/out."""
    n, h, w, _ = x.shape
    kdim, cpad = wph.shape[1], wph.shape[2]
    patches, m, mp, tm = _prep_phase_patches(x, tm_want)
    n_mt = mp // tm

    out = pl.pallas_call(
        _matmul_sigmoid_kernel,
        out_shape=jax.ShapeDtypeStruct((4, mp, cpad), jnp.float32),
        grid=(4, n_mt),
        in_specs=[pl.BlockSpec((None, tm, kdim), lambda p, i: (p, i, 0)),
                  pl.BlockSpec((None, kdim, cpad), lambda p, i: (p, 0, 0))],
        out_specs=pl.BlockSpec((None, tm, cpad), lambda p, i: (p, i, 0)),
        compiler_params=_cparams(2),
    )(patches, wph)

    return _interleave_phases(out[:, :m, :cout], n, h, w, cout)


# ----------------------------------------------------------------------------
# Parameter preparation (hoisted out of the forward path) & forward
# ----------------------------------------------------------------------------
def prepare_params(params):
    """Phase-split / flatten / 128-pad / bf16-cast the conv weights once."""
    prepared = {}
    w1 = params["w1"]                                        # (nz, 8*ngf, 4, 4)
    prepared["w1m"] = w1.reshape(w1.shape[0], -1)            # layer 1 stays in XLA (f32)
    prepared["g1"], prepared["b1"] = params["g1"], params["b1"]
    for i in (2, 3, 4, 5):
        w = params[f"w{i}"]
        cpad = _round_up(w.shape[1], 128)
        prepared[f"w{i}m"] = _phase_weight_matrices(w, cpad)
        if i < 5:
            prepared[f"g{i}"], prepared[f"b{i}"] = params[f"g{i}"], params[f"b{i}"]
    return prepared


@functools.partial(jax.jit, static_argnames=("nc",))
def generator_forward(z_nchw, prepared, *, nc):
    n = z_nchw.shape[0]
    # Layer 1: ConvT(nz, 8*ngf, 4,1,0) on a 1x1 input is a tiny (N, nz) matmul;
    # far too small to feed the MXU, so it runs as plain XLA (perf review).
    c1 = prepared["g1"].shape[0]
    y1 = jnp.dot(z_nchw.reshape(n, -1), prepared["w1m"]).reshape(n, c1, 4, 4)
    y1 = jnp.transpose(y1, (0, 2, 3, 1))                     # NHWC
    mean1 = jnp.mean(y1, axis=(0, 1, 2))
    var1 = jnp.mean(jnp.square(y1 - mean1), axis=(0, 1, 2))  # biased variance
    x = jnp.maximum((y1 - mean1) * jax.lax.rsqrt(var1 + jnp.float32(1e-5))
                    * prepared["g1"] + prepared["b1"], 0.0)

    # Layers 2-4: phase-decomposed ConvT + BN + ReLU (Pallas hot path).
    for i in (2, 3, 4):
        x = _convt_bn_relu_s2(x, prepared[f"w{i}m"], prepared[f"g{i}"], prepared[f"b{i}"])

    # Layer 5: phase-decomposed ConvT + Sigmoid (Pallas).
    x = _convt_sigmoid_s2(x, prepared["w5m"], nc)
    return jnp.transpose(x, (0, 3, 1, 2))                    # NHWC -> NCHW


def init_params(key, nz, ngf, nc):
    """DCGAN-style init: conv weights ~ N(0, 0.02), BN gamma=1, beta=0."""
    ks = jax.random.split(key, 5)

    def wt(k, cin, cout):
        return 0.02 * jax.random.normal(k, (cin, cout, 4, 4), jnp.float32)

    return {
        "w1": wt(ks[0], nz, ngf * 8),
        "w2": wt(ks[1], ngf * 8, ngf * 4),
        "w3": wt(ks[2], ngf * 4, ngf * 2),
        "w4": wt(ks[3], ngf * 2, ngf),
        "w5": wt(ks[4], ngf, nc),
        "g1": jnp.ones((ngf * 8,), jnp.float32), "b1": jnp.zeros((ngf * 8,), jnp.float32),
        "g2": jnp.ones((ngf * 4,), jnp.float32), "b2": jnp.zeros((ngf * 4,), jnp.float32),
        "g3": jnp.ones((ngf * 2,), jnp.float32), "b3": jnp.zeros((ngf * 2,), jnp.float32),
        "g4": jnp.ones((ngf,), jnp.float32),     "b4": jnp.zeros((ngf,), jnp.float32),
    }


# ----------------------------------------------------------------------------
# Pure-XLA reference (PyTorch ConvTranspose2d / BatchNorm2d semantics, f32)
# ----------------------------------------------------------------------------
def _convt_ref(x, w, s, p):
    n, cin, h, wd = x.shape
    _, cout, k, _ = w.shape
    ho, wo = (h - 1) * s - 2 * p + k, (wd - 1) * s - 2 * p + k
    yfull = jnp.zeros((n, cout, (h - 1) * s + k, (wd - 1) * s + k), jnp.float32)
    contrib = jnp.einsum("nchw,cokl->nohwkl", x, w)
    for kh in range(k):
        for kw in range(k):
            yfull = yfull.at[:, :, kh:kh + (h - 1) * s + 1:s,
                             kw:kw + (wd - 1) * s + 1:s].add(contrib[:, :, :, :, kh, kw])
    return yfull[:, :, p:p + ho, p:p + wo]


def _bn_relu_ref(y, g, b):
    mean = jnp.mean(y, axis=(0, 2, 3), keepdims=True)
    var = jnp.mean(jnp.square(y - mean), axis=(0, 2, 3), keepdims=True)
    yn = (y - mean) * jax.lax.rsqrt(var + 1e-5)
    return jnp.maximum(yn * g.reshape(1, -1, 1, 1) + b.reshape(1, -1, 1, 1), 0.0)


def _reference_forward(z, params):
    x = _bn_relu_ref(_convt_ref(z, params["w1"], 1, 0), params["g1"], params["b1"])
    x = _bn_relu_ref(_convt_ref(x, params["w2"], 2, 1), params["g2"], params["b2"])
    x = _bn_relu_ref(_convt_ref(x, params["w3"], 2, 1), params["g3"], params["b3"])
    x = _bn_relu_ref(_convt_ref(x, params["w4"], 2, 1), params["g4"], params["b4"])
    return jax.nn.sigmoid(_convt_ref(x, params["w5"], 2, 1))


if __name__ == "__main__":
    # Small, module-consistent sizes: batch=2, nz=8, ngf=8, nc=3  ->  (2, 3, 64, 64).
    batch, nz, ngf, nc = 2, 8, 8, 3
    key = jax.random.PRNGKey(0)
    kz, kp = jax.random.split(key)
    params = init_params(kp, nz, ngf, nc)
    prepared = prepare_params(params)
    z = jax.random.normal(kz, (batch, nz, 1, 1), jnp.float32)  # NCHW latent, like PyTorch

    out = generator_forward(z, prepared, nc=nc)
    out = jax.block_until_ready(out)

    assert out.shape == (batch, nc, 64, 64), out.shape
    assert bool(jnp.all(jnp.isfinite(out)))
    assert bool(jnp.all(out >= 0.0)) and bool(jnp.all(out <= 1.0))  # sigmoid range

    # Cross-check against the f32 XLA reference (bf16 matmul inputs => loose tol).
    ref = _reference_forward(z, params)
    err = float(jnp.max(jnp.abs(out - ref)))
    assert err < 5e-2, f"max abs err vs reference: {err}"

    print("KERNEL_OK")
</pallas_src>

<mosaic_0001>
module attributes {stable_mosaic.version = 11 : i64} {
  func.func @_matmul_stats_kernel(%arg0: i32, %arg1: i32, %arg2: memref<1x32x256xbf16, #tpu.memory_space<vmem>>, %arg3: memref<1x256x128xbf16, #tpu.memory_space<vmem>>, %arg4: memref<1x32x128xf32, #tpu.memory_space<vmem>>, %arg5: memref<1x2x128xf32, #tpu.memory_space<vmem>>) attributes {dimension_semantics = [#tpu.dimension_semantics<parallel>, #tpu.dimension_semantics<parallel>], iteration_bounds = array<i64: 4, 1>, scalar_prefetch = 0 : i64, scratch_operands = 0 : i64, tpu.core_type = #tpu.core_type<tc>, window_params = [{transform_indices = @transform_0, window_bounds = array<i64: 1, 32, 256>}, {transform_indices = @transform_1, window_bounds = array<i64: 1, 256, 128>}, {transform_indices = @transform_2, window_bounds = array<i64: 1, 32, 128>}, {transform_indices = @transform_3, window_bounds = array<i64: 1, 2, 128>}]} {
    %c0 = arith.constant 0 : index
    %c0_0 = arith.constant 0 : index
    %c0_1 = arith.constant 0 : index
    %0 = vector.load %arg2[%c0, %c0_0, %c0_1] : memref<1x32x256xbf16, #tpu.memory_space<vmem>>, vector<1x32x256xbf16>
    %1 = vector.shape_cast %0 : vector<1x32x256xbf16> to vector<32x256xbf16>
    %c0_2 = arith.constant 0 : index
    %c0_3 = arith.constant 0 : index
    %c0_4 = arith.constant 0 : index
    %2 = vector.load %arg3[%c0_2, %c0_3, %c0_4] : memref<1x256x128xbf16, #tpu.memory_space<vmem>>, vector<1x256x128xbf16>
    %3 = vector.shape_cast %2 : vector<1x256x128xbf16> to vector<256x128xbf16>
    %cst = arith.constant dense<0.000000e+00> : vector<32x128xf32>
    %4 = tpu.matmul %1, %3, %cst {dimension_numbers = #tpu.dot_dimension_numbers<[1], [0], [0], [1], [0, 0, 1, 1], [], []>} : vector<32x256xbf16>, vector<256x128xbf16>, vector<32x128xf32> -> vector<32x128xf32>
    %c0_5 = arith.constant 0 : index
    %c0_6 = arith.constant 0 : index
    %c0_7 = arith.constant 0 : index
    %5 = vector.load %arg4[%c0_5, %c0_6, %c0_7] : memref<1x32x128xf32, #tpu.memory_space<vmem>>, vector<1x32x128xf32>
    %6 = vector.shape_cast %5 : vector<1x32x128xf32> to vector<32x128xf32>
    %7 = vector.shape_cast %4 : vector<32x128xf32> to vector<1x32x128xf32>
    tpu.vector_store %arg4[%c0_5, %c0_6, %c0_7], %7 {strides = array<i32>} : memref<1x32x128xf32, #tpu.memory_space<vmem>>, vector<1x32x128xf32>,
    %cst_8 = arith.constant dense<0.000000e+00> : vector<128xf32>
    %8 = vector.multi_reduction <add>, %4, %cst_8 [0] : vector<32x128xf32> to vector<128xf32>
    %9 = vector.shape_cast %8 : vector<128xf32> to vector<1x128xf32>
    %10 = arith.mulf %4, %4 : vector<32x128xf32>
    %cst_9 = arith.constant dense<0.000000e+00> : vector<128xf32>
    %11 = vector.multi_reduction <add>, %10, %cst_9 [0] : vector<32x128xf32> to vector<128xf32>
    %12 = vector.shape_cast %11 : vector<128xf32> to vector<1x128xf32>
    %13 = tpu.concatenate %9, %12 in 0 : vector<1x128xf32>, vector<1x128xf32> -> vector<2x128xf32>
    %14 = vector.shape_cast %13 : vector<2x128xf32> to vector<1x2x128xf32>
    %c0_10 = arith.constant 0 : index
    %c0_11 = arith.constant 0 : index
    %c0_12 = arith.constant 0 : index
    %15 = vector.load %arg5[%c0_10, %c0_11, %c0_12] : memref<1x2x128xf32, #tpu.memory_space<vmem>>, vector<1x2x128xf32>
    tpu.vector_store %arg5[%c0_10, %c0_11, %c0_12], %14 {strides = array<i32>} : memref<1x2x128xf32, #tpu.memory_space<vmem>>, vector<1x2x128xf32>,
    return
  }
  func.func @transform_0(%arg0: i32, %arg1: i32) -> (i32, i32, i32) {
    %c0_i32 = arith.constant 0 : i32
    %c0_i32_0 = arith.constant 0 : i32
    return %arg0, %arg1, %c0_i32 : i32, i32, i32
  }
  func.func @transform_1(%arg0: i32, %arg1: i32) -> (i32, i32, i32) {
    %c0_i32 = arith.constant 0 : i32
    %c0_i32_0 = arith.constant 0 : i32
    %c0_i32_1 = arith.constant 0 : i32
    return %arg0, %c0_i32, %c0_i32_0 : i32, i32, i32
  }
  func.func @transform_2(%arg0: i32, %arg1: i32) -> (i32, i32, i32) {
    %c0_i32 = arith.constant 0 : i32
    %c0_i32_0 = arith.constant 0 : i32
    return %arg0, %arg1, %c0_i32 : i32, i32, i32
  }
  func.func @transform_3(%arg0: i32, %arg1: i32) -> (i32, i32, i32) {
    %c1_i32 = arith.constant 1 : i32
    %0 = arith.muli %arg0, %c1_i32 : i32
    %1 = arith.addi %0, %arg1 : i32
    %c0_i32 = arith.constant 0 : i32
    %c0_i32_0 = arith.constant 0 : i32
    %c0_i32_1 = arith.constant 0 : i32
    return %1, %c0_i32, %c0_i32_0 : i32, i32, i32
  }
}

module attributes {stable_mosaic.version = 11 : i64} {
  func.func @_bn_relu_kernel(%arg0: i32, %arg1: i32, %arg2: memref<1x32x128xf32, #tpu.memory_space<vmem>>, %arg3: memref<1x128xf32, #tpu.memory_space<vmem>>, %arg4: memref<1x128xf32, #tpu.memory_space<vmem>>, %arg5: memref<1x32x128xf32, #tpu.memory_space<vmem>>) attributes {dimension_semantics = [#tpu.dimension_semantics<parallel>, #tpu.dimension_semantics<parallel>], iteration_bounds = array<i64: 4, 1>, scalar_prefetch = 0 : i64, scratch_operands = 0 : i64, tpu.core_type = #tpu.core_type<tc>, window_params = [{transform_indices = @transform_0, window_bounds = array<i64: 1, 32, 128>}, {pipeline_mode = #tpu.pipeline_mode<synchronous>, transform_indices = @transform_1, window_bounds = array<i64: 1, 128>}, {pipeline_mode = #tpu.pipeline_mode<synchronous>, transform_indices = @transform_2, window_bounds = array<i64: 1, 128>}, {transform_indices = @transform_3, window_bounds = array<i64: 1, 32, 128>}]} {
    %c0 = arith.constant 0 : index
    %c0_0 = arith.constant 0 : index
    %c0_1 = arith.constant 0 : index
    %0 = vector.load %arg2[%c0, %c0_0, %c0_1] : memref<1x32x128xf32, #tpu.memory_space<vmem>>, vector<1x32x128xf32>
    %1 = vector.shape_cast %0 : vector<1x32x128xf32> to vector<32x128xf32>
    %c0_2 = arith.constant 0 : index
    %c0_3 = arith.constant 0 : index
    %2 = vector.load %arg3[%c0_2, %c0_3] : memref<1x128xf32, #tpu.memory_space<vmem>>, vector<1x128xf32>
    %3 = vector.broadcast %2 : vector<1x128xf32> to vector<32x128xf32>
    %4 = arith.mulf %1, %3 : vector<32x128xf32>
    %c0_4 = arith.constant 0 : index
    %c0_5 = arith.constant 0 : index
    %5 = vector.load %arg4[%c0_4, %c0_5] : memref<1x128xf32, #tpu.memory_space<vmem>>, vector<1x128xf32>
    %6 = vector.broadcast %5 : vector<1x128xf32> to vector<32x128xf32>
    %7 = arith.addf %4, %6 : vector<32x128xf32>
    %cst = arith.constant 0.000000e+00 : f32
    %8 = vector.broadcast %cst : f32 to vector<32x128xf32>
    %9 = arith.maximumf %7, %8 : vector<32x128xf32>
    %c0_6 = arith.constant 0 : index
    %c0_7 = arith.constant 0 : index
    %c0_8 = arith.constant 0 : index
    %10 = vector.load %arg5[%c0_6, %c0_7, %c0_8] : memref<1x32x128xf32, #tpu.memory_space<vmem>>, vector<1x32x128xf32>
    %11 = vector.shape_cast %10 : vector<1x32x128xf32> to vector<32x128xf32>
    %12 = vector.shape_cast %9 : vector<32x128xf32> to vector<1x32x128xf32>
    tpu.vector_store %arg5[%c0_6, %c0_7, %c0_8], %12 {strides = array<i32>} : memref<1x32x128xf32, #tpu.memory_space<vmem>>, vector<1x32x128xf32>,
    return
  }
  func.func @transform_0(%arg0: i32, %arg1: i32) -> (i32, i32, i32) {
    %c0_i32 = arith.constant 0 : i32
    %c0_i32_0 = arith.constant 0 : i32
    return %arg0, %arg1, %c0_i32 : i32, i32, i32
  }
  func.func @transform_1(%arg0: i32, %arg1: i32) -> (i32, i32) {
    %c0_i32 = arith.constant 0 : i32
    %c0_i32_0 = arith.constant 0 : i32
    %c0_i32_1 = arith.constant 0 : i32
    return %c0_i32, %c0_i32_0 : i32, i32
  }
  func.func @transform_2(%arg0: i32, %arg1: i32) -> (i32, i32) {
    %c0_i32 = arith.constant 0 : i32
    %c0_i32_0 = arith.constant 0 : i32
    %c0_i32_1 = arith.constant 0 : i32
    return %c0_i32, %c0_i32_0 : i32, i32
  }
  func.func @transform_3(%arg0: i32, %arg1: i32) -> (i32, i32, i32) {
    %c0_i32 = arith.constant 0 : i32
    %c0_i32_0 = arith.constant 0 : i32
    return %arg0, %arg1, %c0_i32 : i32, i32, i32
  }
}

module attributes {stable_mosaic.version = 11 : i64} {
  func.func @_matmul_stats_kernel(%arg0: i32, %arg1: i32, %arg2: memref<1x128x128xbf16, #tpu.memory_space<vmem>>, %arg3: memref<1x128x128xbf16, #tpu.memory_space<vmem>>, %arg4: memref<1x128x128xf32, #tpu.memory_space<vmem>>, %arg5: memref<1x2x128xf32, #tpu.memory_space<vmem>>) attributes {dimension_semantics = [#tpu.dimension_semantics<parallel>, #tpu.dimension_semantics<parallel>], iteration_bounds = array<i64: 4, 1>, scalar_prefetch = 0 : i64, scratch_operands = 0 : i64, tpu.core_type = #tpu.core_type<tc>, window_params = [{transform_indices = @transform_0, window_bounds = array<i64: 1, 128, 128>}, {transform_indices = @transform_1, window_bounds = array<i64: 1, 128, 128>}, {transform_indices = @transform_2, window_bounds = array<i64: 1, 128, 128>}, {transform_indices = @transform_3, window_bounds = array<i64: 1, 2, 128>}]} {
    %c0 = arith.constant 0 : index
    %c0_0 = arith.constant 0 : index
    %c0_1 = arith.constant 0 : index
    %0 = vector.load %arg2[%c0, %c0_0, %c0_1] : memref<1x128x128xbf16, #tpu.memory_space<vmem>>, vector<1x128x128xbf16>
    %1 = vector.shape_cast %0 : vector<1x128x128xbf16> to vector<128x128xbf16>
    %c0_2 = arith.constant 0 : index
    %c0_3 = arith.constant 0 : index
    %c0_4 = arith.constant 0 : index
    %2 = vector.load %arg3[%c0_2, %c0_3, %c0_4] : memref<1x128x128xbf16, #tpu.memory_space<vmem>>, vector<1x128x128xbf16>
    %3 = vector.shape_cast %2 : vector<1x128x128xbf16> to vector<128x128xbf16>
    %cst = arith.constant dense<0.000000e+00> : vector<128x128xf32>
    %4 = tpu.matmul %1, %3, %cst {dimension_numbers = #tpu.dot_dimension_numbers<[1], [0], [0], [1], [0, 0, 1, 1], [], []>} : vector<128x128xbf16>, vector<128x128xbf16>, vector<128x128xf32> -> vector<128x128xf32>
    %c0_5 = arith.constant 0 : index
    %c0_6 = arith.constant 0 : index
    %c0_7 = arith.constant 0 : index
    %5 = vector.load %arg4[%c0_5, %c0_6, %c0_7] : memref<1x128x128xf32, #tpu.memory_space<vmem>>, vector<1x128x128xf32>
    %6 = vector.shape_cast %5 : vector<1x128x128xf32> to vector<128x128xf32>
    %7 = vector.shape_cast %4 : vector<128x128xf32> to vector<1x128x128xf32>
    tpu.vector_store %arg4[%c0_5, %c0_6, %c0_7], %7 {strides = array<i32>} : memref<1x128x128xf32, #tpu.memory_space<vmem>>, vector<1x128x128xf32>,
    %cst_8 = arith.constant dense<0.000000e+00> : vector<128xf32>
    %8 = vector.multi_reduction <add>, %4, %cst_8 [0] : vector<128x128xf32> to vector<128xf32>
    %9 = vector.shape_cast %8 : vector<128xf32> to vector<1x128xf32>
    %10 = arith.mulf %4, %4 : vector<128x128xf32>
    %cst_9 = arith.constant dense<0.000000e+00> : vector<128xf32>
    %11 = vector.multi_reduction <add>, %10, %cst_9 [0] : vector<128x128xf32> to vector<128xf32>
    %12 = vector.shape_cast %11 : vector<128xf32> to vector<1x128xf32>
    %13 = tpu.concatenate %9, %12 in 0 : vector<1x128xf32>, vector<1x128xf32> -> vector<2x128xf32>
    %14 = vector.shape_cast %13 : vector<2x128xf32> to vector<1x2x128xf32>
    %c0_10 = arith.constant 0 : index
    %c0_11 = arith.constant 0 : index
    %c0_12 = arith.constant 0 : index
    %15 = vector.load %arg5[%c0_10, %c0_11, %c0_12] : memref<1x2x128xf32, #tpu.memory_space<vmem>>, vector<1x2x128xf32>
    tpu.vector_store %arg5[%c0_10, %c0_11, %c0_12], %14 {strides = array<i32>} : memref<1x2x128xf32, #tpu.memory_space<vmem>>, vector<1x2x128xf32>,
    return
  }
  func.func @transform_0(%arg0: i32, %arg1: i32) -> (i32, i32, i32) {
    %c0_i32 = arith.constant 0 : i32
    %c0_i32_0 = arith.constant 0 : i32
    return %arg0, %arg1, %c0_i32 : i32, i32, i32
  }
  func.func @transform_1(%arg0: i32, %arg1: i32) -> (i32, i32, i32) {
    %c0_i32 = arith.constant 0 : i32
    %c0_i32_0 = arith.constant 0 : i32
    %c0_i32_1 = arith.constant 0 : i32
    return %arg0, %c0_i32, %c0_i32_0 : i32, i32, i32
  }
  func.func @transform_2(%arg0: i32, %arg1: i32) -> (i32, i32, i32) {
    %c0_i32 = arith.constant 0 : i32
    %c0_i32_0 = arith.constant 0 : i32
    return %arg0, %arg1, %c0_i32 : i32, i32, i32
  }
  func.func @transform_3(%arg0: i32, %arg1: i32) -> (i32, i32, i32) {
    %c1_i32 = arith.constant 1 : i32
    %0 = arith.muli %arg0, %c1_i32 : i32
    %1 = arith.addi %0, %arg1 : i32
    %c0_i32 = arith.constant 0 : i32
    %c0_i32_0 = arith.constant 0 : i32
    %c0_i32_1 = arith.constant 0 : i32
    return %1, %c0_i32, %c0_i32_0 : i32, i32, i32
  }
}

module attributes {stable_mosaic.version = 11 : i64} {
  func.func @_bn_relu_kernel(%arg0: i32, %arg1: i32, %arg2: memref<1x128x128xf32, #tpu.memory_space<vmem>>, %arg3: memref<1x128xf32, #tpu.memory_space<vmem>>, %arg4: memref<1x128xf32, #tpu.memory_space<vmem>>, %arg5: memref<1x128x128xf32, #tpu.memory_space<vmem>>) attributes {dimension_semantics = [#tpu.dimension_semantics<parallel>, #tpu.dimension_semantics<parallel>], iteration_bounds = array<i64: 4, 1>, scalar_prefetch = 0 : i64, scratch_operands = 0 : i64, tpu.core_type = #tpu.core_type<tc>, window_params = [{transform_indices = @transform_0, window_bounds = array<i64: 1, 128, 128>}, {pipeline_mode = #tpu.pipeline_mode<synchronous>, transform_indices = @transform_1, window_bounds = array<i64: 1, 128>}, {pipeline_mode = #tpu.pipeline_mode<synchronous>, transform_indices = @transform_2, window_bounds = array<i64: 1, 128>}, {transform_indices = @transform_3, window_bounds = array<i64: 1, 128, 128>}]} {
    %c0 = arith.constant 0 : index
    %c0_0 = arith.constant 0 : index
    %c0_1 = arith.constant 0 : index
    %0 = vector.load %arg2[%c0, %c0_0, %c0_1] : memref<1x128x128xf32, #tpu.memory_space<vmem>>, vector<1x128x128xf32>
    %1 = vector.shape_cast %0 : vector<1x128x128xf32> to vector<128x128xf32>
    %c0_2 = arith.constant 0 : index
    %c0_3 = arith.constant 0 : index
    %2 = vector.load %arg3[%c0_2, %c0_3] : memref<1x128xf32, #tpu.memory_space<vmem>>, vector<1x128xf32>
    %3 = vector.broadcast %2 : vector<1x128xf32> to vector<128x128xf32>
    %4 = arith.mulf %1, %3 : vector<128x128xf32>
    %c0_4 = arith.constant 0 : index
    %c0_5 = arith.constant 0 : index
    %5 = vector.load %arg4[%c0_4, %c0_5] : memref<1x128xf32, #tpu.memory_space<vmem>>, vector<1x128xf32>
    %6 = vector.broadcast %5 : vector<1x128xf32> to vector<128x128xf32>
    %7 = arith.addf %4, %6 : vector<128x128xf32>
    %cst = arith.constant 0.000000e+00 : f32
    %8 = vector.broadcast %cst : f32 to vector<128x128xf32>
    %9 = arith.maximumf %7, %8 : vector<128x128xf32>
    %c0_6 = arith.constant 0 : index
    %c0_7 = arith.constant 0 : index
    %c0_8 = arith.constant 0 : index
    %10 = vector.load %arg5[%c0_6, %c0_7, %c0_8] : memref<1x128x128xf32, #tpu.memory_space<vmem>>, vector<1x128x128xf32>
    %11 = vector.shape_cast %10 : vector<1x128x128xf32> to vector<128x128xf32>
    %12 = vector.shape_cast %9 : vector<128x128xf32> to vector<1x128x128xf32>
    tpu.vector_store %arg5[%c0_6, %c0_7, %c0_8], %12 {strides = array<i32>} : memref<1x128x128xf32, #tpu.memory_space<vmem>>, vector<1x128x128xf32>,
    return
  }
  func.func @transform_0(%arg0: i32, %arg1: i32) -> (i32, i32, i32) {
    %c0_i32 = arith.constant 0 : i32
    %c0_i32_0 = arith.constant 0 : i32
    return %arg0, %arg1, %c0_i32 : i32, i32, i32
  }
  func.func @transform_1(%arg0: i32, %arg1: i32) -> (i32, i32) {
    %c0_i32 = arith.constant 0 : i32
    %c0_i32_0 = arith.constant 0 : i32
    %c0_i32_1 = arith.constant 0 : i32
    return %c0_i32, %c0_i32_0 : i32, i32
  }
  func.func @transform_2(%arg0: i32, %arg1: i32) -> (i32, i32) {
    %c0_i32 = arith.constant 0 : i32
    %c0_i32_0 = arith.constant 0 : i32
    %c0_i32_1 = arith.constant 0 : i32
    return %c0_i32, %c0_i32_0 : i32, i32
  }
  func.func @transform_3(%arg0: i32, %arg1: i32) -> (i32, i32, i32) {
    %c0_i32 = arith.constant 0 : i32
    %c0_i32_0 = arith.constant 0 : i32
    return %arg0, %arg1, %c0_i32 : i32, i32, i32
  }
}

module attributes {stable_mosaic.version = 11 : i64} {
  func.func @_matmul_stats_kernel(%arg0: i32, %arg1: i32, %arg2: memref<1x512x64xbf16, #tpu.memory_space<vmem>>, %arg3: memref<1x64x128xbf16, #tpu.memory_space<vmem>>, %arg4: memref<1x512x128xf32, #tpu.memory_space<vmem>>, %arg5: memref<1x2x128xf32, #tpu.memory_space<vmem>>) attributes {dimension_semantics = [#tpu.dimension_semantics<parallel>, #tpu.dimension_semantics<parallel>], iteration_bounds = array<i64: 4, 1>, scalar_prefetch = 0 : i64, scratch_operands = 0 : i64, tpu.core_type = #tpu.core_type<tc>, window_params = [{transform_indices = @transform_0, window_bounds = array<i64: 1, 512, 64>}, {transform_indices = @transform_1, window_bounds = array<i64: 1, 64, 128>}, {transform_indices = @transform_2, window_bounds = array<i64: 1, 512, 128>}, {transform_indices = @transform_3, window_bounds = array<i64: 1, 2, 128>}]} {
    %c0 = arith.constant 0 : index
    %c0_0 = arith.constant 0 : index
    %c0_1 = arith.constant 0 : index
    %0 = vector.load %arg2[%c0, %c0_0, %c0_1] : memref<1x512x64xbf16, #tpu.memory_space<vmem>>, vector<1x512x64xbf16>
    %1 = vector.shape_cast %0 : vector<1x512x64xbf16> to vector<512x64xbf16>
    %c0_2 = arith.constant 0 : index
    %c0_3 = arith.constant 0 : index
    %c0_4 = arith.constant 0 : index
    %2 = vector.load %arg3[%c0_2, %c0_3, %c0_4] : memref<1x64x128xbf16, #tpu.memory_space<vmem>>, vector<1x64x128xbf16>
    %3 = vector.shape_cast %2 : vector<1x64x128xbf16> to vector<64x128xbf16>
    %cst = arith.constant dense<0.000000e+00> : vector<512x128xf32>
    %4 = tpu.matmul %1, %3, %cst {dimension_numbers = #tpu.dot_dimension_numbers<[1], [0], [0], [1], [0, 0, 1, 1], [], []>} : vector<512x64xbf16>, vector<64x128xbf16>, vector<512x128xf32> -> vector<512x128xf32>
    %c0_5 = arith.constant 0 : index
    %c0_6 = arith.constant 0 : index
    %c0_7 = arith.constant 0 : index
    %5 = vector.load %arg4[%c0_5, %c0_6, %c0_7] : memref<1x512x128xf32, #tpu.memory_space<vmem>>, vector<1x512x128xf32>
    %6 = vector.shape_cast %5 : vector<1x512x128xf32> to vector<512x128xf32>
    %7 = vector.shape_cast %4 : vector<512x128xf32> to vector<1x512x128xf32>
    tpu.vector_store %arg4[%c0_5, %c0_6, %c0_7], %7 {strides = array<i32>} : memref<1x512x128xf32, #tpu.memory_space<vmem>>, vector<1x512x128xf32>,
    %cst_8 = arith.constant dense<0.000000e+00> : vector<128xf32>
    %8 = vector.multi_reduction <add>, %4, %cst_8 [0] : vector<512x128xf32> to vector<128xf32>
    %9 = vector.shape_cast %8 : vector<128xf32> to vector<1x128xf32>
    %10 = arith.mulf %4, %4 : vector<512x128xf32>
    %cst_9 = arith.constant dense<0.000000e+00> : vector<128xf32>
    %11 = vector.multi_reduction <add>, %10, %cst_9 [0] : vector<512x128xf32> to vector<128xf32>
    %12 = vector.shape_cast %11 : vector<128xf32> to vector<1x128xf32>
    %13 = tpu.concatenate %9, %12 in 0 : vector<1x128xf32>, vector<1x128xf32> -> vector<2x128xf32>
    %14 = vector.shape_cast %13 : vector<2x128xf32> to vector<1x2x128xf32>
    %c0_10 = arith.constant 0 : index
    %c0_11 = arith.constant 0 : index
    %c0_12 = arith.constant 0 : index
    %15 = vector.load %arg5[%c0_10, %c0_11, %c0_12] : memref<1x2x128xf32, #tpu.memory_space<vmem>>, vector<1x2x128xf32>
    tpu.vector_store %arg5[%c0_10, %c0_11, %c0_12], %14 {strides = array<i32>} : memref<1x2x128xf32, #tpu.memory_space<vmem>>, vector<1x2x128xf32>,
    return
  }
  func.func @transform_0(%arg0: i32, %arg1: i32) -> (i32, i32, i32) {
    %c0_i32 = arith.constant 0 : i32
    %c0_i32_0 = arith.constant 0 : i32
    return %arg0, %arg1, %c0_i32 : i32, i32, i32
  }
  func.func @transform_1(%arg0: i32, %arg1: i32) -> (i32, i32, i32) {
    %c0_i32 = arith.constant 0 : i32
    %c0_i32_0 = arith.constant 0 : i32
    %c0_i32_1 = arith.constant 0 : i32
    return %arg0, %c0_i32, %c0_i32_0 : i32, i32, i32
  }
  func.func @transform_2(%arg0: i32, %arg1: i32) -> (i32, i32, i32) {
    %c0_i32 = arith.constant 0 : i32
    %c0_i32_0 = arith.constant 0 : i32
    return %arg0, %arg1, %c0_i32 : i32, i32, i32
  }
  func.func @transform_3(%arg0: i32, %arg1: i32) -> (i32, i32, i32) {
    %c1_i32 = arith.constant 1 : i32
    %0 = arith.muli %arg0, %c1_i32 : i32
    %1 = arith.addi %0, %arg1 : i32
    %c0_i32 = arith.constant 0 : i32
    %c0_i32_0 = arith.constant 0 : i32
    %c0_i32_1 = arith.constant 0 : i32
    return %1, %c0_i32, %c0_i32_0 : i32, i32, i32
  }
}

module attributes {stable_mosaic.version = 11 : i64} {
  func.func @_bn_relu_kernel(%arg0: i32, %arg1: i32, %arg2: memref<1x512x128xf32, #tpu.memory_space<vmem>>, %arg3: memref<1x128xf32, #tpu.memory_space<vmem>>, %arg4: memref<1x128xf32, #tpu.memory_space<vmem>>, %arg5: memref<1x512x128xf32, #tpu.memory_space<vmem>>) attributes {dimension_semantics = [#tpu.dimension_semantics<parallel>, #tpu.dimension_semantics<parallel>], iteration_bounds = array<i64: 4, 1>, scalar_prefetch = 0 : i64, scratch_operands = 0 : i64, tpu.core_type = #tpu.core_type<tc>, window_params = [{transform_indices = @transform_0, window_bounds = array<i64: 1, 512, 128>}, {pipeline_mode = #tpu.pipeline_mode<synchronous>, transform_indices = @transform_1, window_bounds = array<i64: 1, 128>}, {pipeline_mode = #tpu.pipeline_mode<synchronous>, transform_indices = @transform_2, window_bounds = array<i64: 1, 128>}, {transform_indices = @transform_3, window_bounds = array<i64: 1, 512, 128>}]} {
    %c0 = arith.constant 0 : index
    %c0_0 = arith.constant 0 : index
    %c0_1 = arith.constant 0 : index
    %0 = vector.load %arg2[%c0, %c0_0, %c0_1] : memref<1x512x128xf32, #tpu.memory_space<vmem>>, vector<1x512x128xf32>
    %1 = vector.shape_cast %0 : vector<1x512x128xf32> to vector<512x128xf32>
    %c0_2 = arith.constant 0 : index
    %c0_3 = arith.constant 0 : index
    %2 = vector.load %arg3[%c0_2, %c0_3] : memref<1x128xf32, #tpu.memory_space<vmem>>, vector<1x128xf32>
    %3 = vector.broadcast %2 : vector<1x128xf32> to vector<512x128xf32>
    %4 = arith.mulf %1, %3 : vector<512x128xf32>
    %c0_4 = arith.constant 0 : index
    %c0_5 = arith.constant 0 : index
    %5 = vector.load %arg4[%c0_4, %c0_5] : memref<1x128xf32, #tpu.memory_space<vmem>>, vector<1x128xf32>
    %6 = vector.broadcast %5 : vector<1x128xf32> to vector<512x128xf32>
    %7 = arith.addf %4, %6 : vector<512x128xf32>
    %cst = arith.constant 0.000000e+00 : f32
    %8 = vector.broadcast %cst : f32 to vector<512x128xf32>
    %9 = arith.maximumf %7, %8 : vector<512x128xf32>
    %c0_6 = arith.constant 0 : index
    %c0_7 = arith.constant 0 : index
    %c0_8 = arith.constant 0 : index
    %10 = vector.load %arg5[%c0_6, %c0_7, %c0_8] : memref<1x512x128xf32, #tpu.memory_space<vmem>>, vector<1x512x128xf32>
    %11 = vector.shape_cast %10 : vector<1x512x128xf32> to vector<512x128xf32>
    %12 = vector.shape_cast %9 : vector<512x128xf32> to vector<1x512x128xf32>
    tpu.vector_store %arg5[%c0_6, %c0_7, %c0_8], %12 {strides = array<i32>} : memref<1x512x128xf32, #tpu.memory_space<vmem>>, vector<1x512x128xf32>,
    return
  }
  func.func @transform_0(%arg0: i32, %arg1: i32) -> (i32, i32, i32) {
    %c0_i32 = arith.constant 0 : i32
    %c0_i32_0 = arith.constant 0 : i32
    return %arg0, %arg1, %c0_i32 : i32, i32, i32
  }
  func.func @transform_1(%arg0: i32, %arg1: i32) -> (i32, i32) {
    %c0_i32 = arith.constant 0 : i32
    %c0_i32_0 = arith.constant 0 : i32
    %c0_i32_1 = arith.constant 0 : i32
    return %c0_i32, %c0_i32_0 : i32, i32
  }
  func.func @transform_2(%arg0: i32, %arg1: i32) -> (i32, i32) {
    %c0_i32 = arith.constant 0 : i32
    %c0_i32_0 = arith.constant 0 : i32
    %c0_i32_1 = arith.constant 0 : i32
    return %c0_i32, %c0_i32_0 : i32, i32
  }
  func.func @transform_3(%arg0: i32, %arg1: i32) -> (i32, i32, i32) {
    %c0_i32 = arith.constant 0 : i32
    %c0_i32_0 = arith.constant 0 : i32
    return %arg0, %arg1, %c0_i32 : i32, i32, i32
  }
}

module attributes {stable_mosaic.version = 11 : i64} {
  func.func @_matmul_sigmoid_kernel(%arg0: i32, %arg1: i32, %arg2: memref<1x2048x32xbf16, #tpu.memory_space<vmem>>, %arg3: memref<1x32x128xbf16, #tpu.memory_space<vmem>>, %arg4: memref<1x2048x128xf32, #tpu.memory_space<vmem>>) attributes {dimension_semantics = [#tpu.dimension_semantics<parallel>, #tpu.dimension_semantics<parallel>], iteration_bounds = array<i64: 4, 1>, scalar_prefetch = 0 : i64, scratch_operands = 0 : i64, tpu.core_type = #tpu.core_type<tc>, window_params = [{transform_indices = @transform_0, window_bounds = array<i64: 1, 2048, 32>}, {transform_indices = @transform_1, window_bounds = array<i64: 1, 32, 128>}, {transform_indices = @transform_2, window_bounds = array<i64: 1, 2048, 128>}]} {
    %c0 = arith.constant 0 : index
    %c0_0 = arith.constant 0 : index
    %c0_1 = arith.constant 0 : index
    %0 = vector.load %arg2[%c0, %c0_0, %c0_1] : memref<1x2048x32xbf16, #tpu.memory_space<vmem>>, vector<1x2048x32xbf16>
    %1 = vector.shape_cast %0 : vector<1x2048x32xbf16> to vector<2048x32xbf16>
    %c0_2 = arith.constant 0 : index
    %c0_3 = arith.constant 0 : index
    %c0_4 = arith.constant 0 : index
    %2 = vector.load %arg3[%c0_2, %c0_3, %c0_4] : memref<1x32x128xbf16, #tpu.memory_space<vmem>>, vector<1x32x128xbf16>
    %3 = vector.shape_cast %2 : vector<1x32x128xbf16> to vector<32x128xbf16>
    %cst = arith.constant dense<0.000000e+00> : vector<2048x128xf32>
    %4 = tpu.matmul %1, %3, %cst {dimension_numbers = #tpu.dot_dimension_numbers<[1], [0], [0], [1], [0, 0, 1, 1], [], []>} : vector<2048x32xbf16>, vector<32x128xbf16>, vector<2048x128xf32> -> vector<2048x128xf32>
    %5 = arith.negf %4 : vector<2048x128xf32>
    %6 = math.exp %5 : vector<2048x128xf32>
    %cst_5 = arith.constant 1.000000e+00 : f32
    %7 = vector.broadcast %cst_5 : f32 to vector<2048x128xf32>
    %8 = arith.addf %7, %6 : vector<2048x128xf32>
    %9 = arith.divf %7, %8 : vector<2048x128xf32>
    %c0_6 = arith.constant 0 : index
    %c0_7 = arith.constant 0 : index
    %c0_8 = arith.constant 0 : index
    %10 = vector.load %arg4[%c0_6, %c0_7, %c0_8] : memref<1x2048x128xf32, #tpu.memory_space<vmem>>, vector<1x2048x128xf32>
    %11 = vector.shape_cast %10 : vector<1x2048x128xf32> to vector<2048x128xf32>
    %12 = vector.shape_cast %9 : vector<2048x128xf32> to vector<1x2048x128xf32>
    tpu.vector_store %arg4[%c0_6, %c0_7, %c0_8], %12 {strides = array<i32>} : memref<1x2048x128xf32, #tpu.memory_space<vmem>>, vector<1x2048x128xf32>,
    return
  }
  func.func @transform_0(%arg0: i32, %arg1: i32) -> (i32, i32, i32) {
    %c0_i32 = arith.constant 0 : i32
    %c0_i32_0 = arith.constant 0 : i32
    return %arg0, %arg1, %c0_i32 : i32, i32, i32
  }
  func.func @transform_1(%arg0: i32, %arg1: i32) -> (i32, i32, i32) {
    %c0_i32 = arith.constant 0 : i32
    %c0_i32_0 = arith.constant 0 : i32
    %c0_i32_1 = arith.constant 0 : i32
    return %arg0, %c0_i32, %c0_i32_0 : i32, i32, i32
  }
  func.func @transform_2(%arg0: i32, %arg1: i32) -> (i32, i32, i32) {
    %c0_i32 = arith.constant 0 : i32
    %c0_i32_0 = arith.constant 0 : i32
    return %arg0, %arg1, %c0_i32 : i32, i32, i32
  }
}

</mosaic_0001>

<llo_original>
// kernel: generator_forward.7
$region0: #{generator_forward.7}
  #allocation0 [shape = 'u32[]', space=smem, size = 0x4, offset = 0x4, fixed_abs, tag = 'smem constant byte address 0x4 - core index']
  #allocation1 [shape = 'u32[144,128]{1,0:T(1,128)}', space=vmem, size = 0x12000, scoped, tag = 'internal scratch']
  %s0 = inlined_call_operand.vmem [shape: bf16[4,32,256], index: 0, kind: input, shape index: {}]
  %s1 = inlined_call_operand.hbm [shape: bf16[4,256,128], index: 1, kind: input, shape index: {}]
  %s2 = inlined_call_operand.vmem [shape: f32[4,32,128], index: 2, kind: output, shape index: {0}]
  %s3 = inlined_call_operand.vmem [shape: f32[4,2,128], index: 3, kind: output, shape index: {1}]
  %4 = xla_tuple %s2, %s3
  %s5 = sld [smem:[#allocation0]]
  $region53: #{generator_forward.7} parent=0
    _
  %s7 = ssub.s32 1, %s5
  %s8 = scalar_select 0, %s7, %s5
  $region1: #{generator_forward.7} parent=0
    #allocation2 [shape = 'u8[131072]{0}', space=vmem, size = 0x20000, scoped, tag = 'input window, operand 1']
    #allocation3 [shape = 's32[2]{0}', space=sflag, size = 0x8, scoped, tag = 'scoped memory for generator_forward.7']
    %9 = vsyncpa [#allocation3], 0
    %s10 = scalar_lea.sflag [#allocation3], 1
    %11 = vsyncpa %s10, 0
    loop: start=0, step=1, limit=6
    $region2: #{generator_forward.7} parent=1 // loop_pre_header
      _
    $region3: #{generator_forward.7} parent=1 // loop_header
      %s13 = sphi 0, %s17
      %p14 = scmp.ge.s32.totalorder %s13, 6
      %s20 = sphi 0, %s32
      %s21 = sphi 0, %s28
      %s22 = sphi 0, %s20
      %s23 = sphi 0, %s21
      %s24 = sphi 0, %s22
      %s25 = sphi 0, %s23
      %s37 = sphi 0, %s39
      %s40 = sphi 0, %s37
      %s41 = sphi 0, %s40
      %s57 = sphi 0, %s41
      %s63 = sphi 0, %s65
      %s66 = sphi 0, %s63
      %s67 = sphi 0, %s66
      %s83 = sphi 0, %s67
      %s91 = sphi 0, %s93
      %s94 = sphi 0, %s91
      %s95 = sphi 0, %s94
      %s111 = sphi 0, %s95
      %s119 = sphi 0, %s121
      %s122 = sphi 0, %s119
      %s123 = sphi 0, %s122
      %s139 = sphi 0, %s123
    $region4: #{generator_forward.7} parent=1 // loop_header_branch
      %16 = sbr.rel (%p14) target = $region8
    $region5: #{generator_forward.7} parent=1 // loop_body
      %s18 = ssub.s32 %s13, 1
      %s19 = ssub.s32 %s13, 2
      %s26 = sadd.s32 1, %s21
      %p27 = scmp.ge.s32.totalorder %s26, 1
      %s28 = scalar_select %p27, 0, %s26
      %s29 = sadd.s32 1, %s20
      %s30 = scalar_select %p27, %s29, %s20
      %p31 = scmp.ge.s32.totalorder %s30, 4
      %s32 = scalar_select %p31, 0, %s30
      %s33 = ssub.s32 %s20, %s32
      %s34 = ssub.s32 %s21, %s28
      %s35 = sor.u32 %s33, %s34
      %p36 = scmp.eq.s32.totalorder %s35, 0
      %s38 = sadd.s32 %s37, 1
      %s39 = scalar_select %p36, %s37, %s38
      %p42 = pneg %p36
      %p43 = scmp.eq.s32.totalorder %s13, 3
      %p44 = por %p42, %p43
      %p45 = scmp.ne.s32.totalorder %s37, %s40
      %p46 = scmp.eq.s32.totalorder %s13, 0
      %p47 = por %p45, %p46
      %p48 = scmp.ne.s32.totalorder %s37, %s40
      %p49 = scmp.eq.s32.totalorder %s18, 3
      %p50 = por %p48, %p49
      %p51 = scmp.ne.s32.totalorder %s40, %s41
      %p52 = scmp.eq.s32.totalorder %s18, 0
      %p53 = por %p51, %p52
      %p54 = scmp.ne.s32.totalorder %s40, %s41
      %p55 = scmp.eq.s32.totalorder %s19, 3
      %p56 = por %p54, %p55
      %p58 = scmp.ne.s32.totalorder %s41, %s57
      %p59 = scmp.eq.s32.totalorder %s19, 0
      %p60 = por %p58, %p59
      %s61 = ssub.s32 %s20, %s32
      %p62 = scmp.eq.s32.totalorder %s61, 0
      %s64 = sadd.s32 %s63, 1
      %s65 = scalar_select %p62, %s63, %s64
      %p68 = pneg %p62
      %p69 = scmp.eq.s32.totalorder %s13, 3
      %p70 = por %p68, %p69
      %p71 = scmp.ne.s32.totalorder %s63, %s66
      %p72 = scmp.eq.s32.totalorder %s13, 0
      %p73 = por %p71, %p72
      %p74 = scmp.ne.s32.totalorder %s63, %s66
      %p75 = scmp.eq.s32.totalorder %s18, 3
      %p76 = por %p74, %p75
      %p77 = scmp.ne.s32.totalorder %s66, %s67
      %p78 = scmp.eq.s32.totalorder %s18, 0
      %p79 = por %p77, %p78
      %p80 = scmp.ne.s32.totalorder %s66, %s67
      %p81 = scmp.eq.s32.totalorder %s19, 3
      %p82 = por %p80, %p81
      %p84 = scmp.ne.s32.totalorder %s67, %s83
      %p85 = scmp.eq.s32.totalorder %s19, 0
      %p86 = por %p84, %p85
      %s87 = ssub.s32 %s20, %s32
      %s88 = ssub.s32 %s21, %s28
      %s89 = sor.u32 %s87, %s88
      %p90 = scmp.eq.s32.totalorder %s89, 0
      %s92 = sadd.s32 %s91, 1
      %s93 = scalar_select %p90, %s91, %s92
      %p96 = pneg %p90
      %p97 = scmp.eq.s32.totalorder %s13, 3
      %p98 = por %p96, %p97
      %p99 = scmp.ne.s32.totalorder %s91, %s94
      %p100 = scmp.eq.s32.totalorder %s13, 0
      %p101 = por %p99, %p100
      %p102 = scmp.ne.s32.totalorder %s91, %s94
      %p103 = scmp.eq.s32.totalorder %s18, 3
      %p104 = por %p102, %p103
      %p105 = scmp.ne.s32.totalorder %s94, %s95
      %p106 = scmp.eq.s32.totalorder %s18, 0
      %p107 = por %p105, %p106
      %p108 = scmp.ne.s32.totalorder %s94, %s95
      %p109 = scmp.eq.s32.totalorder %s19, 3
      %p110 = por %p108, %p109
      %p112 = scmp.ne.s32.totalorder %s95, %s111
      %p113 = scmp.eq.s32.totalorder %s19, 0
      %p114 = por %p112, %p113
      %s115 = sadd.s32 %s20, %s21
      %s116 = sadd.s32 %s32, %s28
      %s117 = ssub.s32 %s115, %s116
      %p118 = scmp.eq.s32.totalorder %s117, 0
      %s120 = sadd.s32 %s119, 1
      %s121 = scalar_select %p118, %s119, %s120
      %p124 = pneg %p118
      %p125 = scmp.eq.s32.totalorder %s13, 3
      %p126 = por %p124, %p125
      %p127 = scmp.ne.s32.totalorder %s119, %s122
      %p128 = scmp.eq.s32.totalorder %s13, 0
      %p129 = por %p127, %p128
      %p130 = scmp.ne.s32.totalorder %s119, %s122
      %p131 = scmp.eq.s32.totalorder %s18, 3
      %p132 = por %p130, %p131
      %p133 = scmp.ne.s32.totalorder %s122, %s123
      %p134 = scmp.eq.s32.totalorder %s18, 0
      %p135 = por %p133, %p134
      %p136 = scmp.ne.s32.totalorder %s122, %s123
      %p137 = scmp.eq.s32.totalorder %s19, 3
      %p138 = por %p136, %p137
      %p140 = scmp.ne.s32.totalorder %s123, %s139
      %p141 = scmp.eq.s32.totalorder %s19, 0
      %p142 = por %p140, %p141
      %p143 = scmp.le.s32.totalorder 1, %s13
      %p144 = scmp.lt.s32.totalorder %s13, 5
      %p145 = pnand %p143, %p144
      %p146 = pneg %p145
      // Predicated region
      $region9: #{generator_forward.7} parent=5 // pred_check
        _
      $region10: #{generator_forward.7} parent=5 // pred_check_branch
        %148 = sbr.rel (%p145) target = $region12
      $region11: #{generator_forward.7} parent=5 // pred_region
        %s149 = ssub.s32 %s13, 1
      $region12: #{generator_forward.7} parent=5 // pred_fallthru
        _
      %p150 = scmp.lt.s32.totalorder %s13, 4
      // Predicated region
      $region13: #{generator_forward.7} parent=5 // pred_check
        %p151 = pneg %p150
      $region14: #{generator_forward.7} parent=5 // pred_check_branch
        %153 = sbr.rel (%p151) target = $region16
      $region15: #{generator_forward.7} parent=5 // pred_region
        // Predicated region
        $region17: #{generator_forward.7} parent=15 // pred_check
          %p154 = pneg %p47
        $region18: #{generator_forward.7} parent=15 // pred_check_branch
          %156 = sbr.rel (%p154) target = $region20
        $region19: #{generator_forward.7} parent=15 // pred_region
          %s157 = smul.u32 4, %s21
          %p158 = scmp.lt.s32.totalorder %s20, 3
          %s159 = scalar_select %p158, %s20, 3
          %p160 = scmp.lt.s32.totalorder %s157, 3
          %s161 = scalar_select %p160, %s157, 3
          %s162 = smul.addr %s161, 2
          %s163 = smul.addr %s159, 8
          %s164 = sadd.s32 %s162, %s163
          %s165 = smul.addr %s164, 4
          %s166 = scalar_lea.vmem %s0, %s165
          %s167 = smul.u32 4, %s21
        $region20: #{generator_forward.7} parent=15 // pred_fallthru
          _
        // Predicated region
        $region21: #{generator_forward.7} parent=15 // pred_check
          %p168 = pneg %p73
        $region22: #{generator_forward.7} parent=15 // pred_check_branch
          %170 = sbr.rel (%p168) target = $region24
        $region23: #{generator_forward.7} parent=15 // pred_region
          %s171 = sand.u32 %s63, 1
          %s172 = scalar_lea.sflag [#allocation3], %s171
          %s173 = sand.u32 %s63, 1
          %s174 = smul.addr %s173, 128
          %s175 = scalar_lea.vmem [#allocation2], %s174
          %s177 = ssub.s32 2048, 2048
          %178 = vsyncadd %s172, %s177
          %s179 = smul.addr %s20, 32
          %s180 = smul.addr %s179, 64
          %s181 = scalar_lea.hbm %s1, %s180
          %s182 = sshll.u32 %s175, 4
          %s183 = int_to_ptr.vmem [resolvable:$true] %s182
          %188 = dma.hbm_to_vmem [thread:$0]  %s181, 2048, %s183, %s172, 64, 64, 4
        $region24: #{generator_forward.7} parent=15 // pred_fallthru
          _
      $region16: #{generator_forward.7} parent=5 // pred_fallthru
        _
      %p189 = scmp.le.s32.totalorder 1, %s13
      %p190 = scmp.lt.s32.totalorder %s13, 5
      %p191 = pnand %p189, %p190
      %p192 = pneg %p191
      // Predicated region
      $region25: #{generator_forward.7} parent=5 // pred_check
        _
      $region26: #{generator_forward.7} parent=5 // pred_check_branch
        %194 = sbr.rel (%p191) target = $region28
      $region27: #{generator_forward.7} parent=5 // pred_region
        %s195 = ssub.s32 %s13, 1
        %s196 = sand.u32 %s66, 1
        %s197 = scalar_lea.sflag [#allocation3], %s196
        %s198 = sand.u32 %s66, 1
        %s199 = smul.addr %s198, 128
        %s200 = scalar_lea.vmem [#allocation2], %s199
        // Predicated region
        $region29: #{generator_forward.7} parent=27 // pred_check
          %p201 = pneg %p79
        $region30: #{generator_forward.7} parent=27 // pred_check_branch
          %203 = sbr.rel (%p201) target = $region32
        $region31: #{generator_forward.7} parent=27 // pred_region
          %204 = dma.done %s197, 2048
        $region32: #{generator_forward.7} parent=27 // pred_fallthru
          _
        %s205 = smul.u32 4, %s23
        %p206 = scmp.lt.s32.totalorder %s22, 3
        %s207 = scalar_select %p206, %s22, 3
        %p208 = scmp.lt.s32.totalorder %s205, 3
        %s209 = scalar_select %p208, %s205, 3
        %s210 = smul.addr %s209, 2
        %s211 = smul.addr %s207, 8
        %s212 = sadd.s32 %s210, %s211
        %s213 = smul.addr %s212, 4
        %s214 = scalar_lea.vmem %s0, %s213
        %p215 = pneg %p53
        %p216 = pneg %p50
        %s217 = sand.u32 %s66, 1
        %s218 = scalar_lea.sflag [#allocation3], %s217
        %s219 = sand.u32 %s66, 1
        %s220 = smul.addr %s219, 128
        %s221 = scalar_lea.vmem [#allocation2], %s220
        %p222 = pneg %p79
        %p223 = pneg %p76
        %p224 = pneg %p107
        %p225 = pneg %p104
        %s226 = smul.u32 4, %s23
        %p227 = scmp.lt.s32.totalorder %s22, 3
        %s228 = scalar_select %p227, %s22, 3
        %p229 = scmp.lt.s32.totalorder %s226, 3
        %s230 = scalar_select %p229, %s226, 3
        %s231 = smul.addr %s228, 4
        %s232 = sadd.s32 %s230, %s231
        %s233 = smul.addr %s232, 8
        %s234 = scalar_lea.vmem %s2, %s233
        %p235 = pneg %p135
        %p236 = pneg %p132
        %s237 = sadd.s32 %s22, %s23
        %p238 = scmp.lt.s32.totalorder %s237, 3
        %s239 = scalar_select %p238, %s237, 3
        %s240 = smul.addr %s239, 2
        %s241 = scalar_lea.vmem %s3, %s240
        %s242 = smul.u32 4, %s23
        %p243 = scmp.lt.s32.totalorder %s22, 3
        %s244 = scalar_select %p243, %s22, 3
        %p245 = scmp.lt.s32.totalorder %s242, 3
        %s246 = scalar_select %p245, %s242, 3
        %s247 = smul.addr %s246, 2
        %s248 = smul.addr %s244, 8
        %s249 = sadd.s32 %s247, %s248
        %s250 = smul.addr %s249, 4
        %s251 = scalar_lea.vmem %s0, %s250
        %s252 = smul.u32 4, %s23
        %s253 = smul.u32 4, %s23
        %p254 = scmp.lt.s32.totalorder %s22, 3
        %s255 = scalar_select %p254, %s22, 3
        %p256 = scmp.lt.s32.totalorder %s253, 3
        %s257 = scalar_select %p256, %s253, 3
        %s258 = smul.addr %s255, 4
        %s259 = sadd.s32 %s257, %s258
        %s260 = smul.addr %s259, 8
        %s261 = scalar_lea.vmem %s2, %s260
        %s262 = smul.u32 4, %s23
        %s263 = sadd.s32 %s22, %s23
        %p264 = scmp.lt.s32.totalorder %s263, 3
        %s265 = scalar_select %p264, %s263, 3
        %s266 = smul.addr %s265, 2
        %s267 = scalar_lea.vmem %s3, %s266
        %s268 = sadd.s32 %s22, %s23
        %v270 = vld [vmem:[%s251] sm:$0xff]
        %v271 = vld [vmem:[%s251 + $0x8] sm:$0xff]
        %v272 = vld [vmem:[%s251 + $0x10] sm:$0xff]
        %v273 = vld [vmem:[%s251 + $0x18] sm:$0xff]
        %v274 = vld [vmem:[%s200] sm:$0xf]
        %v275 = vld [vmem:[%s200 + $0x4] sm:$0xf]
        %v276 = vld [vmem:[%s200 + $0x8] sm:$0xf]
        %v277 = vld [vmem:[%s200 + $0xc] sm:$0xf]
        %v278 = vld [vmem:[%s200 + $0x10] sm:$0xf]
        %v279 = vld [vmem:[%s200 + $0x14] sm:$0xf]
        %v280 = vld [vmem:[%s200 + $0x18] sm:$0xf]
        %v281 = vld [vmem:[%s200 + $0x1c] sm:$0xf]
        %v282 = vld [vmem:[%s200 + $0x20] sm:$0xf]
        %v283 = vld [vmem:[%s200 + $0x24] sm:$0xf]
        %v284 = vld [vmem:[%s200 + $0x28] sm:$0xf]
        %v285 = vld [vmem:[%s200 + $0x2c] sm:$0xf]
        %v286 = vld [vmem:[%s200 + $0x30] sm:$0xf]
        %v287 = vld [vmem:[%s200 + $0x34] sm:$0xf]
        %v288 = vld [vmem:[%s200 + $0x38] sm:$0xf]
        %v289 = vld [vmem:[%s200 + $0x3c] sm:$0xf]
        %v290 = vld [vmem:[%s200 + $0x40] sm:$0xf]
        %v291 = vld [vmem:[%s200 + $0x44] sm:$0xf]
        %v292 = vld [vmem:[%s200 + $0x48] sm:$0xf]
        %v293 = vld [vmem:[%s200 + $0x4c] sm:$0xf]
        %v294 = vld [vmem:[%s200 + $0x50] sm:$0xf]
        %v295 = vld [vmem:[%s200 + $0x54] sm:$0xf]
        %v296 = vld [vmem:[%s200 + $0x58] sm:$0xf]
        %v297 = vld [vmem:[%s200 + $0x5c] sm:$0xf]
        %v298 = vld [vmem:[%s200 + $0x60] sm:$0xf]
        %v299 = vld [vmem:[%s200 + $0x64] sm:$0xf]
        %v300 = vld [vmem:[%s200 + $0x68] sm:$0xf]
        %v301 = vld [vmem:[%s200 + $0x6c] sm:$0xf]
        %v302 = vld [vmem:[%s200 + $0x70] sm:$0xf]
        %v303 = vld [vmem:[%s200 + $0x74] sm:$0xf]
        %v304 = vld [vmem:[%s200 + $0x78] sm:$0xf]
        %v305 = vld [vmem:[%s200 + $0x7c] sm:$0xf]
        %v310 = vunpack.c.l.b16 %v270
        %v311 = vunpack.c.h.b16 %v270
        %v312 = vunpack.c.l.b16 %v271
        %v313 = vunpack.c.h.b16 %v271
        %v314 = vunpack.c.l.b16 %v272
        %v315 = vunpack.c.h.b16 %v272
        %v316 = vunpack.c.l.b16 %v273
        %v317 = vunpack.c.h.b16 %v273
        %v318 = vpack.c.b16 %v312, %v310
        %v319 = vpack.c.b16 %v313, %v311
        %v320 = vpack.c.b16 %v316, %v314
        %v321 = vpack.c.b16 %v317, %v315
        %v358 = vunpack.c.l.b16 %v274
        %v359 = vunpack.c.l.b16 %v275
        %v360 = vunpack.c.l.b16 %v276
        %v361 = vunpack.c.l.b16 %v277
        %v362 = vunpack.c.l.b16 %v278
        %v363 = vunpack.c.l.b16 %v279
        %v364 = vunpack.c.l.b16 %v280
        %v365 = vunpack.c.l.b16 %v281
        %v366 = vunpack.c.l.b16 %v282
        %v367 = vunpack.c.l.b16 %v283
        %v368 = vunpack.c.l.b16 %v284
        %v369 = vunpack.c.l.b16 %v285
        %v370 = vunpack.c.l.b16 %v286
        %v371 = vunpack.c.l.b16 %v287
        %v372 = vunpack.c.l.b16 %v288
        %v373 = vunpack.c.l.b16 %v289
        %v374 = vunpack.c.l.b16 %v290
        %v375 = vunpack.c.l.b16 %v291
        %v376 = vunpack.c.l.b16 %v292
        %v377 = vunpack.c.l.b16 %v293
        %v378 = vunpack.c.l.b16 %v294
        %v379 = vunpack.c.l.b16 %v295
        %v380 = vunpack.c.l.b16 %v296
        %v381 = vunpack.c.l.b16 %v297
        %v382 = vunpack.c.l.b16 %v298
        %v383 = vunpack.c.l.b16 %v299
        %v384 = vunpack.c.l.b16 %v300
        %v385 = vunpack.c.l.b16 %v301
        %v386 = vunpack.c.l.b16 %v302
        %v387 = vunpack.c.l.b16 %v303
        %v388 = vunpack.c.l.b16 %v304
        %v389 = vunpack.c.l.b16 %v305
        %v390 = vpack.c.b16 %v359, %v358
        %v391 = vpack.c.b16 %v361, %v360
        %v392 = vpack.c.b16 %v363, %v362
        %v393 = vpack.c.b16 %v365, %v364
        %v394 = vpack.c.b16 %v367, %v366
        %v395 = vpack.c.b16 %v369, %v368
        %v396 = vpack.c.b16 %v371, %v370
        %v397 = vpack.c.b16 %v373, %v372
        %v398 = vpack.c.b16 %v375, %v374
        %v399 = vpack.c.b16 %v377, %v376
        %v400 = vpack.c.b16 %v379, %v378
        %v401 = vpack.c.b16 %v381, %v380
        %v402 = vpack.c.b16 %v383, %v382
        %v403 = vpack.c.b16 %v385, %v384
        %v404 = vpack.c.b16 %v387, %v386
        %v405 = vpack.c.b16 %v389, %v388
        %422 = vmatprep.subr.bf16.mxu0 0
        %423 = vmatpush1.bf16.msra.mxu0 %v390
        %424 = vmatprep.subr.bf16.mxu0 0
        %425 = vmatpush1.bf16.msra.mxu0 %v391
        %426 = vmatprep.subr.bf16.mxu0 0
        %427 = vmatpush1.bf16.msra.mxu0 %v392
        %428 = vmatprep.subr.bf16.mxu0 0
        %429 = vmatpush1.bf16.msra.mxu0 %v393
        %430 = vmatprep.subr.bf16.mxu0 0
        %431 = vmatpush1.bf16.msra.mxu0 %v394
        %432 = vmatprep.subr.bf16.mxu0 0
        %433 = vmatpush1.bf16.msra.mxu0 %v395
        %434 = vmatprep.subr.bf16.mxu0 0
        %435 = vmatpush1.bf16.msra.mxu0 %v396
        %436 = vmatprep.subr.bf16.mxu0 0
        %437 = vmatpush1.bf16.msra.mxu0 %v397
        %438 = vmatprep.subr.bf16.mxu0 0
        %439 = vmatpush1.bf16.msra.mxu0 %v398
        %440 = vmatprep.subr.bf16.mxu0 0
        %441 = vmatpush1.bf16.msra.mxu0 %v399
        %442 = vmatprep.subr.bf16.mxu0 0
        %443 = vmatpush1.bf16.msra.mxu0 %v400
        %444 = vmatprep.subr.bf16.mxu0 0
        %445 = vmatpush1.bf16.msra.mxu0 %v401
        %446 = vmatprep.subr.bf16.mxu0 0
        %447 = vmatpush1.bf16.msra.mxu0 %v402
        %448 = vmatprep.subr.bf16.mxu0 0
        %449 = vmatpush1.bf16.msra.mxu0 %v403
        %450 = vmatprep.subr.bf16.mxu0 0
        %451 = vmatpush1.bf16.msra.mxu0 %v404
        %452 = vmatprep.subr.bf16.mxu0 0
        %453 = vmatpush1.bf16.msra.mxu0 %v405
        %454 = vmatprep.mubr.bf16.mxu0 %v319
        %455 = vmatmul.mubr.bf16.gmra.mrb[0].mxu0 %v318
        %v456 = vpop.f32.mrb[0].mxu0
        %v457 = vadd.f32 0.0, %v456
        %v458 = vpop.f32.mrb[0].mxu0
        %v459 = vpop.f32.mrb[0].mxu0
        %v460 = vadd.f32 0.0, %v459
        %v461 = vpop.f32.mrb[0].mxu0
        %462 = vmatprep.mubr.bf16.mxu0 %v321
        %463 = vmatmul.mubr.bf16.gmra.mrb[0].mxu0 %v320
        %v464 = vpop.f32.mrb[0].mxu0
        %v465 = vadd.f32 0.0, %v464
        %v466 = vpop.f32.mrb[0].mxu0
        %v467 = vpop.f32.mrb[0].mxu0
        %v468 = vadd.f32 0.0, %v467
        %v469 = vpop.f32.mrb[0].mxu0
        %470 = vdwg.mxu0
        %471 = vst [vmem:[%s261] sm:$0xff] %v457
        %472 = vst [vmem:[%s261 + $0x8] sm:$0xff] %v460
        %473 = vst [vmem:[%s261 + $0x10] sm:$0xff] %v465
        %474 = vst [vmem:[%s261 + $0x18] sm:$0xff] %v468
        %v475 = vadd.f32 %v457, %v460
        %v476 = vadd.f32 %v475, %v465
        %v477 = vadd.f32 %v476, %v468
        %v478 = vrot.slane %v477, 4
        %v479 = vadd.f32 %v477, %v478
        %v480 = vrot.slane %v479, 2
        %v481 = vadd.f32 %v479, %v480
        %v482 = vrot.slane %v481, 1
        %v483 = vadd.f32 %v481, %v482
        %v484 = vmul.f32 %v457, %v457
        %v485 = vmul.f32 %v460, %v460
        %v486 = vmul.f32 %v465, %v465
        %v487 = vmul.f32 %v468, %v468
        %v488 = vadd.f32 %v484, %v485
        %v489 = vadd.f32 %v488, %v486
        %v490 = vadd.f32 %v489, %v487
        %v491 = vrot.slane %v490, 4
        %v492 = vadd.f32 %v490, %v491
        %v493 = vrot.slane %v492, 2
        %v494 = vadd.f32 %v492, %v493
        %v495 = vrot.slane %v494, 1
        %v496 = vadd.f32 %v494, %v495
        %vm497 = vcmask 1040384
        %v498 = vsel %vm497, %v483, %v496
        %499 = vst [vmem:[%s267] sm:$0x3] %v498
        %s500 = smul.u32 4, %s23
        %p501 = scmp.lt.s32.totalorder %s22, 3
        %s502 = scalar_select %p501, %s22, 3
        %p503 = scmp.lt.s32.totalorder %s500, 3
        %s504 = scalar_select %p503, %s500, 3
        %s505 = smul.addr %s502, 4
        %s506 = sadd.s32 %s504, %s505
        %s507 = smul.addr %s506, 8
        %s508 = scalar_lea.vmem %s2, %s507
        %s509 = sadd.s32 %s22, %s23
        %p510 = scmp.lt.s32.totalorder %s509, 3
        %s511 = scalar_select %p510, %s509, 3
        %s512 = smul.addr %s511, 2
        %s513 = scalar_lea.vmem %s3, %s512
        // Predicated region
        $region33: #{generator_forward.7} parent=27 // pred_check
          %p514 = pneg %p104
        $region34: #{generator_forward.7} parent=27 // pred_check_branch
          %516 = sbr.rel (%p514) target = $region36
        $region35: #{generator_forward.7} parent=27 // pred_region
          %s517 = smul.u32 4, %s23
        $region36: #{generator_forward.7} parent=27 // pred_fallthru
          _
        // Predicated region
        $region37: #{generator_forward.7} parent=27 // pred_check
          %p518 = pneg %p132
        $region38: #{generator_forward.7} parent=27 // pred_check_branch
          %520 = sbr.rel (%p518) target = $region40
        $region39: #{generator_forward.7} parent=27 // pred_region
          %s521 = sadd.s32 %s22, %s23
        $region40: #{generator_forward.7} parent=27 // pred_fallthru
          _
      $region28: #{generator_forward.7} parent=5 // pred_fallthru
        _
      %p522 = scmp.le.s32.totalorder 2, %s13
      // Predicated region
      $region41: #{generator_forward.7} parent=5 // pred_check
        %p523 = pneg %p522
      $region42: #{generator_forward.7} parent=5 // pred_check_branch
        %525 = sbr.rel (%p523) target = $region44
      $region43: #{generator_forward.7} parent=5 // pred_region
        %s526 = ssub.s32 %s13, 2
        // Predicated region
        $region45: #{generator_forward.7} parent=43 // pred_check
          %p527 = pneg %p110
        $region46: #{generator_forward.7} parent=43 // pred_check_branch
          %529 = sbr.rel (%p527) target = $region48
        $region47: #{generator_forward.7} parent=43 // pred_region
          %s530 = smul.u32 4, %s25
          %p531 = scmp.lt.s32.totalorder %s24, 3
          %s532 = scalar_select %p531, %s24, 3
          %p533 = scmp.lt.s32.totalorder %s530, 3
          %s534 = scalar_select %p533, %s530, 3
          %s535 = smul.addr %s532, 4
          %s536 = sadd.s32 %s534, %s535
          %s537 = smul.addr %s536, 8
          %s538 = scalar_lea.vmem %s2, %s537
        $region48: #{generator_forward.7} parent=43 // pred_fallthru
          _
        // Predicated region
        $region49: #{generator_forward.7} parent=43 // pred_check
          %p539 = pneg %p138
        $region50: #{generator_forward.7} parent=43 // pred_check_branch
          %541 = sbr.rel (%p539) target = $region52
        $region51: #{generator_forward.7} parent=43 // pred_region
          %s542 = sadd.s32 %s24, %s25
          %p543 = scmp.lt.s32.totalorder %s542, 3
          %s544 = scalar_select %p543, %s542, 3
          %s545 = smul.addr %s544, 2
          %s546 = scalar_lea.vmem %s3, %s545
        $region52: #{generator_forward.7} parent=43 // pred_fallthru
          _
      $region44: #{generator_forward.7} parent=5 // pred_fallthru
        _
    $region6: #{generator_forward.7} parent=1 // loop_footer
      %s17 = sadd.s32 1, %s13
    $region7: #{generator_forward.7} parent=1 // loop_footer_branch
      %12 = sbr.rel target = $region3
    $region8: #{generator_forward.7} parent=1 // loop_exit
      _
    %547 = vsyncpa [#allocation3], 1
    %s548 = scalar_lea.sflag [#allocation3], 1
    %549 = vsyncpa %s548, 1

// kernel: generator_forward.8
$region0: #{generator_forward.8}
  #allocation0 [shape = 'u32[]', space=smem, size = 0x4, offset = 0x4, fixed_abs, tag = 'smem constant byte address 0x4 - core index']
  #allocation1 [shape = 'u32[144,128]{1,0:T(1,128)}', space=vmem, size = 0x12000, scoped, tag = 'internal scratch']
  %s0 = inlined_call_operand.vmem [shape: f32[4,32,128], index: 0, kind: input, shape index: {}]
  %s1 = inlined_call_operand.vmem [shape: f32[1,128], index: 1, kind: input, shape index: {}]
  %s2 = inlined_call_operand.vmem [shape: f32[1,128], index: 2, kind: input, shape index: {}]
  %s3 = inlined_call_operand.vmem [shape: f32[4,32,128], index: 3, kind: output, shape index: {}]
  %s4 = sld [smem:[#allocation0]]
  $region45: #{generator_forward.8} parent=0
    _
  %s6 = ssub.s32 1, %s4
  %s7 = scalar_select 0, %s6, %s4
  loop: start=0, step=1, limit=6
  $region2: #{generator_forward.8} parent=0 // loop_pre_header
    _
  $region3: #{generator_forward.8} parent=0 // loop_header
    %s9 = sphi 0, %s13
    %p10 = scmp.ge.s32.totalorder %s9, 6
    %s16 = sphi 0, %s28
    %s17 = sphi 0, %s24
    %s18 = sphi 0, %s16
    %s19 = sphi 0, %s17
    %s20 = sphi 0, %s18
    %s21 = sphi 0, %s19
    %s33 = sphi 0, %s35
    %s36 = sphi 0, %s33
    %s37 = sphi 0, %s36
    %s53 = sphi 0, %s37
    %s57 = sphi 0, %s57
    %s59 = sphi 0, %s57
    %s60 = sphi 0, %s59
    %s74 = sphi 0, %s60
    %s78 = sphi 0, %s78
    %s80 = sphi 0, %s78
    %s81 = sphi 0, %s80
    %s95 = sphi 0, %s81
    %s103 = sphi 0, %s105
    %s106 = sphi 0, %s103
    %s107 = sphi 0, %s106
    %s123 = sphi 0, %s107
  $region4: #{generator_forward.8} parent=0 // loop_header_branch
    %12 = sbr.rel (%p10) target = $region8
  $region5: #{generator_forward.8} parent=0 // loop_body
    %s14 = ssub.s32 %s9, 1
    %s15 = ssub.s32 %s9, 2
    %s22 = sadd.s32 1, %s17
    %p23 = scmp.ge.s32.totalorder %s22, 1
    %s24 = scalar_select %p23, 0, %s22
    %s25 = sadd.s32 1, %s16
    %s26 = scalar_select %p23, %s25, %s16
    %p27 = scmp.ge.s32.totalorder %s26, 4
    %s28 = scalar_select %p27, 0, %s26
    %s29 = ssub.s32 %s16, %s28
    %s30 = ssub.s32 %s17, %s24
    %s31 = sor.u32 %s29, %s30
    %p32 = scmp.eq.s32.totalorder %s31, 0
    %s34 = sadd.s32 %s33, 1
    %s35 = scalar_select %p32, %s33, %s34
    %p38 = pneg %p32
    %p39 = scmp.eq.s32.totalorder %s9, 3
    %p40 = por %p38, %p39
    %p41 = scmp.ne.s32.totalorder %s33, %s36
    %p42 = scmp.eq.s32.totalorder %s9, 0
    %p43 = por %p41, %p42
    %p44 = scmp.ne.s32.totalorder %s33, %s36
    %p45 = scmp.eq.s32.totalorder %s14, 3
    %p46 = por %p44, %p45
    %p47 = scmp.ne.s32.totalorder %s36, %s37
    %p48 = scmp.eq.s32.totalorder %s14, 0
    %p49 = por %p47, %p48
    %p50 = scmp.ne.s32.totalorder %s36, %s37
    %p51 = scmp.eq.s32.totalorder %s15, 3
    %p52 = por %p50, %p51
    %p54 = scmp.ne.s32.totalorder %s37, %s53
    %p55 = scmp.eq.s32.totalorder %s15, 0
    %p56 = por %p54, %p55
    %s58 = sadd.s32 %s57, 1
    %p61 = scmp.eq.s32.totalorder %s9, 3
    %p62 = scmp.ne.s32.totalorder %s57, %s59
    %p63 = scmp.eq.s32.totalorder %s9, 0
    %p64 = por %p62, %p63
    %p65 = scmp.ne.s32.totalorder %s57, %s59
    %p66 = scmp.eq.s32.totalorder %s14, 3
    %p67 = por %p65, %p66
    %p68 = scmp.ne.s32.totalorder %s59, %s60
    %p69 = scmp.eq.s32.totalorder %s14, 0
    %p70 = por %p68, %p69
    %p71 = scmp.ne.s32.totalorder %s59, %s60
    %p72 = scmp.eq.s32.totalorder %s15, 3
    %p73 = por %p71, %p72
    %p75 = scmp.ne.s32.totalorder %s60, %s74
    %p76 = scmp.eq.s32.totalorder %s15, 0
    %p77 = por %p75, %p76
    %s79 = sadd.s32 %s78, 1
    %p82 = scmp.eq.s32.totalorder %s9, 3
    %p83 = scmp.ne.s32.totalorder %s78, %s80
    %p84 = scmp.eq.s32.totalorder %s9, 0
    %p85 = por %p83, %p84
    %p86 = scmp.ne.s32.totalorder %s78, %s80
    %p87 = scmp.eq.s32.totalorder %s14, 3
    %p88 = por %p86, %p87
    %p89 = scmp.ne.s32.totalorder %s80, %s81
    %p90 = scmp.eq.s32.totalorder %s14, 0
    %p91 = por %p89, %p90
    %p92 = scmp.ne.s32.totalorder %s80, %s81
    %p93 = scmp.eq.s32.totalorder %s15, 3
    %p94 = por %p92, %p93
    %p96 = scmp.ne.s32.totalorder %s81, %s95
    %p97 = scmp.eq.s32.totalorder %s15, 0
    %p98 = por %p96, %p97
    %s99 = ssub.s32 %s16, %s28
    %s100 = ssub.s32 %s17, %s24
    %s101 = sor.u32 %s99, %s100
    %p102 = scmp.eq.s32.totalorder %s101, 0
    %s104 = sadd.s32 %s103, 1
    %s105 = scalar_select %p102, %s103, %s104
    %p108 = pneg %p102
    %p109 = scmp.eq.s32.totalorder %s9, 3
    %p110 = por %p108, %p109
    %p111 = scmp.ne.s32.totalorder %s103, %s106
    %p112 = scmp.eq.s32.totalorder %s9, 0
    %p113 = por %p111, %p112
    %p114 = scmp.ne.s32.totalorder %s103, %s106
    %p115 = scmp.eq.s32.totalorder %s14, 3
    %p116 = por %p114, %p115
    %p117 = scmp.ne.s32.totalorder %s106, %s107
    %p118 = scmp.eq.s32.totalorder %s14, 0
    %p119 = por %p117, %p118
    %p120 = scmp.ne.s32.totalorder %s106, %s107
    %p121 = scmp.eq.s32.totalorder %s15, 3
    %p122 = por %p120, %p121
    %p124 = scmp.ne.s32.totalorder %s107, %s123
    %p125 = scmp.eq.s32.totalorder %s15, 0
    %p126 = por %p124, %p125
    %p127 = scmp.le.s32.totalorder 1, %s9
    %p128 = scmp.lt.s32.totalorder %s9, 5
    %p129 = pnand %p127, %p128
    %p130 = pneg %p129
    // Predicated region
    $region9: #{generator_forward.8} parent=5 // pred_check
      _
    $region10: #{generator_forward.8} parent=5 // pred_check_branch
      %132 = sbr.rel (%p129) target = $region12
    $region11: #{generator_forward.8} parent=5 // pred_region
      %s133 = ssub.s32 %s9, 1
      // Predicated region
      $region13: #{generator_forward.8} parent=11 // pred_check
        %p134 = pneg %p70
      $region14: #{generator_forward.8} parent=11 // pred_check_branch
        %136 = sbr.rel (%p134) target = $region16
      $region15: #{generator_forward.8} parent=11 // pred_region
        _
      $region16: #{generator_forward.8} parent=11 // pred_fallthru
        _
      // Predicated region
      $region17: #{generator_forward.8} parent=11 // pred_check
        %p137 = pneg %p91
      $region18: #{generator_forward.8} parent=11 // pred_check_branch
        %139 = sbr.rel (%p137) target = $region20
      $region19: #{generator_forward.8} parent=11 // pred_region
        _
      $region20: #{generator_forward.8} parent=11 // pred_fallthru
        _
    $region12: #{generator_forward.8} parent=5 // pred_fallthru
      _
    %p140 = scmp.lt.s32.totalorder %s9, 4
    // Predicated region
    $region21: #{generator_forward.8} parent=5 // pred_check
      %p141 = pneg %p140
    $region22: #{generator_forward.8} parent=5 // pred_check_branch
      %143 = sbr.rel (%p141) target = $region24
    $region23: #{generator_forward.8} parent=5 // pred_region
      // Predicated region
      $region25: #{generator_forward.8} parent=23 // pred_check
        %p144 = pneg %p43
      $region26: #{generator_forward.8} parent=23 // pred_check_branch
        %146 = sbr.rel (%p144) target = $region28
      $region27: #{generator_forward.8} parent=23 // pred_region
        %s147 = smul.u32 4, %s17
        %p148 = scmp.lt.s32.totalorder %s16, 3
        %s149 = scalar_select %p148, %s16, 3
        %p150 = scmp.lt.s32.totalorder %s147, 3
        %s151 = scalar_select %p150, %s147, 3
        %s152 = smul.addr %s149, 4
        %s153 = sadd.s32 %s151, %s152
        %s154 = smul.addr %s153, 8
        %s155 = scalar_lea.vmem %s0, %s154
        %s156 = smul.u32 4, %s17
      $region28: #{generator_forward.8} parent=23 // pred_fallthru
        _
    $region24: #{generator_forward.8} parent=5 // pred_fallthru
      _
    %p157 = scmp.le.s32.totalorder 1, %s9
    %p158 = scmp.lt.s32.totalorder %s9, 5
    %p159 = pnand %p157, %p158
    %p160 = pneg %p159
    // Predicated region
    $region29: #{generator_forward.8} parent=5 // pred_check
      _
    $region30: #{generator_forward.8} parent=5 // pred_check_branch
      %162 = sbr.rel (%p159) target = $region32
    $region31: #{generator_forward.8} parent=5 // pred_region
      %s163 = ssub.s32 %s9, 1
      %s164 = smul.u32 4, %s19
      %p165 = scmp.lt.s32.totalorder %s18, 3
      %s166 = scalar_select %p165, %s18, 3
      %p167 = scmp.lt.s32.totalorder %s164, 3
      %s168 = scalar_select %p167, %s164, 3
      %s169 = smul.addr %s166, 4
      %s170 = sadd.s32 %s168, %s169
      %s171 = smul.addr %s170, 8
      %s172 = scalar_lea.vmem %s0, %s171
      %p173 = pneg %p49
      %p174 = pneg %p46
      %p175 = pneg %p70
      %p176 = pneg %p67
      %p177 = pneg %p91
      %p178 = pneg %p88
      %p179 = pneg %p119
      %p180 = pneg %p116
      %s181 = smul.u32 4, %s19
      %p182 = scmp.lt.s32.totalorder %s18, 3
      %s183 = scalar_select %p182, %s18, 3
      %p184 = scmp.lt.s32.totalorder %s181, 3
      %s185 = scalar_select %p184, %s181, 3
      %s186 = smul.addr %s183, 4
      %s187 = sadd.s32 %s185, %s186
      %s188 = smul.addr %s187, 8
      %s189 = scalar_lea.vmem %s3, %s188
      %s190 = smul.u32 4, %s19
      %p191 = scmp.lt.s32.totalorder %s18, 3
      %s192 = scalar_select %p191, %s18, 3
      %p193 = scmp.lt.s32.totalorder %s190, 3
      %s194 = scalar_select %p193, %s190, 3
      %s195 = smul.addr %s192, 4
      %s196 = sadd.s32 %s194, %s195
      %s197 = smul.addr %s196, 8
      %s198 = scalar_lea.vmem %s0, %s197
      %s199 = smul.u32 4, %s19
      %s200 = smul.u32 4, %s19
      %p201 = scmp.lt.s32.totalorder %s18, 3
      %s202 = scalar_select %p201, %s18, 3
      %p203 = scmp.lt.s32.totalorder %s200, 3
      %s204 = scalar_select %p203, %s200, 3
      %s205 = smul.addr %s202, 4
      %s206 = sadd.s32 %s204, %s205
      %s207 = smul.addr %s206, 8
      %s208 = scalar_lea.vmem %s3, %s207
      %s209 = smul.u32 4, %s19
      %v210 = vld [vmem:[%s198] sm:$0xff]
      %v211 = vld [vmem:[%s198 + $0x8] sm:$0xff]
      %v212 = vld [vmem:[%s198 + $0x10] sm:$0xff]
      %v213 = vld [vmem:[%s198 + $0x18] sm:$0xff]
      %v214 = vld [vmem:[%s1] sm:$0x1]
      %v216 = vlaneseq
      %v217 = vshrl.u32 %v216, 7
      %v218 = vsub.s32 0, %v217
      %v219 = vrot.slane %v214, %v218
      %v221 = vmul.f32 %v210, %v219
      %v222 = vmul.f32 %v211, %v219
      %v223 = vmul.f32 %v212, %v219
      %v224 = vmul.f32 %v213, %v219
      %v225 = vld [vmem:[%s2] sm:$0x1]
      %v227 = vlaneseq
      %v228 = vshrl.u32 %v227, 7
      %v229 = vsub.s32 0, %v228
      %v230 = vrot.slane %v225, %v229
      %v232 = vadd.f32 %v221, %v230
      %v233 = vadd.f32 %v222, %v230
      %v234 = vadd.f32 %v223, %v230
      %v235 = vadd.f32 %v224, %v230
      %v236 = vmax.f32 %v232, 0.0
      %v237 = vmax.f32 %v233, 0.0
      %v238 = vmax.f32 %v234, 0.0
      %v239 = vmax.f32 %v235, 0.0
      %240 = vst [vmem:[%s208] sm:$0xff] %v236
      %241 = vst [vmem:[%s208 + $0x8] sm:$0xff] %v237
      %242 = vst [vmem:[%s208 + $0x10] sm:$0xff] %v238
      %243 = vst [vmem:[%s208 + $0x18] sm:$0xff] %v239
      %s244 = smul.u32 4, %s19
      %p245 = scmp.lt.s32.totalorder %s18, 3
      %s246 = scalar_select %p245, %s18, 3
      %p247 = scmp.lt.s32.totalorder %s244, 3
      %s248 = scalar_select %p247, %s244, 3
      %s249 = smul.addr %s246, 4
      %s250 = sadd.s32 %s248, %s249
      %s251 = smul.addr %s250, 8
      %s252 = scalar_lea.vmem %s3, %s251
      // Predicated region
      $region33: #{generator_forward.8} parent=31 // pred_check
        %p253 = pneg %p116
      $region34: #{generator_forward.8} parent=31 // pred_check_branch
        %255 = sbr.rel (%p253) target = $region36
      $region35: #{generator_forward.8} parent=31 // pred_region
        %s256 = smul.u32 4, %s19
      $region36: #{generator_forward.8} parent=31 // pred_fallthru
        _
    $region32: #{generator_forward.8} parent=5 // pred_fallthru
      _
    %p257 = scmp.le.s32.totalorder 2, %s9
    // Predicated region
    $region37: #{generator_forward.8} parent=5 // pred_check
      %p258 = pneg %p257
    $region38: #{generator_forward.8} parent=5 // pred_check_branch
      %260 = sbr.rel (%p258) target = $region40
    $region39: #{generator_forward.8} parent=5 // pred_region
      %s261 = ssub.s32 %s9, 2
      // Predicated region
      $region41: #{generator_forward.8} parent=39 // pred_check
        %p262 = pneg %p122
      $region42: #{generator_forward.8} parent=39 // pred_check_branch
        %264 = sbr.rel (%p262) target = $region44
      $region43: #{generator_forward.8} parent=39 // pred_region
        %s265 = smul.u32 4, %s21
        %p266 = scmp.lt.s32.totalorder %s20, 3
        %s267 = scalar_select %p266, %s20, 3
        %p268 = scmp.lt.s32.totalorder %s265, 3
        %s269 = scalar_select %p268, %s265, 3
        %s270 = smul.addr %s267, 4
        %s271 = sadd.s32 %s269, %s270
        %s272 = smul.addr %s271, 8
        %s273 = scalar_lea.vmem %s3, %s272
      $region44: #{generator_forward.8} parent=39 // pred_fallthru
        _
    $region40: #{generator_forward.8} parent=5 // pred_fallthru
      _
  $region6: #{generator_forward.8} parent=0 // loop_footer
    %s13 = sadd.s32 1, %s9
  $region7: #{generator_forward.8} parent=0 // loop_footer_branch
    %8 = sbr.rel target = $region3
  $region8: #{generator_forward.8} parent=0 // loop_exit
    _

// kernel: generator_forward.9
$region0: #{generator_forward.9}
  #allocation0 [shape = 'u32[]', space=smem, size = 0x4, offset = 0x4, fixed_abs, tag = 'smem constant byte address 0x4 - core index']
  #allocation1 [shape = 'u32[144,128]{1,0:T(1,128)}', space=vmem, size = 0x12000, scoped, tag = 'internal scratch']
  %s0 = inlined_call_operand.vmem [shape: bf16[4,128,128], index: 0, kind: input, shape index: {}]
  %s1 = inlined_call_operand.vmem [shape: bf16[4,128,128], index: 1, kind: input, shape index: {}]
  %s2 = inlined_call_operand.vmem [shape: f32[4,128,128], index: 2, kind: output, shape index: {0}]
  %s3 = inlined_call_operand.vmem [shape: f32[4,2,128], index: 3, kind: output, shape index: {1}]
  %4 = xla_tuple %s2, %s3
  %s5 = sld [smem:[#allocation0]]
  $region49: #{generator_forward.9} parent=0
    _
  %s7 = ssub.s32 1, %s5
  %s8 = scalar_select 0, %s7, %s5
  loop: start=0, step=1, limit=6
  $region2: #{generator_forward.9} parent=0 // loop_pre_header
    _
  $region3: #{generator_forward.9} parent=0 // loop_header
    %s10 = sphi 0, %s14
    %p11 = scmp.ge.s32.totalorder %s10, 6
    %s17 = sphi 0, %s29
    %s18 = sphi 0, %s25
    %s19 = sphi 0, %s17
    %s20 = sphi 0, %s18
    %s21 = sphi 0, %s19
    %s22 = sphi 0, %s20
    %s34 = sphi 0, %s36
    %s37 = sphi 0, %s34
    %s38 = sphi 0, %s37
    %s54 = sphi 0, %s38
    %s60 = sphi 0, %s62
    %s63 = sphi 0, %s60
    %s64 = sphi 0, %s63
    %s80 = sphi 0, %s64
    %s88 = sphi 0, %s90
    %s91 = sphi 0, %s88
    %s92 = sphi 0, %s91
    %s108 = sphi 0, %s92
    %s116 = sphi 0, %s118
    %s119 = sphi 0, %s116
    %s120 = sphi 0, %s119
    %s136 = sphi 0, %s120
  $region4: #{generator_forward.9} parent=0 // loop_header_branch
    %13 = sbr.rel (%p11) target = $region8
  $region5: #{generator_forward.9} parent=0 // loop_body
    %s15 = ssub.s32 %s10, 1
    %s16 = ssub.s32 %s10, 2
    %s23 = sadd.s32 1, %s18
    %p24 = scmp.ge.s32.totalorder %s23, 1
    %s25 = scalar_select %p24, 0, %s23
    %s26 = sadd.s32 1, %s17
    %s27 = scalar_select %p24, %s26, %s17
    %p28 = scmp.ge.s32.totalorder %s27, 4
    %s29 = scalar_select %p28, 0, %s27
    %s30 = ssub.s32 %s17, %s29
    %s31 = ssub.s32 %s18, %s25
    %s32 = sor.u32 %s30, %s31
    %p33 = scmp.eq.s32.totalorder %s32, 0
    %s35 = sadd.s32 %s34, 1
    %s36 = scalar_select %p33, %s34, %s35
    %p39 = pneg %p33
    %p40 = scmp.eq.s32.totalorder %s10, 3
    %p41 = por %p39, %p40
    %p42 = scmp.ne.s32.totalorder %s34, %s37
    %p43 = scmp.eq.s32.totalorder %s10, 0
    %p44 = por %p42, %p43
    %p45 = scmp.ne.s32.totalorder %s34, %s37
    %p46 = scmp.eq.s32.totalorder %s15, 3
    %p47 = por %p45, %p46
    %p48 = scmp.ne.s32.totalorder %s37, %s38
    %p49 = scmp.eq.s32.totalorder %s15, 0
    %p50 = por %p48, %p49
    %p51 = scmp.ne.s32.totalorder %s37, %s38
    %p52 = scmp.eq.s32.totalorder %s16, 3
    %p53 = por %p51, %p52
    %p55 = scmp.ne.s32.totalorder %s38, %s54
    %p56 = scmp.eq.s32.totalorder %s16, 0
    %p57 = por %p55, %p56
    %s58 = ssub.s32 %s17, %s29
    %p59 = scmp.eq.s32.totalorder %s58, 0
    %s61 = sadd.s32 %s60, 1
    %s62 = scalar_select %p59, %s60, %s61
    %p65 = pneg %p59
    %p66 = scmp.eq.s32.totalorder %s10, 3
    %p67 = por %p65, %p66
    %p68 = scmp.ne.s32.totalorder %s60, %s63
    %p69 = scmp.eq.s32.totalorder %s10, 0
    %p70 = por %p68, %p69
    %p71 = scmp.ne.s32.totalorder %s60, %s63
    %p72 = scmp.eq.s32.totalorder %s15, 3
    %p73 = por %p71, %p72
    %p74 = scmp.ne.s32.totalorder %s63, %s64
    %p75 = scmp.eq.s32.totalorder %s15, 0
    %p76 = por %p74, %p75
    %p77 = scmp.ne.s32.totalorder %s63, %s64
    %p78 = scmp.eq.s32.totalorder %s16, 3
    %p79 = por %p77, %p78
    %p81 = scmp.ne.s32.totalorder %s64, %s80
    %p82 = scmp.eq.s32.totalorder %s16, 0
    %p83 = por %p81, %p82
    %s84 = ssub.s32 %s17, %s29
    %s85 = ssub.s32 %s18, %s25
    %s86 = sor.u32 %s84, %s85
    %p87 = scmp.eq.s32.totalorder %s86, 0
    %s89 = sadd.s32 %s88, 1
    %s90 = scalar_select %p87, %s88, %s89
    %p93 = pneg %p87
    %p94 = scmp.eq.s32.totalorder %s10, 3
    %p95 = por %p93, %p94
    %p96 = scmp.ne.s32.totalorder %s88, %s91
    %p97 = scmp.eq.s32.totalorder %s10, 0
    %p98 = por %p96, %p97
    %p99 = scmp.ne.s32.totalorder %s88, %s91
    %p100 = scmp.eq.s32.totalorder %s15, 3
    %p101 = por %p99, %p100
    %p102 = scmp.ne.s32.totalorder %s91, %s92
    %p103 = scmp.eq.s32.totalorder %s15, 0
    %p104 = por %p102, %p103
    %p105 = scmp.ne.s32.totalorder %s91, %s92
    %p106 = scmp.eq.s32.totalorder %s16, 3
    %p107 = por %p105, %p106
    %p109 = scmp.ne.s32.totalorder %s92, %s108
    %p110 = scmp.eq.s32.totalorder %s16, 0
    %p111 = por %p109, %p110
    %s112 = sadd.s32 %s17, %s18
    %s113 = sadd.s32 %s29, %s25
    %s114 = ssub.s32 %s112, %s113
    %p115 = scmp.eq.s32.totalorder %s114, 0
    %s117 = sadd.s32 %s116, 1
    %s118 = scalar_select %p115, %s116, %s117
    %p121 = pneg %p115
    %p122 = scmp.eq.s32.totalorder %s10, 3
    %p123 = por %p121, %p122
    %p124 = scmp.ne.s32.totalorder %s116, %s119
    %p125 = scmp.eq.s32.totalorder %s10, 0
    %p126 = por %p124, %p125
    %p127 = scmp.ne.s32.totalorder %s116, %s119
    %p128 = scmp.eq.s32.totalorder %s15, 3
    %p129 = por %p127, %p128
    %p130 = scmp.ne.s32.totalorder %s119, %s120
    %p131 = scmp.eq.s32.totalorder %s15, 0
    %p132 = por %p130, %p131
    %p133 = scmp.ne.s32.totalorder %s119, %s120
    %p134 = scmp.eq.s32.totalorder %s16, 3
    %p135 = por %p133, %p134
    %p137 = scmp.ne.s32.totalorder %s120, %s136
    %p138 = scmp.eq.s32.totalorder %s16, 0
    %p139 = por %p137, %p138
    %p140 = scmp.le.s32.totalorder 1, %s10
    %p141 = scmp.lt.s32.totalorder %s10, 5
    %p142 = pnand %p140, %p141
    %p143 = pneg %p142
    // Predicated region
    $region9: #{generator_forward.9} parent=5 // pred_check
      _
    $region10: #{generator_forward.9} parent=5 // pred_check_branch
      %145 = sbr.rel (%p142) target = $region12
    $region11: #{generator_forward.9} parent=5 // pred_region
      %s146 = ssub.s32 %s10, 1
    $region12: #{generator_forward.9} parent=5 // pred_fallthru
      _
    %p147 = scmp.lt.s32.totalorder %s10, 4
    // Predicated region
    $region13: #{generator_forward.9} parent=5 // pred_check
      %p148 = pneg %p147
    $region14: #{generator_forward.9} parent=5 // pred_check_branch
      %150 = sbr.rel (%p148) target = $region16
    $region15: #{generator_forward.9} parent=5 // pred_region
      // Predicated region
      $region17: #{generator_forward.9} parent=15 // pred_check
        %p151 = pneg %p44
      $region18: #{generator_forward.9} parent=15 // pred_check_branch
        %153 = sbr.rel (%p151) target = $region20
      $region19: #{generator_forward.9} parent=15 // pred_region
        %s154 = smul.u32 16, %s18
        %p155 = scmp.lt.s32.totalorder %s17, 3
        %s156 = scalar_select %p155, %s17, 3
        %p157 = scmp.lt.s32.totalorder %s154, 15
        %s158 = scalar_select %p157, %s154, 15
        %s159 = smul.addr %s156, 16
        %s160 = sadd.s32 %s158, %s159
        %s161 = smul.addr %s160, 4
        %s162 = scalar_lea.vmem %s0, %s161
        %s163 = smul.u32 16, %s18
      $region20: #{generator_forward.9} parent=15 // pred_fallthru
        _
      // Predicated region
      $region21: #{generator_forward.9} parent=15 // pred_check
        %p164 = pneg %p70
      $region22: #{generator_forward.9} parent=15 // pred_check_branch
        %166 = sbr.rel (%p164) target = $region24
      $region23: #{generator_forward.9} parent=15 // pred_region
        %p167 = scmp.lt.s32.totalorder %s17, 3
        %s168 = scalar_select %p167, %s17, 3
        %s169 = smul.addr %s168, 16
        %s170 = smul.addr %s169, 4
        %s171 = scalar_lea.vmem %s1, %s170
      $region24: #{generator_forward.9} parent=15 // pred_fallthru
        _
    $region16: #{generator_forward.9} parent=5 // pred_fallthru
      _
    %p172 = scmp.le.s32.totalorder 1, %s10
    %p173 = scmp.lt.s32.totalorder %s10, 5
    %p174 = pnand %p172, %p173
    %p175 = pneg %p174
    // Predicated region
    $region25: #{generator_forward.9} parent=5 // pred_check
      _
    $region26: #{generator_forward.9} parent=5 // pred_check_branch
      %177 = sbr.rel (%p174) target = $region28
    $region27: #{generator_forward.9} parent=5 // pred_region
      %s178 = ssub.s32 %s10, 1
      %s179 = smul.u32 16, %s20
      %p180 = scmp.lt.s32.totalorder %s19, 3
      %s181 = scalar_select %p180, %s19, 3
      %p182 = scmp.lt.s32.totalorder %s179, 15
      %s183 = scalar_select %p182, %s179, 15
      %s184 = smul.addr %s181, 16
      %s185 = sadd.s32 %s183, %s184
      %s186 = smul.addr %s185, 4
      %s187 = scalar_lea.vmem %s0, %s186
      %p188 = pneg %p50
      %p189 = pneg %p47
      %p190 = scmp.lt.s32.totalorder %s19, 3
      %s191 = scalar_select %p190, %s19, 3
      %s192 = smul.addr %s191, 16
      %s193 = smul.addr %s192, 4
      %s194 = scalar_lea.vmem %s1, %s193
      %p195 = pneg %p76
      %p196 = pneg %p73
      %p197 = pneg %p104
      %p198 = pneg %p101
      %s199 = smul.u32 16, %s20
      %p200 = scmp.lt.s32.totalorder %s19, 3
      %s201 = scalar_select %p200, %s19, 3
      %p202 = scmp.lt.s32.totalorder %s199, 15
      %s203 = scalar_select %p202, %s199, 15
      %s204 = smul.addr %s201, 16
      %s205 = sadd.s32 %s203, %s204
      %s206 = smul.addr %s205, 8
      %s207 = scalar_lea.vmem %s2, %s206
      %p208 = pneg %p132
      %p209 = pneg %p129
      %s210 = sadd.s32 %s19, %s20
      %p211 = scmp.lt.s32.totalorder %s210, 3
      %s212 = scalar_select %p211, %s210, 3
      %s213 = smul.addr %s212, 2
      %s214 = scalar_lea.vmem %s3, %s213
      %s215 = smul.u32 16, %s20
      %p216 = scmp.lt.s32.totalorder %s19, 3
      %s217 = scalar_select %p216, %s19, 3
      %p218 = scmp.lt.s32.totalorder %s215, 15
      %s219 = scalar_select %p218, %s215, 15
      %s220 = smul.addr %s217, 16
      %s221 = sadd.s32 %s219, %s220
      %s222 = smul.addr %s221, 4
      %s223 = scalar_lea.vmem %s0, %s222
      %s224 = smul.u32 16, %s20
      %p225 = scmp.lt.s32.totalorder %s19, 3
      %s226 = scalar_select %p225, %s19, 3
      %s227 = smul.addr %s226, 16
      %s228 = smul.addr %s227, 4
      %s229 = scalar_lea.vmem %s1, %s228
      %s230 = smul.u32 16, %s20
      %p231 = scmp.lt.s32.totalorder %s19, 3
      %s232 = scalar_select %p231, %s19, 3
      %p233 = scmp.lt.s32.totalorder %s230, 15
      %s234 = scalar_select %p233, %s230, 15
      %s235 = smul.addr %s232, 16
      %s236 = sadd.s32 %s234, %s235
      %s237 = smul.addr %s236, 8
      %s238 = scalar_lea.vmem %s2, %s237
      %s239 = smul.u32 16, %s20
      %s240 = sadd.s32 %s19, %s20
      %p241 = scmp.lt.s32.totalorder %s240, 3
      %s242 = scalar_select %p241, %s240, 3
      %s243 = smul.addr %s242, 2
      %s244 = scalar_lea.vmem %s3, %s243
      %s245 = sadd.s32 %s19, %s20
      %v247 = vld [vmem:[%s223] sm:$0xf]
      %v248 = vld [vmem:[%s223 + $0x4] sm:$0xf]
      %v249 = vld [vmem:[%s223 + $0x8] sm:$0xf]
      %v250 = vld [vmem:[%s223 + $0xc] sm:$0xf]
      %v251 = vld [vmem:[%s223 + $0x10] sm:$0xf]
      %v252 = vld [vmem:[%s223 + $0x14] sm:$0xf]
      %v253 = vld [vmem:[%s223 + $0x18] sm:$0xf]
      %v254 = vld [vmem:[%s223 + $0x1c] sm:$0xf]
      %v255 = vld [vmem:[%s223 + $0x20] sm:$0xf]
      %v256 = vld [vmem:[%s223 + $0x24] sm:$0xf]
      %v257 = vld [vmem:[%s223 + $0x28] sm:$0xf]
      %v258 = vld [vmem:[%s223 + $0x2c] sm:$0xf]
      %v259 = vld [vmem:[%s223 + $0x30] sm:$0xf]
      %v260 = vld [vmem:[%s223 + $0x34] sm:$0xf]
      %v261 = vld [vmem:[%s223 + $0x38] sm:$0xf]
      %v262 = vld [vmem:[%s223 + $0x3c] sm:$0xf]
      %v263 = vld [vmem:[%s229] sm:$0xf]
      %v264 = vld [vmem:[%s229 + $0x4] sm:$0xf]
      %v265 = vld [vmem:[%s229 + $0x8] sm:$0xf]
      %v266 = vld [vmem:[%s229 + $0xc] sm:$0xf]
      %v267 = vld [vmem:[%s229 + $0x10] sm:$0xf]
      %v268 = vld [vmem:[%s229 + $0x14] sm:$0xf]
      %v269 = vld [vmem:[%s229 + $0x18] sm:$0xf]
      %v270 = vld [vmem:[%s229 + $0x1c] sm:$0xf]
      %v271 = vld [vmem:[%s229 + $0x20] sm:$0xf]
      %v272 = vld [vmem:[%s229 + $0x24] sm:$0xf]
      %v273 = vld [vmem:[%s229 + $0x28] sm:$0xf]
      %v274 = vld [vmem:[%s229 + $0x2c] sm:$0xf]
      %v275 = vld [vmem:[%s229 + $0x30] sm:$0xf]
      %v276 = vld [vmem:[%s229 + $0x34] sm:$0xf]
      %v277 = vld [vmem:[%s229 + $0x38] sm:$0xf]
      %v278 = vld [vmem:[%s229 + $0x3c] sm:$0xf]
      %v295 = vunpack.c.l.b16 %v247
      %v296 = vunpack.c.l.b16 %v248
      %v297 = vunpack.c.l.b16 %v249
      %v298 = vunpack.c.l.b16 %v250
      %v299 = vunpack.c.l.b16 %v251
      %v300 = vunpack.c.l.b16 %v252
      %v301 = vunpack.c.l.b16 %v253
      %v302 = vunpack.c.l.b16 %v254
      %v303 = vunpack.c.l.b16 %v255
      %v304 = vunpack.c.l.b16 %v256
      %v305 = vunpack.c.l.b16 %v257
      %v306 = vunpack.c.l.b16 %v258
      %v307 = vunpack.c.l.b16 %v259
      %v308 = vunpack.c.l.b16 %v260
      %v309 = vunpack.c.l.b16 %v261
      %v310 = vunpack.c.l.b16 %v262
      %v311 = vpack.c.b16 %v296, %v295
      %v312 = vpack.c.b16 %v298, %v297
      %v313 = vpack.c.b16 %v300, %v299
      %v314 = vpack.c.b16 %v302, %v301
      %v315 = vpack.c.b16 %v304, %v303
      %v316 = vpack.c.b16 %v306, %v305
      %v317 = vpack.c.b16 %v308, %v307
      %v318 = vpack.c.b16 %v310, %v309
      %v343 = vunpack.c.l.b16 %v263
      %v344 = vunpack.c.l.b16 %v264
      %v345 = vunpack.c.l.b16 %v265
      %v346 = vunpack.c.l.b16 %v266
      %v347 = vunpack.c.l.b16 %v267
      %v348 = vunpack.c.l.b16 %v268
      %v349 = vunpack.c.l.b16 %v269
      %v350 = vunpack.c.l.b16 %v270
      %v351 = vunpack.c.l.b16 %v271
      %v352 = vunpack.c.l.b16 %v272
      %v353 = vunpack.c.l.b16 %v273
      %v354 = vunpack.c.l.b16 %v274
      %v355 = vunpack.c.l.b16 %v275
      %v356 = vunpack.c.l.b16 %v276
      %v357 = vunpack.c.l.b16 %v277
      %v358 = vunpack.c.l.b16 %v278
      %v359 = vpack.c.b16 %v344, %v343
      %v360 = vpack.c.b16 %v346, %v345
      %v361 = vpack.c.b16 %v348, %v347
      %v362 = vpack.c.b16 %v350, %v349
      %v363 = vpack.c.b16 %v352, %v351
      %v364 = vpack.c.b16 %v354, %v353
      %v365 = vpack.c.b16 %v356, %v355
      %v366 = vpack.c.b16 %v358, %v357
      %375 = vmatprep.subr.bf16.mxu0 0
      %376 = vmatpush1.bf16.msra.mxu0 %v359
      %377 = vmatprep.subr.bf16.mxu0 0
      %378 = vmatpush1.bf16.msra.mxu0 %v360
      %379 = vmatprep.subr.bf16.mxu0 0
      %380 = vmatpush1.bf16.msra.mxu0 %v361
      %381 = vmatprep.subr.bf16.mxu0 0
      %382 = vmatpush1.bf16.msra.mxu0 %v362
      %383 = vmatprep.subr.bf16.mxu0 0
      %384 = vmatpush1.bf16.msra.mxu0 %v363
      %385 = vmatprep.subr.bf16.mxu0 0
      %386 = vmatpush1.bf16.msra.mxu0 %v364
      %387 = vmatprep.subr.bf16.mxu0 0
      %388 = vmatpush1.bf16.msra.mxu0 %v365
      %389 = vmatprep.subr.bf16.mxu0 0
      %390 = vmatpush1.bf16.msra.mxu0 %v366
      %391 = vmatprep.subr.bf16.mxu0 0
      %392 = vmatpush1.bf16.msra.mxu0 0
      %393 = vmatprep.subr.bf16.mxu0 0
      %394 = vmatpush1.bf16.msra.mxu0 0
      %395 = vmatprep.subr.bf16.mxu0 0
      %396 = vmatpush1.bf16.msra.mxu0 0
      %397 = vmatprep.subr.bf16.mxu0 0
      %398 = vmatpush1.bf16.msra.mxu0 0
      %399 = vmatprep.subr.bf16.mxu0 0
      %400 = vmatpush1.bf16.msra.mxu0 0
      %401 = vmatprep.subr.bf16.mxu0 0
      %402 = vmatpush1.bf16.msra.mxu0 0
      %403 = vmatprep.subr.bf16.mxu0 0
      %404 = vmatpush1.bf16.msra.mxu0 0
      %405 = vmatprep.subr.bf16.mxu0 0
      %406 = vmatpush1.bf16.msra.mxu0 0
      %407 = vmatprep.mubr.bf16.mxu0 0
      %408 = vmatmul.mubr.bf16.gmra.mrb[0].mxu0 %v311
      %v409 = vpop.f32.mrb[0].mxu0
      %v410 = vadd.f32 0.0, %v409
      %v411 = vpop.f32.mrb[0].mxu0
      %v412 = vpop.f32.mrb[0].mxu0
      %v413 = vadd.f32 0.0, %v412
      %v414 = vpop.f32.mrb[0].mxu0
      %415 = vmatprep.mubr.bf16.mxu0 0
      %416 = vmatmul.mubr.bf16.gmra.mrb[0].mxu0 %v312
      %v417 = vpop.f32.mrb[0].mxu0
      %v418 = vadd.f32 0.0, %v417
      %v419 = vpop.f32.mrb[0].mxu0
      %v420 = vpop.f32.mrb[0].mxu0
      %v421 = vadd.f32 0.0, %v420
      %v422 = vpop.f32.mrb[0].mxu0
      %423 = vmatprep.mubr.bf16.mxu0 0
      %424 = vmatmul.mubr.bf16.gmra.mrb[0].mxu0 %v313
      %v425 = vpop.f32.mrb[0].mxu0
      %v426 = vadd.f32 0.0, %v425
      %v427 = vpop.f32.mrb[0].mxu0
      %v428 = vpop.f32.mrb[0].mxu0
      %v429 = vadd.f32 0.0, %v428
      %v430 = vpop.f32.mrb[0].mxu0
      %431 = vmatprep.mubr.bf16.mxu0 0
      %432 = vmatmul.mubr.bf16.gmra.mrb[0].mxu0 %v314
      %v433 = vpop.f32.mrb[0].mxu0
      %v434 = vadd.f32 0.0, %v433
      %v435 = vpop.f32.mrb[0].mxu0
      %v436 = vpop.f32.mrb[0].mxu0
      %v437 = vadd.f32 0.0, %v436
      %v438 = vpop.f32.mrb[0].mxu0
      %439 = vmatprep.mubr.bf16.mxu0 0
      %440 = vmatmul.mubr.bf16.gmra.mrb[0].mxu0 %v315
      %v441 = vpop.f32.mrb[0].mxu0
      %v442 = vadd.f32 0.0, %v441
      %v443 = vpop.f32.mrb[0].mxu0
      %v444 = vpop.f32.mrb[0].mxu0
      %v445 = vadd.f32 0.0, %v444
      %v446 = vpop.f32.mrb[0].mxu0
      %447 = vmatprep.mubr.bf16.mxu0 0
      %448 = vmatmul.mubr.bf16.gmra.mrb[0].mxu0 %v316
      %v449 = vpop.f32.mrb[0].mxu0
      %v450 = vadd.f32 0.0, %v449
      %v451 = vpop.f32.mrb[0].mxu0
      %v452 = vpop.f32.mrb[0].mxu0
      %v453 = vadd.f32 0.0, %v452
      %v454 = vpop.f32.mrb[0].mxu0
      %455 = vmatprep.mubr.bf16.mxu0 0
      %456 = vmatmul.mubr.bf16.gmra.mrb[0].mxu0 %v317
      %v457 = vpop.f32.mrb[0].mxu0
      %v458 = vadd.f32 0.0, %v457
      %v459 = vpop.f32.mrb[0].mxu0
      %v460 = vpop.f32.mrb[0].mxu0
      %v461 = vadd.f32 0.0, %v460
      %v462 = vpop.f32.mrb[0].mxu0
      %463 = vmatprep.mubr.bf16.mxu0 0
      %464 = vmatmul.mubr.bf16.gmra.mrb[0].mxu0 %v318
      %v465 = vpop.f32.mrb[0].mxu0
      %v466 = vadd.f32 0.0, %v465
      %v467 = vpop.f32.mrb[0].mxu0
      %v468 = vpop.f32.mrb[0].mxu0
      %v469 = vadd.f32 0.0, %v468
      %v470 = vpop.f32.mrb[0].mxu0
      %471 = vdwg.mxu0
      %472 = vst [vmem:[%s238] sm:$0xff] %v410
      %473 = vst [vmem:[%s238 + $0x8] sm:$0xff] %v413
      %474 = vst [vmem:[%s238 + $0x10] sm:$0xff] %v418
      %475 = vst [vmem:[%s238 + $0x18] sm:$0xff] %v421
      %476 = vst [vmem:[%s238 + $0x20] sm:$0xff] %v426
      %477 = vst [vmem:[%s238 + $0x28] sm:$0xff] %v429
      %478 = vst [vmem:[%s238 + $0x30] sm:$0xff] %v434
      %479 = vst [vmem:[%s238 + $0x38] sm:$0xff] %v437
      %480 = vst [vmem:[%s238 + $0x40] sm:$0xff] %v442
      %481 = vst [vmem:[%s238 + $0x48] sm:$0xff] %v445
      %482 = vst [vmem:[%s238 + $0x50] sm:$0xff] %v450
      %483 = vst [vmem:[%s238 + $0x58] sm:$0xff] %v453
      %484 = vst [vmem:[%s238 + $0x60] sm:$0xff] %v458
      %485 = vst [vmem:[%s238 + $0x68] sm:$0xff] %v461
      %486 = vst [vmem:[%s238 + $0x70] sm:$0xff] %v466
      %487 = vst [vmem:[%s238 + $0x78] sm:$0xff] %v469
      %v488 = vadd.f32 %v410, %v413
      %v489 = vadd.f32 %v488, %v418
      %v490 = vadd.f32 %v489, %v421
      %v491 = vadd.f32 %v490, %v426
      %v492 = vadd.f32 %v491, %v429
      %v493 = vadd.f32 %v492, %v434
      %v494 = vadd.f32 %v493, %v437
      %v495 = vadd.f32 %v494, %v442
      %v496 = vadd.f32 %v495, %v445
      %v497 = vadd.f32 %v496, %v450
      %v498 = vadd.f32 %v497, %v453
      %v499 = vadd.f32 %v498, %v458
      %v500 = vadd.f32 %v499, %v461
      %v501 = vadd.f32 %v500, %v466
      %v502 = vadd.f32 %v501, %v469
      %v503 = vrot.slane %v502, 4
      %v504 = vadd.f32 %v502, %v503
      %v505 = vrot.slane %v504, 2
      %v506 = vadd.f32 %v504, %v505
      %v507 = vrot.slane %v506, 1
      %v508 = vadd.f32 %v506, %v507
      %v509 = vmul.f32 %v410, %v410
      %v510 = vmul.f32 %v413, %v413
      %v511 = vmul.f32 %v418, %v418
      %v512 = vmul.f32 %v421, %v421
      %v513 = vmul.f32 %v426, %v426
      %v514 = vmul.f32 %v429, %v429
      %v515 = vmul.f32 %v434, %v434
      %v516 = vmul.f32 %v437, %v437
      %v517 = vmul.f32 %v442, %v442
      %v518 = vmul.f32 %v445, %v445
      %v519 = vmul.f32 %v450, %v450
      %v520 = vmul.f32 %v453, %v453
      %v521 = vmul.f32 %v458, %v458
      %v522 = vmul.f32 %v461, %v461
      %v523 = vmul.f32 %v466, %v466
      %v524 = vmul.f32 %v469, %v469
      %v525 = vadd.f32 %v509, %v510
      %v526 = vadd.f32 %v525, %v511
      %v527 = vadd.f32 %v526, %v512
      %v528 = vadd.f32 %v527, %v513
      %v529 = vadd.f32 %v528, %v514
      %v530 = vadd.f32 %v529, %v515
      %v531 = vadd.f32 %v530, %v516
      %v532 = vadd.f32 %v531, %v517
      %v533 = vadd.f32 %v532, %v518
      %v534 = vadd.f32 %v533, %v519
      %v535 = vadd.f32 %v534, %v520
      %v536 = vadd.f32 %v535, %v521
      %v537 = vadd.f32 %v536, %v522
      %v538 = vadd.f32 %v537, %v523
      %v539 = vadd.f32 %v538, %v524
      %v540 = vrot.slane %v539, 4
      %v541 = vadd.f32 %v539, %v540
      %v542 = vrot.slane %v541, 2
      %v543 = vadd.f32 %v541, %v542
      %v544 = vrot.slane %v543, 1
      %v545 = vadd.f32 %v543, %v544
      %vm546 = vcmask 1040384
      %v547 = vsel %vm546, %v508, %v545
      %548 = vst [vmem:[%s244] sm:$0x3] %v547
      %s549 = smul.u32 16, %s20
      %p550 = scmp.lt.s32.totalorder %s19, 3
      %s551 = scalar_select %p550, %s19, 3
      %p552 = scmp.lt.s32.totalorder %s549, 15
      %s553 = scalar_select %p552, %s549, 15
      %s554 = smul.addr %s551, 16
      %s555 = sadd.s32 %s553, %s554
      %s556 = smul.addr %s555, 8
      %s557 = scalar_lea.vmem %s2, %s556
      %s558 = sadd.s32 %s19, %s20
      %p559 = scmp.lt.s32.totalorder %s558, 3
      %s560 = scalar_select %p559, %s558, 3
      %s561 = smul.addr %s560, 2
      %s562 = scalar_lea.vmem %s3, %s561
      // Predicated region
      $region29: #{generator_forward.9} parent=27 // pred_check
        %p563 = pneg %p101
      $region30: #{generator_forward.9} parent=27 // pred_check_branch
        %565 = sbr.rel (%p563) target = $region32
      $region31: #{generator_forward.9} parent=27 // pred_region
        %s566 = smul.u32 16, %s20
      $region32: #{generator_forward.9} parent=27 // pred_fallthru
        _
      // Predicated region
      $region33: #{generator_forward.9} parent=27 // pred_check
        %p567 = pneg %p129
      $region34: #{generator_forward.9} parent=27 // pred_check_branch
        %569 = sbr.rel (%p567) target = $region36
      $region35: #{generator_forward.9} parent=27 // pred_region
        %s570 = sadd.s32 %s19, %s20
      $region36: #{generator_forward.9} parent=27 // pred_fallthru
        _
    $region28: #{generator_forward.9} parent=5 // pred_fallthru
      _
    %p571 = scmp.le.s32.totalorder 2, %s10
    // Predicated region
    $region37: #{generator_forward.9} parent=5 // pred_check
      %p572 = pneg %p571
    $region38: #{generator_forward.9} parent=5 // pred_check_branch
      %574 = sbr.rel (%p572) target = $region40
    $region39: #{generator_forward.9} parent=5 // pred_region
      %s575 = ssub.s32 %s10, 2
      // Predicated region
      $region41: #{generator_forward.9} parent=39 // pred_check
        %p576 = pneg %p107
      $region42: #{generator_forward.9} parent=39 // pred_check_branch
        %578 = sbr.rel (%p576) target = $region44
      $region43: #{generator_forward.9} parent=39 // pred_region
        %s579 = smul.u32 16, %s22
        %p580 = scmp.lt.s32.totalorder %s21, 3
        %s581 = scalar_select %p580, %s21, 3
        %p582 = scmp.lt.s32.totalorder %s579, 15
        %s583 = scalar_select %p582, %s579, 15
        %s584 = smul.addr %s581, 16
        %s585 = sadd.s32 %s583, %s584
        %s586 = smul.addr %s585, 8
        %s587 = scalar_lea.vmem %s2, %s586
      $region44: #{generator_forward.9} parent=39 // pred_fallthru
        _
      // Predicated region
      $region45: #{generator_forward.9} parent=39 // pred_check
        %p588 = pneg %p135
      $region46: #{generator_forward.9} parent=39 // pred_check_branch
        %590 = sbr.rel (%p588) target = $region48
      $region47: #{generator_forward.9} parent=39 // pred_region
        %s591 = sadd.s32 %s21, %s22
        %p592 = scmp.lt.s32.totalorder %s591, 3
        %s593 = scalar_select %p592, %s591, 3
        %s594 = smul.addr %s593, 2
        %s595 = scalar_lea.vmem %s3, %s594
      $region48: #{generator_forward.9} parent=39 // pred_fallthru
        _
    $region40: #{generator_forward.9} parent=5 // pred_fallthru
      _
  $region6: #{generator_forward.9} parent=0 // loop_footer
    %s14 = sadd.s32 1, %s10
  $region7: #{generator_forward.9} parent=0 // loop_footer_branch
    %9 = sbr.rel target = $region3
  $region8: #{generator_forward.9} parent=0 // loop_exit
    _

// kernel: generator_forward.10
$region0: #{generator_forward.10}
  #allocation0 [shape = 'u32[]', space=smem, size = 0x4, offset = 0x4, fixed_abs, tag = 'smem constant byte address 0x4 - core index']
  #allocation1 [shape = 'u32[144,128]{1,0:T(1,128)}', space=vmem, size = 0x12000, scoped, tag = 'internal scratch']
  %s0 = inlined_call_operand.vmem [shape: f32[4,128,128], index: 0, kind: input, shape index: {}]
  %s1 = inlined_call_operand.vmem [shape: f32[1,128], index: 1, kind: input, shape index: {}]
  %s2 = inlined_call_operand.vmem [shape: f32[1,128], index: 2, kind: input, shape index: {}]
  %s3 = inlined_call_operand.vmem [shape: f32[4,128,128], index: 3, kind: output, shape index: {}]
  %s4 = sld [smem:[#allocation0]]
  $region45: #{generator_forward.10} parent=0
    _
  %s6 = ssub.s32 1, %s4
  %s7 = scalar_select 0, %s6, %s4
  loop: start=0, step=1, limit=6
  $region2: #{generator_forward.10} parent=0 // loop_pre_header
    _
  $region3: #{generator_forward.10} parent=0 // loop_header
    %s9 = sphi 0, %s13
    %p10 = scmp.ge.s32.totalorder %s9, 6
    %s16 = sphi 0, %s28
    %s17 = sphi 0, %s24
    %s18 = sphi 0, %s16
    %s19 = sphi 0, %s17
    %s20 = sphi 0, %s18
    %s21 = sphi 0, %s19
    %s33 = sphi 0, %s35
    %s36 = sphi 0, %s33
    %s37 = sphi 0, %s36
    %s53 = sphi 0, %s37
    %s57 = sphi 0, %s57
    %s59 = sphi 0, %s57
    %s60 = sphi 0, %s59
    %s74 = sphi 0, %s60
    %s78 = sphi 0, %s78
    %s80 = sphi 0, %s78
    %s81 = sphi 0, %s80
    %s95 = sphi 0, %s81
    %s103 = sphi 0, %s105
    %s106 = sphi 0, %s103
    %s107 = sphi 0, %s106
    %s123 = sphi 0, %s107
  $region4: #{generator_forward.10} parent=0 // loop_header_branch
    %12 = sbr.rel (%p10) target = $region8
  $region5: #{generator_forward.10} parent=0 // loop_body
    %s14 = ssub.s32 %s9, 1
    %s15 = ssub.s32 %s9, 2
    %s22 = sadd.s32 1, %s17
    %p23 = scmp.ge.s32.totalorder %s22, 1
    %s24 = scalar_select %p23, 0, %s22
    %s25 = sadd.s32 1, %s16
    %s26 = scalar_select %p23, %s25, %s16
    %p27 = scmp.ge.s32.totalorder %s26, 4
    %s28 = scalar_select %p27, 0, %s26
    %s29 = ssub.s32 %s16, %s28
    %s30 = ssub.s32 %s17, %s24
    %s31 = sor.u32 %s29, %s30
    %p32 = scmp.eq.s32.totalorder %s31, 0
    %s34 = sadd.s32 %s33, 1
    %s35 = scalar_select %p32, %s33, %s34
    %p38 = pneg %p32
    %p39 = scmp.eq.s32.totalorder %s9, 3
    %p40 = por %p38, %p39
    %p41 = scmp.ne.s32.totalorder %s33, %s36
    %p42 = scmp.eq.s32.totalorder %s9, 0
    %p43 = por %p41, %p42
    %p44 = scmp.ne.s32.totalorder %s33, %s36
    %p45 = scmp.eq.s32.totalorder %s14, 3
    %p46 = por %p44, %p45
    %p47 = scmp.ne.s32.totalorder %s36, %s37
    %p48 = scmp.eq.s32.totalorder %s14, 0
    %p49 = por %p47, %p48
    %p50 = scmp.ne.s32.totalorder %s36, %s37
    %p51 = scmp.eq.s32.totalorder %s15, 3
    %p52 = por %p50, %p51
    %p54 = scmp.ne.s32.totalorder %s37, %s53
    %p55 = scmp.eq.s32.totalorder %s15, 0
    %p56 = por %p54, %p55
    %s58 = sadd.s32 %s57, 1
    %p61 = scmp.eq.s32.totalorder %s9, 3
    %p62 = scmp.ne.s32.totalorder %s57, %s59
    %p63 = scmp.eq.s32.totalorder %s9, 0
    %p64 = por %p62, %p63
    %p65 = scmp.ne.s32.totalorder %s57, %s59
    %p66 = scmp.eq.s32.totalorder %s14, 3
    %p67 = por %p65, %p66
    %p68 = scmp.ne.s32.totalorder %s59, %s60
    %p69 = scmp.eq.s32.totalorder %s14, 0
    %p70 = por %p68, %p69
    %p71 = scmp.ne.s32.totalorder %s59, %s60
    %p72 = scmp.eq.s32.totalorder %s15, 3
    %p73 = por %p71, %p72
    %p75 = scmp.ne.s32.totalorder %s60, %s74
    %p76 = scmp.eq.s32.totalorder %s15, 0
    %p77 = por %p75, %p76
    %s79 = sadd.s32 %s78, 1
    %p82 = scmp.eq.s32.totalorder %s9, 3
    %p83 = scmp.ne.s32.totalorder %s78, %s80
    %p84 = scmp.eq.s32.totalorder %s9, 0
    %p85 = por %p83, %p84
    %p86 = scmp.ne.s32.totalorder %s78, %s80
    %p87 = scmp.eq.s32.totalorder %s14, 3
    %p88 = por %p86, %p87
    %p89 = scmp.ne.s32.totalorder %s80, %s81
    %p90 = scmp.eq.s32.totalorder %s14, 0
    %p91 = por %p89, %p90
    %p92 = scmp.ne.s32.totalorder %s80, %s81
    %p93 = scmp.eq.s32.totalorder %s15, 3
    %p94 = por %p92, %p93
    %p96 = scmp.ne.s32.totalorder %s81, %s95
    %p97 = scmp.eq.s32.totalorder %s15, 0
    %p98 = por %p96, %p97
    %s99 = ssub.s32 %s16, %s28
    %s100 = ssub.s32 %s17, %s24
    %s101 = sor.u32 %s99, %s100
    %p102 = scmp.eq.s32.totalorder %s101, 0
    %s104 = sadd.s32 %s103, 1
    %s105 = scalar_select %p102, %s103, %s104
    %p108 = pneg %p102
    %p109 = scmp.eq.s32.totalorder %s9, 3
    %p110 = por %p108, %p109
    %p111 = scmp.ne.s32.totalorder %s103, %s106
    %p112 = scmp.eq.s32.totalorder %s9, 0
    %p113 = por %p111, %p112
    %p114 = scmp.ne.s32.totalorder %s103, %s106
    %p115 = scmp.eq.s32.totalorder %s14, 3
    %p116 = por %p114, %p115
    %p117 = scmp.ne.s32.totalorder %s106, %s107
    %p118 = scmp.eq.s32.totalorder %s14, 0
    %p119 = por %p117, %p118
    %p120 = scmp.ne.s32.totalorder %s106, %s107
    %p121 = scmp.eq.s32.totalorder %s15, 3
    %p122 = por %p120, %p121
    %p124 = scmp.ne.s32.totalorder %s107, %s123
    %p125 = scmp.eq.s32.totalorder %s15, 0
    %p126 = por %p124, %p125
    %p127 = scmp.le.s32.totalorder 1, %s9
    %p128 = scmp.lt.s32.totalorder %s9, 5
    %p129 = pnand %p127, %p128
    %p130 = pneg %p129
    // Predicated region
    $region9: #{generator_forward.10} parent=5 // pred_check
      _
    $region10: #{generator_forward.10} parent=5 // pred_check_branch
      %132 = sbr.rel (%p129) target = $region12
    $region11: #{generator_forward.10} parent=5 // pred_region
      %s133 = ssub.s32 %s9, 1
      // Predicated region
      $region13: #{generator_forward.10} parent=11 // pred_check
        %p134 = pneg %p70
      $region14: #{generator_forward.10} parent=11 // pred_check_branch
        %136 = sbr.rel (%p134) target = $region16
      $region15: #{generator_forward.10} parent=11 // pred_region
        _
      $region16: #{generator_forward.10} parent=11 // pred_fallthru
        _
      // Predicated region
      $region17: #{generator_forward.10} parent=11 // pred_check
        %p137 = pneg %p91
      $region18: #{generator_forward.10} parent=11 // pred_check_branch
        %139 = sbr.rel (%p137) target = $region20
      $region19: #{generator_forward.10} parent=11 // pred_region
        _
      $region20: #{generator_forward.10} parent=11 // pred_fallthru
        _
    $region12: #{generator_forward.10} parent=5 // pred_fallthru
      _
    %p140 = scmp.lt.s32.totalorder %s9, 4
    // Predicated region
    $region21: #{generator_forward.10} parent=5 // pred_check
      %p141 = pneg %p140
    $region22: #{generator_forward.10} parent=5 // pred_check_branch
      %143 = sbr.rel (%p141) target = $region24
    $region23: #{generator_forward.10} parent=5 // pred_region
      // Predicated region
      $region25: #{generator_forward.10} parent=23 // pred_check
        %p144 = pneg %p43
      $region26: #{generator_forward.10} parent=23 // pred_check_branch
        %146 = sbr.rel (%p144) target = $region28
      $region27: #{generator_forward.10} parent=23 // pred_region
        %s147 = smul.u32 16, %s17
        %p148 = scmp.lt.s32.totalorder %s16, 3
        %s149 = scalar_select %p148, %s16, 3
        %p150 = scmp.lt.s32.totalorder %s147, 15
        %s151 = scalar_select %p150, %s147, 15
        %s152 = smul.addr %s149, 16
        %s153 = sadd.s32 %s151, %s152
        %s154 = smul.addr %s153, 8
        %s155 = scalar_lea.vmem %s0, %s154
        %s156 = smul.u32 16, %s17
      $region28: #{generator_forward.10} parent=23 // pred_fallthru
        _
    $region24: #{generator_forward.10} parent=5 // pred_fallthru
      _
    %p157 = scmp.le.s32.totalorder 1, %s9
    %p158 = scmp.lt.s32.totalorder %s9, 5
    %p159 = pnand %p157, %p158
    %p160 = pneg %p159
    // Predicated region
    $region29: #{generator_forward.10} parent=5 // pred_check
      _
    $region30: #{generator_forward.10} parent=5 // pred_check_branch
      %162 = sbr.rel (%p159) target = $region32
    $region31: #{generator_forward.10} parent=5 // pred_region
      %s163 = ssub.s32 %s9, 1
      %s164 = smul.u32 16, %s19
      %p165 = scmp.lt.s32.totalorder %s18, 3
      %s166 = scalar_select %p165, %s18, 3
      %p167 = scmp.lt.s32.totalorder %s164, 15
      %s168 = scalar_select %p167, %s164, 15
      %s169 = smul.addr %s166, 16
      %s170 = sadd.s32 %s168, %s169
      %s171 = smul.addr %s170, 8
      %s172 = scalar_lea.vmem %s0, %s171
      %p173 = pneg %p49
      %p174 = pneg %p46
      %p175 = pneg %p70
      %p176 = pneg %p67
      %p177 = pneg %p91
      %p178 = pneg %p88
      %p179 = pneg %p119
      %p180 = pneg %p116
      %s181 = smul.u32 16, %s19
      %p182 = scmp.lt.s32.totalorder %s18, 3
      %s183 = scalar_select %p182, %s18, 3
      %p184 = scmp.lt.s32.totalorder %s181, 15
      %s185 = scalar_select %p184, %s181, 15
      %s186 = smul.addr %s183, 16
      %s187 = sadd.s32 %s185, %s186
      %s188 = smul.addr %s187, 8
      %s189 = scalar_lea.vmem %s3, %s188
      %s190 = smul.u32 16, %s19
      %p191 = scmp.lt.s32.totalorder %s18, 3
      %s192 = scalar_select %p191, %s18, 3
      %p193 = scmp.lt.s32.totalorder %s190, 15
      %s194 = scalar_select %p193, %s190, 15
      %s195 = smul.addr %s192, 16
      %s196 = sadd.s32 %s194, %s195
      %s197 = smul.addr %s196, 8
      %s198 = scalar_lea.vmem %s0, %s197
      %s199 = smul.u32 16, %s19
      %s200 = smul.u32 16, %s19
      %p201 = scmp.lt.s32.totalorder %s18, 3
      %s202 = scalar_select %p201, %s18, 3
      %p203 = scmp.lt.s32.totalorder %s200, 15
      %s204 = scalar_select %p203, %s200, 15
      %s205 = smul.addr %s202, 16
      %s206 = sadd.s32 %s204, %s205
      %s207 = smul.addr %s206, 8
      %s208 = scalar_lea.vmem %s3, %s207
      %s209 = smul.u32 16, %s19
      %v210 = vld [vmem:[%s198] sm:$0xff]
      %v211 = vld [vmem:[%s198 + $0x8] sm:$0xff]
      %v212 = vld [vmem:[%s198 + $0x10] sm:$0xff]
      %v213 = vld [vmem:[%s198 + $0x18] sm:$0xff]
      %v214 = vld [vmem:[%s198 + $0x20] sm:$0xff]
      %v215 = vld [vmem:[%s198 + $0x28] sm:$0xff]
      %v216 = vld [vmem:[%s198 + $0x30] sm:$0xff]
      %v217 = vld [vmem:[%s198 + $0x38] sm:$0xff]
      %v218 = vld [vmem:[%s198 + $0x40] sm:$0xff]
      %v219 = vld [vmem:[%s198 + $0x48] sm:$0xff]
      %v220 = vld [vmem:[%s198 + $0x50] sm:$0xff]
      %v221 = vld [vmem:[%s198 + $0x58] sm:$0xff]
      %v222 = vld [vmem:[%s198 + $0x60] sm:$0xff]
      %v223 = vld [vmem:[%s198 + $0x68] sm:$0xff]
      %v224 = vld [vmem:[%s198 + $0x70] sm:$0xff]
      %v225 = vld [vmem:[%s198 + $0x78] sm:$0xff]
      %v226 = vld [vmem:[%s1] sm:$0x1]
      %v228 = vlaneseq
      %v229 = vshrl.u32 %v228, 7
      %v230 = vsub.s32 0, %v229
      %v231 = vrot.slane %v226, %v230
      %v233 = vmul.f32 %v210, %v231
      %v234 = vmul.f32 %v211, %v231
      %v235 = vmul.f32 %v212, %v231
      %v236 = vmul.f32 %v213, %v231
      %v237 = vmul.f32 %v214, %v231
      %v238 = vmul.f32 %v215, %v231
      %v239 = vmul.f32 %v216, %v231
      %v240 = vmul.f32 %v217, %v231
      %v241 = vmul.f32 %v218, %v231
      %v242 = vmul.f32 %v219, %v231
      %v243 = vmul.f32 %v220, %v231
      %v244 = vmul.f32 %v221, %v231
      %v245 = vmul.f32 %v222, %v231
      %v246 = vmul.f32 %v223, %v231
      %v247 = vmul.f32 %v224, %v231
      %v248 = vmul.f32 %v225, %v231
      %v249 = vld [vmem:[%s2] sm:$0x1]
      %v251 = vlaneseq
      %v252 = vshrl.u32 %v251, 7
      %v253 = vsub.s32 0, %v252
      %v254 = vrot.slane %v249, %v253
      %v256 = vadd.f32 %v233, %v254
      %v257 = vadd.f32 %v234, %v254
      %v258 = vadd.f32 %v235, %v254
      %v259 = vadd.f32 %v236, %v254
      %v260 = vadd.f32 %v237, %v254
      %v261 = vadd.f32 %v238, %v254
      %v262 = vadd.f32 %v239, %v254
      %v263 = vadd.f32 %v240, %v254
      %v264 = vadd.f32 %v241, %v254
      %v265 = vadd.f32 %v242, %v254
      %v266 = vadd.f32 %v243, %v254
      %v267 = vadd.f32 %v244, %v254
      %v268 = vadd.f32 %v245, %v254
      %v269 = vadd.f32 %v246, %v254
      %v270 = vadd.f32 %v247, %v254
      %v271 = vadd.f32 %v248, %v254
      %v272 = vmax.f32 %v256, 0.0
      %v273 = vmax.f32 %v257, 0.0
      %v274 = vmax.f32 %v258, 0.0
      %v275 = vmax.f32 %v259, 0.0
      %v276 = vmax.f32 %v260, 0.0
      %v277 = vmax.f32 %v261, 0.0
      %v278 = vmax.f32 %v262, 0.0
      %v279 = vmax.f32 %v263, 0.0
      %v280 = vmax.f32 %v264, 0.0
      %v281 = vmax.f32 %v265, 0.0
      %v282 = vmax.f32 %v266, 0.0
      %v283 = vmax.f32 %v267, 0.0
      %v284 = vmax.f32 %v268, 0.0
      %v285 = vmax.f32 %v269, 0.0
      %v286 = vmax.f32 %v270, 0.0
      %v287 = vmax.f32 %v271, 0.0
      %288 = vst [vmem:[%s208] sm:$0xff] %v272
      %289 = vst [vmem:[%s208 + $0x8] sm:$0xff] %v273
      %290 = vst [vmem:[%s208 + $0x10] sm:$0xff] %v274
      %291 = vst [vmem:[%s208 + $0x18] sm:$0xff] %v275
      %292 = vst [vmem:[%s208 + $0x20] sm:$0xff] %v276
      %293 = vst [vmem:[%s208 + $0x28] sm:$0xff] %v277
      %294 = vst [vmem:[%s208 + $0x30] sm:$0xff] %v278
      %295 = vst [vmem:[%s208 + $0x38] sm:$0xff] %v279
      %296 = vst [vmem:[%s208 + $0x40] sm:$0xff] %v280
      %297 = vst [vmem:[%s208 + $0x48] sm:$0xff] %v281
      %298 = vst [vmem:[%s208 + $0x50] sm:$0xff] %v282
      %299 = vst [vmem:[%s208 + $0x58] sm:$0xff] %v283
      %300 = vst [vmem:[%s208 + $0x60] sm:$0xff] %v284
      %301 = vst [vmem:[%s208 + $0x68] sm:$0xff] %v285
      %302 = vst [vmem:[%s208 + $0x70] sm:$0xff] %v286
      %303 = vst [vmem:[%s208 + $0x78] sm:$0xff] %v287
      %s304 = smul.u32 16, %s19
      %p305 = scmp.lt.s32.totalorder %s18, 3
      %s306 = scalar_select %p305, %s18, 3
      %p307 = scmp.lt.s32.totalorder %s304, 15
      %s308 = scalar_select %p307, %s304, 15
      %s309 = smul.addr %s306, 16
      %s310 = sadd.s32 %s308, %s309
      %s311 = smul.addr %s310, 8
      %s312 = scalar_lea.vmem %s3, %s311
      // Predicated region
      $region33: #{generator_forward.10} parent=31 // pred_check
        %p313 = pneg %p116
      $region34: #{generator_forward.10} parent=31 // pred_check_branch
        %315 = sbr.rel (%p313) target = $region36
      $region35: #{generator_forward.10} parent=31 // pred_region
        %s316 = smul.u32 16, %s19
      $region36: #{generator_forward.10} parent=31 // pred_fallthru
        _
    $region32: #{generator_forward.10} parent=5 // pred_fallthru
      _
    %p317 = scmp.le.s32.totalorder 2, %s9
    // Predicated region
    $region37: #{generator_forward.10} parent=5 // pred_check
      %p318 = pneg %p317
    $region38: #{generator_forward.10} parent=5 // pred_check_branch
      %320 = sbr.rel (%p318) target = $region40
    $region39: #{generator_forward.10} parent=5 // pred_region
      %s321 = ssub.s32 %s9, 2
      // Predicated region
      $region41: #{generator_forward.10} parent=39 // pred_check
        %p322 = pneg %p122
      $region42: #{generator_forward.10} parent=39 // pred_check_branch
        %324 = sbr.rel (%p322) target = $region44
      $region43: #{generator_forward.10} parent=39 // pred_region
        %s325 = smul.u32 16, %s21
        %p326 = scmp.lt.s32.totalorder %s20, 3
        %s327 = scalar_select %p326, %s20, 3
        %p328 = scmp.lt.s32.totalorder %s325, 15
        %s329 = scalar_select %p328, %s325, 15
        %s330 = smul.addr %s327, 16
        %s331 = sadd.s32 %s329, %s330
        %s332 = smul.addr %s331, 8
        %s333 = scalar_lea.vmem %s3, %s332
      $region44: #{generator_forward.10} parent=39 // pred_fallthru
        _
    $region40: #{generator_forward.10} parent=5 // pred_fallthru
      _
  $region6: #{generator_forward.10} parent=0 // loop_footer
    %s13 = sadd.s32 1, %s9
  $region7: #{generator_forward.10} parent=0 // loop_footer_branch
    %8 = sbr.rel target = $region3
  $region8: #{generator_forward.10} parent=0 // loop_exit
    _

// kernel: generator_forward.11
$region0: #{generator_forward.11}
  #allocation0 [shape = 'u32[]', space=smem, size = 0x4, offset = 0x4, fixed_abs, tag = 'smem constant byte address 0x4 - core index']
  #allocation1 [shape = 'u32[144,128]{1,0:T(1,128)}', space=vmem, size = 0x12000, scoped, tag = 'internal scratch']
  %s0 = inlined_call_operand.vmem [shape: bf16[4,512,64], index: 0, kind: input, shape index: {}]
  %s1 = inlined_call_operand.vmem [shape: bf16[4,64,128], index: 1, kind: input, shape index: {}]
  %s2 = inlined_call_operand.vmem [shape: f32[4,512,128], index: 2, kind: output, shape index: {0}]
  %s3 = inlined_call_operand.vmem [shape: f32[4,2,128], index: 3, kind: output, shape index: {1}]
  %4 = xla_tuple %s2, %s3
  %s5 = sld [smem:[#allocation0]]
  $region49: #{generator_forward.11} parent=0
    _
  %s7 = ssub.s32 1, %s5
  %s8 = scalar_select 0, %s7, %s5
  loop: start=0, step=1, limit=6
  $region2: #{generator_forward.11} parent=0 // loop_pre_header
    _
  $region3: #{generator_forward.11} parent=0 // loop_header
    %s10 = sphi 0, %s14
    %p11 = scmp.ge.s32.totalorder %s10, 6
    %s17 = sphi 0, %s29
    %s18 = sphi 0, %s25
    %s19 = sphi 0, %s17
    %s20 = sphi 0, %s18
    %s21 = sphi 0, %s19
    %s22 = sphi 0, %s20
    %s34 = sphi 0, %s36
    %s37 = sphi 0, %s34
    %s38 = sphi 0, %s37
    %s54 = sphi 0, %s38
    %s60 = sphi 0, %s62
    %s63 = sphi 0, %s60
    %s64 = sphi 0, %s63
    %s80 = sphi 0, %s64
    %s88 = sphi 0, %s90
    %s91 = sphi 0, %s88
    %s92 = sphi 0, %s91
    %s108 = sphi 0, %s92
    %s116 = sphi 0, %s118
    %s119 = sphi 0, %s116
    %s120 = sphi 0, %s119
    %s136 = sphi 0, %s120
  $region4: #{generator_forward.11} parent=0 // loop_header_branch
    %13 = sbr.rel (%p11) target = $region8
  $region5: #{generator_forward.11} parent=0 // loop_body
    %s15 = ssub.s32 %s10, 1
    %s16 = ssub.s32 %s10, 2
    %s23 = sadd.s32 1, %s18
    %p24 = scmp.ge.s32.totalorder %s23, 1
    %s25 = scalar_select %p24, 0, %s23
    %s26 = sadd.s32 1, %s17
    %s27 = scalar_select %p24, %s26, %s17
    %p28 = scmp.ge.s32.totalorder %s27, 4
    %s29 = scalar_select %p28, 0, %s27
    %s30 = ssub.s32 %s17, %s29
    %s31 = ssub.s32 %s18, %s25
    %s32 = sor.u32 %s30, %s31
    %p33 = scmp.eq.s32.totalorder %s32, 0
    %s35 = sadd.s32 %s34, 1
    %s36 = scalar_select %p33, %s34, %s35
    %p39 = pneg %p33
    %p40 = scmp.eq.s32.totalorder %s10, 3
    %p41 = por %p39, %p40
    %p42 = scmp.ne.s32.totalorder %s34, %s37
    %p43 = scmp.eq.s32.totalorder %s10, 0
    %p44 = por %p42, %p43
    %p45 = scmp.ne.s32.totalorder %s34, %s37
    %p46 = scmp.eq.s32.totalorder %s15, 3
    %p47 = por %p45, %p46
    %p48 = scmp.ne.s32.totalorder %s37, %s38
    %p49 = scmp.eq.s32.totalorder %s15, 0
    %p50 = por %p48, %p49
    %p51 = scmp.ne.s32.totalorder %s37, %s38
    %p52 = scmp.eq.s32.totalorder %s16, 3
    %p53 = por %p51, %p52
    %p55 = scmp.ne.s32.totalorder %s38, %s54
    %p56 = scmp.eq.s32.totalorder %s16, 0
    %p57 = por %p55, %p56
    %s58 = ssub.s32 %s17, %s29
    %p59 = scmp.eq.s32.totalorder %s58, 0
    %s61 = sadd.s32 %s60, 1
    %s62 = scalar_select %p59, %s60, %s61
    %p65 = pneg %p59
    %p66 = scmp.eq.s32.totalorder %s10, 3
    %p67 = por %p65, %p66
    %p68 = scmp.ne.s32.totalorder %s60, %s63
    %p69 = scmp.eq.s32.totalorder %s10, 0
    %p70 = por %p68, %p69
    %p71 = scmp.ne.s32.totalorder %s60, %s63
    %p72 = scmp.eq.s32.totalorder %s15, 3
    %p73 = por %p71, %p72
    %p74 = scmp.ne.s32.totalorder %s63, %s64
    %p75 = scmp.eq.s32.totalorder %s15, 0
    %p76 = por %p74, %p75
    %p77 = scmp.ne.s32.totalorder %s63, %s64
    %p78 = scmp.eq.s32.totalorder %s16, 3
    %p79 = por %p77, %p78
    %p81 = scmp.ne.s32.totalorder %s64, %s80
    %p82 = scmp.eq.s32.totalorder %s16, 0
    %p83 = por %p81, %p82
    %s84 = ssub.s32 %s17, %s29
    %s85 = ssub.s32 %s18, %s25
    %s86 = sor.u32 %s84, %s85
    %p87 = scmp.eq.s32.totalorder %s86, 0
    %s89 = sadd.s32 %s88, 1
    %s90 = scalar_select %p87, %s88, %s89
    %p93 = pneg %p87
    %p94 = scmp.eq.s32.totalorder %s10, 3
    %p95 = por %p93, %p94
    %p96 = scmp.ne.s32.totalorder %s88, %s91
    %p97 = scmp.eq.s32.totalorder %s10, 0
    %p98 = por %p96, %p97
    %p99 = scmp.ne.s32.totalorder %s88, %s91
    %p100 = scmp.eq.s32.totalorder %s15, 3
    %p101 = por %p99, %p100
    %p102 = scmp.ne.s32.totalorder %s91, %s92
    %p103 = scmp.eq.s32.totalorder %s15, 0
    %p104 = por %p102, %p103
    %p105 = scmp.ne.s32.totalorder %s91, %s92
    %p106 = scmp.eq.s32.totalorder %s16, 3
    %p107 = por %p105, %p106
    %p109 = scmp.ne.s32.totalorder %s92, %s108
    %p110 = scmp.eq.s32.totalorder %s16, 0
    %p111 = por %p109, %p110
    %s112 = sadd.s32 %s17, %s18
    %s113 = sadd.s32 %s29, %s25
    %s114 = ssub.s32 %s112, %s113
    %p115 = scmp.eq.s32.totalorder %s114, 0
    %s117 = sadd.s32 %s116, 1
    %s118 = scalar_select %p115, %s116, %s117
    %p121 = pneg %p115
    %p122 = scmp.eq.s32.totalorder %s10, 3
    %p123 = por %p121, %p122
    %p124 = scmp.ne.s32.totalorder %s116, %s119
    %p125 = scmp.eq.s32.totalorder %s10, 0
    %p126 = por %p124, %p125
    %p127 = scmp.ne.s32.totalorder %s116, %s119
    %p128 = scmp.eq.s32.totalorder %s15, 3
    %p129 = por %p127, %p128
    %p130 = scmp.ne.s32.totalorder %s119, %s120
    %p131 = scmp.eq.s32.totalorder %s15, 0
    %p132 = por %p130, %p131
    %p133 = scmp.ne.s32.totalorder %s119, %s120
    %p134 = scmp.eq.s32.totalorder %s16, 3
    %p135 = por %p133, %p134
    %p137 = scmp.ne.s32.totalorder %s120, %s136
    %p138 = scmp.eq.s32.totalorder %s16, 0
    %p139 = por %p137, %p138
    %p140 = scmp.le.s32.totalorder 1, %s10
    %p141 = scmp.lt.s32.totalorder %s10, 5
    %p142 = pnand %p140, %p141
    %p143 = pneg %p142
    // Predicated region
    $region9: #{generator_forward.11} parent=5 // pred_check
      _
    $region10: #{generator_forward.11} parent=5 // pred_check_branch
      %145 = sbr.rel (%p142) target = $region12
    $region11: #{generator_forward.11} parent=5 // pred_region
      %s146 = ssub.s32 %s10, 1
    $region12: #{generator_forward.11} parent=5 // pred_fallthru
      _
    %p147 = scmp.lt.s32.totalorder %s10, 4
    // Predicated region
    $region13: #{generator_forward.11} parent=5 // pred_check
      %p148 = pneg %p147
    $region14: #{generator_forward.11} parent=5 // pred_check_branch
      %150 = sbr.rel (%p148) target = $region16
    $region15: #{generator_forward.11} parent=5 // pred_region
      // Predicated region
      $region17: #{generator_forward.11} parent=15 // pred_check
        %p151 = pneg %p44
      $region18: #{generator_forward.11} parent=15 // pred_check_branch
        %153 = sbr.rel (%p151) target = $region20
      $region19: #{generator_forward.11} parent=15 // pred_region
        %s154 = smul.u32 64, %s18
        %p155 = scmp.lt.s32.totalorder %s17, 3
        %s156 = scalar_select %p155, %s17, 3
        %p157 = scmp.lt.s32.totalorder %s154, 63
        %s158 = scalar_select %p157, %s154, 63
        %s159 = smul.addr %s156, 64
        %s160 = sadd.s32 %s158, %s159
        %s161 = smul.addr %s160, 4
        %s162 = scalar_lea.vmem %s0, %s161
        %s163 = smul.u32 64, %s18
      $region20: #{generator_forward.11} parent=15 // pred_fallthru
        _
      // Predicated region
      $region21: #{generator_forward.11} parent=15 // pred_check
        %p164 = pneg %p70
      $region22: #{generator_forward.11} parent=15 // pred_check_branch
        %166 = sbr.rel (%p164) target = $region24
      $region23: #{generator_forward.11} parent=15 // pred_region
        %p167 = scmp.lt.s32.totalorder %s17, 3
        %s168 = scalar_select %p167, %s17, 3
        %s169 = smul.addr %s168, 8
        %s170 = smul.addr %s169, 4
        %s171 = scalar_lea.vmem %s1, %s170
      $region24: #{generator_forward.11} parent=15 // pred_fallthru
        _
    $region16: #{generator_forward.11} parent=5 // pred_fallthru
      _
    %p172 = scmp.le.s32.totalorder 1, %s10
    %p173 = scmp.lt.s32.totalorder %s10, 5
    %p174 = pnand %p172, %p173
    %p175 = pneg %p174
    // Predicated region
    $region25: #{generator_forward.11} parent=5 // pred_check
      _
    $region26: #{generator_forward.11} parent=5 // pred_check_branch
      %177 = sbr.rel (%p174) target = $region28
    $region27: #{generator_forward.11} parent=5 // pred_region
      %s178 = ssub.s32 %s10, 1
      %s179 = smul.u32 64, %s20
      %p180 = scmp.lt.s32.totalorder %s19, 3
      %s181 = scalar_select %p180, %s19, 3
      %p182 = scmp.lt.s32.totalorder %s179, 63
      %s183 = scalar_select %p182, %s179, 63
      %s184 = smul.addr %s181, 64
      %s185 = sadd.s32 %s183, %s184
      %s186 = smul.addr %s185, 4
      %s187 = scalar_lea.vmem %s0, %s186
      %p188 = pneg %p50
      %p189 = pneg %p47
      %p190 = scmp.lt.s32.totalorder %s19, 3
      %s191 = scalar_select %p190, %s19, 3
      %s192 = smul.addr %s191, 8
      %s193 = smul.addr %s192, 4
      %s194 = scalar_lea.vmem %s1, %s193
      %p195 = pneg %p76
      %p196 = pneg %p73
      %p197 = pneg %p104
      %p198 = pneg %p101
      %s199 = smul.u32 64, %s20
      %p200 = scmp.lt.s32.totalorder %s19, 3
      %s201 = scalar_select %p200, %s19, 3
      %p202 = scmp.lt.s32.totalorder %s199, 63
      %s203 = scalar_select %p202, %s199, 63
      %s204 = smul.addr %s201, 64
      %s205 = sadd.s32 %s203, %s204
      %s206 = smul.addr %s205, 8
      %s207 = scalar_lea.vmem %s2, %s206
      %p208 = pneg %p132
      %p209 = pneg %p129
      %s210 = sadd.s32 %s19, %s20
      %p211 = scmp.lt.s32.totalorder %s210, 3
      %s212 = scalar_select %p211, %s210, 3
      %s213 = smul.addr %s212, 2
      %s214 = scalar_lea.vmem %s3, %s213
      %s215 = smul.u32 64, %s20
      %p216 = scmp.lt.s32.totalorder %s19, 3
      %s217 = scalar_select %p216, %s19, 3
      %p218 = scmp.lt.s32.totalorder %s215, 63
      %s219 = scalar_select %p218, %s215, 63
      %s220 = smul.addr %s217, 64
      %s221 = sadd.s32 %s219, %s220
      %s222 = smul.addr %s221, 4
      %s223 = scalar_lea.vmem %s0, %s222
      %s224 = smul.u32 64, %s20
      %p225 = scmp.lt.s32.totalorder %s19, 3
      %s226 = scalar_select %p225, %s19, 3
      %s227 = smul.addr %s226, 8
      %s228 = smul.addr %s227, 4
      %s229 = scalar_lea.vmem %s1, %s228
      %s230 = smul.u32 64, %s20
      %p231 = scmp.lt.s32.totalorder %s19, 3
      %s232 = scalar_select %p231, %s19, 3
      %p233 = scmp.lt.s32.totalorder %s230, 63
      %s234 = scalar_select %p233, %s230, 63
      %s235 = smul.addr %s232, 64
      %s236 = sadd.s32 %s234, %s235
      %s237 = smul.addr %s236, 8
      %s238 = scalar_lea.vmem %s2, %s237
      %s239 = smul.u32 64, %s20
      %s240 = sadd.s32 %s19, %s20
      %p241 = scmp.lt.s32.totalorder %s240, 3
      %s242 = scalar_select %p241, %s240, 3
      %s243 = smul.addr %s242, 2
      %s244 = scalar_lea.vmem %s3, %s243
      %s245 = sadd.s32 %s19, %s20
      %v247 = vld [vmem:[%s223] sm:$0xf]
      %v248 = vld [vmem:[%s223 + $0x4] sm:$0xf]
      %v249 = vld [vmem:[%s223 + $0x8] sm:$0xf]
      %v250 = vld [vmem:[%s223 + $0xc] sm:$0xf]
      %v251 = vld [vmem:[%s223 + $0x10] sm:$0xf]
      %v252 = vld [vmem:[%s223 + $0x14] sm:$0xf]
      %v253 = vld [vmem:[%s223 + $0x18] sm:$0xf]
      %v254 = vld [vmem:[%s223 + $0x1c] sm:$0xf]
      %v255 = vld [vmem:[%s223 + $0x20] sm:$0xf]
      %v256 = vld [vmem:[%s223 + $0x24] sm:$0xf]
      %v257 = vld [vmem:[%s223 + $0x28] sm:$0xf]
      %v258 = vld [vmem:[%s223 + $0x2c] sm:$0xf]
      %v259 = vld [vmem:[%s223 + $0x30] sm:$0xf]
      %v260 = vld [vmem:[%s223 + $0x34] sm:$0xf]
      %v261 = vld [vmem:[%s223 + $0x38] sm:$0xf]
      %v262 = vld [vmem:[%s223 + $0x3c] sm:$0xf]
      %v263 = vld [vmem:[%s223 + $0x40] sm:$0xf]
      %v264 = vld [vmem:[%s223 + $0x44] sm:$0xf]
      %v265 = vld [vmem:[%s223 + $0x48] sm:$0xf]
      %v266 = vld [vmem:[%s223 + $0x4c] sm:$0xf]
      %v267 = vld [vmem:[%s223 + $0x50] sm:$0xf]
      %v268 = vld [vmem:[%s223 + $0x54] sm:$0xf]
      %v269 = vld [vmem:[%s223 + $0x58] sm:$0xf]
      %v270 = vld [vmem:[%s223 + $0x5c] sm:$0xf]
      %v271 = vld [vmem:[%s223 + $0x60] sm:$0xf]
      %v272 = vld [vmem:[%s223 + $0x64] sm:$0xf]
      %v273 = vld [vmem:[%s223 + $0x68] sm:$0xf]
      %v274 = vld [vmem:[%s223 + $0x6c] sm:$0xf]
      %v275 = vld [vmem:[%s223 + $0x70] sm:$0xf]
      %v276 = vld [vmem:[%s223 + $0x74] sm:$0xf]
      %v277 = vld [vmem:[%s223 + $0x78] sm:$0xf]
      %v278 = vld [vmem:[%s223 + $0x7c] sm:$0xf]
      %v279 = vld [vmem:[%s223 + $0x80] sm:$0xf]
      %v280 = vld [vmem:[%s223 + $0x84] sm:$0xf]
      %v281 = vld [vmem:[%s223 + $0x88] sm:$0xf]
      %v282 = vld [vmem:[%s223 + $0x8c] sm:$0xf]
      %v283 = vld [vmem:[%s223 + $0x90] sm:$0xf]
      %v284 = vld [vmem:[%s223 + $0x94] sm:$0xf]
      %v285 = vld [vmem:[%s223 + $0x98] sm:$0xf]
      %v286 = vld [vmem:[%s223 + $0x9c] sm:$0xf]
      %v287 = vld [vmem:[%s223 + $0xa0] sm:$0xf]
      %v288 = vld [vmem:[%s223 + $0xa4] sm:$0xf]
      %v289 = vld [vmem:[%s223 + $0xa8] sm:$0xf]
      %v290 = vld [vmem:[%s223 + $0xac] sm:$0xf]
      %v291 = vld [vmem:[%s223 + $0xb0] sm:$0xf]
      %v292 = vld [vmem:[%s223 + $0xb4] sm:$0xf]
      %v293 = vld [vmem:[%s223 + $0xb8] sm:$0xf]
      %v294 = vld [vmem:[%s223 + $0xbc] sm:$0xf]
      %v295 = vld [vmem:[%s223 + $0xc0] sm:$0xf]
      %v296 = vld [vmem:[%s223 + $0xc4] sm:$0xf]
      %v297 = vld [vmem:[%s223 + $0xc8] sm:$0xf]
      %v298 = vld [vmem:[%s223 + $0xcc] sm:$0xf]
      %v299 = vld [vmem:[%s223 + $0xd0] sm:$0xf]
      %v300 = vld [vmem:[%s223 + $0xd4] sm:$0xf]
      %v301 = vld [vmem:[%s223 + $0xd8] sm:$0xf]
      %v302 = vld [vmem:[%s223 + $0xdc] sm:$0xf]
      %v303 = vld [vmem:[%s223 + $0xe0] sm:$0xf]
      %v304 = vld [vmem:[%s223 + $0xe4] sm:$0xf]
      %v305 = vld [vmem:[%s223 + $0xe8] sm:$0xf]
      %v306 = vld [vmem:[%s223 + $0xec] sm:$0xf]
      %v307 = vld [vmem:[%s223 + $0xf0] sm:$0xf]
      %v308 = vld [vmem:[%s223 + $0xf4] sm:$0xf]
      %v309 = vld [vmem:[%s223 + $0xf8] sm:$0xf]
      %v310 = vld [vmem:[%s223 + $0xfc] sm:$0xf]
      %v311 = vld [vmem:[%s229] sm:$0xf]
      %v312 = vld [vmem:[%s229 + $0x4] sm:$0xf]
      %v313 = vld [vmem:[%s229 + $0x8] sm:$0xf]
      %v314 = vld [vmem:[%s229 + $0xc] sm:$0xf]
      %v315 = vld [vmem:[%s229 + $0x10] sm:$0xf]
      %v316 = vld [vmem:[%s229 + $0x14] sm:$0xf]
      %v317 = vld [vmem:[%s229 + $0x18] sm:$0xf]
      %v318 = vld [vmem:[%s229 + $0x1c] sm:$0xf]
      %v383 = vunpack.c.l.b16 %v247
      %v384 = vunpack.c.l.b16 %v248
      %v385 = vunpack.c.l.b16 %v249
      %v386 = vunpack.c.l.b16 %v250
      %v387 = vunpack.c.l.b16 %v251
      %v388 = vunpack.c.l.b16 %v252
      %v389 = vunpack.c.l.b16 %v253
      %v390 = vunpack.c.l.b16 %v254
      %v391 = vunpack.c.l.b16 %v255
      %v392 = vunpack.c.l.b16 %v256
      %v393 = vunpack.c.l.b16 %v257
      %v394 = vunpack.c.l.b16 %v258
      %v395 = vunpack.c.l.b16 %v259
      %v396 = vunpack.c.l.b16 %v260
      %v397 = vunpack.c.l.b16 %v261
      %v398 = vunpack.c.l.b16 %v262
      %v399 = vunpack.c.l.b16 %v263
      %v400 = vunpack.c.l.b16 %v264
      %v401 = vunpack.c.l.b16 %v265
      %v402 = vunpack.c.l.b16 %v266
      %v403 = vunpack.c.l.b16 %v267
      %v404 = vunpack.c.l.b16 %v268
      %v405 = vunpack.c.l.b16 %v269
      %v406 = vunpack.c.l.b16 %v270
      %v407 = vunpack.c.l.b16 %v271
      %v408 = vunpack.c.l.b16 %v272
      %v409 = vunpack.c.l.b16 %v273
      %v410 = vunpack.c.l.b16 %v274
      %v411 = vunpack.c.l.b16 %v275
      %v412 = vunpack.c.l.b16 %v276
      %v413 = vunpack.c.l.b16 %v277
      %v414 = vunpack.c.l.b16 %v278
      %v415 = vunpack.c.l.b16 %v279
      %v416 = vunpack.c.l.b16 %v280
      %v417 = vunpack.c.l.b16 %v281
      %v418 = vunpack.c.l.b16 %v282
      %v419 = vunpack.c.l.b16 %v283
      %v420 = vunpack.c.l.b16 %v284
      %v421 = vunpack.c.l.b16 %v285
      %v422 = vunpack.c.l.b16 %v286
      %v423 = vunpack.c.l.b16 %v287
      %v424 = vunpack.c.l.b16 %v288
      %v425 = vunpack.c.l.b16 %v289
      %v426 = vunpack.c.l.b16 %v290
      %v427 = vunpack.c.l.b16 %v291
      %v428 = vunpack.c.l.b16 %v292
      %v429 = vunpack.c.l.b16 %v293
      %v430 = vunpack.c.l.b16 %v294
      %v431 = vunpack.c.l.b16 %v295
      %v432 = vunpack.c.l.b16 %v296
      %v433 = vunpack.c.l.b16 %v297
      %v434 = vunpack.c.l.b16 %v298
      %v435 = vunpack.c.l.b16 %v299
      %v436 = vunpack.c.l.b16 %v300
      %v437 = vunpack.c.l.b16 %v301
      %v438 = vunpack.c.l.b16 %v302
      %v439 = vunpack.c.l.b16 %v303
      %v440 = vunpack.c.l.b16 %v304
      %v441 = vunpack.c.l.b16 %v305
      %v442 = vunpack.c.l.b16 %v306
      %v443 = vunpack.c.l.b16 %v307
      %v444 = vunpack.c.l.b16 %v308
      %v445 = vunpack.c.l.b16 %v309
      %v446 = vunpack.c.l.b16 %v310
      %v447 = vpack.c.b16 %v384, %v383
      %v448 = vpack.c.b16 %v386, %v385
      %v449 = vpack.c.b16 %v388, %v387
      %v450 = vpack.c.b16 %v390, %v389
      %v451 = vpack.c.b16 %v392, %v391
      %v452 = vpack.c.b16 %v394, %v393
      %v453 = vpack.c.b16 %v396, %v395
      %v454 = vpack.c.b16 %v398, %v397
      %v455 = vpack.c.b16 %v400, %v399
      %v456 = vpack.c.b16 %v402, %v401
      %v457 = vpack.c.b16 %v404, %v403
      %v458 = vpack.c.b16 %v406, %v405
      %v459 = vpack.c.b16 %v408, %v407
      %v460 = vpack.c.b16 %v410, %v409
      %v461 = vpack.c.b16 %v412, %v411
      %v462 = vpack.c.b16 %v414, %v413
      %v463 = vpack.c.b16 %v416, %v415
      %v464 = vpack.c.b16 %v418, %v417
      %v465 = vpack.c.b16 %v420, %v419
      %v466 = vpack.c.b16 %v422, %v421
      %v467 = vpack.c.b16 %v424, %v423
      %v468 = vpack.c.b16 %v426, %v425
      %v469 = vpack.c.b16 %v428, %v427
      %v470 = vpack.c.b16 %v430, %v429
      %v471 = vpack.c.b16 %v432, %v431
      %v472 = vpack.c.b16 %v434, %v433
      %v473 = vpack.c.b16 %v436, %v435
      %v474 = vpack.c.b16 %v438, %v437
      %v475 = vpack.c.b16 %v440, %v439
      %v476 = vpack.c.b16 %v442, %v441
      %v477 = vpack.c.b16 %v444, %v443
      %v478 = vpack.c.b16 %v446, %v445
      %v487 = vunpack.c.l.b16 %v311
      %v488 = vunpack.c.l.b16 %v312
      %v489 = vunpack.c.l.b16 %v313
      %v490 = vunpack.c.l.b16 %v314
      %v491 = vunpack.c.l.b16 %v315
      %v492 = vunpack.c.l.b16 %v316
      %v493 = vunpack.c.l.b16 %v317
      %v494 = vunpack.c.l.b16 %v318
      %v495 = vpack.c.b16 %v488, %v487
      %v496 = vpack.c.b16 %v490, %v489
      %v497 = vpack.c.b16 %v492, %v491
      %v498 = vpack.c.b16 %v494, %v493
      %vm503 = vcmask 523264
      %v505 = vsel %vm503, %v447, 0
      %v508 = vsel %vm503, %v448, 0
      %v511 = vsel %vm503, %v449, 0
      %v514 = vsel %vm503, %v450, 0
      %v517 = vsel %vm503, %v451, 0
      %v520 = vsel %vm503, %v452, 0
      %v523 = vsel %vm503, %v453, 0
      %v526 = vsel %vm503, %v454, 0
      %v529 = vsel %vm503, %v455, 0
      %v532 = vsel %vm503, %v456, 0
      %v535 = vsel %vm503, %v457, 0
      %v538 = vsel %vm503, %v458, 0
      %v541 = vsel %vm503, %v459, 0
      %v544 = vsel %vm503, %v460, 0
      %v547 = vsel %vm503, %v461, 0
      %v550 = vsel %vm503, %v462, 0
      %v553 = vsel %vm503, %v463, 0
      %v556 = vsel %vm503, %v464, 0
      %v559 = vsel %vm503, %v465, 0
      %v562 = vsel %vm503, %v466, 0
      %v565 = vsel %vm503, %v467, 0
      %v568 = vsel %vm503, %v468, 0
      %v571 = vsel %vm503, %v469, 0
      %v574 = vsel %vm503, %v470, 0
      %v577 = vsel %vm503, %v471, 0
      %v580 = vsel %vm503, %v472, 0
      %v583 = vsel %vm503, %v473, 0
      %v586 = vsel %vm503, %v474, 0
      %v589 = vsel %vm503, %v475, 0
      %v592 = vsel %vm503, %v476, 0
      %v595 = vsel %vm503, %v477, 0
      %v598 = vsel %vm503, %v478, 0
      %600 = vmatprep.subr.bf16.mxu0 0
      %601 = vmatpush1.bf16.msra.mxu0 %v495
      %602 = vmatprep.subr.bf16.mxu0 0
      %603 = vmatpush1.bf16.msra.mxu0 %v496
      %604 = vmatprep.subr.bf16.mxu0 0
      %605 = vmatpush1.bf16.msra.mxu0 %v497
      %606 = vmatprep.subr.bf16.mxu0 0
      %607 = vmatpush1.bf16.msra.mxu0 %v498
      %608 = vmatprep.subr.bf16.mxu0 0
      %609 = vmatpush1.bf16.msra.mxu0 0
      %610 = vmatprep.subr.bf16.mxu0 0
      %611 = vmatpush1.bf16.msra.mxu0 0
      %612 = vmatprep.subr.bf16.mxu0 0
      %613 = vmatpush1.bf16.msra.mxu0 0
      %614 = vmatprep.subr.bf16.mxu0 0
      %615 = vmatpush1.bf16.msra.mxu0 0
      %616 = vmatprep.subr.bf16.mxu0 0
      %617 = vmatpush1.bf16.msra.mxu0 0
      %618 = vmatprep.subr.bf16.mxu0 0
      %619 = vmatpush1.bf16.msra.mxu0 0
      %620 = vmatprep.subr.bf16.mxu0 0
      %621 = vmatpush1.bf16.msra.mxu0 0
      %622 = vmatprep.subr.bf16.mxu0 0
      %623 = vmatpush1.bf16.msra.mxu0 0
      %624 = vmatprep.subr.bf16.mxu0 0
      %625 = vmatpush1.bf16.msra.mxu0 0
      %626 = vmatprep.subr.bf16.mxu0 0
      %627 = vmatpush1.bf16.msra.mxu0 0
      %628 = vmatprep.subr.bf16.mxu0 0
      %629 = vmatpush1.bf16.msra.mxu0 0
      %630 = vmatprep.subr.bf16.mxu0 0
      %631 = vmatpush1.bf16.msra.mxu0 0
      %632 = vmatprep.mubr.bf16.mxu0 0
      %633 = vmatmul.mubr.bf16.gmra.mrb[0].mxu0 %v505
      %v634 = vpop.f32.mrb[0].mxu0
      %v635 = vadd.f32 0.0, %v634
      %v636 = vpop.f32.mrb[0].mxu0
      %v637 = vpop.f32.mrb[0].mxu0
      %v638 = vadd.f32 0.0, %v637
      %v639 = vpop.f32.mrb[0].mxu0
      %640 = vmatprep.mubr.bf16.mxu0 0
      %641 = vmatmul.mubr.bf16.gmra.mrb[0].mxu0 %v508
      %v642 = vpop.f32.mrb[0].mxu0
      %v643 = vadd.f32 0.0, %v642
      %v644 = vpop.f32.mrb[0].mxu0
      %v645 = vpop.f32.mrb[0].mxu0
      %v646 = vadd.f32 0.0, %v645
      %v647 = vpop.f32.mrb[0].mxu0
      %648 = vmatprep.mubr.bf16.mxu0 0
      %649 = vmatmul.mubr.bf16.gmra.mrb[0].mxu0 %v511
      %v650 = vpop.f32.mrb[0].mxu0
      %v651 = vadd.f32 0.0, %v650
      %v652 = vpop.f32.mrb[0].mxu0
      %v653 = vpop.f32.mrb[0].mxu0
      %v654 = vadd.f32 0.0, %v653
      %v655 = vpop.f32.mrb[0].mxu0
      %656 = vmatprep.mubr.bf16.mxu0 0
      %657 = vmatmul.mubr.bf16.gmra.mrb[0].mxu0 %v514
      %v658 = vpop.f32.mrb[0].mxu0
      %v659 = vadd.f32 0.0, %v658
      %v660 = vpop.f32.mrb[0].mxu0
      %v661 = vpop.f32.mrb[0].mxu0
      %v662 = vadd.f32 0.0, %v661
      %v663 = vpop.f32.mrb[0].mxu0
      %664 = vmatprep.mubr.bf16.mxu0 0
      %665 = vmatmul.mubr.bf16.gmra.mrb[0].mxu0 %v517
      %v666 = vpop.f32.mrb[0].mxu0
      %v667 = vadd.f32 0.0, %v666
      %v668 = vpop.f32.mrb[0].mxu0
      %v669 = vpop.f32.mrb[0].mxu0
      %v670 = vadd.f32 0.0, %v669
      %v671 = vpop.f32.mrb[0].mxu0
      %672 = vmatprep.mubr.bf16.mxu0 0
      %673 = vmatmul.mubr.bf16.gmra.mrb[0].mxu0 %v520
      %v674 = vpop.f32.mrb[0].mxu0
      %v675 = vadd.f32 0.0, %v674
      %v676 = vpop.f32.mrb[0].mxu0
      %v677 = vpop.f32.mrb[0].mxu0
      %v678 = vadd.f32 0.0, %v677
      %v679 = vpop.f32.mrb[0].mxu0
      %680 = vmatprep.mubr.bf16.mxu0 0
      %681 = vmatmul.mubr.bf16.gmra.mrb[0].mxu0 %v523
      %v682 = vpop.f32.mrb[0].mxu0
      %v683 = vadd.f32 0.0, %v682
      %v684 = vpop.f32.mrb[0].mxu0
      %v685 = vpop.f32.mrb[0].mxu0
      %v686 = vadd.f32 0.0, %v685
      %v687 = vpop.f32.mrb[0].mxu0
      %688 = vmatprep.mubr.bf16.mxu0 0
      %689 = vmatmul.mubr.bf16.gmra.mrb[0].mxu0 %v526
      %v690 = vpop.f32.mrb[0].mxu0
      %v691 = vadd.f32 0.0, %v690
      %v692 = vpop.f32.mrb[0].mxu0
      %v693 = vpop.f32.mrb[0].mxu0
      %v694 = vadd.f32 0.0, %v693
      %v695 = vpop.f32.mrb[0].mxu0
      %696 = vmatprep.mubr.bf16.mxu0 0
      %697 = vmatmul.mubr.bf16.gmra.mrb[0].mxu0 %v529
      %v698 = vpop.f32.mrb[0].mxu0
      %v699 = vadd.f32 0.0, %v698
      %v700 = vpop.f32.mrb[0].mxu0
      %v701 = vpop.f32.mrb[0].mxu0
      %v702 = vadd.f32 0.0, %v701
      %v703 = vpop.f32.mrb[0].mxu0
      %704 = vmatprep.mubr.bf16.mxu0 0
      %705 = vmatmul.mubr.bf16.gmra.mrb[0].mxu0 %v532
      %v706 = vpop.f32.mrb[0].mxu0
      %v707 = vadd.f32 0.0, %v706
      %v708 = vpop.f32.mrb[0].mxu0
      %v709 = vpop.f32.mrb[0].mxu0
      %v710 = vadd.f32 0.0, %v709
      %v711 = vpop.f32.mrb[0].mxu0
      %712 = vmatprep.mubr.bf16.mxu0 0
      %713 = vmatmul.mubr.bf16.gmra.mrb[0].mxu0 %v535
      %v714 = vpop.f32.mrb[0].mxu0
      %v715 = vadd.f32 0.0, %v714
      %v716 = vpop.f32.mrb[0].mxu0
      %v717 = vpop.f32.mrb[0].mxu0
      %v718 = vadd.f32 0.0, %v717
      %v719 = vpop.f32.mrb[0].mxu0
      %720 = vmatprep.mubr.bf16.mxu0 0
      %721 = vmatmul.mubr.bf16.gmra.mrb[0].mxu0 %v538
      %v722 = vpop.f32.mrb[0].mxu0
      %v723 = vadd.f32 0.0, %v722
      %v724 = vpop.f32.mrb[0].mxu0
      %v725 = vpop.f32.mrb[0].mxu0
      %v726 = vadd.f32 0.0, %v725
      %v727 = vpop.f32.mrb[0].mxu0
      %728 = vmatprep.mubr.bf16.mxu0 0
      %729 = vmatmul.mubr.bf16.gmra.mrb[0].mxu0 %v541
      %v730 = vpop.f32.mrb[0].mxu0
      %v731 = vadd.f32 0.0, %v730
      %v732 = vpop.f32.mrb[0].mxu0
      %v733 = vpop.f32.mrb[0].mxu0
      %v734 = vadd.f32 0.0, %v733
      %v735 = vpop.f32.mrb[0].mxu0
      %736 = vmatprep.mubr.bf16.mxu0 0
      %737 = vmatmul.mubr.bf16.gmra.mrb[0].mxu0 %v544
      %v738 = vpop.f32.mrb[0].mxu0
      %v739 = vadd.f32 0.0, %v738
      %v740 = vpop.f32.mrb[0].mxu0
      %v741 = vpop.f32.mrb[0].mxu0
      %v742 = vadd.f32 0.0, %v741
      %v743 = vpop.f32.mrb[0].mxu0
      %744 = vmatprep.mubr.bf16.mxu0 0
      %745 = vmatmul.mubr.bf16.gmra.mrb[0].mxu0 %v547
      %v746 = vpop.f32.mrb[0].mxu0
      %v747 = vadd.f32 0.0, %v746
      %v748 = vpop.f32.mrb[0].mxu0
      %v749 = vpop.f32.mrb[0].mxu0
      %v750 = vadd.f32 0.0, %v749
      %v751 = vpop.f32.mrb[0].mxu0
      %752 = vmatprep.mubr.bf16.mxu0 0
      %753 = vmatmul.mubr.bf16.gmra.mrb[0].mxu0 %v550
      %v754 = vpop.f32.mrb[0].mxu0
      %v755 = vadd.f32 0.0, %v754
      %v756 = vpop.f32.mrb[0].mxu0
      %v757 = vpop.f32.mrb[0].mxu0
      %v758 = vadd.f32 0.0, %v757
      %v759 = vpop.f32.mrb[0].mxu0
      %760 = vmatprep.mubr.bf16.mxu0 0
      %761 = vmatmul.mubr.bf16.gmra.mrb[0].mxu0 %v553
      %v762 = vpop.f32.mrb[0].mxu0
      %v763 = vadd.f32 0.0, %v762
      %v764 = vpop.f32.mrb[0].mxu0
      %v765 = vpop.f32.mrb[0].mxu0
      %v766 = vadd.f32 0.0, %v765
      %v767 = vpop.f32.mrb[0].mxu0
      %768 = vmatprep.mubr.bf16.mxu0 0
      %769 = vmatmul.mubr.bf16.gmra.mrb[0].mxu0 %v556
      %v770 = vpop.f32.mrb[0].mxu0
      %v771 = vadd.f32 0.0, %v770
      %v772 = vpop.f32.mrb[0].mxu0
      %v773 = vpop.f32.mrb[0].mxu0
      %v774 = vadd.f32 0.0, %v773
      %v775 = vpop.f32.mrb[0].mxu0
      %776 = vmatprep.mubr.bf16.mxu0 0
      %777 = vmatmul.mubr.bf16.gmra.mrb[0].mxu0 %v559
      %v778 = vpop.f32.mrb[0].mxu0
      %v779 = vadd.f32 0.0, %v778
      %v780 = vpop.f32.mrb[0].mxu0
      %v781 = vpop.f32.mrb[0].mxu0
      %v782 = vadd.f32 0.0, %v781
      %v783 = vpop.f32.mrb[0].mxu0
      %784 = vmatprep.mubr.bf16.mxu0 0
      %785 = vmatmul.mubr.bf16.gmra.mrb[0].mxu0 %v562
      %v786 = vpop.f32.mrb[0].mxu0
      %v787 = vadd.f32 0.0, %v786
      %v788 = vpop.f32.mrb[0].mxu0
      %v789 = vpop.f32.mrb[0].mxu0
      %v790 = vadd.f32 0.0, %v789
      %v791 = vpop.f32.mrb[0].mxu0
      %792 = vmatprep.mubr.bf16.mxu0 0
      %793 = vmatmul.mubr.bf16.gmra.mrb[0].mxu0 %v565
      %v794 = vpop.f32.mrb[0].mxu0
      %v795 = vadd.f32 0.0, %v794
      %v796 = vpop.f32.mrb[0].mxu0
      %v797 = vpop.f32.mrb[0].mxu0
      %v798 = vadd.f32 0.0, %v797
      %v799 = vpop.f32.mrb[0].mxu0
      %800 = vmatprep.mubr.bf16.mxu0 0
      %801 = vmatmul.mubr.bf16.gmra.mrb[0].mxu0 %v568
      %v802 = vpop.f32.mrb[0].mxu0
      %v803 = vadd.f32 0.0, %v802
      %v804 = vpop.f32.mrb[0].mxu0
      %v805 = vpop.f32.mrb[0].mxu0
      %v806 = vadd.f32 0.0, %v805
      %v807 = vpop.f32.mrb[0].mxu0
      %808 = vmatprep.mubr.bf16.mxu0 0
      %809 = vmatmul.mubr.bf16.gmra.mrb[0].mxu0 %v571
      %v810 = vpop.f32.mrb[0].mxu0
      %v811 = vadd.f32 0.0, %v810
      %v812 = vpop.f32.mrb[0].mxu0
      %v813 = vpop.f32.mrb[0].mxu0
      %v814 = vadd.f32 0.0, %v813
      %v815 = vpop.f32.mrb[0].mxu0
      %816 = vmatprep.mubr.bf16.mxu0 0
      %817 = vmatmul.mubr.bf16.gmra.mrb[0].mxu0 %v574
      %v818 = vpop.f32.mrb[0].mxu0
      %v819 = vadd.f32 0.0, %v818
      %v820 = vpop.f32.mrb[0].mxu0
      %v821 = vpop.f32.mrb[0].mxu0
      %v822 = vadd.f32 0.0, %v821
      %v823 = vpop.f32.mrb[0].mxu0
      %824 = vmatprep.mubr.bf16.mxu0 0
      %825 = vmatmul.mubr.bf16.gmra.mrb[0].mxu0 %v577
      %v826 = vpop.f32.mrb[0].mxu0
      %v827 = vadd.f32 0.0, %v826
      %v828 = vpop.f32.mrb[0].mxu0
      %v829 = vpop.f32.mrb[0].mxu0
      %v830 = vadd.f32 0.0, %v829
      %v831 = vpop.f32.mrb[0].mxu0
      %832 = vmatprep.mubr.bf16.mxu0 0
      %833 = vmatmul.mubr.bf16.gmra.mrb[0].mxu0 %v580
      %v834 = vpop.f32.mrb[0].mxu0
      %v835 = vadd.f32 0.0, %v834
      %v836 = vpop.f32.mrb[0].mxu0
      %v837 = vpop.f32.mrb[0].mxu0
      %v838 = vadd.f32 0.0, %v837
      %v839 = vpop.f32.mrb[0].mxu0
      %840 = vmatprep.mubr.bf16.mxu0 0
      %841 = vmatmul.mubr.bf16.gmra.mrb[0].mxu0 %v583
      %v842 = vpop.f32.mrb[0].mxu0
      %v843 = vadd.f32 0.0, %v842
      %v844 = vpop.f32.mrb[0].mxu0
      %v845 = vpop.f32.mrb[0].mxu0
      %v846 = vadd.f32 0.0, %v845
      %v847 = vpop.f32.mrb[0].mxu0
      %848 = vmatprep.mubr.bf16.mxu0 0
      %849 = vmatmul.mubr.bf16.gmra.mrb[0].mxu0 %v586
      %v850 = vpop.f32.mrb[0].mxu0
      %v851 = vadd.f32 0.0, %v850
      %v852 = vpop.f32.mrb[0].mxu0
      %v853 = vpop.f32.mrb[0].mxu0
      %v854 = vadd.f32 0.0, %v853
      %v855 = vpop.f32.mrb[0].mxu0
      %856 = vmatprep.mubr.bf16.mxu0 0
      %857 = vmatmul.mubr.bf16.gmra.mrb[0].mxu0 %v589
      %v858 = vpop.f32.mrb[0].mxu0
      %v859 = vadd.f32 0.0, %v858
      %v860 = vpop.f32.mrb[0].mxu0
      %v861 = vpop.f32.mrb[0].mxu0
      %v862 = vadd.f32 0.0, %v861
      %v863 = vpop.f32.mrb[0].mxu0
      %864 = vmatprep.mubr.bf16.mxu0 0
      %865 = vmatmul.mubr.bf16.gmra.mrb[0].mxu0 %v592
      %v866 = vpop.f32.mrb[0].mxu0
      %v867 = vadd.f32 0.0, %v866
      %v868 = vpop.f32.mrb[0].mxu0
      %v869 = vpop.f32.mrb[0].mxu0
      %v870 = vadd.f32 0.0, %v869
      %v871 = vpop.f32.mrb[0].mxu0
      %872 = vmatprep.mubr.bf16.mxu0 0
      %873 = vmatmul.mubr.bf16.gmra.mrb[0].mxu0 %v595
      %v874 = vpop.f32.mrb[0].mxu0
      %v875 = vadd.f32 0.0, %v874
      %v876 = vpop.f32.mrb[0].mxu0
      %v877 = vpop.f32.mrb[0].mxu0
      %v878 = vadd.f32 0.0, %v877
      %v879 = vpop.f32.mrb[0].mxu0
      %880 = vmatprep.mubr.bf16.mxu0 0
      %881 = vmatmul.mubr.bf16.gmra.mrb[0].mxu0 %v598
      %v882 = vpop.f32.mrb[0].mxu0
      %v883 = vadd.f32 0.0, %v882
      %v884 = vpop.f32.mrb[0].mxu0
      %v885 = vpop.f32.mrb[0].mxu0
      %v886 = vadd.f32 0.0, %v885
      %v887 = vpop.f32.mrb[0].mxu0
      %888 = vdwg.mxu0
      %889 = vst [vmem:[%s238] sm:$0xff] %v635
      %890 = vst [vmem:[%s238 + $0x8] sm:$0xff] %v638
      %891 = vst [vmem:[%s238 + $0x10] sm:$0xff] %v643
      %892 = vst [vmem:[%s238 + $0x18] sm:$0xff] %v646
      %893 = vst [vmem:[%s238 + $0x20] sm:$0xff] %v651
      %894 = vst [vmem:[%s238 + $0x28] sm:$0xff] %v654
      %895 = vst [vmem:[%s238 + $0x30] sm:$0xff] %v659
      %896 = vst [vmem:[%s238 + $0x38] sm:$0xff] %v662
      %897 = vst [vmem:[%s238 + $0x40] sm:$0xff] %v667
      %898 = vst [vmem:[%s238 + $0x48] sm:$0xff] %v670
      %899 = vst [vmem:[%s238 + $0x50] sm:$0xff] %v675
      %900 = vst [vmem:[%s238 + $0x58] sm:$0xff] %v678
      %901 = vst [vmem:[%s238 + $0x60] sm:$0xff] %v683
      %902 = vst [vmem:[%s238 + $0x68] sm:$0xff] %v686
      %903 = vst [vmem:[%s238 + $0x70] sm:$0xff] %v691
      %904 = vst [vmem:[%s238 + $0x78] sm:$0xff] %v694
      %905 = vst [vmem:[%s238 + $0x80] sm:$0xff] %v699
      %906 = vst [vmem:[%s238 + $0x88] sm:$0xff] %v702
      %907 = vst [vmem:[%s238 + $0x90] sm:$0xff] %v707
      %908 = vst [vmem:[%s238 + $0x98] sm:$0xff] %v710
      %909 = vst [vmem:[%s238 + $0xa0] sm:$0xff] %v715
      %910 = vst [vmem:[%s238 + $0xa8] sm:$0xff] %v718
      %911 = vst [vmem:[%s238 + $0xb0] sm:$0xff] %v723
      %912 = vst [vmem:[%s238 + $0xb8] sm:$0xff] %v726
      %913 = vst [vmem:[%s238 + $0xc0] sm:$0xff] %v731
      %914 = vst [vmem:[%s238 + $0xc8] sm:$0xff] %v734
      %915 = vst [vmem:[%s238 + $0xd0] sm:$0xff] %v739
      %916 = vst [vmem:[%s238 + $0xd8] sm:$0xff] %v742
      %917 = vst [vmem:[%s238 + $0xe0] sm:$0xff] %v747
      %918 = vst [vmem:[%s238 + $0xe8] sm:$0xff] %v750
      %919 = vst [vmem:[%s238 + $0xf0] sm:$0xff] %v755
      %920 = vst [vmem:[%s238 + $0xf8] sm:$0xff] %v758
      %921 = vst [vmem:[%s238 + $0x100] sm:$0xff] %v763
      %922 = vst [vmem:[%s238 + $0x108] sm:$0xff] %v766
      %923 = vst [vmem:[%s238 + $0x110] sm:$0xff] %v771
      %924 = vst [vmem:[%s238 + $0x118] sm:$0xff] %v774
      %925 = vst [vmem:[%s238 + $0x120] sm:$0xff] %v779
      %926 = vst [vmem:[%s238 + $0x128] sm:$0xff] %v782
      %927 = vst [vmem:[%s238 + $0x130] sm:$0xff] %v787
      %928 = vst [vmem:[%s238 + $0x138] sm:$0xff] %v790
      %929 = vst [vmem:[%s238 + $0x140] sm:$0xff] %v795
      %930 = vst [vmem:[%s238 + $0x148] sm:$0xff] %v798
      %931 = vst [vmem:[%s238 + $0x150] sm:$0xff] %v803
      %932 = vst [vmem:[%s238 + $0x158] sm:$0xff] %v806
      %933 = vst [vmem:[%s238 + $0x160] sm:$0xff] %v811
      %934 = vst [vmem:[%s238 + $0x168] sm:$0xff] %v814
      %935 = vst [vmem:[%s238 + $0x170] sm:$0xff] %v819
      %936 = vst [vmem:[%s238 + $0x178] sm:$0xff] %v822
      %937 = vst [vmem:[%s238 + $0x180] sm:$0xff] %v827
      %938 = vst [vmem:[%s238 + $0x188] sm:$0xff] %v830
      %939 = vst [vmem:[%s238 + $0x190] sm:$0xff] %v835
      %940 = vst [vmem:[%s238 + $0x198] sm:$0xff] %v838
      %941 = vst [vmem:[%s238 + $0x1a0] sm:$0xff] %v843
      %942 = vst [vmem:[%s238 + $0x1a8] sm:$0xff] %v846
      %943 = vst [vmem:[%s238 + $0x1b0] sm:$0xff] %v851
      %944 = vst [vmem:[%s238 + $0x1b8] sm:$0xff] %v854
      %945 = vst [vmem:[%s238 + $0x1c0] sm:$0xff] %v859
      %946 = vst [vmem:[%s238 + $0x1c8] sm:$0xff] %v862
      %947 = vst [vmem:[%s238 + $0x1d0] sm:$0xff] %v867
      %948 = vst [vmem:[%s238 + $0x1d8] sm:$0xff] %v870
      %949 = vst [vmem:[%s238 + $0x1e0] sm:$0xff] %v875
      %950 = vst [vmem:[%s238 + $0x1e8] sm:$0xff] %v878
      %951 = vst [vmem:[%s238 + $0x1f0] sm:$0xff] %v883
      %952 = vst [vmem:[%s238 + $0x1f8] sm:$0xff] %v886
      %v953 = vadd.f32 %v635, %v638
      %v954 = vadd.f32 %v953, %v643
      %v955 = vadd.f32 %v954, %v646
      %v956 = vadd.f32 %v955, %v651
      %v957 = vadd.f32 %v956, %v654
      %v958 = vadd.f32 %v957, %v659
      %v959 = vadd.f32 %v958, %v662
      %v960 = vadd.f32 %v959, %v667
      %v961 = vadd.f32 %v960, %v670
      %v962 = vadd.f32 %v961, %v675
      %v963 = vadd.f32 %v962, %v678
      %v964 = vadd.f32 %v963, %v683
      %v965 = vadd.f32 %v964, %v686
      %v966 = vadd.f32 %v965, %v691
      %v967 = vadd.f32 %v966, %v694
      %v968 = vadd.f32 %v967, %v699
      %v969 = vadd.f32 %v968, %v702
      %v970 = vadd.f32 %v969, %v707
      %v971 = vadd.f32 %v970, %v710
      %v972 = vadd.f32 %v971, %v715
      %v973 = vadd.f32 %v972, %v718
      %v974 = vadd.f32 %v973, %v723
      %v975 = vadd.f32 %v974, %v726
      %v976 = vadd.f32 %v975, %v731
      %v977 = vadd.f32 %v976, %v734
      %v978 = vadd.f32 %v977, %v739
      %v979 = vadd.f32 %v978, %v742
      %v980 = vadd.f32 %v979, %v747
      %v981 = vadd.f32 %v980, %v750
      %v982 = vadd.f32 %v981, %v755
      %v983 = vadd.f32 %v982, %v758
      %v984 = vadd.f32 %v983, %v763
      %v985 = vadd.f32 %v984, %v766
      %v986 = vadd.f32 %v985, %v771
      %v987 = vadd.f32 %v986, %v774
      %v988 = vadd.f32 %v987, %v779
      %v989 = vadd.f32 %v988, %v782
      %v990 = vadd.f32 %v989, %v787
      %v991 = vadd.f32 %v990, %v790
      %v992 = vadd.f32 %v991, %v795
      %v993 = vadd.f32 %v992, %v798
      %v994 = vadd.f32 %v993, %v803
      %v995 = vadd.f32 %v994, %v806
      %v996 = vadd.f32 %v995, %v811
      %v997 = vadd.f32 %v996, %v814
      %v998 = vadd.f32 %v997, %v819
      %v999 = vadd.f32 %v998, %v822
      %v1000 = vadd.f32 %v999, %v827
      %v1001 = vadd.f32 %v1000, %v830
      %v1002 = vadd.f32 %v1001, %v835
      %v1003 = vadd.f32 %v1002, %v838
      %v1004 = vadd.f32 %v1003, %v843
      %v1005 = vadd.f32 %v1004, %v846
      %v1006 = vadd.f32 %v1005, %v851
      %v1007 = vadd.f32 %v1006, %v854
      %v1008 = vadd.f32 %v1007, %v859
      %v1009 = vadd.f32 %v1008, %v862
      %v1010 = vadd.f32 %v1009, %v867
      %v1011 = vadd.f32 %v1010, %v870
      %v1012 = vadd.f32 %v1011, %v875
      %v1013 = vadd.f32 %v1012, %v878
      %v1014 = vadd.f32 %v1013, %v883
      %v1015 = vadd.f32 %v1014, %v886
      %v1016 = vrot.slane %v1015, 4
      %v1017 = vadd.f32 %v1015, %v1016
      %v1018 = vrot.slane %v1017, 2
      %v1019 = vadd.f32 %v1017, %v1018
      %v1020 = vrot.slane %v1019, 1
      %v1021 = vadd.f32 %v1019, %v1020
      %v1022 = vmul.f32 %v635, %v635
      %v1023 = vmul.f32 %v638, %v638
      %v1024 = vmul.f32 %v643, %v643
      %v1025 = vmul.f32 %v646, %v646
      %v1026 = vmul.f32 %v651, %v651
      %v1027 = vmul.f32 %v654, %v654
      %v1028 = vmul.f32 %v659, %v659
      %v1029 = vmul.f32 %v662, %v662
      %v1030 = vmul.f32 %v667, %v667
      %v1031 = vmul.f32 %v670, %v670
      %v1032 = vmul.f32 %v675, %v675
      %v1033 = vmul.f32 %v678, %v678
      %v1034 = vmul.f32 %v683, %v683
      %v1035 = vmul.f32 %v686, %v686
      %v1036 = vmul.f32 %v691, %v691
      %v1037 = vmul.f32 %v694, %v694
      %v1038 = vmul.f32 %v699, %v699
      %v1039 = vmul.f32 %v702, %v702
      %v1040 = vmul.f32 %v707, %v707
      %v1041 = vmul.f32 %v710, %v710
      %v1042 = vmul.f32 %v715, %v715
      %v1043 = vmul.f32 %v718, %v718
      %v1044 = vmul.f32 %v723, %v723
      %v1045 = vmul.f32 %v726, %v726
      %v1046 = vmul.f32 %v731, %v731
      %v1047 = vmul.f32 %v734, %v734
      %v1048 = vmul.f32 %v739, %v739
      %v1049 = vmul.f32 %v742, %v742
      %v1050 = vmul.f32 %v747, %v747
      %v1051 = vmul.f32 %v750, %v750
      %v1052 = vmul.f32 %v755, %v755
      %v1053 = vmul.f32 %v758, %v758
      %v1054 = vmul.f32 %v763, %v763
      %v1055 = vmul.f32 %v766, %v766
      %v1056 = vmul.f32 %v771, %v771
      %v1057 = vmul.f32 %v774, %v774
      %v1058 = vmul.f32 %v779, %v779
      %v1059 = vmul.f32 %v782, %v782
      %v1060 = vmul.f32 %v787, %v787
      %v1061 = vmul.f32 %v790, %v790
      %v1062 = vmul.f32 %v795, %v795
      %v1063 = vmul.f32 %v798, %v798
      %v1064 = vmul.f32 %v803, %v803
      %v1065 = vmul.f32 %v806, %v806
      %v1066 = vmul.f32 %v811, %v811
      %v1067 = vmul.f32 %v814, %v814
      %v1068 = vmul.f32 %v819, %v819
      %v1069 = vmul.f32 %v822, %v822
      %v1070 = vmul.f32 %v827, %v827
      %v1071 = vmul.f32 %v830, %v830
      %v1072 = vmul.f32 %v835, %v835
      %v1073 = vmul.f32 %v838, %v838
      %v1074 = vmul.f32 %v843, %v843
      %v1075 = vmul.f32 %v846, %v846
      %v1076 = vmul.f32 %v851, %v851
      %v1077 = vmul.f32 %v854, %v854
      %v1078 = vmul.f32 %v859, %v859
      %v1079 = vmul.f32 %v862, %v862
      %v1080 = vmul.f32 %v867, %v867
      %v1081 = vmul.f32 %v870, %v870
      %v1082 = vmul.f32 %v875, %v875
      %v1083 = vmul.f32 %v878, %v878
      %v1084 = vmul.f32 %v883, %v883
      %v1085 = vmul.f32 %v886, %v886
      %v1086 = vadd.f32 %v1022, %v1023
      %v1087 = vadd.f32 %v1086, %v1024
      %v1088 = vadd.f32 %v1087, %v1025
      %v1089 = vadd.f32 %v1088, %v1026
      %v1090 = vadd.f32 %v1089, %v1027
      %v1091 = vadd.f32 %v1090, %v1028
      %v1092 = vadd.f32 %v1091, %v1029
      %v1093 = vadd.f32 %v1092, %v1030
      %v1094 = vadd.f32 %v1093, %v1031
      %v1095 = vadd.f32 %v1094, %v1032
      %v1096 = vadd.f32 %v1095, %v1033
      %v1097 = vadd.f32 %v1096, %v1034
      %v1098 = vadd.f32 %v1097, %v1035
      %v1099 = vadd.f32 %v1098, %v1036
      %v1100 = vadd.f32 %v1099, %v1037
      %v1101 = vadd.f32 %v1100, %v1038
      %v1102 = vadd.f32 %v1101, %v1039
      %v1103 = vadd.f32 %v1102, %v1040
      %v1104 = vadd.f32 %v1103, %v1041
      %v1105 = vadd.f32 %v1104, %v1042
      %v1106 = vadd.f32 %v1105, %v1043
      %v1107 = vadd.f32 %v1106, %v1044
      %v1108 = vadd.f32 %v1107, %v1045
      %v1109 = vadd.f32 %v1108, %v1046
      %v1110 = vadd.f32 %v1109, %v1047
      %v1111 = vadd.f32 %v1110, %v1048
      %v1112 = vadd.f32 %v1111, %v1049
      %v1113 = vadd.f32 %v1112, %v1050
      %v1114 = vadd.f32 %v1113, %v1051
      %v1115 = vadd.f32 %v1114, %v1052
      %v1116 = vadd.f32 %v1115, %v1053
      %v1117 = vadd.f32 %v1116, %v1054
      %v1118 = vadd.f32 %v1117, %v1055
      %v1119 = vadd.f32 %v1118, %v1056
      %v1120 = vadd.f32 %v1119, %v1057
      %v1121 = vadd.f32 %v1120, %v1058
      %v1122 = vadd.f32 %v1121, %v1059
      %v1123 = vadd.f32 %v1122, %v1060
      %v1124 = vadd.f32 %v1123, %v1061
      %v1125 = vadd.f32 %v1124, %v1062
      %v1126 = vadd.f32 %v1125, %v1063
      %v1127 = vadd.f32 %v1126, %v1064
      %v1128 = vadd.f32 %v1127, %v1065
      %v1129 = vadd.f32 %v1128, %v1066
      %v1130 = vadd.f32 %v1129, %v1067
      %v1131 = vadd.f32 %v1130, %v1068
      %v1132 = vadd.f32 %v1131, %v1069
      %v1133 = vadd.f32 %v1132, %v1070
      %v1134 = vadd.f32 %v1133, %v1071
      %v1135 = vadd.f32 %v1134, %v1072
      %v1136 = vadd.f32 %v1135, %v1073
      %v1137 = vadd.f32 %v1136, %v1074
      %v1138 = vadd.f32 %v1137, %v1075
      %v1139 = vadd.f32 %v1138, %v1076
      %v1140 = vadd.f32 %v1139, %v1077
      %v1141 = vadd.f32 %v1140, %v1078
      %v1142 = vadd.f32 %v1141, %v1079
      %v1143 = vadd.f32 %v1142, %v1080
      %v1144 = vadd.f32 %v1143, %v1081
      %v1145 = vadd.f32 %v1144, %v1082
      %v1146 = vadd.f32 %v1145, %v1083
      %v1147 = vadd.f32 %v1146, %v1084
      %v1148 = vadd.f32 %v1147, %v1085
      %v1149 = vrot.slane %v1148, 4
      %v1150 = vadd.f32 %v1148, %v1149
      %v1151 = vrot.slane %v1150, 2
      %v1152 = vadd.f32 %v1150, %v1151
      %v1153 = vrot.slane %v1152, 1
      %v1154 = vadd.f32 %v1152, %v1153
      %vm1155 = vcmask 1040384
      %v1156 = vsel %vm1155, %v1021, %v1154
      %1157 = vst [vmem:[%s244] sm:$0x3] %v1156
      %s1158 = smul.u32 64, %s20
      %p1159 = scmp.lt.s32.totalorder %s19, 3
      %s1160 = scalar_select %p1159, %s19, 3
      %p1161 = scmp.lt.s32.totalorder %s1158, 63
      %s1162 = scalar_select %p1161, %s1158, 63
      %s1163 = smul.addr %s1160, 64
      %s1164 = sadd.s32 %s1162, %s1163
      %s1165 = smul.addr %s1164, 8
      %s1166 = scalar_lea.vmem %s2, %s1165
      %s1167 = sadd.s32 %s19, %s20
      %p1168 = scmp.lt.s32.totalorder %s1167, 3
      %s1169 = scalar_select %p1168, %s1167, 3
      %s1170 = smul.addr %s1169, 2
      %s1171 = scalar_lea.vmem %s3, %s1170
      // Predicated region
      $region29: #{generator_forward.11} parent=27 // pred_check
        %p1172 = pneg %p101
      $region30: #{generator_forward.11} parent=27 // pred_check_branch
        %1174 = sbr.rel (%p1172) target = $region32
      $region31: #{generator_forward.11} parent=27 // pred_region
        %s1175 = smul.u32 64, %s20
      $region32: #{generator_forward.11} parent=27 // pred_fallthru
        _
      // Predicated region
      $region33: #{generator_forward.11} parent=27 // pred_check
        %p1176 = pneg %p129
      $region34: #{generator_forward.11} parent=27 // pred_check_branch
        %1178 = sbr.rel (%p1176) target = $region36
      $region35: #{generator_forward.11} parent=27 // pred_region
        %s1179 = sadd.s32 %s19, %s20
      $region36: #{generator_forward.11} parent=27 // pred_fallthru
        _
    $region28: #{generator_forward.11} parent=5 // pred_fallthru
      _
    %p1180 = scmp.le.s32.totalorder 2, %s10
    // Predicated region
    $region37: #{generator_forward.11} parent=5 // pred_check
      %p1181 = pneg %p1180
    $region38: #{generator_forward.11} parent=5 // pred_check_branch
      %1183 = sbr.rel (%p1181) target = $region40
    $region39: #{generator_forward.11} parent=5 // pred_region
      %s1184 = ssub.s32 %s10, 2
      // Predicated region
      $region41: #{generator_forward.11} parent=39 // pred_check
        %p1185 = pneg %p107
      $region42: #{generator_forward.11} parent=39 // pred_check_branch
        %1187 = sbr.rel (%p1185) target = $region44
      $region43: #{generator_forward.11} parent=39 // pred_region
        %s1188 = smul.u32 64, %s22
        %p1189 = scmp.lt.s32.totalorder %s21, 3
        %s1190 = scalar_select %p1189, %s21, 3
        %p1191 = scmp.lt.s32.totalorder %s1188, 63
        %s1192 = scalar_select %p1191, %s1188, 63
        %s1193 = smul.addr %s1190, 64
        %s1194 = sadd.s32 %s1192, %s1193
        %s1195 = smul.addr %s1194, 8
        %s1196 = scalar_lea.vmem %s2, %s1195
      $region44: #{generator_forward.11} parent=39 // pred_fallthru
        _
      // Predicated region
      $region45: #{generator_forward.11} parent=39 // pred_check
        %p1197 = pneg %p135
      $region46: #{generator_forward.11} parent=39 // pred_check_branch
        %1199 = sbr.rel (%p1197) target = $region48
      $region47: #{generator_forward.11} parent=39 // pred_region
        %s1200 = sadd.s32 %s21, %s22
        %p1201 = scmp.lt.s32.totalorder %s1200, 3
        %s1202 = scalar_select %p1201, %s1200, 3
        %s1203 = smul.addr %s1202, 2
        %s1204 = scalar_lea.vmem %s3, %s1203
      $region48: #{generator_forward.11} parent=39 // pred_fallthru
        _
    $region40: #{generator_forward.11} parent=5 // pred_fallthru
      _
  $region6: #{generator_forward.11} parent=0 // loop_footer
    %s14 = sadd.s32 1, %s10
  $region7: #{generator_forward.11} parent=0 // loop_footer_branch
    %9 = sbr.rel target = $region3
  $region8: #{generator_forward.11} parent=0 // loop_exit
    _

// kernel: generator_forward.12
$region0: #{generator_forward.12}
  #allocation0 [shape = 'u32[]', space=smem, size = 0x4, offset = 0x4, fixed_abs, tag = 'smem constant byte address 0x4 - core index']
  #allocation1 [shape = 'u32[144,128]{1,0:T(1,128)}', space=vmem, size = 0x12000, scoped, tag = 'internal scratch']
  %s0 = inlined_call_operand.vmem [shape: f32[4,512,128], index: 0, kind: input, shape index: {}]
  %s1 = inlined_call_operand.vmem [shape: f32[1,128], index: 1, kind: input, shape index: {}]
  %s2 = inlined_call_operand.vmem [shape: f32[1,128], index: 2, kind: input, shape index: {}]
  %s3 = inlined_call_operand.vmem [shape: f32[4,512,128], index: 3, kind: output, shape index: {}]
  %s4 = sld [smem:[#allocation0]]
  $region45: #{generator_forward.12} parent=0
    _
  %s6 = ssub.s32 1, %s4
  %s7 = scalar_select 0, %s6, %s4
  loop: start=0, step=1, limit=6
  $region2: #{generator_forward.12} parent=0 // loop_pre_header
    _
  $region3: #{generator_forward.12} parent=0 // loop_header
    %s9 = sphi 0, %s13
    %p10 = scmp.ge.s32.totalorder %s9, 6
    %s16 = sphi 0, %s28
    %s17 = sphi 0, %s24
    %s18 = sphi 0, %s16
    %s19 = sphi 0, %s17
    %s20 = sphi 0, %s18
    %s21 = sphi 0, %s19
    %s33 = sphi 0, %s35
    %s36 = sphi 0, %s33
    %s37 = sphi 0, %s36
    %s53 = sphi 0, %s37
    %s57 = sphi 0, %s57
    %s59 = sphi 0, %s57
    %s60 = sphi 0, %s59
    %s74 = sphi 0, %s60
    %s78 = sphi 0, %s78
    %s80 = sphi 0, %s78
    %s81 = sphi 0, %s80
    %s95 = sphi 0, %s81
    %s103 = sphi 0, %s105
    %s106 = sphi 0, %s103
    %s107 = sphi 0, %s106
    %s123 = sphi 0, %s107
  $region4: #{generator_forward.12} parent=0 // loop_header_branch
    %12 = sbr.rel (%p10) target = $region8
  $region5: #{generator_forward.12} parent=0 // loop_body
    %s14 = ssub.s32 %s9, 1
    %s15 = ssub.s32 %s9, 2
    %s22 = sadd.s32 1, %s17
    %p23 = scmp.ge.s32.totalorder %s22, 1
    %s24 = scalar_select %p23, 0, %s22
    %s25 = sadd.s32 1, %s16
    %s26 = scalar_select %p23, %s25, %s16
    %p27 = scmp.ge.s32.totalorder %s26, 4
    %s28 = scalar_select %p27, 0, %s26
    %s29 = ssub.s32 %s16, %s28
    %s30 = ssub.s32 %s17, %s24
    %s31 = sor.u32 %s29, %s30
    %p32 = scmp.eq.s32.totalorder %s31, 0
    %s34 = sadd.s32 %s33, 1
    %s35 = scalar_select %p32, %s33, %s34
    %p38 = pneg %p32
    %p39 = scmp.eq.s32.totalorder %s9, 3
    %p40 = por %p38, %p39
    %p41 = scmp.ne.s32.totalorder %s33, %s36
    %p42 = scmp.eq.s32.totalorder %s9, 0
    %p43 = por %p41, %p42
    %p44 = scmp.ne.s32.totalorder %s33, %s36
    %p45 = scmp.eq.s32.totalorder %s14, 3
    %p46 = por %p44, %p45
    %p47 = scmp.ne.s32.totalorder %s36, %s37
    %p48 = scmp.eq.s32.totalorder %s14, 0
    %p49 = por %p47, %p48
    %p50 = scmp.ne.s32.totalorder %s36, %s37
    %p51 = scmp.eq.s32.totalorder %s15, 3
    %p52 = por %p50, %p51
    %p54 = scmp.ne.s32.totalorder %s37, %s53
    %p55 = scmp.eq.s32.totalorder %s15, 0
    %p56 = por %p54, %p55
    %s58 = sadd.s32 %s57, 1
    %p61 = scmp.eq.s32.totalorder %s9, 3
    %p62 = scmp.ne.s32.totalorder %s57, %s59
    %p63 = scmp.eq.s32.totalorder %s9, 0
    %p64 = por %p62, %p63
    %p65 = scmp.ne.s32.totalorder %s57, %s59
    %p66 = scmp.eq.s32.totalorder %s14, 3
    %p67 = por %p65, %p66
    %p68 = scmp.ne.s32.totalorder %s59, %s60
    %p69 = scmp.eq.s32.totalorder %s14, 0
    %p70 = por %p68, %p69
    %p71 = scmp.ne.s32.totalorder %s59, %s60
    %p72 = scmp.eq.s32.totalorder %s15, 3
    %p73 = por %p71, %p72
    %p75 = scmp.ne.s32.totalorder %s60, %s74
    %p76 = scmp.eq.s32.totalorder %s15, 0
    %p77 = por %p75, %p76
    %s79 = sadd.s32 %s78, 1
    %p82 = scmp.eq.s32.totalorder %s9, 3
    %p83 = scmp.ne.s32.totalorder %s78, %s80
    %p84 = scmp.eq.s32.totalorder %s9, 0
    %p85 = por %p83, %p84
    %p86 = scmp.ne.s32.totalorder %s78, %s80
    %p87 = scmp.eq.s32.totalorder %s14, 3
    %p88 = por %p86, %p87
    %p89 = scmp.ne.s32.totalorder %s80, %s81
    %p90 = scmp.eq.s32.totalorder %s14, 0
    %p91 = por %p89, %p90
    %p92 = scmp.ne.s32.totalorder %s80, %s81
    %p93 = scmp.eq.s32.totalorder %s15, 3
    %p94 = por %p92, %p93
    %p96 = scmp.ne.s32.totalorder %s81, %s95
    %p97 = scmp.eq.s32.totalorder %s15, 0
    %p98 = por %p96, %p97
    %s99 = ssub.s32 %s16, %s28
    %s100 = ssub.s32 %s17, %s24
    %s101 = sor.u32 %s99, %s100
    %p102 = scmp.eq.s32.totalorder %s101, 0
    %s104 = sadd.s32 %s103, 1
    %s105 = scalar_select %p102, %s103, %s104
    %p108 = pneg %p102
    %p109 = scmp.eq.s32.totalorder %s9, 3
    %p110 = por %p108, %p109
    %p111 = scmp.ne.s32.totalorder %s103, %s106
    %p112 = scmp.eq.s32.totalorder %s9, 0
    %p113 = por %p111, %p112
    %p114 = scmp.ne.s32.totalorder %s103, %s106
    %p115 = scmp.eq.s32.totalorder %s14, 3
    %p116 = por %p114, %p115
    %p117 = scmp.ne.s32.totalorder %s106, %s107
    %p118 = scmp.eq.s32.totalorder %s14, 0
    %p119 = por %p117, %p118
    %p120 = scmp.ne.s32.totalorder %s106, %s107
    %p121 = scmp.eq.s32.totalorder %s15, 3
    %p122 = por %p120, %p121
    %p124 = scmp.ne.s32.totalorder %s107, %s123
    %p125 = scmp.eq.s32.totalorder %s15, 0
    %p126 = por %p124, %p125
    %p127 = scmp.le.s32.totalorder 1, %s9
    %p128 = scmp.lt.s32.totalorder %s9, 5
    %p129 = pnand %p127, %p128
    %p130 = pneg %p129
    // Predicated region
    $region9: #{generator_forward.12} parent=5 // pred_check
      _
    $region10: #{generator_forward.12} parent=5 // pred_check_branch
      %132 = sbr.rel (%p129) target = $region12
    $region11: #{generator_forward.12} parent=5 // pred_region
      %s133 = ssub.s32 %s9, 1
      // Predicated region
      $region13: #{generator_forward.12} parent=11 // pred_check
        %p134 = pneg %p70
      $region14: #{generator_forward.12} parent=11 // pred_check_branch
        %136 = sbr.rel (%p134) target = $region16
      $region15: #{generator_forward.12} parent=11 // pred_region
        _
      $region16: #{generator_forward.12} parent=11 // pred_fallthru
        _
      // Predicated region
      $region17: #{generator_forward.12} parent=11 // pred_check
        %p137 = pneg %p91
      $region18: #{generator_forward.12} parent=11 // pred_check_branch
        %139 = sbr.rel (%p137) target = $region20
      $region19: #{generator_forward.12} parent=11 // pred_region
        _
      $region20: #{generator_forward.12} parent=11 // pred_fallthru
        _
    $region12: #{generator_forward.12} parent=5 // pred_fallthru
      _
    %p140 = scmp.lt.s32.totalorder %s9, 4
    // Predicated region
    $region21: #{generator_forward.12} parent=5 // pred_check
      %p141 = pneg %p140
    $region22: #{generator_forward.12} parent=5 // pred_check_branch
      %143 = sbr.rel (%p141) target = $region24
    $region23: #{generator_forward.12} parent=5 // pred_region
      // Predicated region
      $region25: #{generator_forward.12} parent=23 // pred_check
        %p144 = pneg %p43
      $region26: #{generator_forward.12} parent=23 // pred_check_branch
        %146 = sbr.rel (%p144) target = $region28
      $region27: #{generator_forward.12} parent=23 // pred_region
        %s147 = smul.u32 64, %s17
        %p148 = scmp.lt.s32.totalorder %s16, 3
        %s149 = scalar_select %p148, %s16, 3
        %p150 = scmp.lt.s32.totalorder %s147, 63
        %s151 = scalar_select %p150, %s147, 63
        %s152 = smul.addr %s149, 64
        %s153 = sadd.s32 %s151, %s152
        %s154 = smul.addr %s153, 8
        %s155 = scalar_lea.vmem %s0, %s154
        %s156 = smul.u32 64, %s17
      $region28: #{generator_forward.12} parent=23 // pred_fallthru
        _
    $region24: #{generator_forward.12} parent=5 // pred_fallthru
      _
    %p157 = scmp.le.s32.totalorder 1, %s9
    %p158 = scmp.lt.s32.totalorder %s9, 5
    %p159 = pnand %p157, %p158
    %p160 = pneg %p159
    // Predicated region
    $region29: #{generator_forward.12} parent=5 // pred_check
      _
    $region30: #{generator_forward.12} parent=5 // pred_check_branch
      %162 = sbr.rel (%p159) target = $region32
    $region31: #{generator_forward.12} parent=5 // pred_region
      %s163 = ssub.s32 %s9, 1
      %s164 = smul.u32 64, %s19
      %p165 = scmp.lt.s32.totalorder %s18, 3
      %s166 = scalar_select %p165, %s18, 3
      %p167 = scmp.lt.s32.totalorder %s164, 63
      %s168 = scalar_select %p167, %s164, 63
      %s169 = smul.addr %s166, 64
      %s170 = sadd.s32 %s168, %s169
      %s171 = smul.addr %s170, 8
      %s172 = scalar_lea.vmem %s0, %s171
      %p173 = pneg %p49
      %p174 = pneg %p46
      %p175 = pneg %p70
      %p176 = pneg %p67
      %p177 = pneg %p91
      %p178 = pneg %p88
      %p179 = pneg %p119
      %p180 = pneg %p116
      %s181 = smul.u32 64, %s19
      %p182 = scmp.lt.s32.totalorder %s18, 3
      %s183 = scalar_select %p182, %s18, 3
      %p184 = scmp.lt.s32.totalorder %s181, 63
      %s185 = scalar_select %p184, %s181, 63
      %s186 = smul.addr %s183, 64
      %s187 = sadd.s32 %s185, %s186
      %s188 = smul.addr %s187, 8
      %s189 = scalar_lea.vmem %s3, %s188
      %s190 = smul.u32 64, %s19
      %p191 = scmp.lt.s32.totalorder %s18, 3
      %s192 = scalar_select %p191, %s18, 3
      %p193 = scmp.lt.s32.totalorder %s190, 63
      %s194 = scalar_select %p193, %s190, 63
      %s195 = smul.addr %s192, 64
      %s196 = sadd.s32 %s194, %s195
      %s197 = smul.addr %s196, 8
      %s198 = scalar_lea.vmem %s0, %s197
      %s199 = smul.u32 64, %s19
      %s200 = smul.u32 64, %s19
      %p201 = scmp.lt.s32.totalorder %s18, 3
      %s202 = scalar_select %p201, %s18, 3
      %p203 = scmp.lt.s32.totalorder %s200, 63
      %s204 = scalar_select %p203, %s200, 63
      %s205 = smul.addr %s202, 64
      %s206 = sadd.s32 %s204, %s205
      %s207 = smul.addr %s206, 8
      %s208 = scalar_lea.vmem %s3, %s207
      %s209 = smul.u32 64, %s19
      %v210 = vld [vmem:[%s198] sm:$0xff]
      %v211 = vld [vmem:[%s198 + $0x8] sm:$0xff]
      %v212 = vld [vmem:[%s198 + $0x10] sm:$0xff]
      %v213 = vld [vmem:[%s198 + $0x18] sm:$0xff]
      %v214 = vld [vmem:[%s198 + $0x20] sm:$0xff]
      %v215 = vld [vmem:[%s198 + $0x28] sm:$0xff]
      %v216 = vld [vmem:[%s198 + $0x30] sm:$0xff]
      %v217 = vld [vmem:[%s198 + $0x38] sm:$0xff]
      %v218 = vld [vmem:[%s198 + $0x40] sm:$0xff]
      %v219 = vld [vmem:[%s198 + $0x48] sm:$0xff]
      %v220 = vld [vmem:[%s198 + $0x50] sm:$0xff]
      %v221 = vld [vmem:[%s198 + $0x58] sm:$0xff]
      %v222 = vld [vmem:[%s198 + $0x60] sm:$0xff]
      %v223 = vld [vmem:[%s198 + $0x68] sm:$0xff]
      %v224 = vld [vmem:[%s198 + $0x70] sm:$0xff]
      %v225 = vld [vmem:[%s198 + $0x78] sm:$0xff]
      %v226 = vld [vmem:[%s198 + $0x80] sm:$0xff]
      %v227 = vld [vmem:[%s198 + $0x88] sm:$0xff]
      %v228 = vld [vmem:[%s198 + $0x90] sm:$0xff]
      %v229 = vld [vmem:[%s198 + $0x98] sm:$0xff]
      %v230 = vld [vmem:[%s198 + $0xa0] sm:$0xff]
      %v231 = vld [vmem:[%s198 + $0xa8] sm:$0xff]
      %v232 = vld [vmem:[%s198 + $0xb0] sm:$0xff]
      %v233 = vld [vmem:[%s198 + $0xb8] sm:$0xff]
      %v234 = vld [vmem:[%s198 + $0xc0] sm:$0xff]
      %v235 = vld [vmem:[%s198 + $0xc8] sm:$0xff]
      %v236 = vld [vmem:[%s198 + $0xd0] sm:$0xff]
      %v237 = vld [vmem:[%s198 + $0xd8] sm:$0xff]
      %v238 = vld [vmem:[%s198 + $0xe0] sm:$0xff]
      %v239 = vld [vmem:[%s198 + $0xe8] sm:$0xff]
      %v240 = vld [vmem:[%s198 + $0xf0] sm:$0xff]
      %v241 = vld [vmem:[%s198 + $0xf8] sm:$0xff]
      %v242 = vld [vmem:[%s198 + $0x100] sm:$0xff]
      %v243 = vld [vmem:[%s198 + $0x108] sm:$0xff]
      %v244 = vld [vmem:[%s198 + $0x110] sm:$0xff]
      %v245 = vld [vmem:[%s198 + $0x118] sm:$0xff]
      %v246 = vld [vmem:[%s198 + $0x120] sm:$0xff]
      %v247 = vld [vmem:[%s198 + $0x128] sm:$0xff]
      %v248 = vld [vmem:[%s198 + $0x130] sm:$0xff]
      %v249 = vld [vmem:[%s198 + $0x138] sm:$0xff]
      %v250 = vld [vmem:[%s198 + $0x140] sm:$0xff]
      %v251 = vld [vmem:[%s198 + $0x148] sm:$0xff]
      %v252 = vld [vmem:[%s198 + $0x150] sm:$0xff]
      %v253 = vld [vmem:[%s198 + $0x158] sm:$0xff]
      %v254 = vld [vmem:[%s198 + $0x160] sm:$0xff]
      %v255 = vld [vmem:[%s198 + $0x168] sm:$0xff]
      %v256 = vld [vmem:[%s198 + $0x170] sm:$0xff]
      %v257 = vld [vmem:[%s198 + $0x178] sm:$0xff]
      %v258 = vld [vmem:[%s198 + $0x180] sm:$0xff]
      %v259 = vld [vmem:[%s198 + $0x188] sm:$0xff]
      %v260 = vld [vmem:[%s198 + $0x190] sm:$0xff]
      %v261 = vld [vmem:[%s198 + $0x198] sm:$0xff]
      %v262 = vld [vmem:[%s198 + $0x1a0] sm:$0xff]
      %v263 = vld [vmem:[%s198 + $0x1a8] sm:$0xff]
      %v264 = vld [vmem:[%s198 + $0x1b0] sm:$0xff]
      %v265 = vld [vmem:[%s198 + $0x1b8] sm:$0xff]
      %v266 = vld [vmem:[%s198 + $0x1c0] sm:$0xff]
      %v267 = vld [vmem:[%s198 + $0x1c8] sm:$0xff]
      %v268 = vld [vmem:[%s198 + $0x1d0] sm:$0xff]
      %v269 = vld [vmem:[%s198 + $0x1d8] sm:$0xff]
      %v270 = vld [vmem:[%s198 + $0x1e0] sm:$0xff]
      %v271 = vld [vmem:[%s198 + $0x1e8] sm:$0xff]
      %v272 = vld [vmem:[%s198 + $0x1f0] sm:$0xff]
      %v273 = vld [vmem:[%s198 + $0x1f8] sm:$0xff]
      %v274 = vld [vmem:[%s1] sm:$0x1]
      %v276 = vlaneseq
      %v277 = vshrl.u32 %v276, 7
      %v278 = vsub.s32 0, %v277
      %v279 = vrot.slane %v274, %v278
      %v281 = vmul.f32 %v210, %v279
      %v282 = vmul.f32 %v211, %v279
      %v283 = vmul.f32 %v212, %v279
      %v284 = vmul.f32 %v213, %v279
      %v285 = vmul.f32 %v214, %v279
      %v286 = vmul.f32 %v215, %v279
      %v287 = vmul.f32 %v216, %v279
      %v288 = vmul.f32 %v217, %v279
      %v289 = vmul.f32 %v218, %v279
      %v290 = vmul.f32 %v219, %v279
      %v291 = vmul.f32 %v220, %v279
      %v292 = vmul.f32 %v221, %v279
      %v293 = vmul.f32 %v222, %v279
      %v294 = vmul.f32 %v223, %v279
      %v295 = vmul.f32 %v224, %v279
      %v296 = vmul.f32 %v225, %v279
      %v297 = vmul.f32 %v226, %v279
      %v298 = vmul.f32 %v227, %v279
      %v299 = vmul.f32 %v228, %v279
      %v300 = vmul.f32 %v229, %v279
      %v301 = vmul.f32 %v230, %v279
      %v302 = vmul.f32 %v231, %v279
      %v303 = vmul.f32 %v232, %v279
      %v304 = vmul.f32 %v233, %v279
      %v305 = vmul.f32 %v234, %v279
      %v306 = vmul.f32 %v235, %v279
      %v307 = vmul.f32 %v236, %v279
      %v308 = vmul.f32 %v237, %v279
      %v309 = vmul.f32 %v238, %v279
      %v310 = vmul.f32 %v239, %v279
      %v311 = vmul.f32 %v240, %v279
      %v312 = vmul.f32 %v241, %v279
      %v313 = vmul.f32 %v242, %v279
      %v314 = vmul.f32 %v243, %v279
      %v315 = vmul.f32 %v244, %v279
      %v316 = vmul.f32 %v245, %v279
      %v317 = vmul.f32 %v246, %v279
      %v318 = vmul.f32 %v247, %v279
      %v319 = vmul.f32 %v248, %v279
      %v320 = vmul.f32 %v249, %v279
      %v321 = vmul.f32 %v250, %v279
      %v322 = vmul.f32 %v251, %v279
      %v323 = vmul.f32 %v252, %v279
      %v324 = vmul.f32 %v253, %v279
      %v325 = vmul.f32 %v254, %v279
      %v326 = vmul.f32 %v255, %v279
      %v327 = vmul.f32 %v256, %v279
      %v328 = vmul.f32 %v257, %v279
      %v329 = vmul.f32 %v258, %v279
      %v330 = vmul.f32 %v259, %v279
      %v331 = vmul.f32 %v260, %v279
      %v332 = vmul.f32 %v261, %v279
      %v333 = vmul.f32 %v262, %v279
      %v334 = vmul.f32 %v263, %v279
      %v335 = vmul.f32 %v264, %v279
      %v336 = vmul.f32 %v265, %v279
      %v337 = vmul.f32 %v266, %v279
      %v338 = vmul.f32 %v267, %v279
      %v339 = vmul.f32 %v268, %v279
      %v340 = vmul.f32 %v269, %v279
      %v341 = vmul.f32 %v270, %v279
      %v342 = vmul.f32 %v271, %v279
      %v343 = vmul.f32 %v272, %v279
      %v344 = vmul.f32 %v273, %v279
      %v345 = vld [vmem:[%s2] sm:$0x1]
      %v347 = vlaneseq
      %v348 = vshrl.u32 %v347, 7
      %v349 = vsub.s32 0, %v348
      %v350 = vrot.slane %v345, %v349
      %v352 = vadd.f32 %v281, %v350
      %v353 = vadd.f32 %v282, %v350
      %v354 = vadd.f32 %v283, %v350
      %v355 = vadd.f32 %v284, %v350
      %v356 = vadd.f32 %v285, %v350
      %v357 = vadd.f32 %v286, %v350
      %v358 = vadd.f32 %v287, %v350
      %v359 = vadd.f32 %v288, %v350
      %v360 = vadd.f32 %v289, %v350
      %v361 = vadd.f32 %v290, %v350
      %v362 = vadd.f32 %v291, %v350
      %v363 = vadd.f32 %v292, %v350
      %v364 = vadd.f32 %v293, %v350
      %v365 = vadd.f32 %v294, %v350
      %v366 = vadd.f32 %v295, %v350
      %v367 = vadd.f32 %v296, %v350
      %v368 = vadd.f32 %v297, %v350
      %v369 = vadd.f32 %v298, %v350
      %v370 = vadd.f32 %v299, %v350
      %v371 = vadd.f32 %v300, %v350
      %v372 = vadd.f32 %v301, %v350
      %v373 = vadd.f32 %v302, %v350
      %v374 = vadd.f32 %v303, %v350
      %v375 = vadd.f32 %v304, %v350
      %v376 = vadd.f32 %v305, %v350
      %v377 = vadd.f32 %v306, %v350
      %v378 = vadd.f32 %v307, %v350
      %v379 = vadd.f32 %v308, %v350
      %v380 = vadd.f32 %v309, %v350
      %v381 = vadd.f32 %v310, %v350
      %v382 = vadd.f32 %v311, %v350
      %v383 = vadd.f32 %v312, %v350
      %v384 = vadd.f32 %v313, %v350
      %v385 = vadd.f32 %v314, %v350
      %v386 = vadd.f32 %v315, %v350
      %v387 = vadd.f32 %v316, %v350
      %v388 = vadd.f32 %v317, %v350
      %v389 = vadd.f32 %v318, %v350
      %v390 = vadd.f32 %v319, %v350
      %v391 = vadd.f32 %v320, %v350
      %v392 = vadd.f32 %v321, %v350
      %v393 = vadd.f32 %v322, %v350
      %v394 = vadd.f32 %v323, %v350
      %v395 = vadd.f32 %v324, %v350
      %v396 = vadd.f32 %v325, %v350
      %v397 = vadd.f32 %v326, %v350
      %v398 = vadd.f32 %v327, %v350
      %v399 = vadd.f32 %v328, %v350
      %v400 = vadd.f32 %v329, %v350
      %v401 = vadd.f32 %v330, %v350
      %v402 = vadd.f32 %v331, %v350
      %v403 = vadd.f32 %v332, %v350
      %v404 = vadd.f32 %v333, %v350
      %v405 = vadd.f32 %v334, %v350
      %v406 = vadd.f32 %v335, %v350
      %v407 = vadd.f32 %v336, %v350
      %v408 = vadd.f32 %v337, %v350
      %v409 = vadd.f32 %v338, %v350
      %v410 = vadd.f32 %v339, %v350
      %v411 = vadd.f32 %v340, %v350
      %v412 = vadd.f32 %v341, %v350
      %v413 = vadd.f32 %v342, %v350
      %v414 = vadd.f32 %v343, %v350
      %v415 = vadd.f32 %v344, %v350
      %v416 = vmax.f32 %v352, 0.0
      %v417 = vmax.f32 %v353, 0.0
      %v418 = vmax.f32 %v354, 0.0
      %v419 = vmax.f32 %v355, 0.0
      %v420 = vmax.f32 %v356, 0.0
      %v421 = vmax.f32 %v357, 0.0
      %v422 = vmax.f32 %v358, 0.0
      %v423 = vmax.f32 %v359, 0.0
      %v424 = vmax.f32 %v360, 0.0
      %v425 = vmax.f32 %v361, 0.0
      %v426 = vmax.f32 %v362, 0.0
      %v427 = vmax.f32 %v363, 0.0
      %v428 = vmax.f32 %v364, 0.0
      %v429 = vmax.f32 %v365, 0.0
      %v430 = vmax.f32 %v366, 0.0
      %v431 = vmax.f32 %v367, 0.0
      %v432 = vmax.f32 %v368, 0.0
      %v433 = vmax.f32 %v369, 0.0
      %v434 = vmax.f32 %v370, 0.0
      %v435 = vmax.f32 %v371, 0.0
      %v436 = vmax.f32 %v372, 0.0
      %v437 = vmax.f32 %v373, 0.0
      %v438 = vmax.f32 %v374, 0.0
      %v439 = vmax.f32 %v375, 0.0
      %v440 = vmax.f32 %v376, 0.0
      %v441 = vmax.f32 %v377, 0.0
      %v442 = vmax.f32 %v378, 0.0
      %v443 = vmax.f32 %v379, 0.0
      %v444 = vmax.f32 %v380, 0.0
      %v445 = vmax.f32 %v381, 0.0
      %v446 = vmax.f32 %v382, 0.0
      %v447 = vmax.f32 %v383, 0.0
      %v448 = vmax.f32 %v384, 0.0
      %v449 = vmax.f32 %v385, 0.0
      %v450 = vmax.f32 %v386, 0.0
      %v451 = vmax.f32 %v387, 0.0
      %v452 = vmax.f32 %v388, 0.0
      %v453 = vmax.f32 %v389, 0.0
      %v454 = vmax.f32 %v390, 0.0
      %v455 = vmax.f32 %v391, 0.0
      %v456 = vmax.f32 %v392, 0.0
      %v457 = vmax.f32 %v393, 0.0
      %v458 = vmax.f32 %v394, 0.0
      %v459 = vmax.f32 %v395, 0.0
      %v460 = vmax.f32 %v396, 0.0
      %v461 = vmax.f32 %v397, 0.0
      %v462 = vmax.f32 %v398, 0.0
      %v463 = vmax.f32 %v399, 0.0
      %v464 = vmax.f32 %v400, 0.0
      %v465 = vmax.f32 %v401, 0.0
      %v466 = vmax.f32 %v402, 0.0
      %v467 = vmax.f32 %v403, 0.0
      %v468 = vmax.f32 %v404, 0.0
      %v469 = vmax.f32 %v405, 0.0
      %v470 = vmax.f32 %v406, 0.0
      %v471 = vmax.f32 %v407, 0.0
      %v472 = vmax.f32 %v408, 0.0
      %v473 = vmax.f32 %v409, 0.0
      %v474 = vmax.f32 %v410, 0.0
      %v475 = vmax.f32 %v411, 0.0
      %v476 = vmax.f32 %v412, 0.0
      %v477 = vmax.f32 %v413, 0.0
      %v478 = vmax.f32 %v414, 0.0
      %v479 = vmax.f32 %v415, 0.0
      %480 = vst [vmem:[%s208] sm:$0xff] %v416
      %481 = vst [vmem:[%s208 + $0x8] sm:$0xff] %v417
      %482 = vst [vmem:[%s208 + $0x10] sm:$0xff] %v418
      %483 = vst [vmem:[%s208 + $0x18] sm:$0xff] %v419
      %484 = vst [vmem:[%s208 + $0x20] sm:$0xff] %v420
      %485 = vst [vmem:[%s208 + $0x28] sm:$0xff] %v421
      %486 = vst [vmem:[%s208 + $0x30] sm:$0xff] %v422
      %487 = vst [vmem:[%s208 + $0x38] sm:$0xff] %v423
      %488 = vst [vmem:[%s208 + $0x40] sm:$0xff] %v424
      %489 = vst [vmem:[%s208 + $0x48] sm:$0xff] %v425
      %490 = vst [vmem:[%s208 + $0x50] sm:$0xff] %v426
      %491 = vst [vmem:[%s208 + $0x58] sm:$0xff] %v427
      %492 = vst [vmem:[%s208 + $0x60] sm:$0xff] %v428
      %493 = vst [vmem:[%s208 + $0x68] sm:$0xff] %v429
      %494 = vst [vmem:[%s208 + $0x70] sm:$0xff] %v430
      %495 = vst [vmem:[%s208 + $0x78] sm:$0xff] %v431
      %496 = vst [vmem:[%s208 + $0x80] sm:$0xff] %v432
      %497 = vst [vmem:[%s208 + $0x88] sm:$0xff] %v433
      %498 = vst [vmem:[%s208 + $0x90] sm:$0xff] %v434
      %499 = vst [vmem:[%s208 + $0x98] sm:$0xff] %v435
      %500 = vst [vmem:[%s208 + $0xa0] sm:$0xff] %v436
      %501 = vst [vmem:[%s208 + $0xa8] sm:$0xff] %v437
      %502 = vst [vmem:[%s208 + $0xb0] sm:$0xff] %v438
      %503 = vst [vmem:[%s208 + $0xb8] sm:$0xff] %v439
      %504 = vst [vmem:[%s208 + $0xc0] sm:$0xff] %v440
      %505 = vst [vmem:[%s208 + $0xc8] sm:$0xff] %v441
      %506 = vst [vmem:[%s208 + $0xd0] sm:$0xff] %v442
      %507 = vst [vmem:[%s208 + $0xd8] sm:$0xff] %v443
      %508 = vst [vmem:[%s208 + $0xe0] sm:$0xff] %v444
      %509 = vst [vmem:[%s208 + $0xe8] sm:$0xff] %v445
      %510 = vst [vmem:[%s208 + $0xf0] sm:$0xff] %v446
      %511 = vst [vmem:[%s208 + $0xf8] sm:$0xff] %v447
      %512 = vst [vmem:[%s208 + $0x100] sm:$0xff] %v448
      %513 = vst [vmem:[%s208 + $0x108] sm:$0xff] %v449
      %514 = vst [vmem:[%s208 + $0x110] sm:$0xff] %v450
      %515 = vst [vmem:[%s208 + $0x118] sm:$0xff] %v451
      %516 = vst [vmem:[%s208 + $0x120] sm:$0xff] %v452
      %517 = vst [vmem:[%s208 + $0x128] sm:$0xff] %v453
      %518 = vst [vmem:[%s208 + $0x130] sm:$0xff] %v454
      %519 = vst [vmem:[%s208 + $0x138] sm:$0xff] %v455
      %520 = vst [vmem:[%s208 + $0x140] sm:$0xff] %v456
      %521 = vst [vmem:[%s208 + $0x148] sm:$0xff] %v457
      %522 = vst [vmem:[%s208 + $0x150] sm:$0xff] %v458
      %523 = vst [vmem:[%s208 + $0x158] sm:$0xff] %v459
      %524 = vst [vmem:[%s208 + $0x160] sm:$0xff] %v460
      %525 = vst [vmem:[%s208 + $0x168] sm:$0xff] %v461
      %526 = vst [vmem:[%s208 + $0x170] sm:$0xff] %v462
      %527 = vst [vmem:[%s208 + $0x178] sm:$0xff] %v463
      %528 = vst [vmem:[%s208 + $0x180] sm:$0xff] %v464
      %529 = vst [vmem:[%s208 + $0x188] sm:$0xff] %v465
      %530 = vst [vmem:[%s208 + $0x190] sm:$0xff] %v466
      %531 = vst [vmem:[%s208 + $0x198] sm:$0xff] %v467
      %532 = vst [vmem:[%s208 + $0x1a0] sm:$0xff] %v468
      %533 = vst [vmem:[%s208 + $0x1a8] sm:$0xff] %v469
      %534 = vst [vmem:[%s208 + $0x1b0] sm:$0xff] %v470
      %535 = vst [vmem:[%s208 + $0x1b8] sm:$0xff] %v471
      %536 = vst [vmem:[%s208 + $0x1c0] sm:$0xff] %v472
      %537 = vst [vmem:[%s208 + $0x1c8] sm:$0xff] %v473
      %538 = vst [vmem:[%s208 + $0x1d0] sm:$0xff] %v474
      %539 = vst [vmem:[%s208 + $0x1d8] sm:$0xff] %v475
      %540 = vst [vmem:[%s208 + $0x1e0] sm:$0xff] %v476
      %541 = vst [vmem:[%s208 + $0x1e8] sm:$0xff] %v477
      %542 = vst [vmem:[%s208 + $0x1f0] sm:$0xff] %v478
      %543 = vst [vmem:[%s208 + $0x1f8] sm:$0xff] %v479
      %s544 = smul.u32 64, %s19
      %p545 = scmp.lt.s32.totalorder %s18, 3
      %s546 = scalar_select %p545, %s18, 3
      %p547 = scmp.lt.s32.totalorder %s544, 63
      %s548 = scalar_select %p547, %s544, 63
      %s549 = smul.addr %s546, 64
      %s550 = sadd.s32 %s548, %s549
      %s551 = smul.addr %s550, 8
      %s552 = scalar_lea.vmem %s3, %s551
      // Predicated region
      $region33: #{generator_forward.12} parent=31 // pred_check
        %p553 = pneg %p116
      $region34: #{generator_forward.12} parent=31 // pred_check_branch
        %555 = sbr.rel (%p553) target = $region36
      $region35: #{generator_forward.12} parent=31 // pred_region
        %s556 = smul.u32 64, %s19
      $region36: #{generator_forward.12} parent=31 // pred_fallthru
        _
    $region32: #{generator_forward.12} parent=5 // pred_fallthru
      _
    %p557 = scmp.le.s32.totalorder 2, %s9
    // Predicated region
    $region37: #{generator_forward.12} parent=5 // pred_check
      %p558 = pneg %p557
    $region38: #{generator_forward.12} parent=5 // pred_check_branch
      %560 = sbr.rel (%p558) target = $region40
    $region39: #{generator_forward.12} parent=5 // pred_region
      %s561 = ssub.s32 %s9, 2
      // Predicated region
      $region41: #{generator_forward.12} parent=39 // pred_check
        %p562 = pneg %p122
      $region42: #{generator_forward.12} parent=39 // pred_check_branch
        %564 = sbr.rel (%p562) target = $region44
      $region43: #{generator_forward.12} parent=39 // pred_region
        %s565 = smul.u32 64, %s21
        %p566 = scmp.lt.s32.totalorder %s20, 3
        %s567 = scalar_select %p566, %s20, 3
        %p568 = scmp.lt.s32.totalorder %s565, 63
        %s569 = scalar_select %p568, %s565, 63
        %s570 = smul.addr %s567, 64
        %s571 = sadd.s32 %s569, %s570
        %s572 = smul.addr %s571, 8
        %s573 = scalar_lea.vmem %s3, %s572
      $region44: #{generator_forward.12} parent=39 // pred_fallthru
        _
    $region40: #{generator_forward.12} parent=5 // pred_fallthru
      _
  $region6: #{generator_forward.12} parent=0 // loop_footer
    %s13 = sadd.s32 1, %s9
  $region7: #{generator_forward.12} parent=0 // loop_footer_branch
    %8 = sbr.rel target = $region3
  $region8: #{generator_forward.12} parent=0 // loop_exit
    _

// kernel: generator_forward.13
$region0: #{generator_forward.13}
  #allocation0 [shape = 'u32[]', space=smem, size = 0x4, offset = 0x4, fixed_abs, tag = 'smem constant byte address 0x4 - core index']
  #allocation1 [shape = 'u32[144,128]{1,0:T(1,128)}', space=vmem, size = 0x12000, scoped, tag = 'internal scratch']
  %s0 = inlined_call_operand.vmem [shape: bf16[4,2048,32], index: 0, kind: input, shape index: {}]
  %s1 = inlined_call_operand.vmem [shape: bf16[4,32,128], index: 1, kind: input, shape index: {}]
  %s2 = inlined_call_operand.vmem [shape: f32[4,2048,128], index: 2, kind: output, shape index: {}]
  %s3 = sld [smem:[#allocation0]]
  $region41: #{generator_forward.13} parent=0
    _
  %s5 = ssub.s32 1, %s3
  %s6 = scalar_select 0, %s5, %s3
  loop: start=0, step=1, limit=6
  $region2: #{generator_forward.13} parent=0 // loop_pre_header
    _
  $region3: #{generator_forward.13} parent=0 // loop_header
    %s8 = sphi 0, %s12
    %p9 = scmp.ge.s32.totalorder %s8, 6
    %s15 = sphi 0, %s27
    %s16 = sphi 0, %s23
    %s17 = sphi 0, %s15
    %s18 = sphi 0, %s16
    %s19 = sphi 0, %s17
    %s20 = sphi 0, %s18
    %s32 = sphi 0, %s34
    %s35 = sphi 0, %s32
    %s36 = sphi 0, %s35
    %s52 = sphi 0, %s36
    %s58 = sphi 0, %s60
    %s61 = sphi 0, %s58
    %s62 = sphi 0, %s61
    %s78 = sphi 0, %s62
    %s86 = sphi 0, %s88
    %s89 = sphi 0, %s86
    %s90 = sphi 0, %s89
    %s106 = sphi 0, %s90
  $region4: #{generator_forward.13} parent=0 // loop_header_branch
    %11 = sbr.rel (%p9) target = $region8
  $region5: #{generator_forward.13} parent=0 // loop_body
    %s13 = ssub.s32 %s8, 1
    %s14 = ssub.s32 %s8, 2
    %s21 = sadd.s32 1, %s16
    %p22 = scmp.ge.s32.totalorder %s21, 1
    %s23 = scalar_select %p22, 0, %s21
    %s24 = sadd.s32 1, %s15
    %s25 = scalar_select %p22, %s24, %s15
    %p26 = scmp.ge.s32.totalorder %s25, 4
    %s27 = scalar_select %p26, 0, %s25
    %s28 = ssub.s32 %s15, %s27
    %s29 = ssub.s32 %s16, %s23
    %s30 = sor.u32 %s28, %s29
    %p31 = scmp.eq.s32.totalorder %s30, 0
    %s33 = sadd.s32 %s32, 1
    %s34 = scalar_select %p31, %s32, %s33
    %p37 = pneg %p31
    %p38 = scmp.eq.s32.totalorder %s8, 3
    %p39 = por %p37, %p38
    %p40 = scmp.ne.s32.totalorder %s32, %s35
    %p41 = scmp.eq.s32.totalorder %s8, 0
    %p42 = por %p40, %p41
    %p43 = scmp.ne.s32.totalorder %s32, %s35
    %p44 = scmp.eq.s32.totalorder %s13, 3
    %p45 = por %p43, %p44
    %p46 = scmp.ne.s32.totalorder %s35, %s36
    %p47 = scmp.eq.s32.totalorder %s13, 0
    %p48 = por %p46, %p47
    %p49 = scmp.ne.s32.totalorder %s35, %s36
    %p50 = scmp.eq.s32.totalorder %s14, 3
    %p51 = por %p49, %p50
    %p53 = scmp.ne.s32.totalorder %s36, %s52
    %p54 = scmp.eq.s32.totalorder %s14, 0
    %p55 = por %p53, %p54
    %s56 = ssub.s32 %s15, %s27
    %p57 = scmp.eq.s32.totalorder %s56, 0
    %s59 = sadd.s32 %s58, 1
    %s60 = scalar_select %p57, %s58, %s59
    %p63 = pneg %p57
    %p64 = scmp.eq.s32.totalorder %s8, 3
    %p65 = por %p63, %p64
    %p66 = scmp.ne.s32.totalorder %s58, %s61
    %p67 = scmp.eq.s32.totalorder %s8, 0
    %p68 = por %p66, %p67
    %p69 = scmp.ne.s32.totalorder %s58, %s61
    %p70 = scmp.eq.s32.totalorder %s13, 3
    %p71 = por %p69, %p70
    %p72 = scmp.ne.s32.totalorder %s61, %s62
    %p73 = scmp.eq.s32.totalorder %s13, 0
    %p74 = por %p72, %p73
    %p75 = scmp.ne.s32.totalorder %s61, %s62
    %p76 = scmp.eq.s32.totalorder %s14, 3
    %p77 = por %p75, %p76
    %p79 = scmp.ne.s32.totalorder %s62, %s78
    %p80 = scmp.eq.s32.totalorder %s14, 0
    %p81 = por %p79, %p80
    %s82 = ssub.s32 %s15, %s27
    %s83 = ssub.s32 %s16, %s23
    %s84 = sor.u32 %s82, %s83
    %p85 = scmp.eq.s32.totalorder %s84, 0
    %s87 = sadd.s32 %s86, 1
    %s88 = scalar_select %p85, %s86, %s87
    %p91 = pneg %p85
    %p92 = scmp.eq.s32.totalorder %s8, 3
    %p93 = por %p91, %p92
    %p94 = scmp.ne.s32.totalorder %s86, %s89
    %p95 = scmp.eq.s32.totalorder %s8, 0
    %p96 = por %p94, %p95
    %p97 = scmp.ne.s32.totalorder %s86, %s89
    %p98 = scmp.eq.s32.totalorder %s13, 3
    %p99 = por %p97, %p98
    %p100 = scmp.ne.s32.totalorder %s89, %s90
    %p101 = scmp.eq.s32.totalorder %s13, 0
    %p102 = por %p100, %p101
    %p103 = scmp.ne.s32.totalorder %s89, %s90
    %p104 = scmp.eq.s32.totalorder %s14, 3
    %p105 = por %p103, %p104
    %p107 = scmp.ne.s32.totalorder %s90, %s106
    %p108 = scmp.eq.s32.totalorder %s14, 0
    %p109 = por %p107, %p108
    %p110 = scmp.le.s32.totalorder 1, %s8
    %p111 = scmp.lt.s32.totalorder %s8, 5
    %p112 = pnand %p110, %p111
    %p113 = pneg %p112
    // Predicated region
    $region9: #{generator_forward.13} parent=5 // pred_check
      _
    $region10: #{generator_forward.13} parent=5 // pred_check_branch
      %115 = sbr.rel (%p112) target = $region12
    $region11: #{generator_forward.13} parent=5 // pred_region
      %s116 = ssub.s32 %s8, 1
    $region12: #{generator_forward.13} parent=5 // pred_fallthru
      _
    %p117 = scmp.lt.s32.totalorder %s8, 4
    // Predicated region
    $region13: #{generator_forward.13} parent=5 // pred_check
      %p118 = pneg %p117
    $region14: #{generator_forward.13} parent=5 // pred_check_branch
      %120 = sbr.rel (%p118) target = $region16
    $region15: #{generator_forward.13} parent=5 // pred_region
      // Predicated region
      $region17: #{generator_forward.13} parent=15 // pred_check
        %p121 = pneg %p42
      $region18: #{generator_forward.13} parent=15 // pred_check_branch
        %123 = sbr.rel (%p121) target = $region20
      $region19: #{generator_forward.13} parent=15 // pred_region
        %s124 = smul.u32 256, %s16
        %p125 = scmp.lt.s32.totalorder %s15, 3
        %s126 = scalar_select %p125, %s15, 3
        %p127 = scmp.lt.s32.totalorder %s124, 255
        %s128 = scalar_select %p127, %s124, 255
        %s129 = smul.addr %s126, 256
        %s130 = sadd.s32 %s128, %s129
        %s131 = smul.addr %s130, 4
        %s132 = scalar_lea.vmem %s0, %s131
        %s133 = smul.u32 256, %s16
      $region20: #{generator_forward.13} parent=15 // pred_fallthru
        _
      // Predicated region
      $region21: #{generator_forward.13} parent=15 // pred_check
        %p134 = pneg %p68
      $region22: #{generator_forward.13} parent=15 // pred_check_branch
        %136 = sbr.rel (%p134) target = $region24
      $region23: #{generator_forward.13} parent=15 // pred_region
        %p137 = scmp.lt.s32.totalorder %s15, 3
        %s138 = scalar_select %p137, %s15, 3
        %s139 = smul.addr %s138, 4
        %s140 = smul.addr %s139, 4
        %s141 = scalar_lea.vmem %s1, %s140
      $region24: #{generator_forward.13} parent=15 // pred_fallthru
        _
    $region16: #{generator_forward.13} parent=5 // pred_fallthru
      _
    %p142 = scmp.le.s32.totalorder 1, %s8
    %p143 = scmp.lt.s32.totalorder %s8, 5
    %p144 = pnand %p142, %p143
    %p145 = pneg %p144
    // Predicated region
    $region25: #{generator_forward.13} parent=5 // pred_check
      _
    $region26: #{generator_forward.13} parent=5 // pred_check_branch
      %147 = sbr.rel (%p144) target = $region28
    $region27: #{generator_forward.13} parent=5 // pred_region
      %s148 = ssub.s32 %s8, 1
      %s149 = smul.u32 256, %s18
      %p150 = scmp.lt.s32.totalorder %s17, 3
      %s151 = scalar_select %p150, %s17, 3
      %p152 = scmp.lt.s32.totalorder %s149, 255
      %s153 = scalar_select %p152, %s149, 255
      %s154 = smul.addr %s151, 256
      %s155 = sadd.s32 %s153, %s154
      %s156 = smul.addr %s155, 4
      %s157 = scalar_lea.vmem %s0, %s156
      %p158 = pneg %p48
      %p159 = pneg %p45
      %p160 = scmp.lt.s32.totalorder %s17, 3
      %s161 = scalar_select %p160, %s17, 3
      %s162 = smul.addr %s161, 4
      %s163 = smul.addr %s162, 4
      %s164 = scalar_lea.vmem %s1, %s163
      %p165 = pneg %p74
      %p166 = pneg %p71
      %p167 = pneg %p102
      %p168 = pneg %p99
      %s169 = smul.u32 256, %s18
      %p170 = scmp.lt.s32.totalorder %s17, 3
      %s171 = scalar_select %p170, %s17, 3
      %p172 = scmp.lt.s32.totalorder %s169, 255
      %s173 = scalar_select %p172, %s169, 255
      %s174 = smul.addr %s171, 256
      %s175 = sadd.s32 %s173, %s174
      %s176 = smul.addr %s175, 8
      %s177 = scalar_lea.vmem %s2, %s176
      %s178 = smul.u32 256, %s18
      %p179 = scmp.lt.s32.totalorder %s17, 3
      %s180 = scalar_select %p179, %s17, 3
      %p181 = scmp.lt.s32.totalorder %s178, 255
      %s182 = scalar_select %p181, %s178, 255
      %s183 = smul.addr %s180, 256
      %s184 = sadd.s32 %s182, %s183
      %s185 = smul.addr %s184, 4
      %s186 = scalar_lea.vmem %s0, %s185
      %s187 = smul.u32 256, %s18
      %p188 = scmp.lt.s32.totalorder %s17, 3
      %s189 = scalar_select %p188, %s17, 3
      %s190 = smul.addr %s189, 4
      %s191 = smul.addr %s190, 4
      %s192 = scalar_lea.vmem %s1, %s191
      %s193 = smul.u32 256, %s18
      %p194 = scmp.lt.s32.totalorder %s17, 3
      %s195 = scalar_select %p194, %s17, 3
      %p196 = scmp.lt.s32.totalorder %s193, 255
      %s197 = scalar_select %p196, %s193, 255
      %s198 = smul.addr %s195, 256
      %s199 = sadd.s32 %s197, %s198
      %s200 = smul.addr %s199, 8
      %s201 = scalar_lea.vmem %s2, %s200
      %s202 = smul.u32 256, %s18
      %v204 = vld [vmem:[%s186] sm:$0xf]
      %v205 = vld [vmem:[%s186 + $0x4] sm:$0xf]
      %v206 = vld [vmem:[%s186 + $0x8] sm:$0xf]
      %v207 = vld [vmem:[%s186 + $0xc] sm:$0xf]
      %v208 = vld [vmem:[%s186 + $0x10] sm:$0xf]
      %v209 = vld [vmem:[%s186 + $0x14] sm:$0xf]
      %v210 = vld [vmem:[%s186 + $0x18] sm:$0xf]
      %v211 = vld [vmem:[%s186 + $0x1c] sm:$0xf]
      %v212 = vld [vmem:[%s186 + $0x20] sm:$0xf]
      %v213 = vld [vmem:[%s186 + $0x24] sm:$0xf]
      %v214 = vld [vmem:[%s186 + $0x28] sm:$0xf]
      %v215 = vld [vmem:[%s186 + $0x2c] sm:$0xf]
      %v216 = vld [vmem:[%s186 + $0x30] sm:$0xf]
      %v217 = vld [vmem:[%s186 + $0x34] sm:$0xf]
      %v218 = vld [vmem:[%s186 + $0x38] sm:$0xf]
      %v219 = vld [vmem:[%s186 + $0x3c] sm:$0xf]
      %v220 = vld [vmem:[%s186 + $0x40] sm:$0xf]
      %v221 = vld [vmem:[%s186 + $0x44] sm:$0xf]
      %v222 = vld [vmem:[%s186 + $0x48] sm:$0xf]
      %v223 = vld [vmem:[%s186 + $0x4c] sm:$0xf]
      %v224 = vld [vmem:[%s186 + $0x50] sm:$0xf]
      %v225 = vld [vmem:[%s186 + $0x54] sm:$0xf]
      %v226 = vld [vmem:[%s186 + $0x58] sm:$0xf]
      %v227 = vld [vmem:[%s186 + $0x5c] sm:$0xf]
      %v228 = vld [vmem:[%s186 + $0x60] sm:$0xf]
      %v229 = vld [vmem:[%s186 + $0x64] sm:$0xf]
      %v230 = vld [vmem:[%s186 + $0x68] sm:$0xf]
      %v231 = vld [vmem:[%s186 + $0x6c] sm:$0xf]
      %v232 = vld [vmem:[%s186 + $0x70] sm:$0xf]
      %v233 = vld [vmem:[%s186 + $0x74] sm:$0xf]
      %v234 = vld [vmem:[%s186 + $0x78] sm:$0xf]
      %v235 = vld [vmem:[%s186 + $0x7c] sm:$0xf]
      %v236 = vld [vmem:[%s186 + $0x80] sm:$0xf]
      %v237 = vld [vmem:[%s186 + $0x84] sm:$0xf]
      %v238 = vld [vmem:[%s186 + $0x88] sm:$0xf]
      %v239 = vld [vmem:[%s186 + $0x8c] sm:$0xf]
      %v240 = vld [vmem:[%s186 + $0x90] sm:$0xf]
      %v241 = vld [vmem:[%s186 + $0x94] sm:$0xf]
      %v242 = vld [vmem:[%s186 + $0x98] sm:$0xf]
      %v243 = vld [vmem:[%s186 + $0x9c] sm:$0xf]
      %v244 = vld [vmem:[%s186 + $0xa0] sm:$0xf]
      %v245 = vld [vmem:[%s186 + $0xa4] sm:$0xf]
      %v246 = vld [vmem:[%s186 + $0xa8] sm:$0xf]
      %v247 = vld [vmem:[%s186 + $0xac] sm:$0xf]
      %v248 = vld [vmem:[%s186 + $0xb0] sm:$0xf]
      %v249 = vld [vmem:[%s186 + $0xb4] sm:$0xf]
      %v250 = vld [vmem:[%s186 + $0xb8] sm:$0xf]
      %v251 = vld [vmem:[%s186 + $0xbc] sm:$0xf]
      %v252 = vld [vmem:[%s186 + $0xc0] sm:$0xf]
      %v253 = vld [vmem:[%s186 + $0xc4] sm:$0xf]
      %v254 = vld [vmem:[%s186 + $0xc8] sm:$0xf]
      %v255 = vld [vmem:[%s186 + $0xcc] sm:$0xf]
      %v256 = vld [vmem:[%s186 + $0xd0] sm:$0xf]
      %v257 = vld [vmem:[%s186 + $0xd4] sm:$0xf]
      %v258 = vld [vmem:[%s186 + $0xd8] sm:$0xf]
      %v259 = vld [vmem:[%s186 + $0xdc] sm:$0xf]
      %v260 = vld [vmem:[%s186 + $0xe0] sm:$0xf]
      %v261 = vld [vmem:[%s186 + $0xe4] sm:$0xf]
      %v262 = vld [vmem:[%s186 + $0xe8] sm:$0xf]
      %v263 = vld [vmem:[%s186 + $0xec] sm:$0xf]
      %v264 = vld [vmem:[%s186 + $0xf0] sm:$0xf]
      %v265 = vld [vmem:[%s186 + $0xf4] sm:$0xf]
      %v266 = vld [vmem:[%s186 + $0xf8] sm:$0xf]
      %v267 = vld [vmem:[%s186 + $0xfc] sm:$0xf]
      %v268 = vld [vmem:[%s186 + $0x100] sm:$0xf]
      %v269 = vld [vmem:[%s186 + $0x104] sm:$0xf]
      %v270 = vld [vmem:[%s186 + $0x108] sm:$0xf]
      %v271 = vld [vmem:[%s186 + $0x10c] sm:$0xf]
      %v272 = vld [vmem:[%s186 + $0x110] sm:$0xf]
      %v273 = vld [vmem:[%s186 + $0x114] sm:$0xf]
      %v274 = vld [vmem:[%s186 + $0x118] sm:$0xf]
      %v275 = vld [vmem:[%s186 + $0x11c] sm:$0xf]
      %v276 = vld [vmem:[%s186 + $0x120] sm:$0xf]
      %v277 = vld [vmem:[%s186 + $0x124] sm:$0xf]
      %v278 = vld [vmem:[%s186 + $0x128] sm:$0xf]
      %v279 = vld [vmem:[%s186 + $0x12c] sm:$0xf]
      %v280 = vld [vmem:[%s186 + $0x130] sm:$0xf]
      %v281 = vld [vmem:[%s186 + $0x134] sm:$0xf]
      %v282 = vld [vmem:[%s186 + $0x138] sm:$0xf]
      %v283 = vld [vmem:[%s186 + $0x13c] sm:$0xf]
      %v284 = vld [vmem:[%s186 + $0x140] sm:$0xf]
      %v285 = vld [vmem:[%s186 + $0x144] sm:$0xf]
      %v286 = vld [vmem:[%s186 + $0x148] sm:$0xf]
      %v287 = vld [vmem:[%s186 + $0x14c] sm:$0xf]
      %v288 = vld [vmem:[%s186 + $0x150] sm:$0xf]
      %v289 = vld [vmem:[%s186 + $0x154] sm:$0xf]
      %v290 = vld [vmem:[%s186 + $0x158] sm:$0xf]
      %v291 = vld [vmem:[%s186 + $0x15c] sm:$0xf]
      %v292 = vld [vmem:[%s186 + $0x160] sm:$0xf]
      %v293 = vld [vmem:[%s186 + $0x164] sm:$0xf]
      %v294 = vld [vmem:[%s186 + $0x168] sm:$0xf]
      %v295 = vld [vmem:[%s186 + $0x16c] sm:$0xf]
      %v296 = vld [vmem:[%s186 + $0x170] sm:$0xf]
      %v297 = vld [vmem:[%s186 + $0x174] sm:$0xf]
      %v298 = vld [vmem:[%s186 + $0x178] sm:$0xf]
      %v299 = vld [vmem:[%s186 + $0x17c] sm:$0xf]
      %v300 = vld [vmem:[%s186 + $0x180] sm:$0xf]
      %v301 = vld [vmem:[%s186 + $0x184] sm:$0xf]
      %v302 = vld [vmem:[%s186 + $0x188] sm:$0xf]
      %v303 = vld [vmem:[%s186 + $0x18c] sm:$0xf]
      %v304 = vld [vmem:[%s186 + $0x190] sm:$0xf]
      %v305 = vld [vmem:[%s186 + $0x194] sm:$0xf]
      %v306 = vld [vmem:[%s186 + $0x198] sm:$0xf]
      %v307 = vld [vmem:[%s186 + $0x19c] sm:$0xf]
      %v308 = vld [vmem:[%s186 + $0x1a0] sm:$0xf]
      %v309 = vld [vmem:[%s186 + $0x1a4] sm:$0xf]
      %v310 = vld [vmem:[%s186 + $0x1a8] sm:$0xf]
      %v311 = vld [vmem:[%s186 + $0x1ac] sm:$0xf]
      %v312 = vld [vmem:[%s186 + $0x1b0] sm:$0xf]
      %v313 = vld [vmem:[%s186 + $0x1b4] sm:$0xf]
      %v314 = vld [vmem:[%s186 + $0x1b8] sm:$0xf]
      %v315 = vld [vmem:[%s186 + $0x1bc] sm:$0xf]
      %v316 = vld [vmem:[%s186 + $0x1c0] sm:$0xf]
      %v317 = vld [vmem:[%s186 + $0x1c4] sm:$0xf]
      %v318 = vld [vmem:[%s186 + $0x1c8] sm:$0xf]
      %v319 = vld [vmem:[%s186 + $0x1cc] sm:$0xf]
      %v320 = vld [vmem:[%s186 + $0x1d0] sm:$0xf]
      %v321 = vld [vmem:[%s186 + $0x1d4] sm:$0xf]
      %v322 = vld [vmem:[%s186 + $0x1d8] sm:$0xf]
      %v323 = vld [vmem:[%s186 + $0x1dc] sm:$0xf]
      %v324 = vld [vmem:[%s186 + $0x1e0] sm:$0xf]
      %v325 = vld [vmem:[%s186 + $0x1e4] sm:$0xf]
      %v326 = vld [vmem:[%s186 + $0x1e8] sm:$0xf]
      %v327 = vld [vmem:[%s186 + $0x1ec] sm:$0xf]
      %v328 = vld [vmem:[%s186 + $0x1f0] sm:$0xf]
      %v329 = vld [vmem:[%s186 + $0x1f4] sm:$0xf]
      %v330 = vld [vmem:[%s186 + $0x1f8] sm:$0xf]
      %v331 = vld [vmem:[%s186 + $0x1fc] sm:$0xf]
      %v332 = vld [vmem:[%s186 + $0x200] sm:$0xf]
      %v333 = vld [vmem:[%s186 + $0x204] sm:$0xf]
      %v334 = vld [vmem:[%s186 + $0x208] sm:$0xf]
      %v335 = vld [vmem:[%s186 + $0x20c] sm:$0xf]
      %v336 = vld [vmem:[%s186 + $0x210] sm:$0xf]
      %v337 = vld [vmem:[%s186 + $0x214] sm:$0xf]
      %v338 = vld [vmem:[%s186 + $0x218] sm:$0xf]
      %v339 = vld [vmem:[%s186 + $0x21c] sm:$0xf]
      %v340 = vld [vmem:[%s186 + $0x220] sm:$0xf]
      %v341 = vld [vmem:[%s186 + $0x224] sm:$0xf]
      %v342 = vld [vmem:[%s186 + $0x228] sm:$0xf]
      %v343 = vld [vmem:[%s186 + $0x22c] sm:$0xf]
      %v344 = vld [vmem:[%s186 + $0x230] sm:$0xf]
      %v345 = vld [vmem:[%s186 + $0x234] sm:$0xf]
      %v346 = vld [vmem:[%s186 + $0x238] sm:$0xf]
      %v347 = vld [vmem:[%s186 + $0x23c] sm:$0xf]
      %v348 = vld [vmem:[%s186 + $0x240] sm:$0xf]
      %v349 = vld [vmem:[%s186 + $0x244] sm:$0xf]
      %v350 = vld [vmem:[%s186 + $0x248] sm:$0xf]
      %v351 = vld [vmem:[%s186 + $0x24c] sm:$0xf]
      %v352 = vld [vmem:[%s186 + $0x250] sm:$0xf]
      %v353 = vld [vmem:[%s186 + $0x254] sm:$0xf]
      %v354 = vld [vmem:[%s186 + $0x258] sm:$0xf]
      %v355 = vld [vmem:[%s186 + $0x25c] sm:$0xf]
      %v356 = vld [vmem:[%s186 + $0x260] sm:$0xf]
      %v357 = vld [vmem:[%s186 + $0x264] sm:$0xf]
      %v358 = vld [vmem:[%s186 + $0x268] sm:$0xf]
      %v359 = vld [vmem:[%s186 + $0x26c] sm:$0xf]
      %v360 = vld [vmem:[%s186 + $0x270] sm:$0xf]
      %v361 = vld [vmem:[%s186 + $0x274] sm:$0xf]
      %v362 = vld [vmem:[%s186 + $0x278] sm:$0xf]
      %v363 = vld [vmem:[%s186 + $0x27c] sm:$0xf]
      %v364 = vld [vmem:[%s186 + $0x280] sm:$0xf]
      %v365 = vld [vmem:[%s186 + $0x284] sm:$0xf]
      %v366 = vld [vmem:[%s186 + $0x288] sm:$0xf]
      %v367 = vld [vmem:[%s186 + $0x28c] sm:$0xf]
      %v368 = vld [vmem:[%s186 + $0x290] sm:$0xf]
      %v369 = vld [vmem:[%s186 + $0x294] sm:$0xf]
      %v370 = vld [vmem:[%s186 + $0x298] sm:$0xf]
      %v371 = vld [vmem:[%s186 + $0x29c] sm:$0xf]
      %v372 = vld [vmem:[%s186 + $0x2a0] sm:$0xf]
      %v373 = vld [vmem:[%s186 + $0x2a4] sm:$0xf]
      %v374 = vld [vmem:[%s186 + $0x2a8] sm:$0xf]
      %v375 = vld [vmem:[%s186 + $0x2ac] sm:$0xf]
      %v376 = vld [vmem:[%s186 + $0x2b0] sm:$0xf]
      %v377 = vld [vmem:[%s186 + $0x2b4] sm:$0xf]
      %v378 = vld [vmem:[%s186 + $0x2b8] sm:$0xf]
      %v379 = vld [vmem:[%s186 + $0x2bc] sm:$0xf]
      %v380 = vld [vmem:[%s186 + $0x2c0] sm:$0xf]
      %v381 = vld [vmem:[%s186 + $0x2c4] sm:$0xf]
      %v382 = vld [vmem:[%s186 + $0x2c8] sm:$0xf]
      %v383 = vld [vmem:[%s186 + $0x2cc] sm:$0xf]
      %v384 = vld [vmem:[%s186 + $0x2d0] sm:$0xf]
      %v385 = vld [vmem:[%s186 + $0x2d4] sm:$0xf]
      %v386 = vld [vmem:[%s186 + $0x2d8] sm:$0xf]
      %v387 = vld [vmem:[%s186 + $0x2dc] sm:$0xf]
      %v388 = vld [vmem:[%s186 + $0x2e0] sm:$0xf]
      %v389 = vld [vmem:[%s186 + $0x2e4] sm:$0xf]
      %v390 = vld [vmem:[%s186 + $0x2e8] sm:$0xf]
      %v391 = vld [vmem:[%s186 + $0x2ec] sm:$0xf]
      %v392 = vld [vmem:[%s186 + $0x2f0] sm:$0xf]
      %v393 = vld [vmem:[%s186 + $0x2f4] sm:$0xf]
      %v394 = vld [vmem:[%s186 + $0x2f8] sm:$0xf]
      %v395 = vld [vmem:[%s186 + $0x2fc] sm:$0xf]
      %v396 = vld [vmem:[%s186 + $0x300] sm:$0xf]
      %v397 = vld [vmem:[%s186 + $0x304] sm:$0xf]
      %v398 = vld [vmem:[%s186 + $0x308] sm:$0xf]
      %v399 = vld [vmem:[%s186 + $0x30c] sm:$0xf]
      %v400 = vld [vmem:[%s186 + $0x310] sm:$0xf]
      %v401 = vld [vmem:[%s186 + $0x314] sm:$0xf]
      %v402 = vld [vmem:[%s186 + $0x318] sm:$0xf]
      %v403 = vld [vmem:[%s186 + $0x31c] sm:$0xf]
      %v404 = vld [vmem:[%s186 + $0x320] sm:$0xf]
      %v405 = vld [vmem:[%s186 + $0x324] sm:$0xf]
      %v406 = vld [vmem:[%s186 + $0x328] sm:$0xf]
      %v407 = vld [vmem:[%s186 + $0x32c] sm:$0xf]
      %v408 = vld [vmem:[%s186 + $0x330] sm:$0xf]
      %v409 = vld [vmem:[%s186 + $0x334] sm:$0xf]
      %v410 = vld [vmem:[%s186 + $0x338] sm:$0xf]
      %v411 = vld [vmem:[%s186 + $0x33c] sm:$0xf]
      %v412 = vld [vmem:[%s186 + $0x340] sm:$0xf]
      %v413 = vld [vmem:[%s186 + $0x344] sm:$0xf]
      %v414 = vld [vmem:[%s186 + $0x348] sm:$0xf]
      %v415 = vld [vmem:[%s186 + $0x34c] sm:$0xf]
      %v416 = vld [vmem:[%s186 + $0x350] sm:$0xf]
      %v417 = vld [vmem:[%s186 + $0x354] sm:$0xf]
      %v418 = vld [vmem:[%s186 + $0x358] sm:$0xf]
      %v419 = vld [vmem:[%s186 + $0x35c] sm:$0xf]
      %v420 = vld [vmem:[%s186 + $0x360] sm:$0xf]
      %v421 = vld [vmem:[%s186 + $0x364] sm:$0xf]
      %v422 = vld [vmem:[%s186 + $0x368] sm:$0xf]
      %v423 = vld [vmem:[%s186 + $0x36c] sm:$0xf]
      %v424 = vld [vmem:[%s186 + $0x370] sm:$0xf]
      %v425 = vld [vmem:[%s186 + $0x374] sm:$0xf]
      %v426 = vld [vmem:[%s186 + $0x378] sm:$0xf]
      %v427 = vld [vmem:[%s186 + $0x37c] sm:$0xf]
      %v428 = vld [vmem:[%s186 + $0x380] sm:$0xf]
      %v429 = vld [vmem:[%s186 + $0x384] sm:$0xf]
      %v430 = vld [vmem:[%s186 + $0x388] sm:$0xf]
      %v431 = vld [vmem:[%s186 + $0x38c] sm:$0xf]
      %v432 = vld [vmem:[%s186 + $0x390] sm:$0xf]
      %v433 = vld [vmem:[%s186 + $0x394] sm:$0xf]
      %v434 = vld [vmem:[%s186 + $0x398] sm:$0xf]
      %v435 = vld [vmem:[%s186 + $0x39c] sm:$0xf]
      %v436 = vld [vmem:[%s186 + $0x3a0] sm:$0xf]
      %v437 = vld [vmem:[%s186 + $0x3a4] sm:$0xf]
      %v438 = vld [vmem:[%s186 + $0x3a8] sm:$0xf]
      %v439 = vld [vmem:[%s186 + $0x3ac] sm:$0xf]
      %v440 = vld [vmem:[%s186 + $0x3b0] sm:$0xf]
      %v441 = vld [vmem:[%s186 + $0x3b4] sm:$0xf]
      %v442 = vld [vmem:[%s186 + $0x3b8] sm:$0xf]
      %v443 = vld [vmem:[%s186 + $0x3bc] sm:$0xf]
      %v444 = vld [vmem:[%s186 + $0x3c0] sm:$0xf]
      %v445 = vld [vmem:[%s186 + $0x3c4] sm:$0xf]
      %v446 = vld [vmem:[%s186 + $0x3c8] sm:$0xf]
      %v447 = vld [vmem:[%s186 + $0x3cc] sm:$0xf]
      %v448 = vld [vmem:[%s186 + $0x3d0] sm:$0xf]
      %v449 = vld [vmem:[%s186 + $0x3d4] sm:$0xf]
      %v450 = vld [vmem:[%s186 + $0x3d8] sm:$0xf]
      %v451 = vld [vmem:[%s186 + $0x3dc] sm:$0xf]
      %v452 = vld [vmem:[%s186 + $0x3e0] sm:$0xf]
      %v453 = vld [vmem:[%s186 + $0x3e4] sm:$0xf]
      %v454 = vld [vmem:[%s186 + $0x3e8] sm:$0xf]
      %v455 = vld [vmem:[%s186 + $0x3ec] sm:$0xf]
      %v456 = vld [vmem:[%s186 + $0x3f0] sm:$0xf]
      %v457 = vld [vmem:[%s186 + $0x3f4] sm:$0xf]
      %v458 = vld [vmem:[%s186 + $0x3f8] sm:$0xf]
      %v459 = vld [vmem:[%s186 + $0x3fc] sm:$0xf]
      %v460 = vld [vmem:[%s192] sm:$0xf]
      %v461 = vld [vmem:[%s192 + $0x4] sm:$0xf]
      %v462 = vld [vmem:[%s192 + $0x8] sm:$0xf]
      %v463 = vld [vmem:[%s192 + $0xc] sm:$0xf]
      %v720 = vunpack.c.l.b16 %v204
      %v721 = vunpack.c.l.b16 %v205
      %v722 = vunpack.c.l.b16 %v206
      %v723 = vunpack.c.l.b16 %v207
      %v724 = vunpack.c.l.b16 %v208
      %v725 = vunpack.c.l.b16 %v209
      %v726 = vunpack.c.l.b16 %v210
      %v727 = vunpack.c.l.b16 %v211
      %v728 = vunpack.c.l.b16 %v212
      %v729 = vunpack.c.l.b16 %v213
      %v730 = vunpack.c.l.b16 %v214
      %v731 = vunpack.c.l.b16 %v215
      %v732 = vunpack.c.l.b16 %v216
      %v733 = vunpack.c.l.b16 %v217
      %v734 = vunpack.c.l.b16 %v218
      %v735 = vunpack.c.l.b16 %v219
      %v736 = vunpack.c.l.b16 %v220
      %v737 = vunpack.c.l.b16 %v221
      %v738 = vunpack.c.l.b16 %v222
      %v739 = vunpack.c.l.b16 %v223
      %v740 = vunpack.c.l.b16 %v224
      %v741 = vunpack.c.l.b16 %v225
      %v742 = vunpack.c.l.b16 %v226
      %v743 = vunpack.c.l.b16 %v227
      %v744 = vunpack.c.l.b16 %v228
      %v745 = vunpack.c.l.b16 %v229
      %v746 = vunpack.c.l.b16 %v230
      %v747 = vunpack.c.l.b16 %v231
      %v748 = vunpack.c.l.b16 %v232
      %v749 = vunpack.c.l.b16 %v233
      %v750 = vunpack.c.l.b16 %v234
      %v751 = vunpack.c.l.b16 %v235
      %v752 = vunpack.c.l.b16 %v236
      %v753 = vunpack.c.l.b16 %v237
      %v754 = vunpack.c.l.b16 %v238
      %v755 = vunpack.c.l.b16 %v239
      %v756 = vunpack.c.l.b16 %v240
      %v757 = vunpack.c.l.b16 %v241
      %v758 = vunpack.c.l.b16 %v242
      %v759 = vunpack.c.l.b16 %v243
      %v760 = vunpack.c.l.b16 %v244
      %v761 = vunpack.c.l.b16 %v245
      %v762 = vunpack.c.l.b16 %v246
      %v763 = vunpack.c.l.b16 %v247
      %v764 = vunpack.c.l.b16 %v248
      %v765 = vunpack.c.l.b16 %v249
      %v766 = vunpack.c.l.b16 %v250
      %v767 = vunpack.c.l.b16 %v251
      %v768 = vunpack.c.l.b16 %v252
      %v769 = vunpack.c.l.b16 %v253
      %v770 = vunpack.c.l.b16 %v254
      %v771 = vunpack.c.l.b16 %v255
      %v772 = vunpack.c.l.b16 %v256
      %v773 = vunpack.c.l.b16 %v257
      %v774 = vunpack.c.l.b16 %v258
      %v775 = vunpack.c.l.b16 %v259
      %v776 = vunpack.c.l.b16 %v260
      %v777 = vunpack.c.l.b16 %v261
      %v778 = vunpack.c.l.b16 %v262
      %v779 = vunpack.c.l.b16 %v263
      %v780 = vunpack.c.l.b16 %v264
      %v781 = vunpack.c.l.b16 %v265
      %v782 = vunpack.c.l.b16 %v266
      %v783 = vunpack.c.l.b16 %v267
      %v784 = vunpack.c.l.b16 %v268
      %v785 = vunpack.c.l.b16 %v269
      %v786 = vunpack.c.l.b16 %v270
      %v787 = vunpack.c.l.b16 %v271
      %v788 = vunpack.c.l.b16 %v272
      %v789 = vunpack.c.l.b16 %v273
      %v790 = vunpack.c.l.b16 %v274
      %v791 = vunpack.c.l.b16 %v275
      %v792 = vunpack.c.l.b16 %v276
      %v793 = vunpack.c.l.b16 %v277
      %v794 = vunpack.c.l.b16 %v278
      %v795 = vunpack.c.l.b16 %v279
      %v796 = vunpack.c.l.b16 %v280
      %v797 = vunpack.c.l.b16 %v281
      %v798 = vunpack.c.l.b16 %v282
      %v799 = vunpack.c.l.b16 %v283
      %v800 = vunpack.c.l.b16 %v284
      %v801 = vunpack.c.l.b16 %v285
      %v802 = vunpack.c.l.b16 %v286
      %v803 = vunpack.c.l.b16 %v287
      %v804 = vunpack.c.l.b16 %v288
      %v805 = vunpack.c.l.b16 %v289
      %v806 = vunpack.c.l.b16 %v290
      %v807 = vunpack.c.l.b16 %v291
      %v808 = vunpack.c.l.b16 %v292
      %v809 = vunpack.c.l.b16 %v293
      %v810 = vunpack.c.l.b16 %v294
      %v811 = vunpack.c.l.b16 %v295
      %v812 = vunpack.c.l.b16 %v296
      %v813 = vunpack.c.l.b16 %v297
      %v814 = vunpack.c.l.b16 %v298
      %v815 = vunpack.c.l.b16 %v299
      %v816 = vunpack.c.l.b16 %v300
      %v817 = vunpack.c.l.b16 %v301
      %v818 = vunpack.c.l.b16 %v302
      %v819 = vunpack.c.l.b16 %v303
      %v820 = vunpack.c.l.b16 %v304
      %v821 = vunpack.c.l.b16 %v305
      %v822 = vunpack.c.l.b16 %v306
      %v823 = vunpack.c.l.b16 %v307
      %v824 = vunpack.c.l.b16 %v308
      %v825 = vunpack.c.l.b16 %v309
      %v826 = vunpack.c.l.b16 %v310
      %v827 = vunpack.c.l.b16 %v311
      %v828 = vunpack.c.l.b16 %v312
      %v829 = vunpack.c.l.b16 %v313
      %v830 = vunpack.c.l.b16 %v314
      %v831 = vunpack.c.l.b16 %v315
      %v832 = vunpack.c.l.b16 %v316
      %v833 = vunpack.c.l.b16 %v317
      %v834 = vunpack.c.l.b16 %v318
      %v835 = vunpack.c.l.b16 %v319
      %v836 = vunpack.c.l.b16 %v320
      %v837 = vunpack.c.l.b16 %v321
      %v838 = vunpack.c.l.b16 %v322
      %v839 = vunpack.c.l.b16 %v323
      %v840 = vunpack.c.l.b16 %v324
      %v841 = vunpack.c.l.b16 %v325
      %v842 = vunpack.c.l.b16 %v326
      %v843 = vunpack.c.l.b16 %v327
      %v844 = vunpack.c.l.b16 %v328
      %v845 = vunpack.c.l.b16 %v329
      %v846 = vunpack.c.l.b16 %v330
      %v847 = vunpack.c.l.b16 %v331
      %v848 = vunpack.c.l.b16 %v332
      %v849 = vunpack.c.l.b16 %v333
      %v850 = vunpack.c.l.b16 %v334
      %v851 = vunpack.c.l.b16 %v335
      %v852 = vunpack.c.l.b16 %v336
      %v853 = vunpack.c.l.b16 %v337
      %v854 = vunpack.c.l.b16 %v338
      %v855 = vunpack.c.l.b16 %v339
      %v856 = vunpack.c.l.b16 %v340
      %v857 = vunpack.c.l.b16 %v341
      %v858 = vunpack.c.l.b16 %v342
      %v859 = vunpack.c.l.b16 %v343
      %v860 = vunpack.c.l.b16 %v344
      %v861 = vunpack.c.l.b16 %v345
      %v862 = vunpack.c.l.b16 %v346
      %v863 = vunpack.c.l.b16 %v347
      %v864 = vunpack.c.l.b16 %v348
      %v865 = vunpack.c.l.b16 %v349
      %v866 = vunpack.c.l.b16 %v350
      %v867 = vunpack.c.l.b16 %v351
      %v868 = vunpack.c.l.b16 %v352
      %v869 = vunpack.c.l.b16 %v353
      %v870 = vunpack.c.l.b16 %v354
      %v871 = vunpack.c.l.b16 %v355
      %v872 = vunpack.c.l.b16 %v356
      %v873 = vunpack.c.l.b16 %v357
      %v874 = vunpack.c.l.b16 %v358
      %v875 = vunpack.c.l.b16 %v359
      %v876 = vunpack.c.l.b16 %v360
      %v877 = vunpack.c.l.b16 %v361
      %v878 = vunpack.c.l.b16 %v362
      %v879 = vunpack.c.l.b16 %v363
      %v880 = vunpack.c.l.b16 %v364
      %v881 = vunpack.c.l.b16 %v365
      %v882 = vunpack.c.l.b16 %v366
      %v883 = vunpack.c.l.b16 %v367
      %v884 = vunpack.c.l.b16 %v368
      %v885 = vunpack.c.l.b16 %v369
      %v886 = vunpack.c.l.b16 %v370
      %v887 = vunpack.c.l.b16 %v371
      %v888 = vunpack.c.l.b16 %v372
      %v889 = vunpack.c.l.b16 %v373
      %v890 = vunpack.c.l.b16 %v374
      %v891 = vunpack.c.l.b16 %v375
      %v892 = vunpack.c.l.b16 %v376
      %v893 = vunpack.c.l.b16 %v377
      %v894 = vunpack.c.l.b16 %v378
      %v895 = vunpack.c.l.b16 %v379
      %v896 = vunpack.c.l.b16 %v380
      %v897 = vunpack.c.l.b16 %v381
      %v898 = vunpack.c.l.b16 %v382
      %v899 = vunpack.c.l.b16 %v383
      %v900 = vunpack.c.l.b16 %v384
      %v901 = vunpack.c.l.b16 %v385
      %v902 = vunpack.c.l.b16 %v386
      %v903 = vunpack.c.l.b16 %v387
      %v904 = vunpack.c.l.b16 %v388
      %v905 = vunpack.c.l.b16 %v389
      %v906 = vunpack.c.l.b16 %v390
      %v907 = vunpack.c.l.b16 %v391
      %v908 = vunpack.c.l.b16 %v392
      %v909 = vunpack.c.l.b16 %v393
      %v910 = vunpack.c.l.b16 %v394
      %v911 = vunpack.c.l.b16 %v395
      %v912 = vunpack.c.l.b16 %v396
      %v913 = vunpack.c.l.b16 %v397
      %v914 = vunpack.c.l.b16 %v398
      %v915 = vunpack.c.l.b16 %v399
      %v916 = vunpack.c.l.b16 %v400
      %v917 = vunpack.c.l.b16 %v401
      %v918 = vunpack.c.l.b16 %v402
      %v919 = vunpack.c.l.b16 %v403
      %v920 = vunpack.c.l.b16 %v404
      %v921 = vunpack.c.l.b16 %v405
      %v922 = vunpack.c.l.b16 %v406
      %v923 = vunpack.c.l.b16 %v407
      %v924 = vunpack.c.l.b16 %v408
      %v925 = vunpack.c.l.b16 %v409
      %v926 = vunpack.c.l.b16 %v410
      %v927 = vunpack.c.l.b16 %v411
      %v928 = vunpack.c.l.b16 %v412
      %v929 = vunpack.c.l.b16 %v413
      %v930 = vunpack.c.l.b16 %v414
      %v931 = vunpack.c.l.b16 %v415
      %v932 = vunpack.c.l.b16 %v416
      %v933 = vunpack.c.l.b16 %v417
      %v934 = vunpack.c.l.b16 %v418
      %v935 = vunpack.c.l.b16 %v419
      %v936 = vunpack.c.l.b16 %v420
      %v937 = vunpack.c.l.b16 %v421
      %v938 = vunpack.c.l.b16 %v422
      %v939 = vunpack.c.l.b16 %v423
      %v940 = vunpack.c.l.b16 %v424
      %v941 = vunpack.c.l.b16 %v425
      %v942 = vunpack.c.l.b16 %v426
      %v943 = vunpack.c.l.b16 %v427
      %v944 = vunpack.c.l.b16 %v428
      %v945 = vunpack.c.l.b16 %v429
      %v946 = vunpack.c.l.b16 %v430
      %v947 = vunpack.c.l.b16 %v431
      %v948 = vunpack.c.l.b16 %v432
      %v949 = vunpack.c.l.b16 %v433
      %v950 = vunpack.c.l.b16 %v434
      %v951 = vunpack.c.l.b16 %v435
      %v952 = vunpack.c.l.b16 %v436
      %v953 = vunpack.c.l.b16 %v437
      %v954 = vunpack.c.l.b16 %v438
      %v955 = vunpack.c.l.b16 %v439
      %v956 = vunpack.c.l.b16 %v440
      %v957 = vunpack.c.l.b16 %v441
      %v958 = vunpack.c.l.b16 %v442
      %v959 = vunpack.c.l.b16 %v443
      %v960 = vunpack.c.l.b16 %v444
      %v961 = vunpack.c.l.b16 %v445
      %v962 = vunpack.c.l.b16 %v446
      %v963 = vunpack.c.l.b16 %v447
      %v964 = vunpack.c.l.b16 %v448
      %v965 = vunpack.c.l.b16 %v449
      %v966 = vunpack.c.l.b16 %v450
      %v967 = vunpack.c.l.b16 %v451
      %v968 = vunpack.c.l.b16 %v452
      %v969 = vunpack.c.l.b16 %v453
      %v970 = vunpack.c.l.b16 %v454
      %v971 = vunpack.c.l.b16 %v455
      %v972 = vunpack.c.l.b16 %v456
      %v973 = vunpack.c.l.b16 %v457
      %v974 = vunpack.c.l.b16 %v458
      %v975 = vunpack.c.l.b16 %v459
      %v976 = vpack.c.b16 %v721, %v720
      %v977 = vpack.c.b16 %v723, %v722
      %v978 = vpack.c.b16 %v725, %v724
      %v979 = vpack.c.b16 %v727, %v726
      %v980 = vpack.c.b16 %v729, %v728
      %v981 = vpack.c.b16 %v731, %v730
      %v982 = vpack.c.b16 %v733, %v732
      %v983 = vpack.c.b16 %v735, %v734
      %v984 = vpack.c.b16 %v737, %v736
      %v985 = vpack.c.b16 %v739, %v738
      %v986 = vpack.c.b16 %v741, %v740
      %v987 = vpack.c.b16 %v743, %v742
      %v988 = vpack.c.b16 %v745, %v744
      %v989 = vpack.c.b16 %v747, %v746
      %v990 = vpack.c.b16 %v749, %v748
      %v991 = vpack.c.b16 %v751, %v750
      %v992 = vpack.c.b16 %v753, %v752
      %v993 = vpack.c.b16 %v755, %v754
      %v994 = vpack.c.b16 %v757, %v756
      %v995 = vpack.c.b16 %v759, %v758
      %v996 = vpack.c.b16 %v761, %v760
      %v997 = vpack.c.b16 %v763, %v762
      %v998 = vpack.c.b16 %v765, %v764
      %v999 = vpack.c.b16 %v767, %v766
      %v1000 = vpack.c.b16 %v769, %v768
      %v1001 = vpack.c.b16 %v771, %v770
      %v1002 = vpack.c.b16 %v773, %v772
      %v1003 = vpack.c.b16 %v775, %v774
      %v1004 = vpack.c.b16 %v777, %v776
      %v1005 = vpack.c.b16 %v779, %v778
      %v1006 = vpack.c.b16 %v781, %v780
      %v1007 = vpack.c.b16 %v783, %v782
      %v1008 = vpack.c.b16 %v785, %v784
      %v1009 = vpack.c.b16 %v787, %v786
      %v1010 = vpack.c.b16 %v789, %v788
      %v1011 = vpack.c.b16 %v791, %v790
      %v1012 = vpack.c.b16 %v793, %v792
      %v1013 = vpack.c.b16 %v795, %v794
      %v1014 = vpack.c.b16 %v797, %v796
      %v1015 = vpack.c.b16 %v799, %v798
      %v1016 = vpack.c.b16 %v801, %v800
      %v1017 = vpack.c.b16 %v803, %v802
      %v1018 = vpack.c.b16 %v805, %v804
      %v1019 = vpack.c.b16 %v807, %v806
      %v1020 = vpack.c.b16 %v809, %v808
      %v1021 = vpack.c.b16 %v811, %v810
      %v1022 = vpack.c.b16 %v813, %v812
      %v1023 = vpack.c.b16 %v815, %v814
      %v1024 = vpack.c.b16 %v817, %v816
      %v1025 = vpack.c.b16 %v819, %v818
      %v1026 = vpack.c.b16 %v821, %v820
      %v1027 = vpack.c.b16 %v823, %v822
      %v1028 = vpack.c.b16 %v825, %v824
      %v1029 = vpack.c.b16 %v827, %v826
      %v1030 = vpack.c.b16 %v829, %v828
      %v1031 = vpack.c.b16 %v831, %v830
      %v1032 = vpack.c.b16 %v833, %v832
      %v1033 = vpack.c.b16 %v835, %v834
      %v1034 = vpack.c.b16 %v837, %v836
      %v1035 = vpack.c.b16 %v839, %v838
      %v1036 = vpack.c.b16 %v841, %v840
      %v1037 = vpack.c.b16 %v843, %v842
      %v1038 = vpack.c.b16 %v845, %v844
      %v1039 = vpack.c.b16 %v847, %v846
      %v1040 = vpack.c.b16 %v849, %v848
      %v1041 = vpack.c.b16 %v851, %v850
      %v1042 = vpack.c.b16 %v853, %v852
      %v1043 = vpack.c.b16 %v855, %v854
      %v1044 = vpack.c.b16 %v857, %v856
      %v1045 = vpack.c.b16 %v859, %v858
      %v1046 = vpack.c.b16 %v861, %v860
      %v1047 = vpack.c.b16 %v863, %v862
      %v1048 = vpack.c.b16 %v865, %v864
      %v1049 = vpack.c.b16 %v867, %v866
      %v1050 = vpack.c.b16 %v869, %v868
      %v1051 = vpack.c.b16 %v871, %v870
      %v1052 = vpack.c.b16 %v873, %v872
      %v1053 = vpack.c.b16 %v875, %v874
      %v1054 = vpack.c.b16 %v877, %v876
      %v1055 = vpack.c.b16 %v879, %v878
      %v1056 = vpack.c.b16 %v881, %v880
      %v1057 = vpack.c.b16 %v883, %v882
      %v1058 = vpack.c.b16 %v885, %v884
      %v1059 = vpack.c.b16 %v887, %v886
      %v1060 = vpack.c.b16 %v889, %v888
      %v1061 = vpack.c.b16 %v891, %v890
      %v1062 = vpack.c.b16 %v893, %v892
      %v1063 = vpack.c.b16 %v895, %v894
      %v1064 = vpack.c.b16 %v897, %v896
      %v1065 = vpack.c.b16 %v899, %v898
      %v1066 = vpack.c.b16 %v901, %v900
      %v1067 = vpack.c.b16 %v903, %v902
      %v1068 = vpack.c.b16 %v905, %v904
      %v1069 = vpack.c.b16 %v907, %v906
      %v1070 = vpack.c.b16 %v909, %v908
      %v1071 = vpack.c.b16 %v911, %v910
      %v1072 = vpack.c.b16 %v913, %v912
      %v1073 = vpack.c.b16 %v915, %v914
      %v1074 = vpack.c.b16 %v917, %v916
      %v1075 = vpack.c.b16 %v919, %v918
      %v1076 = vpack.c.b16 %v921, %v920
      %v1077 = vpack.c.b16 %v923, %v922
      %v1078 = vpack.c.b16 %v925, %v924
      %v1079 = vpack.c.b16 %v927, %v926
      %v1080 = vpack.c.b16 %v929, %v928
      %v1081 = vpack.c.b16 %v931, %v930
      %v1082 = vpack.c.b16 %v933, %v932
      %v1083 = vpack.c.b16 %v935, %v934
      %v1084 = vpack.c.b16 %v937, %v936
      %v1085 = vpack.c.b16 %v939, %v938
      %v1086 = vpack.c.b16 %v941, %v940
      %v1087 = vpack.c.b16 %v943, %v942
      %v1088 = vpack.c.b16 %v945, %v944
      %v1089 = vpack.c.b16 %v947, %v946
      %v1090 = vpack.c.b16 %v949, %v948
      %v1091 = vpack.c.b16 %v951, %v950
      %v1092 = vpack.c.b16 %v953, %v952
      %v1093 = vpack.c.b16 %v955, %v954
      %v1094 = vpack.c.b16 %v957, %v956
      %v1095 = vpack.c.b16 %v959, %v958
      %v1096 = vpack.c.b16 %v961, %v960
      %v1097 = vpack.c.b16 %v963, %v962
      %v1098 = vpack.c.b16 %v965, %v964
      %v1099 = vpack.c.b16 %v967, %v966
      %v1100 = vpack.c.b16 %v969, %v968
      %v1101 = vpack.c.b16 %v971, %v970
      %v1102 = vpack.c.b16 %v973, %v972
      %v1103 = vpack.c.b16 %v975, %v974
      %v1108 = vunpack.c.l.b16 %v460
      %v1109 = vunpack.c.l.b16 %v461
      %v1110 = vunpack.c.l.b16 %v462
      %v1111 = vunpack.c.l.b16 %v463
      %v1112 = vpack.c.b16 %v1109, %v1108
      %v1113 = vpack.c.b16 %v1111, %v1110
      %vm1116 = vcmask 261120
      %v1118 = vsel %vm1116, %v976, 0
      %v1121 = vsel %vm1116, %v977, 0
      %v1124 = vsel %vm1116, %v978, 0
      %v1127 = vsel %vm1116, %v979, 0
      %v1130 = vsel %vm1116, %v980, 0
      %v1133 = vsel %vm1116, %v981, 0
      %v1136 = vsel %vm1116, %v982, 0
      %v1139 = vsel %vm1116, %v983, 0
      %v1142 = vsel %vm1116, %v984, 0
      %v1145 = vsel %vm1116, %v985, 0
      %v1148 = vsel %vm1116, %v986, 0
      %v1151 = vsel %vm1116, %v987, 0
      %v1154 = vsel %vm1116, %v988, 0
      %v1157 = vsel %vm1116, %v989, 0
      %v1160 = vsel %vm1116, %v990, 0
      %v1163 = vsel %vm1116, %v991, 0
      %v1166 = vsel %vm1116, %v992, 0
      %v1169 = vsel %vm1116, %v993, 0
      %v1172 = vsel %vm1116, %v994, 0
      %v1175 = vsel %vm1116, %v995, 0
      %v1178 = vsel %vm1116, %v996, 0
      %v1181 = vsel %vm1116, %v997, 0
      %v1184 = vsel %vm1116, %v998, 0
      %v1187 = vsel %vm1116, %v999, 0
      %v1190 = vsel %vm1116, %v1000, 0
      %v1193 = vsel %vm1116, %v1001, 0
      %v1196 = vsel %vm1116, %v1002, 0
      %v1199 = vsel %vm1116, %v1003, 0
      %v1202 = vsel %vm1116, %v1004, 0
      %v1205 = vsel %vm1116, %v1005, 0
      %v1208 = vsel %vm1116, %v1006, 0
      %v1211 = vsel %vm1116, %v1007, 0
      %v1214 = vsel %vm1116, %v1008, 0
      %v1217 = vsel %vm1116, %v1009, 0
      %v1220 = vsel %vm1116, %v1010, 0
      %v1223 = vsel %vm1116, %v1011, 0
      %v1226 = vsel %vm1116, %v1012, 0
      %v1229 = vsel %vm1116, %v1013, 0
      %v1232 = vsel %vm1116, %v1014, 0
      %v1235 = vsel %vm1116, %v1015, 0
      %v1238 = vsel %vm1116, %v1016, 0
      %v1241 = vsel %vm1116, %v1017, 0
      %v1244 = vsel %vm1116, %v1018, 0
      %v1247 = vsel %vm1116, %v1019, 0
      %v1250 = vsel %vm1116, %v1020, 0
      %v1253 = vsel %vm1116, %v1021, 0
      %v1256 = vsel %vm1116, %v1022, 0
      %v1259 = vsel %vm1116, %v1023, 0
      %v1262 = vsel %vm1116, %v1024, 0
      %v1265 = vsel %vm1116, %v1025, 0
      %v1268 = vsel %vm1116, %v1026, 0
      %v1271 = vsel %vm1116, %v1027, 0
      %v1274 = vsel %vm1116, %v1028, 0
      %v1277 = vsel %vm1116, %v1029, 0
      %v1280 = vsel %vm1116, %v1030, 0
      %v1283 = vsel %vm1116, %v1031, 0
      %v1286 = vsel %vm1116, %v1032, 0
      %v1289 = vsel %vm1116, %v1033, 0
      %v1292 = vsel %vm1116, %v1034, 0
      %v1295 = vsel %vm1116, %v1035, 0
      %v1298 = vsel %vm1116, %v1036, 0
      %v1301 = vsel %vm1116, %v1037, 0
      %v1304 = vsel %vm1116, %v1038, 0
      %v1307 = vsel %vm1116, %v1039, 0
      %v1310 = vsel %vm1116, %v1040, 0
      %v1313 = vsel %vm1116, %v1041, 0
      %v1316 = vsel %vm1116, %v1042, 0
      %v1319 = vsel %vm1116, %v1043, 0
      %v1322 = vsel %vm1116, %v1044, 0
      %v1325 = vsel %vm1116, %v1045, 0
      %v1328 = vsel %vm1116, %v1046, 0
      %v1331 = vsel %vm1116, %v1047, 0
      %v1334 = vsel %vm1116, %v1048, 0
      %v1337 = vsel %vm1116, %v1049, 0
      %v1340 = vsel %vm1116, %v1050, 0
      %v1343 = vsel %vm1116, %v1051, 0
      %v1346 = vsel %vm1116, %v1052, 0
      %v1349 = vsel %vm1116, %v1053, 0
      %v1352 = vsel %vm1116, %v1054, 0
      %v1355 = vsel %vm1116, %v1055, 0
      %v1358 = vsel %vm1116, %v1056, 0
      %v1361 = vsel %vm1116, %v1057, 0
      %v1364 = vsel %vm1116, %v1058, 0
      %v1367 = vsel %vm1116, %v1059, 0
      %v1370 = vsel %vm1116, %v1060, 0
      %v1373 = vsel %vm1116, %v1061, 0
      %v1376 = vsel %vm1116, %v1062, 0
      %v1379 = vsel %vm1116, %v1063, 0
      %v1382 = vsel %vm1116, %v1064, 0
      %v1385 = vsel %vm1116, %v1065, 0
      %v1388 = vsel %vm1116, %v1066, 0
      %v1391 = vsel %vm1116, %v1067, 0
      %v1394 = vsel %vm1116, %v1068, 0
      %v1397 = vsel %vm1116, %v1069, 0
      %v1400 = vsel %vm1116, %v1070, 0
      %v1403 = vsel %vm1116, %v1071, 0
      %v1406 = vsel %vm1116, %v1072, 0
      %v1409 = vsel %vm1116, %v1073, 0
      %v1412 = vsel %vm1116, %v1074, 0
      %v1415 = vsel %vm1116, %v1075, 0
      %v1418 = vsel %vm1116, %v1076, 0
      %v1421 = vsel %vm1116, %v1077, 0
      %v1424 = vsel %vm1116, %v1078, 0
      %v1427 = vsel %vm1116, %v1079, 0
      %v1430 = vsel %vm1116, %v1080, 0
      %v1433 = vsel %vm1116, %v1081, 0
      %v1436 = vsel %vm1116, %v1082, 0
      %v1439 = vsel %vm1116, %v1083, 0
      %v1442 = vsel %vm1116, %v1084, 0
      %v1445 = vsel %vm1116, %v1085, 0
      %v1448 = vsel %vm1116, %v1086, 0
      %v1451 = vsel %vm1116, %v1087, 0
      %v1454 = vsel %vm1116, %v1088, 0
      %v1457 = vsel %vm1116, %v1089, 0
      %v1460 = vsel %vm1116, %v1090, 0
      %v1463 = vsel %vm1116, %v1091, 0
      %v1466 = vsel %vm1116, %v1092, 0
      %v1469 = vsel %vm1116, %v1093, 0
      %v1472 = vsel %vm1116, %v1094, 0
      %v1475 = vsel %vm1116, %v1095, 0
      %v1478 = vsel %vm1116, %v1096, 0
      %v1481 = vsel %vm1116, %v1097, 0
      %v1484 = vsel %vm1116, %v1098, 0
      %v1487 = vsel %vm1116, %v1099, 0
      %v1490 = vsel %vm1116, %v1100, 0
      %v1493 = vsel %vm1116, %v1101, 0
      %v1496 = vsel %vm1116, %v1102, 0
      %v1499 = vsel %vm1116, %v1103, 0
      %1501 = vmatprep.subr.bf16.mxu0 0
      %1502 = vmatpush1.bf16.msra.mxu0 %v1112
      %1503 = vmatprep.subr.bf16.mxu0 0
      %1504 = vmatpush1.bf16.msra.mxu0 %v1113
      %1505 = vmatprep.subr.bf16.mxu0 0
      %1506 = vmatpush1.bf16.msra.mxu0 0
      %1507 = vmatprep.subr.bf16.mxu0 0
      %1508 = vmatpush1.bf16.msra.mxu0 0
      %1509 = vmatprep.subr.bf16.mxu0 0
      %1510 = vmatpush1.bf16.msra.mxu0 0
      %1511 = vmatprep.subr.bf16.mxu0 0
      %1512 = vmatpush1.bf16.msra.mxu0 0
      %1513 = vmatprep.subr.bf16.mxu0 0
      %1514 = vmatpush1.bf16.msra.mxu0 0
      %1515 = vmatprep.subr.bf16.mxu0 0
      %1516 = vmatpush1.bf16.msra.mxu0 0
      %1517 = vmatprep.subr.bf16.mxu0 0
      %1518 = vmatpush1.bf16.msra.mxu0 0
      %1519 = vmatprep.subr.bf16.mxu0 0
      %1520 = vmatpush1.bf16.msra.mxu0 0
      %1521 = vmatprep.subr.bf16.mxu0 0
      %1522 = vmatpush1.bf16.msra.mxu0 0
      %1523 = vmatprep.subr.bf16.mxu0 0
      %1524 = vmatpush1.bf16.msra.mxu0 0
      %1525 = vmatprep.subr.bf16.mxu0 0
      %1526 = vmatpush1.bf16.msra.mxu0 0
      %1527 = vmatprep.subr.bf16.mxu0 0
      %1528 = vmatpush1.bf16.msra.mxu0 0
      %1529 = vmatprep.subr.bf16.mxu0 0
      %1530 = vmatpush1.bf16.msra.mxu0 0
      %1531 = vmatprep.subr.bf16.mxu0 0
      %1532 = vmatpush1.bf16.msra.mxu0 0
      %1533 = vmatprep.mubr.bf16.mxu0 0
      %1534 = vmatmul.mubr.bf16.gmra.mrb[0].mxu0 %v1118
      %v1535 = vpop.f32.mrb[0].mxu0
      %v1536 = vadd.f32 0.0, %v1535
      %v1537 = vpop.f32.mrb[0].mxu0
      %v1538 = vpop.f32.mrb[0].mxu0
      %v1539 = vadd.f32 0.0, %v1538
      %v1540 = vpop.f32.mrb[0].mxu0
      %1541 = vmatprep.mubr.bf16.mxu0 0
      %1542 = vmatmul.mubr.bf16.gmra.mrb[0].mxu0 %v1121
      %v1543 = vpop.f32.mrb[0].mxu0
      %v1544 = vadd.f32 0.0, %v1543
      %v1545 = vpop.f32.mrb[0].mxu0
      %v1546 = vpop.f32.mrb[0].mxu0
      %v1547 = vadd.f32 0.0, %v1546
      %v1548 = vpop.f32.mrb[0].mxu0
      %1549 = vmatprep.mubr.bf16.mxu0 0
      %1550 = vmatmul.mubr.bf16.gmra.mrb[0].mxu0 %v1124
      %v1551 = vpop.f32.mrb[0].mxu0
      %v1552 = vadd.f32 0.0, %v1551
      %v1553 = vpop.f32.mrb[0].mxu0
      %v1554 = vpop.f32.mrb[0].mxu0
      %v1555 = vadd.f32 0.0, %v1554
      %v1556 = vpop.f32.mrb[0].mxu0
      %1557 = vmatprep.mubr.bf16.mxu0 0
      %1558 = vmatmul.mubr.bf16.gmra.mrb[0].mxu0 %v1127
      %v1559 = vpop.f32.mrb[0].mxu0
      %v1560 = vadd.f32 0.0, %v1559
      %v1561 = vpop.f32.mrb[0].mxu0
      %v1562 = vpop.f32.mrb[0].mxu0
      %v1563 = vadd.f32 0.0, %v1562
      %v1564 = vpop.f32.mrb[0].mxu0
      %1565 = vmatprep.mubr.bf16.mxu0 0
      %1566 = vmatmul.mubr.bf16.gmra.mrb[0].mxu0 %v1130
      %v1567 = vpop.f32.mrb[0].mxu0
      %v1568 = vadd.f32 0.0, %v1567
      %v1569 = vpop.f32.mrb[0].mxu0
      %v1570 = vpop.f32.mrb[0].mxu0
      %v1571 = vadd.f32 0.0, %v1570
      %v1572 = vpop.f32.mrb[0].mxu0
      %1573 = vmatprep.mubr.bf16.mxu0 0
      %1574 = vmatmul.mubr.bf16.gmra.mrb[0].mxu0 %v1133
      %v1575 = vpop.f32.mrb[0].mxu0
      %v1576 = vadd.f32 0.0, %v1575
      %v1577 = vpop.f32.mrb[0].mxu0
      %v1578 = vpop.f32.mrb[0].mxu0
      %v1579 = vadd.f32 0.0, %v1578
      %v1580 = vpop.f32.mrb[0].mxu0
      %1581 = vmatprep.mubr.bf16.mxu0 0
      %1582 = vmatmul.mubr.bf16.gmra.mrb[0].mxu0 %v1136
      %v1583 = vpop.f32.mrb[0].mxu0
      %v1584 = vadd.f32 0.0, %v1583
      %v1585 = vpop.f32.mrb[0].mxu0
      %v1586 = vpop.f32.mrb[0].mxu0
      %v1587 = vadd.f32 0.0, %v1586
      %v1588 = vpop.f32.mrb[0].mxu0
      %1589 = vmatprep.mubr.bf16.mxu0 0
      %1590 = vmatmul.mubr.bf16.gmra.mrb[0].mxu0 %v1139
      %v1591 = vpop.f32.mrb[0].mxu0
      %v1592 = vadd.f32 0.0, %v1591
      %v1593 = vpop.f32.mrb[0].mxu0
      %v1594 = vpop.f32.mrb[0].mxu0
      %v1595 = vadd.f32 0.0, %v1594
      %v1596 = vpop.f32.mrb[0].mxu0
      %1597 = vmatprep.mubr.bf16.mxu0 0
      %1598 = vmatmul.mubr.bf16.gmra.mrb[0].mxu0 %v1142
      %v1599 = vpop.f32.mrb[0].mxu0
      %v1600 = vadd.f32 0.0, %v1599
      %v1601 = vpop.f32.mrb[0].mxu0
      %v1602 = vpop.f32.mrb[0].mxu0
      %v1603 = vadd.f32 0.0, %v1602
      %v1604 = vpop.f32.mrb[0].mxu0
      %1605 = vmatprep.mubr.bf16.mxu0 0
      %1606 = vmatmul.mubr.bf16.gmra.mrb[0].mxu0 %v1145
      %v1607 = vpop.f32.mrb[0].mxu0
      %v1608 = vadd.f32 0.0, %v1607
      %v1609 = vpop.f32.mrb[0].mxu0
      %v1610 = vpop.f32.mrb[0].mxu0
      %v1611 = vadd.f32 0.0, %v1610
      %v1612 = vpop.f32.mrb[0].mxu0
      %1613 = vmatprep.mubr.bf16.mxu0 0
      %1614 = vmatmul.mubr.bf16.gmra.mrb[0].mxu0 %v1148
      %v1615 = vpop.f32.mrb[0].mxu0
      %v1616 = vadd.f32 0.0, %v1615
      %v1617 = vpop.f32.mrb[0].mxu0
      %v1618 = vpop.f32.mrb[0].mxu0
      %v1619 = vadd.f32 0.0, %v1618
      %v1620 = vpop.f32.mrb[0].mxu0
      %1621 = vmatprep.mubr.bf16.mxu0 0
      %1622 = vmatmul.mubr.bf16.gmra.mrb[0].mxu0 %v1151
      %v1623 = vpop.f32.mrb[0].mxu0
      %v1624 = vadd.f32 0.0, %v1623
      %v1625 = vpop.f32.mrb[0].mxu0
      %v1626 = vpop.f32.mrb[0].mxu0
      %v1627 = vadd.f32 0.0, %v1626
      %v1628 = vpop.f32.mrb[0].mxu0
      %1629 = vmatprep.mubr.bf16.mxu0 0
      %1630 = vmatmul.mubr.bf16.gmra.mrb[0].mxu0 %v1154
      %v1631 = vpop.f32.mrb[0].mxu0
      %v1632 = vadd.f32 0.0, %v1631
      %v1633 = vpop.f32.mrb[0].mxu0
      %v1634 = vpop.f32.mrb[0].mxu0
      %v1635 = vadd.f32 0.0, %v1634
      %v1636 = vpop.f32.mrb[0].mxu0
      %1637 = vmatprep.mubr.bf16.mxu0 0
      %1638 = vmatmul.mubr.bf16.gmra.mrb[0].mxu0 %v1157
      %v1639 = vpop.f32.mrb[0].mxu0
      %v1640 = vadd.f32 0.0, %v1639
      %v1641 = vpop.f32.mrb[0].mxu0
      %v1642 = vpop.f32.mrb[0].mxu0
      %v1643 = vadd.f32 0.0, %v1642
      %v1644 = vpop.f32.mrb[0].mxu0
      %1645 = vmatprep.mubr.bf16.mxu0 0
      %1646 = vmatmul.mubr.bf16.gmra.mrb[0].mxu0 %v1160
      %v1647 = vpop.f32.mrb[0].mxu0
      %v1648 = vadd.f32 0.0, %v1647
      %v1649 = vpop.f32.mrb[0].mxu0
      %v1650 = vpop.f32.mrb[0].mxu0
      %v1651 = vadd.f32 0.0, %v1650
      %v1652 = vpop.f32.mrb[0].mxu0
      %1653 = vmatprep.mubr.bf16.mxu0 0
      %1654 = vmatmul.mubr.bf16.gmra.mrb[0].mxu0 %v1163
      %v1655 = vpop.f32.mrb[0].mxu0
      %v1656 = vadd.f32 0.0, %v1655
      %v1657 = vpop.f32.mrb[0].mxu0
      %v1658 = vpop.f32.mrb[0].mxu0
      %v1659 = vadd.f32 0.0, %v1658
      %v1660 = vpop.f32.mrb[0].mxu0
      %1661 = vmatprep.mubr.bf16.mxu0 0
      %1662 = vmatmul.mubr.bf16.gmra.mrb[0].mxu0 %v1166
      %v1663 = vpop.f32.mrb[0].mxu0
      %v1664 = vadd.f32 0.0, %v1663
      %v1665 = vpop.f32.mrb[0].mxu0
      %v1666 = vpop.f32.mrb[0].mxu0
      %v1667 = vadd.f32 0.0, %v1666
      %v1668 = vpop.f32.mrb[0].mxu0
      %1669 = vmatprep.mubr.bf16.mxu0 0
      %1670 = vmatmul.mubr.bf16.gmra.mrb[0].mxu0 %v1169
      %v1671 = vpop.f32.mrb[0].mxu0
      %v1672 = vadd.f32 0.0, %v1671
      %v1673 = vpop.f32.mrb[0].mxu0
      %v1674 = vpop.f32.mrb[0].mxu0
      %v1675 = vadd.f32 0.0, %v1674
      %v1676 = vpop.f32.mrb[0].mxu0
      %1677 = vmatprep.mubr.bf16.mxu0 0
      %1678 = vmatmul.mubr.bf16.gmra.mrb[0].mxu0 %v1172
      %v1679 = vpop.f32.mrb[0].mxu0
      %v1680 = vadd.f32 0.0, %v1679
      %v1681 = vpop.f32.mrb[0].mxu0
      %v1682 = vpop.f32.mrb[0].mxu0
      %v1683 = vadd.f32 0.0, %v1682
      %v1684 = vpop.f32.mrb[0].mxu0
      %1685 = vmatprep.mubr.bf16.mxu0 0
      %1686 = vmatmul.mubr.bf16.gmra.mrb[0].mxu0 %v1175
      %v1687 = vpop.f32.mrb[0].mxu0
      %v1688 = vadd.f32 0.0, %v1687
      %v1689 = vpop.f32.mrb[0].mxu0
      %v1690 = vpop.f32.mrb[0].mxu0
      %v1691 = vadd.f32 0.0, %v1690
      %v1692 = vpop.f32.mrb[0].mxu0
      %1693 = vmatprep.mubr.bf16.mxu0 0
      %1694 = vmatmul.mubr.bf16.gmra.mrb[0].mxu0 %v1178
      %v1695 = vpop.f32.mrb[0].mxu0
      %v1696 = vadd.f32 0.0, %v1695
      %v1697 = vpop.f32.mrb[0].mxu0
      %v1698 = vpop.f32.mrb[0].mxu0
      %v1699 = vadd.f32 0.0, %v1698
      %v1700 = vpop.f32.mrb[0].mxu0
      %1701 = vmatprep.mubr.bf16.mxu0 0
      %1702 = vmatmul.mubr.bf16.gmra.mrb[0].mxu0 %v1181
      %v1703 = vpop.f32.mrb[0].mxu0
      %v1704 = vadd.f32 0.0, %v1703
      %v1705 = vpop.f32.mrb[0].mxu0
      %v1706 = vpop.f32.mrb[0].mxu0
      %v1707 = vadd.f32 0.0, %v1706
      %v1708 = vpop.f32.mrb[0].mxu0
      %1709 = vmatprep.mubr.bf16.mxu0 0
      %1710 = vmatmul.mubr.bf16.gmra.mrb[0].mxu0 %v1184
      %v1711 = vpop.f32.mrb[0].mxu0
      %v1712 = vadd.f32 0.0, %v1711
      %v1713 = vpop.f32.mrb[0].mxu0
      %v1714 = vpop.f32.mrb[0].mxu0
      %v1715 = vadd.f32 0.0, %v1714
      %v1716 = vpop.f32.mrb[0].mxu0
      %1717 = vmatprep.mubr.bf16.mxu0 0
      %1718 = vmatmul.mubr.bf16.gmra.mrb[0].mxu0 %v1187
      %v1719 = vpop.f32.mrb[0].mxu0
      %v1720 = vadd.f32 0.0, %v1719
      %v1721 = vpop.f32.mrb[0].mxu0
      %v1722 = vpop.f32.mrb[0].mxu0
      %v1723 = vadd.f32 0.0, %v1722
      %v1724 = vpop.f32.mrb[0].mxu0
      %1725 = vmatprep.mubr.bf16.mxu0 0
      %1726 = vmatmul.mubr.bf16.gmra.mrb[0].mxu0 %v1190
      %v1727 = vpop.f32.mrb[0].mxu0
      %v1728 = vadd.f32 0.0, %v1727
      %v1729 = vpop.f32.mrb[0].mxu0
      %v1730 = vpop.f32.mrb[0].mxu0
      %v1731 = vadd.f32 0.0, %v1730
      %v1732 = vpop.f32.mrb[0].mxu0
      %1733 = vmatprep.mubr.bf16.mxu0 0
      %1734 = vmatmul.mubr.bf16.gmra.mrb[0].mxu0 %v1193
      %v1735 = vpop.f32.mrb[0].mxu0
      %v1736 = vadd.f32 0.0, %v1735
      %v1737 = vpop.f32.mrb[0].mxu0
      %v1738 = vpop.f32.mrb[0].mxu0
      %v1739 = vadd.f32 0.0, %v1738
      %v1740 = vpop.f32.mrb[0].mxu0
      %1741 = vmatprep.mubr.bf16.mxu0 0
      %1742 = vmatmul.mubr.bf16.gmra.mrb[0].mxu0 %v1196
      %v1743 = vpop.f32.mrb[0].mxu0
      %v1744 = vadd.f32 0.0, %v1743
      %v1745 = vpop.f32.mrb[0].mxu0
      %v1746 = vpop.f32.mrb[0].mxu0
      %v1747 = vadd.f32 0.0, %v1746
      %v1748 = vpop.f32.mrb[0].mxu0
      %1749 = vmatprep.mubr.bf16.mxu0 0
      %1750 = vmatmul.mubr.bf16.gmra.mrb[0].mxu0 %v1199
      %v1751 = vpop.f32.mrb[0].mxu0
      %v1752 = vadd.f32 0.0, %v1751
      %v1753 = vpop.f32.mrb[0].mxu0
      %v1754 = vpop.f32.mrb[0].mxu0
      %v1755 = vadd.f32 0.0, %v1754
      %v1756 = vpop.f32.mrb[0].mxu0
      %1757 = vmatprep.mubr.bf16.mxu0 0
      %1758 = vmatmul.mubr.bf16.gmra.mrb[0].mxu0 %v1202
      %v1759 = vpop.f32.mrb[0].mxu0
      %v1760 = vadd.f32 0.0, %v1759
      %v1761 = vpop.f32.mrb[0].mxu0
      %v1762 = vpop.f32.mrb[0].mxu0
      %v1763 = vadd.f32 0.0, %v1762
      %v1764 = vpop.f32.mrb[0].mxu0
      %1765 = vmatprep.mubr.bf16.mxu0 0
      %1766 = vmatmul.mubr.bf16.gmra.mrb[0].mxu0 %v1205
      %v1767 = vpop.f32.mrb[0].mxu0
      %v1768 = vadd.f32 0.0, %v1767
      %v1769 = vpop.f32.mrb[0].mxu0
      %v1770 = vpop.f32.mrb[0].mxu0
      %v1771 = vadd.f32 0.0, %v1770
      %v1772 = vpop.f32.mrb[0].mxu0
      %1773 = vmatprep.mubr.bf16.mxu0 0
      %1774 = vmatmul.mubr.bf16.gmra.mrb[0].mxu0 %v1208
      %v1775 = vpop.f32.mrb[0].mxu0
      %v1776 = vadd.f32 0.0, %v1775
      %v1777 = vpop.f32.mrb[0].mxu0
      %v1778 = vpop.f32.mrb[0].mxu0
      %v1779 = vadd.f32 0.0, %v1778
      %v1780 = vpop.f32.mrb[0].mxu0
      %1781 = vmatprep.mubr.bf16.mxu0 0
      %1782 = vmatmul.mubr.bf16.gmra.mrb[0].mxu0 %v1211
      %v1783 = vpop.f32.mrb[0].mxu0
      %v1784 = vadd.f32 0.0, %v1783
      %v1785 = vpop.f32.mrb[0].mxu0
      %v1786 = vpop.f32.mrb[0].mxu0
      %v1787 = vadd.f32 0.0, %v1786
      %v1788 = vpop.f32.mrb[0].mxu0
      %1789 = vmatprep.mubr.bf16.mxu0 0
      %1790 = vmatmul.mubr.bf16.gmra.mrb[0].mxu0 %v1214
      %v1791 = vpop.f32.mrb[0].mxu0
      %v1792 = vadd.f32 0.0, %v1791
      %v1793 = vpop.f32.mrb[0].mxu0
      %v1794 = vpop.f32.mrb[0].mxu0
      %v1795 = vadd.f32 0.0, %v1794
      %v1796 = vpop.f32.mrb[0].mxu0
      %1797 = vmatprep.mubr.bf16.mxu0 0
      %1798 = vmatmul.mubr.bf16.gmra.mrb[0].mxu0 %v1217
      %v1799 = vpop.f32.mrb[0].mxu0
      %v1800 = vadd.f32 0.0, %v1799
      %v1801 = vpop.f32.mrb[0].mxu0
      %v1802 = vpop.f32.mrb[0].mxu0
      %v1803 = vadd.f32 0.0, %v1802
      %v1804 = vpop.f32.mrb[0].mxu0
      %1805 = vmatprep.mubr.bf16.mxu0 0
      %1806 = vmatmul.mubr.bf16.gmra.mrb[0].mxu0 %v1220
      %v1807 = vpop.f32.mrb[0].mxu0
      %v1808 = vadd.f32 0.0, %v1807
      %v1809 = vpop.f32.mrb[0].mxu0
      %v1810 = vpop.f32.mrb[0].mxu0
      %v1811 = vadd.f32 0.0, %v1810
      %v1812 = vpop.f32.mrb[0].mxu0
      %1813 = vmatprep.mubr.bf16.mxu0 0
      %1814 = vmatmul.mubr.bf16.gmra.mrb[0].mxu0 %v1223
      %v1815 = vpop.f32.mrb[0].mxu0
      %v1816 = vadd.f32 0.0, %v1815
      %v1817 = vpop.f32.mrb[0].mxu0
      %v1818 = vpop.f32.mrb[0].mxu0
      %v1819 = vadd.f32 0.0, %v1818
      %v1820 = vpop.f32.mrb[0].mxu0
      %1821 = vmatprep.mubr.bf16.mxu0 0
      %1822 = vmatmul.mubr.bf16.gmra.mrb[0].mxu0 %v1226
      %v1823 = vpop.f32.mrb[0].mxu0
      %v1824 = vadd.f32 0.0, %v1823
      %v1825 = vpop.f32.mrb[0].mxu0
      %v1826 = vpop.f32.mrb[0].mxu0
      %v1827 = vadd.f32 0.0, %v1826
      %v1828 = vpop.f32.mrb[0].mxu0
      %1829 = vmatprep.mubr.bf16.mxu0 0
      %1830 = vmatmul.mubr.bf16.gmra.mrb[0].mxu0 %v1229
      %v1831 = vpop.f32.mrb[0].mxu0
      %v1832 = vadd.f32 0.0, %v1831
      %v1833 = vpop.f32.mrb[0].mxu0
      %v1834 = vpop.f32.mrb[0].mxu0
      %v1835 = vadd.f32 0.0, %v1834
      %v1836 = vpop.f32.mrb[0].mxu0
      %1837 = vmatprep.mubr.bf16.mxu0 0
      %1838 = vmatmul.mubr.bf16.gmra.mrb[0].mxu0 %v1232
      %v1839 = vpop.f32.mrb[0].mxu0
      %v1840 = vadd.f32 0.0, %v1839
      %v1841 = vpop.f32.mrb[0].mxu0
      %v1842 = vpop.f32.mrb[0].mxu0
      %v1843 = vadd.f32 0.0, %v1842
      %v1844 = vpop.f32.mrb[0].mxu0
      %1845 = vmatprep.mubr.bf16.mxu0 0
      %1846 = vmatmul.mubr.bf16.gmra.mrb[0].mxu0 %v1235
      %v1847 = vpop.f32.mrb[0].mxu0
      %v1848 = vadd.f32 0.0, %v1847
      %v1849 = vpop.f32.mrb[0].mxu0
      %v1850 = vpop.f32.mrb[0].mxu0
      %v1851 = vadd.f32 0.0, %v1850
      %v1852 = vpop.f32.mrb[0].mxu0
      %1853 = vmatprep.mubr.bf16.mxu0 0
      %1854 = vmatmul.mubr.bf16.gmra.mrb[0].mxu0 %v1238
      %v1855 = vpop.f32.mrb[0].mxu0
      %v1856 = vadd.f32 0.0, %v1855
      %v1857 = vpop.f32.mrb[0].mxu0
      %v1858 = vpop.f32.mrb[0].mxu0
      %v1859 = vadd.f32 0.0, %v1858
      %v1860 = vpop.f32.mrb[0].mxu0
      %1861 = vmatprep.mubr.bf16.mxu0 0
      %1862 = vmatmul.mubr.bf16.gmra.mrb[0].mxu0 %v1241
      %v1863 = vpop.f32.mrb[0].mxu0
      %v1864 = vadd.f32 0.0, %v1863
      %v1865 = vpop.f32.mrb[0].mxu0
      %v1866 = vpop.f32.mrb[0].mxu0
      %v1867 = vadd.f32 0.0, %v1866
      %v1868 = vpop.f32.mrb[0].mxu0
      %1869 = vmatprep.mubr.bf16.mxu0 0
      %1870 = vmatmul.mubr.bf16.gmra.mrb[0].mxu0 %v1244
      %v1871 = vpop.f32.mrb[0].mxu0
      %v1872 = vadd.f32 0.0, %v1871
      %v1873 = vpop.f32.mrb[0].mxu0
      %v1874 = vpop.f32.mrb[0].mxu0
      %v1875 = vadd.f32 0.0, %v1874
      %v1876 = vpop.f32.mrb[0].mxu0
      %1877 = vmatprep.mubr.bf16.mxu0 0
      %1878 = vmatmul.mubr.bf16.gmra.mrb[0].mxu0 %v1247
      %v1879 = vpop.f32.mrb[0].mxu0
      %v1880 = vadd.f32 0.0, %v1879
      %v1881 = vpop.f32.mrb[0].mxu0
      %v1882 = vpop.f32.mrb[0].mxu0
      %v1883 = vadd.f32 0.0, %v1882
      %v1884 = vpop.f32.mrb[0].mxu0
      %1885 = vmatprep.mubr.bf16.mxu0 0
      %1886 = vmatmul.mubr.bf16.gmra.mrb[0].mxu0 %v1250
      %v1887 = vpop.f32.mrb[0].mxu0
      %v1888 = vadd.f32 0.0, %v1887
      %v1889 = vpop.f32.mrb[0].mxu0
      %v1890 = vpop.f32.mrb[0].mxu0
      %v1891 = vadd.f32 0.0, %v1890
      %v1892 = vpop.f32.mrb[0].mxu0
      %1893 = vmatprep.mubr.bf16.mxu0 0
      %1894 = vmatmul.mubr.bf16.gmra.mrb[0].mxu0 %v1253
      %v1895 = vpop.f32.mrb[0].mxu0
      %v1896 = vadd.f32 0.0, %v1895
      %v1897 = vpop.f32.mrb[0].mxu0
      %v1898 = vpop.f32.mrb[0].mxu0
      %v1899 = vadd.f32 0.0, %v1898
      %v1900 = vpop.f32.mrb[0].mxu0
      %1901 = vmatprep.mubr.bf16.mxu0 0
      %1902 = vmatmul.mubr.bf16.gmra.mrb[0].mxu0 %v1256
      %v1903 = vpop.f32.mrb[0].mxu0
      %v1904 = vadd.f32 0.0, %v1903
      %v1905 = vpop.f32.mrb[0].mxu0
      %v1906 = vpop.f32.mrb[0].mxu0
      %v1907 = vadd.f32 0.0, %v1906
      %v1908 = vpop.f32.mrb[0].mxu0
      %1909 = vmatprep.mubr.bf16.mxu0 0
      %1910 = vmatmul.mubr.bf16.gmra.mrb[0].mxu0 %v1259
      %v1911 = vpop.f32.mrb[0].mxu0
      %v1912 = vadd.f32 0.0, %v1911
      %v1913 = vpop.f32.mrb[0].mxu0
      %v1914 = vpop.f32.mrb[0].mxu0
      %v1915 = vadd.f32 0.0, %v1914
      %v1916 = vpop.f32.mrb[0].mxu0
      %1917 = vmatprep.mubr.bf16.mxu0 0
      %1918 = vmatmul.mubr.bf16.gmra.mrb[0].mxu0 %v1262
      %v1919 = vpop.f32.mrb[0].mxu0
      %v1920 = vadd.f32 0.0, %v1919
      %v1921 = vpop.f32.mrb[0].mxu0
      %v1922 = vpop.f32.mrb[0].mxu0
      %v1923 = vadd.f32 0.0, %v1922
      %v1924 = vpop.f32.mrb[0].mxu0
      %1925 = vmatprep.mubr.bf16.mxu0 0
      %1926 = vmatmul.mubr.bf16.gmra.mrb[0].mxu0 %v1265
      %v1927 = vpop.f32.mrb[0].mxu0
      %v1928 = vadd.f32 0.0, %v1927
      %v1929 = vpop.f32.mrb[0].mxu0
      %v1930 = vpop.f32.mrb[0].mxu0
      %v1931 = vadd.f32 0.0, %v1930
      %v1932 = vpop.f32.mrb[0].mxu0
      %1933 = vmatprep.mubr.bf16.mxu0 0
      %1934 = vmatmul.mubr.bf16.gmra.mrb[0].mxu0 %v1268
      %v1935 = vpop.f32.mrb[0].mxu0
      %v1936 = vadd.f32 0.0, %v1935
      %v1937 = vpop.f32.mrb[0].mxu0
      %v1938 = vpop.f32.mrb[0].mxu0
      %v1939 = vadd.f32 0.0, %v1938
      %v1940 = vpop.f32.mrb[0].mxu0
      %1941 = vmatprep.mubr.bf16.mxu0 0
      %1942 = vmatmul.mubr.bf16.gmra.mrb[0].mxu0 %v1271
      %v1943 = vpop.f32.mrb[0].mxu0
      %v1944 = vadd.f32 0.0, %v1943
      %v1945 = vpop.f32.mrb[0].mxu0
      %v1946 = vpop.f32.mrb[0].mxu0
      %v1947 = vadd.f32 0.0, %v1946
      %v1948 = vpop.f32.mrb[0].mxu0
      %1949 = vmatprep.mubr.bf16.mxu0 0
      %1950 = vmatmul.mubr.bf16.gmra.mrb[0].mxu0 %v1274
      %v1951 = vpop.f32.mrb[0].mxu0
      %v1952 = vadd.f32 0.0, %v1951
      %v1953 = vpop.f32.mrb[0].mxu0
      %v1954 = vpop.f32.mrb[0].mxu0
      %v1955 = vadd.f32 0.0, %v1954
      %v1956 = vpop.f32.mrb[0].mxu0
      %1957 = vmatprep.mubr.bf16.mxu0 0
      %1958 = vmatmul.mubr.bf16.gmra.mrb[0].mxu0 %v1277
      %v1959 = vpop.f32.mrb[0].mxu0
      %v1960 = vadd.f32 0.0, %v1959
      %v1961 = vpop.f32.mrb[0].mxu0
      %v1962 = vpop.f32.mrb[0].mxu0
      %v1963 = vadd.f32 0.0, %v1962
      %v1964 = vpop.f32.mrb[0].mxu0
      %1965 = vmatprep.mubr.bf16.mxu0 0
      %1966 = vmatmul.mubr.bf16.gmra.mrb[0].mxu0 %v1280
      %v1967 = vpop.f32.mrb[0].mxu0
      %v1968 = vadd.f32 0.0, %v1967
      %v1969 = vpop.f32.mrb[0].mxu0
      %v1970 = vpop.f32.mrb[0].mxu0
      %v1971 = vadd.f32 0.0, %v1970
      %v1972 = vpop.f32.mrb[0].mxu0
      %1973 = vmatprep.mubr.bf16.mxu0 0
      %1974 = vmatmul.mubr.bf16.gmra.mrb[0].mxu0 %v1283
      %v1975 = vpop.f32.mrb[0].mxu0
      %v1976 = vadd.f32 0.0, %v1975
      %v1977 = vpop.f32.mrb[0].mxu0
      %v1978 = vpop.f32.mrb[0].mxu0
      %v1979 = vadd.f32 0.0, %v1978
      %v1980 = vpop.f32.mrb[0].mxu0
      %1981 = vmatprep.mubr.bf16.mxu0 0
      %1982 = vmatmul.mubr.bf16.gmra.mrb[0].mxu0 %v1286
      %v1983 = vpop.f32.mrb[0].mxu0
      %v1984 = vadd.f32 0.0, %v1983
      %v1985 = vpop.f32.mrb[0].mxu0
      %v1986 = vpop.f32.mrb[0].mxu0
      %v1987 = vadd.f32 0.0, %v1986
      %v1988 = vpop.f32.mrb[0].mxu0
      %1989 = vmatprep.mubr.bf16.mxu0 0
      %1990 = vmatmul.mubr.bf16.gmra.mrb[0].mxu0 %v1289
      %v1991 = vpop.f32.mrb[0].mxu0
      %v1992 = vadd.f32 0.0, %v1991
      %v1993 = vpop.f32.mrb[0].mxu0
      %v1994 = vpop.f32.mrb[0].mxu0
      %v1995 = vadd.f32 0.0, %v1994
      %v1996 = vpop.f32.mrb[0].mxu0
      %1997 = vmatprep.mubr.bf16.mxu0 0
      %1998 = vmatmul.mubr.bf16.gmra.mrb[0].mxu0 %v1292
      %v1999 = vpop.f32.mrb[0].mxu0
      %v2000 = vadd.f32 0.0, %v1999
      %v2001 = vpop.f32.mrb[0].mxu0
      %v2002 = vpop.f32.mrb[0].mxu0
      %v2003 = vadd.f32 0.0, %v2002
      %v2004 = vpop.f32.mrb[0].mxu0
      %2005 = vmatprep.mubr.bf16.mxu0 0
      %2006 = vmatmul.mubr.bf16.gmra.mrb[0].mxu0 %v1295
      %v2007 = vpop.f32.mrb[0].mxu0
      %v2008 = vadd.f32 0.0, %v2007
      %v2009 = vpop.f32.mrb[0].mxu0
      %v2010 = vpop.f32.mrb[0].mxu0
      %v2011 = vadd.f32 0.0, %v2010
      %v2012 = vpop.f32.mrb[0].mxu0
      %2013 = vmatprep.mubr.bf16.mxu0 0
      %2014 = vmatmul.mubr.bf16.gmra.mrb[0].mxu0 %v1298
      %v2015 = vpop.f32.mrb[0].mxu0
      %v2016 = vadd.f32 0.0, %v2015
      %v2017 = vpop.f32.mrb[0].mxu0
      %v2018 = vpop.f32.mrb[0].mxu0
      %v2019 = vadd.f32 0.0, %v2018
      %v2020 = vpop.f32.mrb[0].mxu0
      %2021 = vmatprep.mubr.bf16.mxu0 0
      %2022 = vmatmul.mubr.bf16.gmra.mrb[0].mxu0 %v1301
      %v2023 = vpop.f32.mrb[0].mxu0
      %v2024 = vadd.f32 0.0, %v2023
      %v2025 = vpop.f32.mrb[0].mxu0
      %v2026 = vpop.f32.mrb[0].mxu0
      %v2027 = vadd.f32 0.0, %v2026
      %v2028 = vpop.f32.mrb[0].mxu0
      %2029 = vmatprep.mubr.bf16.mxu0 0
      %2030 = vmatmul.mubr.bf16.gmra.mrb[0].mxu0 %v1304
      %v2031 = vpop.f32.mrb[0].mxu0
      %v2032 = vadd.f32 0.0, %v2031
      %v2033 = vpop.f32.mrb[0].mxu0
      %v2034 = vpop.f32.mrb[0].mxu0
      %v2035 = vadd.f32 0.0, %v2034
      %v2036 = vpop.f32.mrb[0].mxu0
      %2037 = vmatprep.mubr.bf16.mxu0 0
      %2038 = vmatmul.mubr.bf16.gmra.mrb[0].mxu0 %v1307
      %v2039 = vpop.f32.mrb[0].mxu0
      %v2040 = vadd.f32 0.0, %v2039
      %v2041 = vpop.f32.mrb[0].mxu0
      %v2042 = vpop.f32.mrb[0].mxu0
      %v2043 = vadd.f32 0.0, %v2042
      %v2044 = vpop.f32.mrb[0].mxu0
      %2045 = vmatprep.mubr.bf16.mxu0 0
      %2046 = vmatmul.mubr.bf16.gmra.mrb[0].mxu0 %v1310
      %v2047 = vpop.f32.mrb[0].mxu0
      %v2048 = vadd.f32 0.0, %v2047
      %v2049 = vpop.f32.mrb[0].mxu0
      %v2050 = vpop.f32.mrb[0].mxu0
      %v2051 = vadd.f32 0.0, %v2050
      %v2052 = vpop.f32.mrb[0].mxu0
      %2053 = vmatprep.mubr.bf16.mxu0 0
      %2054 = vmatmul.mubr.bf16.gmra.mrb[0].mxu0 %v1313
      %v2055 = vpop.f32.mrb[0].mxu0
      %v2056 = vadd.f32 0.0, %v2055
      %v2057 = vpop.f32.mrb[0].mxu0
      %v2058 = vpop.f32.mrb[0].mxu0
      %v2059 = vadd.f32 0.0, %v2058
      %v2060 = vpop.f32.mrb[0].mxu0
      %2061 = vmatprep.mubr.bf16.mxu0 0
      %2062 = vmatmul.mubr.bf16.gmra.mrb[0].mxu0 %v1316
      %v2063 = vpop.f32.mrb[0].mxu0
      %v2064 = vadd.f32 0.0, %v2063
      %v2065 = vpop.f32.mrb[0].mxu0
      %v2066 = vpop.f32.mrb[0].mxu0
      %v2067 = vadd.f32 0.0, %v2066
      %v2068 = vpop.f32.mrb[0].mxu0
      %2069 = vmatprep.mubr.bf16.mxu0 0
      %2070 = vmatmul.mubr.bf16.gmra.mrb[0].mxu0 %v1319
      %v2071 = vpop.f32.mrb[0].mxu0
      %v2072 = vadd.f32 0.0, %v2071
      %v2073 = vpop.f32.mrb[0].mxu0
      %v2074 = vpop.f32.mrb[0].mxu0
      %v2075 = vadd.f32 0.0, %v2074
      %v2076 = vpop.f32.mrb[0].mxu0
      %2077 = vmatprep.mubr.bf16.mxu0 0
      %2078 = vmatmul.mubr.bf16.gmra.mrb[0].mxu0 %v1322
      %v2079 = vpop.f32.mrb[0].mxu0
      %v2080 = vadd.f32 0.0, %v2079
      %v2081 = vpop.f32.mrb[0].mxu0
      %v2082 = vpop.f32.mrb[0].mxu0
      %v2083 = vadd.f32 0.0, %v2082
      %v2084 = vpop.f32.mrb[0].mxu0
      %2085 = vmatprep.mubr.bf16.mxu0 0
      %2086 = vmatmul.mubr.bf16.gmra.mrb[0].mxu0 %v1325
      %v2087 = vpop.f32.mrb[0].mxu0
      %v2088 = vadd.f32 0.0, %v2087
      %v2089 = vpop.f32.mrb[0].mxu0
      %v2090 = vpop.f32.mrb[0].mxu0
      %v2091 = vadd.f32 0.0, %v2090
      %v2092 = vpop.f32.mrb[0].mxu0
      %2093 = vmatprep.mubr.bf16.mxu0 0
      %2094 = vmatmul.mubr.bf16.gmra.mrb[0].mxu0 %v1328
      %v2095 = vpop.f32.mrb[0].mxu0
      %v2096 = vadd.f32 0.0, %v2095
      %v2097 = vpop.f32.mrb[0].mxu0
      %v2098 = vpop.f32.mrb[0].mxu0
      %v2099 = vadd.f32 0.0, %v2098
      %v2100 = vpop.f32.mrb[0].mxu0
      %2101 = vmatprep.mubr.bf16.mxu0 0
      %2102 = vmatmul.mubr.bf16.gmra.mrb[0].mxu0 %v1331
      %v2103 = vpop.f32.mrb[0].mxu0
      %v2104 = vadd.f32 0.0, %v2103
      %v2105 = vpop.f32.mrb[0].mxu0
      %v2106 = vpop.f32.mrb[0].mxu0
      %v2107 = vadd.f32 0.0, %v2106
      %v2108 = vpop.f32.mrb[0].mxu0
      %2109 = vmatprep.mubr.bf16.mxu0 0
      %2110 = vmatmul.mubr.bf16.gmra.mrb[0].mxu0 %v1334
      %v2111 = vpop.f32.mrb[0].mxu0
      %v2112 = vadd.f32 0.0, %v2111
      %v2113 = vpop.f32.mrb[0].mxu0
      %v2114 = vpop.f32.mrb[0].mxu0
      %v2115 = vadd.f32 0.0, %v2114
      %v2116 = vpop.f32.mrb[0].mxu0
      %2117 = vmatprep.mubr.bf16.mxu0 0
      %2118 = vmatmul.mubr.bf16.gmra.mrb[0].mxu0 %v1337
      %v2119 = vpop.f32.mrb[0].mxu0
      %v2120 = vadd.f32 0.0, %v2119
      %v2121 = vpop.f32.mrb[0].mxu0
      %v2122 = vpop.f32.mrb[0].mxu0
      %v2123 = vadd.f32 0.0, %v2122
      %v2124 = vpop.f32.mrb[0].mxu0
      %2125 = vmatprep.mubr.bf16.mxu0 0
      %2126 = vmatmul.mubr.bf16.gmra.mrb[0].mxu0 %v1340
      %v2127 = vpop.f32.mrb[0].mxu0
      %v2128 = vadd.f32 0.0, %v2127
      %v2129 = vpop.f32.mrb[0].mxu0
      %v2130 = vpop.f32.mrb[0].mxu0
      %v2131 = vadd.f32 0.0, %v2130
      %v2132 = vpop.f32.mrb[0].mxu0
      %2133 = vmatprep.mubr.bf16.mxu0 0
      %2134 = vmatmul.mubr.bf16.gmra.mrb[0].mxu0 %v1343
      %v2135 = vpop.f32.mrb[0].mxu0
      %v2136 = vadd.f32 0.0, %v2135
      %v2137 = vpop.f32.mrb[0].mxu0
      %v2138 = vpop.f32.mrb[0].mxu0
      %v2139 = vadd.f32 0.0, %v2138
      %v2140 = vpop.f32.mrb[0].mxu0
      %2141 = vmatprep.mubr.bf16.mxu0 0
      %2142 = vmatmul.mubr.bf16.gmra.mrb[0].mxu0 %v1346
      %v2143 = vpop.f32.mrb[0].mxu0
      %v2144 = vadd.f32 0.0, %v2143
      %v2145 = vpop.f32.mrb[0].mxu0
      %v2146 = vpop.f32.mrb[0].mxu0
      %v2147 = vadd.f32 0.0, %v2146
      %v2148 = vpop.f32.mrb[0].mxu0
      %2149 = vmatprep.mubr.bf16.mxu0 0
      %2150 = vmatmul.mubr.bf16.gmra.mrb[0].mxu0 %v1349
      %v2151 = vpop.f32.mrb[0].mxu0
      %v2152 = vadd.f32 0.0, %v2151
      %v2153 = vpop.f32.mrb[0].mxu0
      %v2154 = vpop.f32.mrb[0].mxu0
      %v2155 = vadd.f32 0.0, %v2154
      %v2156 = vpop.f32.mrb[0].mxu0
      %2157 = vmatprep.mubr.bf16.mxu0 0
      %2158 = vmatmul.mubr.bf16.gmra.mrb[0].mxu0 %v1352
      %v2159 = vpop.f32.mrb[0].mxu0
      %v2160 = vadd.f32 0.0, %v2159
      %v2161 = vpop.f32.mrb[0].mxu0
      %v2162 = vpop.f32.mrb[0].mxu0
      %v2163 = vadd.f32 0.0, %v2162
      %v2164 = vpop.f32.mrb[0].mxu0
      %2165 = vmatprep.mubr.bf16.mxu0 0
      %2166 = vmatmul.mubr.bf16.gmra.mrb[0].mxu0 %v1355
      %v2167 = vpop.f32.mrb[0].mxu0
      %v2168 = vadd.f32 0.0, %v2167
      %v2169 = vpop.f32.mrb[0].mxu0
      %v2170 = vpop.f32.mrb[0].mxu0
      %v2171 = vadd.f32 0.0, %v2170
      %v2172 = vpop.f32.mrb[0].mxu0
      %2173 = vmatprep.mubr.bf16.mxu0 0
      %2174 = vmatmul.mubr.bf16.gmra.mrb[0].mxu0 %v1358
      %v2175 = vpop.f32.mrb[0].mxu0
      %v2176 = vadd.f32 0.0, %v2175
      %v2177 = vpop.f32.mrb[0].mxu0
      %v2178 = vpop.f32.mrb[0].mxu0
      %v2179 = vadd.f32 0.0, %v2178
      %v2180 = vpop.f32.mrb[0].mxu0
      %2181 = vmatprep.mubr.bf16.mxu0 0
      %2182 = vmatmul.mubr.bf16.gmra.mrb[0].mxu0 %v1361
      %v2183 = vpop.f32.mrb[0].mxu0
      %v2184 = vadd.f32 0.0, %v2183
      %v2185 = vpop.f32.mrb[0].mxu0
      %v2186 = vpop.f32.mrb[0].mxu0
      %v2187 = vadd.f32 0.0, %v2186
      %v2188 = vpop.f32.mrb[0].mxu0
      %2189 = vmatprep.mubr.bf16.mxu0 0
      %2190 = vmatmul.mubr.bf16.gmra.mrb[0].mxu0 %v1364
      %v2191 = vpop.f32.mrb[0].mxu0
      %v2192 = vadd.f32 0.0, %v2191
      %v2193 = vpop.f32.mrb[0].mxu0
      %v2194 = vpop.f32.mrb[0].mxu0
      %v2195 = vadd.f32 0.0, %v2194
      %v2196 = vpop.f32.mrb[0].mxu0
      %2197 = vmatprep.mubr.bf16.mxu0 0
      %2198 = vmatmul.mubr.bf16.gmra.mrb[0].mxu0 %v1367
      %v2199 = vpop.f32.mrb[0].mxu0
      %v2200 = vadd.f32 0.0, %v2199
      %v2201 = vpop.f32.mrb[0].mxu0
      %v2202 = vpop.f32.mrb[0].mxu0
      %v2203 = vadd.f32 0.0, %v2202
      %v2204 = vpop.f32.mrb[0].mxu0
      %2205 = vmatprep.mubr.bf16.mxu0 0
      %2206 = vmatmul.mubr.bf16.gmra.mrb[0].mxu0 %v1370
      %v2207 = vpop.f32.mrb[0].mxu0
      %v2208 = vadd.f32 0.0, %v2207
      %v2209 = vpop.f32.mrb[0].mxu0
      %v2210 = vpop.f32.mrb[0].mxu0
      %v2211 = vadd.f32 0.0, %v2210
      %v2212 = vpop.f32.mrb[0].mxu0
      %2213 = vmatprep.mubr.bf16.mxu0 0
      %2214 = vmatmul.mubr.bf16.gmra.mrb[0].mxu0 %v1373
      %v2215 = vpop.f32.mrb[0].mxu0
      %v2216 = vadd.f32 0.0, %v2215
      %v2217 = vpop.f32.mrb[0].mxu0
      %v2218 = vpop.f32.mrb[0].mxu0
      %v2219 = vadd.f32 0.0, %v2218
      %v2220 = vpop.f32.mrb[0].mxu0
      %2221 = vmatprep.mubr.bf16.mxu0 0
      %2222 = vmatmul.mubr.bf16.gmra.mrb[0].mxu0 %v1376
      %v2223 = vpop.f32.mrb[0].mxu0
      %v2224 = vadd.f32 0.0, %v2223
      %v2225 = vpop.f32.mrb[0].mxu0
      %v2226 = vpop.f32.mrb[0].mxu0
      %v2227 = vadd.f32 0.0, %v2226
      %v2228 = vpop.f32.mrb[0].mxu0
      %2229 = vmatprep.mubr.bf16.mxu0 0
      %2230 = vmatmul.mubr.bf16.gmra.mrb[0].mxu0 %v1379
      %v2231 = vpop.f32.mrb[0].mxu0
      %v2232 = vadd.f32 0.0, %v2231
      %v2233 = vpop.f32.mrb[0].mxu0
      %v2234 = vpop.f32.mrb[0].mxu0
      %v2235 = vadd.f32 0.0, %v2234
      %v2236 = vpop.f32.mrb[0].mxu0
      %2237 = vmatprep.mubr.bf16.mxu0 0
      %2238 = vmatmul.mubr.bf16.gmra.mrb[0].mxu0 %v1382
      %v2239 = vpop.f32.mrb[0].mxu0
      %v2240 = vadd.f32 0.0, %v2239
      %v2241 = vpop.f32.mrb[0].mxu0
      %v2242 = vpop.f32.mrb[0].mxu0
      %v2243 = vadd.f32 0.0, %v2242
      %v2244 = vpop.f32.mrb[0].mxu0
      %2245 = vmatprep.mubr.bf16.mxu0 0
      %2246 = vmatmul.mubr.bf16.gmra.mrb[0].mxu0 %v1385
      %v2247 = vpop.f32.mrb[0].mxu0
      %v2248 = vadd.f32 0.0, %v2247
      %v2249 = vpop.f32.mrb[0].mxu0
      %v2250 = vpop.f32.mrb[0].mxu0
      %v2251 = vadd.f32 0.0, %v2250
      %v2252 = vpop.f32.mrb[0].mxu0
      %2253 = vmatprep.mubr.bf16.mxu0 0
      %2254 = vmatmul.mubr.bf16.gmra.mrb[0].mxu0 %v1388
      %v2255 = vpop.f32.mrb[0].mxu0
      %v2256 = vadd.f32 0.0, %v2255
      %v2257 = vpop.f32.mrb[0].mxu0
      %v2258 = vpop.f32.mrb[0].mxu0
      %v2259 = vadd.f32 0.0, %v2258
      %v2260 = vpop.f32.mrb[0].mxu0
      %2261 = vmatprep.mubr.bf16.mxu0 0
      %2262 = vmatmul.mubr.bf16.gmra.mrb[0].mxu0 %v1391
      %v2263 = vpop.f32.mrb[0].mxu0
      %v2264 = vadd.f32 0.0, %v2263
      %v2265 = vpop.f32.mrb[0].mxu0
      %v2266 = vpop.f32.mrb[0].mxu0
      %v2267 = vadd.f32 0.0, %v2266
      %v2268 = vpop.f32.mrb[0].mxu0
      %2269 = vmatprep.mubr.bf16.mxu0 0
      %2270 = vmatmul.mubr.bf16.gmra.mrb[0].mxu0 %v1394
      %v2271 = vpop.f32.mrb[0].mxu0
      %v2272 = vadd.f32 0.0, %v2271
      %v2273 = vpop.f32.mrb[0].mxu0
      %v2274 = vpop.f32.mrb[0].mxu0
      %v2275 = vadd.f32 0.0, %v2274
      %v2276 = vpop.f32.mrb[0].mxu0
      %2277 = vmatprep.mubr.bf16.mxu0 0
      %2278 = vmatmul.mubr.bf16.gmra.mrb[0].mxu0 %v1397
      %v2279 = vpop.f32.mrb[0].mxu0
      %v2280 = vadd.f32 0.0, %v2279
      %v2281 = vpop.f32.mrb[0].mxu0
      %v2282 = vpop.f32.mrb[0].mxu0
      %v2283 = vadd.f32 0.0, %v2282
      %v2284 = vpop.f32.mrb[0].mxu0
      %2285 = vmatprep.mubr.bf16.mxu0 0
      %2286 = vmatmul.mubr.bf16.gmra.mrb[0].mxu0 %v1400
      %v2287 = vpop.f32.mrb[0].mxu0
      %v2288 = vadd.f32 0.0, %v2287
      %v2289 = vpop.f32.mrb[0].mxu0
      %v2290 = vpop.f32.mrb[0].mxu0
      %v2291 = vadd.f32 0.0, %v2290
      %v2292 = vpop.f32.mrb[0].mxu0
      %2293 = vmatprep.mubr.bf16.mxu0 0
      %2294 = vmatmul.mubr.bf16.gmra.mrb[0].mxu0 %v1403
      %v2295 = vpop.f32.mrb[0].mxu0
      %v2296 = vadd.f32 0.0, %v2295
      %v2297 = vpop.f32.mrb[0].mxu0
      %v2298 = vpop.f32.mrb[0].mxu0
      %v2299 = vadd.f32 0.0, %v2298
      %v2300 = vpop.f32.mrb[0].mxu0
      %2301 = vmatprep.mubr.bf16.mxu0 0
      %2302 = vmatmul.mubr.bf16.gmra.mrb[0].mxu0 %v1406
      %v2303 = vpop.f32.mrb[0].mxu0
      %v2304 = vadd.f32 0.0, %v2303
      %v2305 = vpop.f32.mrb[0].mxu0
      %v2306 = vpop.f32.mrb[0].mxu0
      %v2307 = vadd.f32 0.0, %v2306
      %v2308 = vpop.f32.mrb[0].mxu0
      %2309 = vmatprep.mubr.bf16.mxu0 0
      %2310 = vmatmul.mubr.bf16.gmra.mrb[0].mxu0 %v1409
      %v2311 = vpop.f32.mrb[0].mxu0
      %v2312 = vadd.f32 0.0, %v2311
      %v2313 = vpop.f32.mrb[0].mxu0
      %v2314 = vpop.f32.mrb[0].mxu0
      %v2315 = vadd.f32 0.0, %v2314
      %v2316 = vpop.f32.mrb[0].mxu0
      %2317 = vmatprep.mubr.bf16.mxu0 0
      %2318 = vmatmul.mubr.bf16.gmra.mrb[0].mxu0 %v1412
      %v2319 = vpop.f32.mrb[0].mxu0
      %v2320 = vadd.f32 0.0, %v2319
      %v2321 = vpop.f32.mrb[0].mxu0
      %v2322 = vpop.f32.mrb[0].mxu0
      %v2323 = vadd.f32 0.0, %v2322
      %v2324 = vpop.f32.mrb[0].mxu0
      %2325 = vmatprep.mubr.bf16.mxu0 0
      %2326 = vmatmul.mubr.bf16.gmra.mrb[0].mxu0 %v1415
      %v2327 = vpop.f32.mrb[0].mxu0
      %v2328 = vadd.f32 0.0, %v2327
      %v2329 = vpop.f32.mrb[0].mxu0
      %v2330 = vpop.f32.mrb[0].mxu0
      %v2331 = vadd.f32 0.0, %v2330
      %v2332 = vpop.f32.mrb[0].mxu0
      %2333 = vmatprep.mubr.bf16.mxu0 0
      %2334 = vmatmul.mubr.bf16.gmra.mrb[0].mxu0 %v1418
      %v2335 = vpop.f32.mrb[0].mxu0
      %v2336 = vadd.f32 0.0, %v2335
      %v2337 = vpop.f32.mrb[0].mxu0
      %v2338 = vpop.f32.mrb[0].mxu0
      %v2339 = vadd.f32 0.0, %v2338
      %v2340 = vpop.f32.mrb[0].mxu0
      %2341 = vmatprep.mubr.bf16.mxu0 0
      %2342 = vmatmul.mubr.bf16.gmra.mrb[0].mxu0 %v1421
      %v2343 = vpop.f32.mrb[0].mxu0
      %v2344 = vadd.f32 0.0, %v2343
      %v2345 = vpop.f32.mrb[0].mxu0
      %v2346 = vpop.f32.mrb[0].mxu0
      %v2347 = vadd.f32 0.0, %v2346
      %v2348 = vpop.f32.mrb[0].mxu0
      %2349 = vmatprep.mubr.bf16.mxu0 0
      %2350 = vmatmul.mubr.bf16.gmra.mrb[0].mxu0 %v1424
      %v2351 = vpop.f32.mrb[0].mxu0
      %v2352 = vadd.f32 0.0, %v2351
      %v2353 = vpop.f32.mrb[0].mxu0
      %v2354 = vpop.f32.mrb[0].mxu0
      %v2355 = vadd.f32 0.0, %v2354
      %v2356 = vpop.f32.mrb[0].mxu0
      %2357 = vmatprep.mubr.bf16.mxu0 0
      %2358 = vmatmul.mubr.bf16.gmra.mrb[0].mxu0 %v1427
      %v2359 = vpop.f32.mrb[0].mxu0
      %v2360 = vadd.f32 0.0, %v2359
      %v2361 = vpop.f32.mrb[0].mxu0
      %v2362 = vpop.f32.mrb[0].mxu0
      %v2363 = vadd.f32 0.0, %v2362
      %v2364 = vpop.f32.mrb[0].mxu0
      %2365 = vmatprep.mubr.bf16.mxu0 0
      %2366 = vmatmul.mubr.bf16.gmra.mrb[0].mxu0 %v1430
      %v2367 = vpop.f32.mrb[0].mxu0
      %v2368 = vadd.f32 0.0, %v2367
      %v2369 = vpop.f32.mrb[0].mxu0
      %v2370 = vpop.f32.mrb[0].mxu0
      %v2371 = vadd.f32 0.0, %v2370
      %v2372 = vpop.f32.mrb[0].mxu0
      %2373 = vmatprep.mubr.bf16.mxu0 0
      %2374 = vmatmul.mubr.bf16.gmra.mrb[0].mxu0 %v1433
      %v2375 = vpop.f32.mrb[0].mxu0
      %v2376 = vadd.f32 0.0, %v2375
      %v2377 = vpop.f32.mrb[0].mxu0
      %v2378 = vpop.f32.mrb[0].mxu0
      %v2379 = vadd.f32 0.0, %v2378
      %v2380 = vpop.f32.mrb[0].mxu0
      %2381 = vmatprep.mubr.bf16.mxu0 0
      %2382 = vmatmul.mubr.bf16.gmra.mrb[0].mxu0 %v1436
      %v2383 = vpop.f32.mrb[0].mxu0
      %v2384 = vadd.f32 0.0, %v2383
      %v2385 = vpop.f32.mrb[0].mxu0
      %v2386 = vpop.f32.mrb[0].mxu0
      %v2387 = vadd.f32 0.0, %v2386
      %v2388 = vpop.f32.mrb[0].mxu0
      %2389 = vmatprep.mubr.bf16.mxu0 0
      %2390 = vmatmul.mubr.bf16.gmra.mrb[0].mxu0 %v1439
      %v2391 = vpop.f32.mrb[0].mxu0
      %v2392 = vadd.f32 0.0, %v2391
      %v2393 = vpop.f32.mrb[0].mxu0
      %v2394 = vpop.f32.mrb[0].mxu0
      %v2395 = vadd.f32 0.0, %v2394
      %v2396 = vpop.f32.mrb[0].mxu0
      %2397 = vmatprep.mubr.bf16.mxu0 0
      %2398 = vmatmul.mubr.bf16.gmra.mrb[0].mxu0 %v1442
      %v2399 = vpop.f32.mrb[0].mxu0
      %v2400 = vadd.f32 0.0, %v2399
      %v2401 = vpop.f32.mrb[0].mxu0
      %v2402 = vpop.f32.mrb[0].mxu0
      %v2403 = vadd.f32 0.0, %v2402
      %v2404 = vpop.f32.mrb[0].mxu0
      %2405 = vmatprep.mubr.bf16.mxu0 0
      %2406 = vmatmul.mubr.bf16.gmra.mrb[0].mxu0 %v1445
      %v2407 = vpop.f32.mrb[0].mxu0
      %v2408 = vadd.f32 0.0, %v2407
      %v2409 = vpop.f32.mrb[0].mxu0
      %v2410 = vpop.f32.mrb[0].mxu0
      %v2411 = vadd.f32 0.0, %v2410
      %v2412 = vpop.f32.mrb[0].mxu0
      %2413 = vmatprep.mubr.bf16.mxu0 0
      %2414 = vmatmul.mubr.bf16.gmra.mrb[0].mxu0 %v1448
      %v2415 = vpop.f32.mrb[0].mxu0
      %v2416 = vadd.f32 0.0, %v2415
      %v2417 = vpop.f32.mrb[0].mxu0
      %v2418 = vpop.f32.mrb[0].mxu0
      %v2419 = vadd.f32 0.0, %v2418
      %v2420 = vpop.f32.mrb[0].mxu0
      %2421 = vmatprep.mubr.bf16.mxu0 0
      %2422 = vmatmul.mubr.bf16.gmra.mrb[0].mxu0 %v1451
      %v2423 = vpop.f32.mrb[0].mxu0
      %v2424 = vadd.f32 0.0, %v2423
      %v2425 = vpop.f32.mrb[0].mxu0
      %v2426 = vpop.f32.mrb[0].mxu0
      %v2427 = vadd.f32 0.0, %v2426
      %v2428 = vpop.f32.mrb[0].mxu0
      %2429 = vmatprep.mubr.bf16.mxu0 0
      %2430 = vmatmul.mubr.bf16.gmra.mrb[0].mxu0 %v1454
      %v2431 = vpop.f32.mrb[0].mxu0
      %v2432 = vadd.f32 0.0, %v2431
      %v2433 = vpop.f32.mrb[0].mxu0
      %v2434 = vpop.f32.mrb[0].mxu0
      %v2435 = vadd.f32 0.0, %v2434
      %v2436 = vpop.f32.mrb[0].mxu0
      %2437 = vmatprep.mubr.bf16.mxu0 0
      %2438 = vmatmul.mubr.bf16.gmra.mrb[0].mxu0 %v1457
      %v2439 = vpop.f32.mrb[0].mxu0
      %v2440 = vadd.f32 0.0, %v2439
      %v2441 = vpop.f32.mrb[0].mxu0
      %v2442 = vpop.f32.mrb[0].mxu0
      %v2443 = vadd.f32 0.0, %v2442
      %v2444 = vpop.f32.mrb[0].mxu0
      %2445 = vmatprep.mubr.bf16.mxu0 0
      %2446 = vmatmul.mubr.bf16.gmra.mrb[0].mxu0 %v1460
      %v2447 = vpop.f32.mrb[0].mxu0
      %v2448 = vadd.f32 0.0, %v2447
      %v2449 = vpop.f32.mrb[0].mxu0
      %v2450 = vpop.f32.mrb[0].mxu0
      %v2451 = vadd.f32 0.0, %v2450
      %v2452 = vpop.f32.mrb[0].mxu0
      %2453 = vmatprep.mubr.bf16.mxu0 0
      %2454 = vmatmul.mubr.bf16.gmra.mrb[0].mxu0 %v1463
      %v2455 = vpop.f32.mrb[0].mxu0
      %v2456 = vadd.f32 0.0, %v2455
      %v2457 = vpop.f32.mrb[0].mxu0
      %v2458 = vpop.f32.mrb[0].mxu0
      %v2459 = vadd.f32 0.0, %v2458
      %v2460 = vpop.f32.mrb[0].mxu0
      %2461 = vmatprep.mubr.bf16.mxu0 0
      %2462 = vmatmul.mubr.bf16.gmra.mrb[0].mxu0 %v1466
      %v2463 = vpop.f32.mrb[0].mxu0
      %v2464 = vadd.f32 0.0, %v2463
      %v2465 = vpop.f32.mrb[0].mxu0
      %v2466 = vpop.f32.mrb[0].mxu0
      %v2467 = vadd.f32 0.0, %v2466
      %v2468 = vpop.f32.mrb[0].mxu0
      %2469 = vmatprep.mubr.bf16.mxu0 0
      %2470 = vmatmul.mubr.bf16.gmra.mrb[0].mxu0 %v1469
      %v2471 = vpop.f32.mrb[0].mxu0
      %v2472 = vadd.f32 0.0, %v2471
      %v2473 = vpop.f32.mrb[0].mxu0
      %v2474 = vpop.f32.mrb[0].mxu0
      %v2475 = vadd.f32 0.0, %v2474
      %v2476 = vpop.f32.mrb[0].mxu0
      %2477 = vmatprep.mubr.bf16.mxu0 0
      %2478 = vmatmul.mubr.bf16.gmra.mrb[0].mxu0 %v1472
      %v2479 = vpop.f32.mrb[0].mxu0
      %v2480 = vadd.f32 0.0, %v2479
      %v2481 = vpop.f32.mrb[0].mxu0
      %v2482 = vpop.f32.mrb[0].mxu0
      %v2483 = vadd.f32 0.0, %v2482
      %v2484 = vpop.f32.mrb[0].mxu0
      %2485 = vmatprep.mubr.bf16.mxu0 0
      %2486 = vmatmul.mubr.bf16.gmra.mrb[0].mxu0 %v1475
      %v2487 = vpop.f32.mrb[0].mxu0
      %v2488 = vadd.f32 0.0, %v2487
      %v2489 = vpop.f32.mrb[0].mxu0
      %v2490 = vpop.f32.mrb[0].mxu0
      %v2491 = vadd.f32 0.0, %v2490
      %v2492 = vpop.f32.mrb[0].mxu0
      %2493 = vmatprep.mubr.bf16.mxu0 0
      %2494 = vmatmul.mubr.bf16.gmra.mrb[0].mxu0 %v1478
      %v2495 = vpop.f32.mrb[0].mxu0
      %v2496 = vadd.f32 0.0, %v2495
      %v2497 = vpop.f32.mrb[0].mxu0
      %v2498 = vpop.f32.mrb[0].mxu0
      %v2499 = vadd.f32 0.0, %v2498
      %v2500 = vpop.f32.mrb[0].mxu0
      %2501 = vmatprep.mubr.bf16.mxu0 0
      %2502 = vmatmul.mubr.bf16.gmra.mrb[0].mxu0 %v1481
      %v2503 = vpop.f32.mrb[0].mxu0
      %v2504 = vadd.f32 0.0, %v2503
      %v2505 = vpop.f32.mrb[0].mxu0
      %v2506 = vpop.f32.mrb[0].mxu0
      %v2507 = vadd.f32 0.0, %v2506
      %v2508 = vpop.f32.mrb[0].mxu0
      %2509 = vmatprep.mubr.bf16.mxu0 0
      %2510 = vmatmul.mubr.bf16.gmra.mrb[0].mxu0 %v1484
      %v2511 = vpop.f32.mrb[0].mxu0
      %v2512 = vadd.f32 0.0, %v2511
      %v2513 = vpop.f32.mrb[0].mxu0
      %v2514 = vpop.f32.mrb[0].mxu0
      %v2515 = vadd.f32 0.0, %v2514
      %v2516 = vpop.f32.mrb[0].mxu0
      %2517 = vmatprep.mubr.bf16.mxu0 0
      %2518 = vmatmul.mubr.bf16.gmra.mrb[0].mxu0 %v1487
      %v2519 = vpop.f32.mrb[0].mxu0
      %v2520 = vadd.f32 0.0, %v2519
      %v2521 = vpop.f32.mrb[0].mxu0
      %v2522 = vpop.f32.mrb[0].mxu0
      %v2523 = vadd.f32 0.0, %v2522
      %v2524 = vpop.f32.mrb[0].mxu0
      %2525 = vmatprep.mubr.bf16.mxu0 0
      %2526 = vmatmul.mubr.bf16.gmra.mrb[0].mxu0 %v1490
      %v2527 = vpop.f32.mrb[0].mxu0
      %v2528 = vadd.f32 0.0, %v2527
      %v2529 = vpop.f32.mrb[0].mxu0
      %v2530 = vpop.f32.mrb[0].mxu0
      %v2531 = vadd.f32 0.0, %v2530
      %v2532 = vpop.f32.mrb[0].mxu0
      %2533 = vmatprep.mubr.bf16.mxu0 0
      %2534 = vmatmul.mubr.bf16.gmra.mrb[0].mxu0 %v1493
      %v2535 = vpop.f32.mrb[0].mxu0
      %v2536 = vadd.f32 0.0, %v2535
      %v2537 = vpop.f32.mrb[0].mxu0
      %v2538 = vpop.f32.mrb[0].mxu0
      %v2539 = vadd.f32 0.0, %v2538
      %v2540 = vpop.f32.mrb[0].mxu0
      %2541 = vmatprep.mubr.bf16.mxu0 0
      %2542 = vmatmul.mubr.bf16.gmra.mrb[0].mxu0 %v1496
      %v2543 = vpop.f32.mrb[0].mxu0
      %v2544 = vadd.f32 0.0, %v2543
      %v2545 = vpop.f32.mrb[0].mxu0
      %v2546 = vpop.f32.mrb[0].mxu0
      %v2547 = vadd.f32 0.0, %v2546
      %v2548 = vpop.f32.mrb[0].mxu0
      %2549 = vmatprep.mubr.bf16.mxu0 0
      %2550 = vmatmul.mubr.bf16.gmra.mrb[0].mxu0 %v1499
      %v2551 = vpop.f32.mrb[0].mxu0
      %v2552 = vadd.f32 0.0, %v2551
      %v2553 = vpop.f32.mrb[0].mxu0
      %v2554 = vpop.f32.mrb[0].mxu0
      %v2555 = vadd.f32 0.0, %v2554
      %v2556 = vpop.f32.mrb[0].mxu0
      %2557 = vdwg.mxu0
      %v2558 = vxor.u32 %v1536, 2147483648
      %v2559 = vxor.u32 %v1539, 2147483648
      %v2560 = vxor.u32 %v1544, 2147483648
      %v2561 = vxor.u32 %v1547, 2147483648
      %v2562 = vxor.u32 %v1552, 2147483648
      %v2563 = vxor.u32 %v1555, 2147483648
      %v2564 = vxor.u32 %v1560, 2147483648
      %v2565 = vxor.u32 %v1563, 2147483648
      %v2566 = vxor.u32 %v1568, 2147483648
      %v2567 = vxor.u32 %v1571, 2147483648
      %v2568 = vxor.u32 %v1576, 2147483648
      %v2569 = vxor.u32 %v1579, 2147483648
      %v2570 = vxor.u32 %v1584, 2147483648
      %v2571 = vxor.u32 %v1587, 2147483648
      %v2572 = vxor.u32 %v1592, 2147483648
      %v2573 = vxor.u32 %v1595, 2147483648
      %v2574 = vxor.u32 %v1600, 2147483648
      %v2575 = vxor.u32 %v1603, 2147483648
      %v2576 = vxor.u32 %v1608, 2147483648
      %v2577 = vxor.u32 %v1611, 2147483648
      %v2578 = vxor.u32 %v1616, 2147483648
      %v2579 = vxor.u32 %v1619, 2147483648
      %v2580 = vxor.u32 %v1624, 2147483648
      %v2581 = vxor.u32 %v1627, 2147483648
      %v2582 = vxor.u32 %v1632, 2147483648
      %v2583 = vxor.u32 %v1635, 2147483648
      %v2584 = vxor.u32 %v1640, 2147483648
      %v2585 = vxor.u32 %v1643, 2147483648
      %v2586 = vxor.u32 %v1648, 2147483648
      %v2587 = vxor.u32 %v1651, 2147483648
      %v2588 = vxor.u32 %v1656, 2147483648
      %v2589 = vxor.u32 %v1659, 2147483648
      %v2590 = vxor.u32 %v1664, 2147483648
      %v2591 = vxor.u32 %v1667, 2147483648
      %v2592 = vxor.u32 %v1672, 2147483648
      %v2593 = vxor.u32 %v1675, 2147483648
      %v2594 = vxor.u32 %v1680, 2147483648
      %v2595 = vxor.u32 %v1683, 2147483648
      %v2596 = vxor.u32 %v1688, 2147483648
      %v2597 = vxor.u32 %v1691, 2147483648
      %v2598 = vxor.u32 %v1696, 2147483648
      %v2599 = vxor.u32 %v1699, 2147483648
      %v2600 = vxor.u32 %v1704, 2147483648
      %v2601 = vxor.u32 %v1707, 2147483648
      %v2602 = vxor.u32 %v1712, 2147483648
      %v2603 = vxor.u32 %v1715, 2147483648
      %v2604 = vxor.u32 %v1720, 2147483648
      %v2605 = vxor.u32 %v1723, 2147483648
      %v2606 = vxor.u32 %v1728, 2147483648
      %v2607 = vxor.u32 %v1731, 2147483648
      %v2608 = vxor.u32 %v1736, 2147483648
      %v2609 = vxor.u32 %v1739, 2147483648
      %v2610 = vxor.u32 %v1744, 2147483648
      %v2611 = vxor.u32 %v1747, 2147483648
      %v2612 = vxor.u32 %v1752, 2147483648
      %v2613 = vxor.u32 %v1755, 2147483648
      %v2614 = vxor.u32 %v1760, 2147483648
      %v2615 = vxor.u32 %v1763, 2147483648
      %v2616 = vxor.u32 %v1768, 2147483648
      %v2617 = vxor.u32 %v1771, 2147483648
      %v2618 = vxor.u32 %v1776, 2147483648
      %v2619 = vxor.u32 %v1779, 2147483648
      %v2620 = vxor.u32 %v1784, 2147483648
      %v2621 = vxor.u32 %v1787, 2147483648
      %v2622 = vxor.u32 %v1792, 2147483648
      %v2623 = vxor.u32 %v1795, 2147483648
      %v2624 = vxor.u32 %v1800, 2147483648
      %v2625 = vxor.u32 %v1803, 2147483648
      %v2626 = vxor.u32 %v1808, 2147483648
      %v2627 = vxor.u32 %v1811, 2147483648
      %v2628 = vxor.u32 %v1816, 2147483648
      %v2629 = vxor.u32 %v1819, 2147483648
      %v2630 = vxor.u32 %v1824, 2147483648
      %v2631 = vxor.u32 %v1827, 2147483648
      %v2632 = vxor.u32 %v1832, 2147483648
      %v2633 = vxor.u32 %v1835, 2147483648
      %v2634 = vxor.u32 %v1840, 2147483648
      %v2635 = vxor.u32 %v1843, 2147483648
      %v2636 = vxor.u32 %v1848, 2147483648
      %v2637 = vxor.u32 %v1851, 2147483648
      %v2638 = vxor.u32 %v1856, 2147483648
      %v2639 = vxor.u32 %v1859, 2147483648
      %v2640 = vxor.u32 %v1864, 2147483648
      %v2641 = vxor.u32 %v1867, 2147483648
      %v2642 = vxor.u32 %v1872, 2147483648
      %v2643 = vxor.u32 %v1875, 2147483648
      %v2644 = vxor.u32 %v1880, 2147483648
      %v2645 = vxor.u32 %v1883, 2147483648
      %v2646 = vxor.u32 %v1888, 2147483648
      %v2647 = vxor.u32 %v1891, 2147483648
      %v2648 = vxor.u32 %v1896, 2147483648
      %v2649 = vxor.u32 %v1899, 2147483648
      %v2650 = vxor.u32 %v1904, 2147483648
      %v2651 = vxor.u32 %v1907, 2147483648
      %v2652 = vxor.u32 %v1912, 2147483648
      %v2653 = vxor.u32 %v1915, 2147483648
      %v2654 = vxor.u32 %v1920, 2147483648
      %v2655 = vxor.u32 %v1923, 2147483648
      %v2656 = vxor.u32 %v1928, 2147483648
      %v2657 = vxor.u32 %v1931, 2147483648
      %v2658 = vxor.u32 %v1936, 2147483648
      %v2659 = vxor.u32 %v1939, 2147483648
      %v2660 = vxor.u32 %v1944, 2147483648
      %v2661 = vxor.u32 %v1947, 2147483648
      %v2662 = vxor.u32 %v1952, 2147483648
      %v2663 = vxor.u32 %v1955, 2147483648
      %v2664 = vxor.u32 %v1960, 2147483648
      %v2665 = vxor.u32 %v1963, 2147483648
      %v2666 = vxor.u32 %v1968, 2147483648
      %v2667 = vxor.u32 %v1971, 2147483648
      %v2668 = vxor.u32 %v1976, 2147483648
      %v2669 = vxor.u32 %v1979, 2147483648
      %v2670 = vxor.u32 %v1984, 2147483648
      %v2671 = vxor.u32 %v1987, 2147483648
      %v2672 = vxor.u32 %v1992, 2147483648
      %v2673 = vxor.u32 %v1995, 2147483648
      %v2674 = vxor.u32 %v2000, 2147483648
      %v2675 = vxor.u32 %v2003, 2147483648
      %v2676 = vxor.u32 %v2008, 2147483648
      %v2677 = vxor.u32 %v2011, 2147483648
      %v2678 = vxor.u32 %v2016, 2147483648
      %v2679 = vxor.u32 %v2019, 2147483648
      %v2680 = vxor.u32 %v2024, 2147483648
      %v2681 = vxor.u32 %v2027, 2147483648
      %v2682 = vxor.u32 %v2032, 2147483648
      %v2683 = vxor.u32 %v2035, 2147483648
      %v2684 = vxor.u32 %v2040, 2147483648
      %v2685 = vxor.u32 %v2043, 2147483648
      %v2686 = vxor.u32 %v2048, 2147483648
      %v2687 = vxor.u32 %v2051, 2147483648
      %v2688 = vxor.u32 %v2056, 2147483648
      %v2689 = vxor.u32 %v2059, 2147483648
      %v2690 = vxor.u32 %v2064, 2147483648
      %v2691 = vxor.u32 %v2067, 2147483648
      %v2692 = vxor.u32 %v2072, 2147483648
      %v2693 = vxor.u32 %v2075, 2147483648
      %v2694 = vxor.u32 %v2080, 2147483648
      %v2695 = vxor.u32 %v2083, 2147483648
      %v2696 = vxor.u32 %v2088, 2147483648
      %v2697 = vxor.u32 %v2091, 2147483648
      %v2698 = vxor.u32 %v2096, 2147483648
      %v2699 = vxor.u32 %v2099, 2147483648
      %v2700 = vxor.u32 %v2104, 2147483648
      %v2701 = vxor.u32 %v2107, 2147483648
      %v2702 = vxor.u32 %v2112, 2147483648
      %v2703 = vxor.u32 %v2115, 2147483648
      %v2704 = vxor.u32 %v2120, 2147483648
      %v2705 = vxor.u32 %v2123, 2147483648
      %v2706 = vxor.u32 %v2128, 2147483648
      %v2707 = vxor.u32 %v2131, 2147483648
      %v2708 = vxor.u32 %v2136, 2147483648
      %v2709 = vxor.u32 %v2139, 2147483648
      %v2710 = vxor.u32 %v2144, 2147483648
      %v2711 = vxor.u32 %v2147, 2147483648
      %v2712 = vxor.u32 %v2152, 2147483648
      %v2713 = vxor.u32 %v2155, 2147483648
      %v2714 = vxor.u32 %v2160, 2147483648
      %v2715 = vxor.u32 %v2163, 2147483648
      %v2716 = vxor.u32 %v2168, 2147483648
      %v2717 = vxor.u32 %v2171, 2147483648
      %v2718 = vxor.u32 %v2176, 2147483648
      %v2719 = vxor.u32 %v2179, 2147483648
      %v2720 = vxor.u32 %v2184, 2147483648
      %v2721 = vxor.u32 %v2187, 2147483648
      %v2722 = vxor.u32 %v2192, 2147483648
      %v2723 = vxor.u32 %v2195, 2147483648
      %v2724 = vxor.u32 %v2200, 2147483648
      %v2725 = vxor.u32 %v2203, 2147483648
      %v2726 = vxor.u32 %v2208, 2147483648
      %v2727 = vxor.u32 %v2211, 2147483648
      %v2728 = vxor.u32 %v2216, 2147483648
      %v2729 = vxor.u32 %v2219, 2147483648
      %v2730 = vxor.u32 %v2224, 2147483648
      %v2731 = vxor.u32 %v2227, 2147483648
      %v2732 = vxor.u32 %v2232, 2147483648
      %v2733 = vxor.u32 %v2235, 2147483648
      %v2734 = vxor.u32 %v2240, 2147483648
      %v2735 = vxor.u32 %v2243, 2147483648
      %v2736 = vxor.u32 %v2248, 2147483648
      %v2737 = vxor.u32 %v2251, 2147483648
      %v2738 = vxor.u32 %v2256, 2147483648
      %v2739 = vxor.u32 %v2259, 2147483648
      %v2740 = vxor.u32 %v2264, 2147483648
      %v2741 = vxor.u32 %v2267, 2147483648
      %v2742 = vxor.u32 %v2272, 2147483648
      %v2743 = vxor.u32 %v2275, 2147483648
      %v2744 = vxor.u32 %v2280, 2147483648
      %v2745 = vxor.u32 %v2283, 2147483648
      %v2746 = vxor.u32 %v2288, 2147483648
      %v2747 = vxor.u32 %v2291, 2147483648
      %v2748 = vxor.u32 %v2296, 2147483648
      %v2749 = vxor.u32 %v2299, 2147483648
      %v2750 = vxor.u32 %v2304, 2147483648
      %v2751 = vxor.u32 %v2307, 2147483648
      %v2752 = vxor.u32 %v2312, 2147483648
      %v2753 = vxor.u32 %v2315, 2147483648
      %v2754 = vxor.u32 %v2320, 2147483648
      %v2755 = vxor.u32 %v2323, 2147483648
      %v2756 = vxor.u32 %v2328, 2147483648
      %v2757 = vxor.u32 %v2331, 2147483648
      %v2758 = vxor.u32 %v2336, 2147483648
      %v2759 = vxor.u32 %v2339, 2147483648
      %v2760 = vxor.u32 %v2344, 2147483648
      %v2761 = vxor.u32 %v2347, 2147483648
      %v2762 = vxor.u32 %v2352, 2147483648
      %v2763 = vxor.u32 %v2355, 2147483648
      %v2764 = vxor.u32 %v2360, 2147483648
      %v2765 = vxor.u32 %v2363, 2147483648
      %v2766 = vxor.u32 %v2368, 2147483648
      %v2767 = vxor.u32 %v2371, 2147483648
      %v2768 = vxor.u32 %v2376, 2147483648
      %v2769 = vxor.u32 %v2379, 2147483648
      %v2770 = vxor.u32 %v2384, 2147483648
      %v2771 = vxor.u32 %v2387, 2147483648
      %v2772 = vxor.u32 %v2392, 2147483648
      %v2773 = vxor.u32 %v2395, 2147483648
      %v2774 = vxor.u32 %v2400, 2147483648
      %v2775 = vxor.u32 %v2403, 2147483648
      %v2776 = vxor.u32 %v2408, 2147483648
      %v2777 = vxor.u32 %v2411, 2147483648
      %v2778 = vxor.u32 %v2416, 2147483648
      %v2779 = vxor.u32 %v2419, 2147483648
      %v2780 = vxor.u32 %v2424, 2147483648
      %v2781 = vxor.u32 %v2427, 2147483648
      %v2782 = vxor.u32 %v2432, 2147483648
      %v2783 = vxor.u32 %v2435, 2147483648
      %v2784 = vxor.u32 %v2440, 2147483648
      %v2785 = vxor.u32 %v2443, 2147483648
      %v2786 = vxor.u32 %v2448, 2147483648
      %v2787 = vxor.u32 %v2451, 2147483648
      %v2788 = vxor.u32 %v2456, 2147483648
      %v2789 = vxor.u32 %v2459, 2147483648
      %v2790 = vxor.u32 %v2464, 2147483648
      %v2791 = vxor.u32 %v2467, 2147483648
      %v2792 = vxor.u32 %v2472, 2147483648
      %v2793 = vxor.u32 %v2475, 2147483648
      %v2794 = vxor.u32 %v2480, 2147483648
      %v2795 = vxor.u32 %v2483, 2147483648
      %v2796 = vxor.u32 %v2488, 2147483648
      %v2797 = vxor.u32 %v2491, 2147483648
      %v2798 = vxor.u32 %v2496, 2147483648
      %v2799 = vxor.u32 %v2499, 2147483648
      %v2800 = vxor.u32 %v2504, 2147483648
      %v2801 = vxor.u32 %v2507, 2147483648
      %v2802 = vxor.u32 %v2512, 2147483648
      %v2803 = vxor.u32 %v2515, 2147483648
      %v2804 = vxor.u32 %v2520, 2147483648
      %v2805 = vxor.u32 %v2523, 2147483648
      %v2806 = vxor.u32 %v2528, 2147483648
      %v2807 = vxor.u32 %v2531, 2147483648
      %v2808 = vxor.u32 %v2536, 2147483648
      %v2809 = vxor.u32 %v2539, 2147483648
      %v2810 = vxor.u32 %v2544, 2147483648
      %v2811 = vxor.u32 %v2547, 2147483648
      %v2812 = vxor.u32 %v2552, 2147483648
      %v2813 = vxor.u32 %v2555, 2147483648
      %v2814 = vmul.f32 %v2558, 1.442695
      %v2815 = vpow.pop %v2814
      %v2816 = vmul.f32 %v2559, 1.442695
      %v2817 = vpow.pop %v2816
      %v2818 = vmul.f32 %v2560, 1.442695
      %v2819 = vpow.pop %v2818
      %v2820 = vmul.f32 %v2561, 1.442695
      %v2821 = vpow.pop %v2820
      %v2822 = vmul.f32 %v2562, 1.442695
      %v2823 = vpow.pop %v2822
      %v2824 = vmul.f32 %v2563, 1.442695
      %v2825 = vpow.pop %v2824
      %v2826 = vmul.f32 %v2564, 1.442695
      %v2827 = vpow.pop %v2826
      %v2828 = vmul.f32 %v2565, 1.442695
      %v2829 = vpow.pop %v2828
      %v2830 = vmul.f32 %v2566, 1.442695
      %v2831 = vpow.pop %v2830
      %v2832 = vmul.f32 %v2567, 1.442695
      %v2833 = vpow.pop %v2832
      %v2834 = vmul.f32 %v2568, 1.442695
      %v2835 = vpow.pop %v2834
      %v2836 = vmul.f32 %v2569, 1.442695
      %v2837 = vpow.pop %v2836
      %v2838 = vmul.f32 %v2570, 1.442695
      %v2839 = vpow.pop %v2838
      %v2840 = vmul.f32 %v2571, 1.442695
      %v2841 = vpow.pop %v2840
      %v2842 = vmul.f32 %v2572, 1.442695
      %v2843 = vpow.pop %v2842
      %v2844 = vmul.f32 %v2573, 1.442695
      %v2845 = vpow.pop %v2844
      %v2846 = vmul.f32 %v2574, 1.442695
      %v2847 = vpow.pop %v2846
      %v2848 = vmul.f32 %v2575, 1.442695
      %v2849 = vpow.pop %v2848
      %v2850 = vmul.f32 %v2576, 1.442695
      %v2851 = vpow.pop %v2850
      %v2852 = vmul.f32 %v2577, 1.442695
      %v2853 = vpow.pop %v2852
      %v2854 = vmul.f32 %v2578, 1.442695
      %v2855 = vpow.pop %v2854
      %v2856 = vmul.f32 %v2579, 1.442695
      %v2857 = vpow.pop %v2856
      %v2858 = vmul.f32 %v2580, 1.442695
      %v2859 = vpow.pop %v2858
      %v2860 = vmul.f32 %v2581, 1.442695
      %v2861 = vpow.pop %v2860
      %v2862 = vmul.f32 %v2582, 1.442695
      %v2863 = vpow.pop %v2862
      %v2864 = vmul.f32 %v2583, 1.442695
      %v2865 = vpow.pop %v2864
      %v2866 = vmul.f32 %v2584, 1.442695
      %v2867 = vpow.pop %v2866
      %v2868 = vmul.f32 %v2585, 1.442695
      %v2869 = vpow.pop %v2868
      %v2870 = vmul.f32 %v2586, 1.442695
      %v2871 = vpow.pop %v2870
      %v2872 = vmul.f32 %v2587, 1.442695
      %v2873 = vpow.pop %v2872
      %v2874 = vmul.f32 %v2588, 1.442695
      %v2875 = vpow.pop %v2874
      %v2876 = vmul.f32 %v2589, 1.442695
      %v2877 = vpow.pop %v2876
      %v2878 = vmul.f32 %v2590, 1.442695
      %v2879 = vpow.pop %v2878
      %v2880 = vmul.f32 %v2591, 1.442695
      %v2881 = vpow.pop %v2880
      %v2882 = vmul.f32 %v2592, 1.442695
      %v2883 = vpow.pop %v2882
      %v2884 = vmul.f32 %v2593, 1.442695
      %v2885 = vpow.pop %v2884
      %v2886 = vmul.f32 %v2594, 1.442695
      %v2887 = vpow.pop %v2886
      %v2888 = vmul.f32 %v2595, 1.442695
      %v2889 = vpow.pop %v2888
      %v2890 = vmul.f32 %v2596, 1.442695
      %v2891 = vpow.pop %v2890
      %v2892 = vmul.f32 %v2597, 1.442695
      %v2893 = vpow.pop %v2892
      %v2894 = vmul.f32 %v2598, 1.442695
      %v2895 = vpow.pop %v2894
      %v2896 = vmul.f32 %v2599, 1.442695
      %v2897 = vpow.pop %v2896
      %v2898 = vmul.f32 %v2600, 1.442695
      %v2899 = vpow.pop %v2898
      %v2900 = vmul.f32 %v2601, 1.442695
      %v2901 = vpow.pop %v2900
      %v2902 = vmul.f32 %v2602, 1.442695
      %v2903 = vpow.pop %v2902
      %v2904 = vmul.f32 %v2603, 1.442695
      %v2905 = vpow.pop %v2904
      %v2906 = vmul.f32 %v2604, 1.442695
      %v2907 = vpow.pop %v2906
      %v2908 = vmul.f32 %v2605, 1.442695
      %v2909 = vpow.pop %v2908
      %v2910 = vmul.f32 %v2606, 1.442695
      %v2911 = vpow.pop %v2910
      %v2912 = vmul.f32 %v2607, 1.442695
      %v2913 = vpow.pop %v2912
      %v2914 = vmul.f32 %v2608, 1.442695
      %v2915 = vpow.pop %v2914
      %v2916 = vmul.f32 %v2609, 1.442695
      %v2917 = vpow.pop %v2916
      %v2918 = vmul.f32 %v2610, 1.442695
      %v2919 = vpow.pop %v2918
      %v2920 = vmul.f32 %v2611, 1.442695
      %v2921 = vpow.pop %v2920
      %v2922 = vmul.f32 %v2612, 1.442695
      %v2923 = vpow.pop %v2922
      %v2924 = vmul.f32 %v2613, 1.442695
      %v2925 = vpow.pop %v2924
      %v2926 = vmul.f32 %v2614, 1.442695
      %v2927 = vpow.pop %v2926
      %v2928 = vmul.f32 %v2615, 1.442695
      %v2929 = vpow.pop %v2928
      %v2930 = vmul.f32 %v2616, 1.442695
      %v2931 = vpow.pop %v2930
      %v2932 = vmul.f32 %v2617, 1.442695
      %v2933 = vpow.pop %v2932
      %v2934 = vmul.f32 %v2618, 1.442695
      %v2935 = vpow.pop %v2934
      %v2936 = vmul.f32 %v2619, 1.442695
      %v2937 = vpow.pop %v2936
      %v2938 = vmul.f32 %v2620, 1.442695
      %v2939 = vpow.pop %v2938
      %v2940 = vmul.f32 %v2621, 1.442695
      %v2941 = vpow.pop %v2940
      %v2942 = vmul.f32 %v2622, 1.442695
      %v2943 = vpow.pop %v2942
      %v2944 = vmul.f32 %v2623, 1.442695
      %v2945 = vpow.pop %v2944
      %v2946 = vmul.f32 %v2624, 1.442695
      %v2947 = vpow.pop %v2946
      %v2948 = vmul.f32 %v2625, 1.442695
      %v2949 = vpow.pop %v2948
      %v2950 = vmul.f32 %v2626, 1.442695
      %v2951 = vpow.pop %v2950
      %v2952 = vmul.f32 %v2627, 1.442695
      %v2953 = vpow.pop %v2952
      %v2954 = vmul.f32 %v2628, 1.442695
      %v2955 = vpow.pop %v2954
      %v2956 = vmul.f32 %v2629, 1.442695
      %v2957 = vpow.pop %v2956
      %v2958 = vmul.f32 %v2630, 1.442695
      %v2959 = vpow.pop %v2958
      %v2960 = vmul.f32 %v2631, 1.442695
      %v2961 = vpow.pop %v2960
      %v2962 = vmul.f32 %v2632, 1.442695
      %v2963 = vpow.pop %v2962
      %v2964 = vmul.f32 %v2633, 1.442695
      %v2965 = vpow.pop %v2964
      %v2966 = vmul.f32 %v2634, 1.442695
      %v2967 = vpow.pop %v2966
      %v2968 = vmul.f32 %v2635, 1.442695
      %v2969 = vpow.pop %v2968
      %v2970 = vmul.f32 %v2636, 1.442695
      %v2971 = vpow.pop %v2970
      %v2972 = vmul.f32 %v2637, 1.442695
      %v2973 = vpow.pop %v2972
      %v2974 = vmul.f32 %v2638, 1.442695
      %v2975 = vpow.pop %v2974
      %v2976 = vmul.f32 %v2639, 1.442695
      %v2977 = vpow.pop %v2976
      %v2978 = vmul.f32 %v2640, 1.442695
      %v2979 = vpow.pop %v2978
      %v2980 = vmul.f32 %v2641, 1.442695
      %v2981 = vpow.pop %v2980
      %v2982 = vmul.f32 %v2642, 1.442695
      %v2983 = vpow.pop %v2982
      %v2984 = vmul.f32 %v2643, 1.442695
      %v2985 = vpow.pop %v2984
      %v2986 = vmul.f32 %v2644, 1.442695
      %v2987 = vpow.pop %v2986
      %v2988 = vmul.f32 %v2645, 1.442695
      %v2989 = vpow.pop %v2988
      %v2990 = vmul.f32 %v2646, 1.442695
      %v2991 = vpow.pop %v2990
      %v2992 = vmul.f32 %v2647, 1.442695
      %v2993 = vpow.pop %v2992
      %v2994 = vmul.f32 %v2648, 1.442695
      %v2995 = vpow.pop %v2994
      %v2996 = vmul.f32 %v2649, 1.442695
      %v2997 = vpow.pop %v2996
      %v2998 = vmul.f32 %v2650, 1.442695
      %v2999 = vpow.pop %v2998
      %v3000 = vmul.f32 %v2651, 1.442695
      %v3001 = vpow.pop %v3000
      %v3002 = vmul.f32 %v2652, 1.442695
      %v3003 = vpow.pop %v3002
      %v3004 = vmul.f32 %v2653, 1.442695
      %v3005 = vpow.pop %v3004
      %v3006 = vmul.f32 %v2654, 1.442695
      %v3007 = vpow.pop %v3006
      %v3008 = vmul.f32 %v2655, 1.442695
      %v3009 = vpow.pop %v3008
      %v3010 = vmul.f32 %v2656, 1.442695
      %v3011 = vpow.pop %v3010
      %v3012 = vmul.f32 %v2657, 1.442695
      %v3013 = vpow.pop %v3012
      %v3014 = vmul.f32 %v2658, 1.442695
      %v3015 = vpow.pop %v3014
      %v3016 = vmul.f32 %v2659, 1.442695
      %v3017 = vpow.pop %v3016
      %v3018 = vmul.f32 %v2660, 1.442695
      %v3019 = vpow.pop %v3018
      %v3020 = vmul.f32 %v2661, 1.442695
      %v3021 = vpow.pop %v3020
      %v3022 = vmul.f32 %v2662, 1.442695
      %v3023 = vpow.pop %v3022
      %v3024 = vmul.f32 %v2663, 1.442695
      %v3025 = vpow.pop %v3024
      %v3026 = vmul.f32 %v2664, 1.442695
      %v3027 = vpow.pop %v3026
      %v3028 = vmul.f32 %v2665, 1.442695
      %v3029 = vpow.pop %v3028
      %v3030 = vmul.f32 %v2666, 1.442695
      %v3031 = vpow.pop %v3030
      %v3032 = vmul.f32 %v2667, 1.442695
      %v3033 = vpow.pop %v3032
      %v3034 = vmul.f32 %v2668, 1.442695
      %v3035 = vpow.pop %v3034
      %v3036 = vmul.f32 %v2669, 1.442695
      %v3037 = vpow.pop %v3036
      %v3038 = vmul.f32 %v2670, 1.442695
      %v3039 = vpow.pop %v3038
      %v3040 = vmul.f32 %v2671, 1.442695
      %v3041 = vpow.pop %v3040
      %v3042 = vmul.f32 %v2672, 1.442695
      %v3043 = vpow.pop %v3042
      %v3044 = vmul.f32 %v2673, 1.442695
      %v3045 = vpow.pop %v3044
      %v3046 = vmul.f32 %v2674, 1.442695
      %v3047 = vpow.pop %v3046
      %v3048 = vmul.f32 %v2675, 1.442695
      %v3049 = vpow.pop %v3048
      %v3050 = vmul.f32 %v2676, 1.442695
      %v3051 = vpow.pop %v3050
      %v3052 = vmul.f32 %v2677, 1.442695
      %v3053 = vpow.pop %v3052
      %v3054 = vmul.f32 %v2678, 1.442695
      %v3055 = vpow.pop %v3054
      %v3056 = vmul.f32 %v2679, 1.442695
      %v3057 = vpow.pop %v3056
      %v3058 = vmul.f32 %v2680, 1.442695
      %v3059 = vpow.pop %v3058
      %v3060 = vmul.f32 %v2681, 1.442695
      %v3061 = vpow.pop %v3060
      %v3062 = vmul.f32 %v2682, 1.442695
      %v3063 = vpow.pop %v3062
      %v3064 = vmul.f32 %v2683, 1.442695
      %v3065 = vpow.pop %v3064
      %v3066 = vmul.f32 %v2684, 1.442695
      %v3067 = vpow.pop %v3066
      %v3068 = vmul.f32 %v2685, 1.442695
      %v3069 = vpow.pop %v3068
      %v3070 = vmul.f32 %v2686, 1.442695
      %v3071 = vpow.pop %v3070
      %v3072 = vmul.f32 %v2687, 1.442695
      %v3073 = vpow.pop %v3072
      %v3074 = vmul.f32 %v2688, 1.442695
      %v3075 = vpow.pop %v3074
      %v3076 = vmul.f32 %v2689, 1.442695
      %v3077 = vpow.pop %v3076
      %v3078 = vmul.f32 %v2690, 1.442695
      %v3079 = vpow.pop %v3078
      %v3080 = vmul.f32 %v2691, 1.442695
      %v3081 = vpow.pop %v3080
      %v3082 = vmul.f32 %v2692, 1.442695
      %v3083 = vpow.pop %v3082
      %v3084 = vmul.f32 %v2693, 1.442695
      %v3085 = vpow.pop %v3084
      %v3086 = vmul.f32 %v2694, 1.442695
      %v3087 = vpow.pop %v3086
      %v3088 = vmul.f32 %v2695, 1.442695
      %v3089 = vpow.pop %v3088
      %v3090 = vmul.f32 %v2696, 1.442695
      %v3091 = vpow.pop %v3090
      %v3092 = vmul.f32 %v2697, 1.442695
      %v3093 = vpow.pop %v3092
      %v3094 = vmul.f32 %v2698, 1.442695
      %v3095 = vpow.pop %v3094
      %v3096 = vmul.f32 %v2699, 1.442695
      %v3097 = vpow.pop %v3096
      %v3098 = vmul.f32 %v2700, 1.442695
      %v3099 = vpow.pop %v3098
      %v3100 = vmul.f32 %v2701, 1.442695
      %v3101 = vpow.pop %v3100
      %v3102 = vmul.f32 %v2702, 1.442695
      %v3103 = vpow.pop %v3102
      %v3104 = vmul.f32 %v2703, 1.442695
      %v3105 = vpow.pop %v3104
      %v3106 = vmul.f32 %v2704, 1.442695
      %v3107 = vpow.pop %v3106
      %v3108 = vmul.f32 %v2705, 1.442695
      %v3109 = vpow.pop %v3108
      %v3110 = vmul.f32 %v2706, 1.442695
      %v3111 = vpow.pop %v3110
      %v3112 = vmul.f32 %v2707, 1.442695
      %v3113 = vpow.pop %v3112
      %v3114 = vmul.f32 %v2708, 1.442695
      %v3115 = vpow.pop %v3114
      %v3116 = vmul.f32 %v2709, 1.442695
      %v3117 = vpow.pop %v3116
      %v3118 = vmul.f32 %v2710, 1.442695
      %v3119 = vpow.pop %v3118
      %v3120 = vmul.f32 %v2711, 1.442695
      %v3121 = vpow.pop %v3120
      %v3122 = vmul.f32 %v2712, 1.442695
      %v3123 = vpow.pop %v3122
      %v3124 = vmul.f32 %v2713, 1.442695
      %v3125 = vpow.pop %v3124
      %v3126 = vmul.f32 %v2714, 1.442695
      %v3127 = vpow.pop %v3126
      %v3128 = vmul.f32 %v2715, 1.442695
      %v3129 = vpow.pop %v3128
      %v3130 = vmul.f32 %v2716, 1.442695
      %v3131 = vpow.pop %v3130
      %v3132 = vmul.f32 %v2717, 1.442695
      %v3133 = vpow.pop %v3132
      %v3134 = vmul.f32 %v2718, 1.442695
      %v3135 = vpow.pop %v3134
      %v3136 = vmul.f32 %v2719, 1.442695
      %v3137 = vpow.pop %v3136
      %v3138 = vmul.f32 %v2720, 1.442695
      %v3139 = vpow.pop %v3138
      %v3140 = vmul.f32 %v2721, 1.442695
      %v3141 = vpow.pop %v3140
      %v3142 = vmul.f32 %v2722, 1.442695
      %v3143 = vpow.pop %v3142
      %v3144 = vmul.f32 %v2723, 1.442695
      %v3145 = vpow.pop %v3144
      %v3146 = vmul.f32 %v2724, 1.442695
      %v3147 = vpow.pop %v3146
      %v3148 = vmul.f32 %v2725, 1.442695
      %v3149 = vpow.pop %v3148
      %v3150 = vmul.f32 %v2726, 1.442695
      %v3151 = vpow.pop %v3150
      %v3152 = vmul.f32 %v2727, 1.442695
      %v3153 = vpow.pop %v3152
      %v3154 = vmul.f32 %v2728, 1.442695
      %v3155 = vpow.pop %v3154
      %v3156 = vmul.f32 %v2729, 1.442695
      %v3157 = vpow.pop %v3156
      %v3158 = vmul.f32 %v2730, 1.442695
      %v3159 = vpow.pop %v3158
      %v3160 = vmul.f32 %v2731, 1.442695
      %v3161 = vpow.pop %v3160
      %v3162 = vmul.f32 %v2732, 1.442695
      %v3163 = vpow.pop %v3162
      %v3164 = vmul.f32 %v2733, 1.442695
      %v3165 = vpow.pop %v3164
      %v3166 = vmul.f32 %v2734, 1.442695
      %v3167 = vpow.pop %v3166
      %v3168 = vmul.f32 %v2735, 1.442695
      %v3169 = vpow.pop %v3168
      %v3170 = vmul.f32 %v2736, 1.442695
      %v3171 = vpow.pop %v3170
      %v3172 = vmul.f32 %v2737, 1.442695
      %v3173 = vpow.pop %v3172
      %v3174 = vmul.f32 %v2738, 1.442695
      %v3175 = vpow.pop %v3174
      %v3176 = vmul.f32 %v2739, 1.442695
      %v3177 = vpow.pop %v3176
      %v3178 = vmul.f32 %v2740, 1.442695
      %v3179 = vpow.pop %v3178
      %v3180 = vmul.f32 %v2741, 1.442695
      %v3181 = vpow.pop %v3180
      %v3182 = vmul.f32 %v2742, 1.442695
      %v3183 = vpow.pop %v3182
      %v3184 = vmul.f32 %v2743, 1.442695
      %v3185 = vpow.pop %v3184
      %v3186 = vmul.f32 %v2744, 1.442695
      %v3187 = vpow.pop %v3186
      %v3188 = vmul.f32 %v2745, 1.442695
      %v3189 = vpow.pop %v3188
      %v3190 = vmul.f32 %v2746, 1.442695
      %v3191 = vpow.pop %v3190
      %v3192 = vmul.f32 %v2747, 1.442695
      %v3193 = vpow.pop %v3192
      %v3194 = vmul.f32 %v2748, 1.442695
      %v3195 = vpow.pop %v3194
      %v3196 = vmul.f32 %v2749, 1.442695
      %v3197 = vpow.pop %v3196
      %v3198 = vmul.f32 %v2750, 1.442695
      %v3199 = vpow.pop %v3198
      %v3200 = vmul.f32 %v2751, 1.442695
      %v3201 = vpow.pop %v3200
      %v3202 = vmul.f32 %v2752, 1.442695
      %v3203 = vpow.pop %v3202
      %v3204 = vmul.f32 %v2753, 1.442695
      %v3205 = vpow.pop %v3204
      %v3206 = vmul.f32 %v2754, 1.442695
      %v3207 = vpow.pop %v3206
      %v3208 = vmul.f32 %v2755, 1.442695
      %v3209 = vpow.pop %v3208
      %v3210 = vmul.f32 %v2756, 1.442695
      %v3211 = vpow.pop %v3210
      %v3212 = vmul.f32 %v2757, 1.442695
      %v3213 = vpow.pop %v3212
      %v3214 = vmul.f32 %v2758, 1.442695
      %v3215 = vpow.pop %v3214
      %v3216 = vmul.f32 %v2759, 1.442695
      %v3217 = vpow.pop %v3216
      %v3218 = vmul.f32 %v2760, 1.442695
      %v3219 = vpow.pop %v3218
      %v3220 = vmul.f32 %v2761, 1.442695
      %v3221 = vpow.pop %v3220
      %v3222 = vmul.f32 %v2762, 1.442695
      %v3223 = vpow.pop %v3222
      %v3224 = vmul.f32 %v2763, 1.442695
      %v3225 = vpow.pop %v3224
      %v3226 = vmul.f32 %v2764, 1.442695
      %v3227 = vpow.pop %v3226
      %v3228 = vmul.f32 %v2765, 1.442695
      %v3229 = vpow.pop %v3228
      %v3230 = vmul.f32 %v2766, 1.442695
      %v3231 = vpow.pop %v3230
      %v3232 = vmul.f32 %v2767, 1.442695
      %v3233 = vpow.pop %v3232
      %v3234 = vmul.f32 %v2768, 1.442695
      %v3235 = vpow.pop %v3234
      %v3236 = vmul.f32 %v2769, 1.442695
      %v3237 = vpow.pop %v3236
      %v3238 = vmul.f32 %v2770, 1.442695
      %v3239 = vpow.pop %v3238
      %v3240 = vmul.f32 %v2771, 1.442695
      %v3241 = vpow.pop %v3240
      %v3242 = vmul.f32 %v2772, 1.442695
      %v3243 = vpow.pop %v3242
      %v3244 = vmul.f32 %v2773, 1.442695
      %v3245 = vpow.pop %v3244
      %v3246 = vmul.f32 %v2774, 1.442695
      %v3247 = vpow.pop %v3246
      %v3248 = vmul.f32 %v2775, 1.442695
      %v3249 = vpow.pop %v3248
      %v3250 = vmul.f32 %v2776, 1.442695
      %v3251 = vpow.pop %v3250
      %v3252 = vmul.f32 %v2777, 1.442695
      %v3253 = vpow.pop %v3252
      %v3254 = vmul.f32 %v2778, 1.442695
      %v3255 = vpow.pop %v3254
      %v3256 = vmul.f32 %v2779, 1.442695
      %v3257 = vpow.pop %v3256
      %v3258 = vmul.f32 %v2780, 1.442695
      %v3259 = vpow.pop %v3258
      %v3260 = vmul.f32 %v2781, 1.442695
      %v3261 = vpow.pop %v3260
      %v3262 = vmul.f32 %v2782, 1.442695
      %v3263 = vpow.pop %v3262
      %v3264 = vmul.f32 %v2783, 1.442695
      %v3265 = vpow.pop %v3264
      %v3266 = vmul.f32 %v2784, 1.442695
      %v3267 = vpow.pop %v3266
      %v3268 = vmul.f32 %v2785, 1.442695
      %v3269 = vpow.pop %v3268
      %v3270 = vmul.f32 %v2786, 1.442695
      %v3271 = vpow.pop %v3270
      %v3272 = vmul.f32 %v2787, 1.442695
      %v3273 = vpow.pop %v3272
      %v3274 = vmul.f32 %v2788, 1.442695
      %v3275 = vpow.pop %v3274
      %v3276 = vmul.f32 %v2789, 1.442695
      %v3277 = vpow.pop %v3276
      %v3278 = vmul.f32 %v2790, 1.442695
      %v3279 = vpow.pop %v3278
      %v3280 = vmul.f32 %v2791, 1.442695
      %v3281 = vpow.pop %v3280
      %v3282 = vmul.f32 %v2792, 1.442695
      %v3283 = vpow.pop %v3282
      %v3284 = vmul.f32 %v2793, 1.442695
      %v3285 = vpow.pop %v3284
      %v3286 = vmul.f32 %v2794, 1.442695
      %v3287 = vpow.pop %v3286
      %v3288 = vmul.f32 %v2795, 1.442695
      %v3289 = vpow.pop %v3288
      %v3290 = vmul.f32 %v2796, 1.442695
      %v3291 = vpow.pop %v3290
      %v3292 = vmul.f32 %v2797, 1.442695
      %v3293 = vpow.pop %v3292
      %v3294 = vmul.f32 %v2798, 1.442695
      %v3295 = vpow.pop %v3294
      %v3296 = vmul.f32 %v2799, 1.442695
      %v3297 = vpow.pop %v3296
      %v3298 = vmul.f32 %v2800, 1.442695
      %v3299 = vpow.pop %v3298
      %v3300 = vmul.f32 %v2801, 1.442695
      %v3301 = vpow.pop %v3300
      %v3302 = vmul.f32 %v2802, 1.442695
      %v3303 = vpow.pop %v3302
      %v3304 = vmul.f32 %v2803, 1.442695
      %v3305 = vpow.pop %v3304
      %v3306 = vmul.f32 %v2804, 1.442695
      %v3307 = vpow.pop %v3306
      %v3308 = vmul.f32 %v2805, 1.442695
      %v3309 = vpow.pop %v3308
      %v3310 = vmul.f32 %v2806, 1.442695
      %v3311 = vpow.pop %v3310
      %v3312 = vmul.f32 %v2807, 1.442695
      %v3313 = vpow.pop %v3312
      %v3314 = vmul.f32 %v2808, 1.442695
      %v3315 = vpow.pop %v3314
      %v3316 = vmul.f32 %v2809, 1.442695
      %v3317 = vpow.pop %v3316
      %v3318 = vmul.f32 %v2810, 1.442695
      %v3319 = vpow.pop %v3318
      %v3320 = vmul.f32 %v2811, 1.442695
      %v3321 = vpow.pop %v3320
      %v3322 = vmul.f32 %v2812, 1.442695
      %v3323 = vpow.pop %v3322
      %v3324 = vmul.f32 %v2813, 1.442695
      %v3325 = vpow.pop %v3324
      %v3326 = vadd.f32 %v2815, 1.0
      %v3327 = vadd.f32 %v2817, 1.0
      %v3328 = vadd.f32 %v2819, 1.0
      %v3329 = vadd.f32 %v2821, 1.0
      %v3330 = vadd.f32 %v2823, 1.0
      %v3331 = vadd.f32 %v2825, 1.0
      %v3332 = vadd.f32 %v2827, 1.0
      %v3333 = vadd.f32 %v2829, 1.0
      %v3334 = vadd.f32 %v2831, 1.0
      %v3335 = vadd.f32 %v2833, 1.0
      %v3336 = vadd.f32 %v2835, 1.0
      %v3337 = vadd.f32 %v2837, 1.0
      %v3338 = vadd.f32 %v2839, 1.0
      %v3339 = vadd.f32 %v2841, 1.0
      %v3340 = vadd.f32 %v2843, 1.0
      %v3341 = vadd.f32 %v2845, 1.0
      %v3342 = vadd.f32 %v2847, 1.0
      %v3343 = vadd.f32 %v2849, 1.0
      %v3344 = vadd.f32 %v2851, 1.0
      %v3345 = vadd.f32 %v2853, 1.0
      %v3346 = vadd.f32 %v2855, 1.0
      %v3347 = vadd.f32 %v2857, 1.0
      %v3348 = vadd.f32 %v2859, 1.0
      %v3349 = vadd.f32 %v2861, 1.0
      %v3350 = vadd.f32 %v2863, 1.0
      %v3351 = vadd.f32 %v2865, 1.0
      %v3352 = vadd.f32 %v2867, 1.0
      %v3353 = vadd.f32 %v2869, 1.0
      %v3354 = vadd.f32 %v2871, 1.0
      %v3355 = vadd.f32 %v2873, 1.0
      %v3356 = vadd.f32 %v2875, 1.0
      %v3357 = vadd.f32 %v2877, 1.0
      %v3358 = vadd.f32 %v2879, 1.0
      %v3359 = vadd.f32 %v2881, 1.0
      %v3360 = vadd.f32 %v2883, 1.0
      %v3361 = vadd.f32 %v2885, 1.0
      %v3362 = vadd.f32 %v2887, 1.0
      %v3363 = vadd.f32 %v2889, 1.0
      %v3364 = vadd.f32 %v2891, 1.0
      %v3365 = vadd.f32 %v2893, 1.0
      %v3366 = vadd.f32 %v2895, 1.0
      %v3367 = vadd.f32 %v2897, 1.0
      %v3368 = vadd.f32 %v2899, 1.0
      %v3369 = vadd.f32 %v2901, 1.0
      %v3370 = vadd.f32 %v2903, 1.0
      %v3371 = vadd.f32 %v2905, 1.0
      %v3372 = vadd.f32 %v2907, 1.0
      %v3373 = vadd.f32 %v2909, 1.0
      %v3374 = vadd.f32 %v2911, 1.0
      %v3375 = vadd.f32 %v2913, 1.0
      %v3376 = vadd.f32 %v2915, 1.0
      %v3377 = vadd.f32 %v2917, 1.0
      %v3378 = vadd.f32 %v2919, 1.0
      %v3379 = vadd.f32 %v2921, 1.0
      %v3380 = vadd.f32 %v2923, 1.0
      %v3381 = vadd.f32 %v2925, 1.0
      %v3382 = vadd.f32 %v2927, 1.0
      %v3383 = vadd.f32 %v2929, 1.0
      %v3384 = vadd.f32 %v2931, 1.0
      %v3385 = vadd.f32 %v2933, 1.0
      %v3386 = vadd.f32 %v2935, 1.0
      %v3387 = vadd.f32 %v2937, 1.0
      %v3388 = vadd.f32 %v2939, 1.0
      %v3389 = vadd.f32 %v2941, 1.0
      %v3390 = vadd.f32 %v2943, 1.0
      %v3391 = vadd.f32 %v2945, 1.0
      %v3392 = vadd.f32 %v2947, 1.0
      %v3393 = vadd.f32 %v2949, 1.0
      %v3394 = vadd.f32 %v2951, 1.0
      %v3395 = vadd.f32 %v2953, 1.0
      %v3396 = vadd.f32 %v2955, 1.0
      %v3397 = vadd.f32 %v2957, 1.0
      %v3398 = vadd.f32 %v2959, 1.0
      %v3399 = vadd.f32 %v2961, 1.0
      %v3400 = vadd.f32 %v2963, 1.0
      %v3401 = vadd.f32 %v2965, 1.0
      %v3402 = vadd.f32 %v2967, 1.0
      %v3403 = vadd.f32 %v2969, 1.0
      %v3404 = vadd.f32 %v2971, 1.0
      %v3405 = vadd.f32 %v2973, 1.0
      %v3406 = vadd.f32 %v2975, 1.0
      %v3407 = vadd.f32 %v2977, 1.0
      %v3408 = vadd.f32 %v2979, 1.0
      %v3409 = vadd.f32 %v2981, 1.0
      %v3410 = vadd.f32 %v2983, 1.0
      %v3411 = vadd.f32 %v2985, 1.0
      %v3412 = vadd.f32 %v2987, 1.0
      %v3413 = vadd.f32 %v2989, 1.0
      %v3414 = vadd.f32 %v2991, 1.0
      %v3415 = vadd.f32 %v2993, 1.0
      %v3416 = vadd.f32 %v2995, 1.0
      %v3417 = vadd.f32 %v2997, 1.0
      %v3418 = vadd.f32 %v2999, 1.0
      %v3419 = vadd.f32 %v3001, 1.0
      %v3420 = vadd.f32 %v3003, 1.0
      %v3421 = vadd.f32 %v3005, 1.0
      %v3422 = vadd.f32 %v3007, 1.0
      %v3423 = vadd.f32 %v3009, 1.0
      %v3424 = vadd.f32 %v3011, 1.0
      %v3425 = vadd.f32 %v3013, 1.0
      %v3426 = vadd.f32 %v3015, 1.0
      %v3427 = vadd.f32 %v3017, 1.0
      %v3428 = vadd.f32 %v3019, 1.0
      %v3429 = vadd.f32 %v3021, 1.0
      %v3430 = vadd.f32 %v3023, 1.0
      %v3431 = vadd.f32 %v3025, 1.0
      %v3432 = vadd.f32 %v3027, 1.0
      %v3433 = vadd.f32 %v3029, 1.0
      %v3434 = vadd.f32 %v3031, 1.0
      %v3435 = vadd.f32 %v3033, 1.0
      %v3436 = vadd.f32 %v3035, 1.0
      %v3437 = vadd.f32 %v3037, 1.0
      %v3438 = vadd.f32 %v3039, 1.0
      %v3439 = vadd.f32 %v3041, 1.0
      %v3440 = vadd.f32 %v3043, 1.0
      %v3441 = vadd.f32 %v3045, 1.0
      %v3442 = vadd.f32 %v3047, 1.0
      %v3443 = vadd.f32 %v3049, 1.0
      %v3444 = vadd.f32 %v3051, 1.0
      %v3445 = vadd.f32 %v3053, 1.0
      %v3446 = vadd.f32 %v3055, 1.0
      %v3447 = vadd.f32 %v3057, 1.0
      %v3448 = vadd.f32 %v3059, 1.0
      %v3449 = vadd.f32 %v3061, 1.0
      %v3450 = vadd.f32 %v3063, 1.0
      %v3451 = vadd.f32 %v3065, 1.0
      %v3452 = vadd.f32 %v3067, 1.0
      %v3453 = vadd.f32 %v3069, 1.0
      %v3454 = vadd.f32 %v3071, 1.0
      %v3455 = vadd.f32 %v3073, 1.0
      %v3456 = vadd.f32 %v3075, 1.0
      %v3457 = vadd.f32 %v3077, 1.0
      %v3458 = vadd.f32 %v3079, 1.0
      %v3459 = vadd.f32 %v3081, 1.0
      %v3460 = vadd.f32 %v3083, 1.0
      %v3461 = vadd.f32 %v3085, 1.0
      %v3462 = vadd.f32 %v3087, 1.0
      %v3463 = vadd.f32 %v3089, 1.0
      %v3464 = vadd.f32 %v3091, 1.0
      %v3465 = vadd.f32 %v3093, 1.0
      %v3466 = vadd.f32 %v3095, 1.0
      %v3467 = vadd.f32 %v3097, 1.0
      %v3468 = vadd.f32 %v3099, 1.0
      %v3469 = vadd.f32 %v3101, 1.0
      %v3470 = vadd.f32 %v3103, 1.0
      %v3471 = vadd.f32 %v3105, 1.0
      %v3472 = vadd.f32 %v3107, 1.0
      %v3473 = vadd.f32 %v3109, 1.0
      %v3474 = vadd.f32 %v3111, 1.0
      %v3475 = vadd.f32 %v3113, 1.0
      %v3476 = vadd.f32 %v3115, 1.0
      %v3477 = vadd.f32 %v3117, 1.0
      %v3478 = vadd.f32 %v3119, 1.0
      %v3479 = vadd.f32 %v3121, 1.0
      %v3480 = vadd.f32 %v3123, 1.0
      %v3481 = vadd.f32 %v3125, 1.0
      %v3482 = vadd.f32 %v3127, 1.0
      %v3483 = vadd.f32 %v3129, 1.0
      %v3484 = vadd.f32 %v3131, 1.0
      %v3485 = vadd.f32 %v3133, 1.0
      %v3486 = vadd.f32 %v3135, 1.0
      %v3487 = vadd.f32 %v3137, 1.0
      %v3488 = vadd.f32 %v3139, 1.0
      %v3489 = vadd.f32 %v3141, 1.0
      %v3490 = vadd.f32 %v3143, 1.0
      %v3491 = vadd.f32 %v3145, 1.0
      %v3492 = vadd.f32 %v3147, 1.0
      %v3493 = vadd.f32 %v3149, 1.0
      %v3494 = vadd.f32 %v3151, 1.0
      %v3495 = vadd.f32 %v3153, 1.0
      %v3496 = vadd.f32 %v3155, 1.0
      %v3497 = vadd.f32 %v3157, 1.0
      %v3498 = vadd.f32 %v3159, 1.0
      %v3499 = vadd.f32 %v3161, 1.0
      %v3500 = vadd.f32 %v3163, 1.0
      %v3501 = vadd.f32 %v3165, 1.0
      %v3502 = vadd.f32 %v3167, 1.0
      %v3503 = vadd.f32 %v3169, 1.0
      %v3504 = vadd.f32 %v3171, 1.0
      %v3505 = vadd.f32 %v3173, 1.0
      %v3506 = vadd.f32 %v3175, 1.0
      %v3507 = vadd.f32 %v3177, 1.0
      %v3508 = vadd.f32 %v3179, 1.0
      %v3509 = vadd.f32 %v3181, 1.0
      %v3510 = vadd.f32 %v3183, 1.0
      %v3511 = vadd.f32 %v3185, 1.0
      %v3512 = vadd.f32 %v3187, 1.0
      %v3513 = vadd.f32 %v3189, 1.0
      %v3514 = vadd.f32 %v3191, 1.0
      %v3515 = vadd.f32 %v3193, 1.0
      %v3516 = vadd.f32 %v3195, 1.0
      %v3517 = vadd.f32 %v3197, 1.0
      %v3518 = vadd.f32 %v3199, 1.0
      %v3519 = vadd.f32 %v3201, 1.0
      %v3520 = vadd.f32 %v3203, 1.0
      %v3521 = vadd.f32 %v3205, 1.0
      %v3522 = vadd.f32 %v3207, 1.0
      %v3523 = vadd.f32 %v3209, 1.0
      %v3524 = vadd.f32 %v3211, 1.0
      %v3525 = vadd.f32 %v3213, 1.0
      %v3526 = vadd.f32 %v3215, 1.0
      %v3527 = vadd.f32 %v3217, 1.0
      %v3528 = vadd.f32 %v3219, 1.0
      %v3529 = vadd.f32 %v3221, 1.0
      %v3530 = vadd.f32 %v3223, 1.0
      %v3531 = vadd.f32 %v3225, 1.0
      %v3532 = vadd.f32 %v3227, 1.0
      %v3533 = vadd.f32 %v3229, 1.0
      %v3534 = vadd.f32 %v3231, 1.0
      %v3535 = vadd.f32 %v3233, 1.0
      %v3536 = vadd.f32 %v3235, 1.0
      %v3537 = vadd.f32 %v3237, 1.0
      %v3538 = vadd.f32 %v3239, 1.0
      %v3539 = vadd.f32 %v3241, 1.0
      %v3540 = vadd.f32 %v3243, 1.0
      %v3541 = vadd.f32 %v3245, 1.0
      %v3542 = vadd.f32 %v3247, 1.0
      %v3543 = vadd.f32 %v3249, 1.0
      %v3544 = vadd.f32 %v3251, 1.0
      %v3545 = vadd.f32 %v3253, 1.0
      %v3546 = vadd.f32 %v3255, 1.0
      %v3547 = vadd.f32 %v3257, 1.0
      %v3548 = vadd.f32 %v3259, 1.0
      %v3549 = vadd.f32 %v3261, 1.0
      %v3550 = vadd.f32 %v3263, 1.0
      %v3551 = vadd.f32 %v3265, 1.0
      %v3552 = vadd.f32 %v3267, 1.0
      %v3553 = vadd.f32 %v3269, 1.0
      %v3554 = vadd.f32 %v3271, 1.0
      %v3555 = vadd.f32 %v3273, 1.0
      %v3556 = vadd.f32 %v3275, 1.0
      %v3557 = vadd.f32 %v3277, 1.0
      %v3558 = vadd.f32 %v3279, 1.0
      %v3559 = vadd.f32 %v3281, 1.0
      %v3560 = vadd.f32 %v3283, 1.0
      %v3561 = vadd.f32 %v3285, 1.0
      %v3562 = vadd.f32 %v3287, 1.0
      %v3563 = vadd.f32 %v3289, 1.0
      %v3564 = vadd.f32 %v3291, 1.0
      %v3565 = vadd.f32 %v3293, 1.0
      %v3566 = vadd.f32 %v3295, 1.0
      %v3567 = vadd.f32 %v3297, 1.0
      %v3568 = vadd.f32 %v3299, 1.0
      %v3569 = vadd.f32 %v3301, 1.0
      %v3570 = vadd.f32 %v3303, 1.0
      %v3571 = vadd.f32 %v3305, 1.0
      %v3572 = vadd.f32 %v3307, 1.0
      %v3573 = vadd.f32 %v3309, 1.0
      %v3574 = vadd.f32 %v3311, 1.0
      %v3575 = vadd.f32 %v3313, 1.0
      %v3576 = vadd.f32 %v3315, 1.0
      %v3577 = vadd.f32 %v3317, 1.0
      %v3578 = vadd.f32 %v3319, 1.0
      %v3579 = vadd.f32 %v3321, 1.0
      %v3580 = vadd.f32 %v3323, 1.0
      %v3581 = vadd.f32 %v3325, 1.0
      %v3582 = vrcp.pop %v3326
      %v3583 = vmul.f32 1.0, %v3582
      %v3584 = vrcp.pop %v3327
      %v3585 = vmul.f32 1.0, %v3584
      %v3586 = vrcp.pop %v3328
      %v3587 = vmul.f32 1.0, %v3586
      %v3588 = vrcp.pop %v3329
      %v3589 = vmul.f32 1.0, %v3588
      %v3590 = vrcp.pop %v3330
      %v3591 = vmul.f32 1.0, %v3590
      %v3592 = vrcp.pop %v3331
      %v3593 = vmul.f32 1.0, %v3592
      %v3594 = vrcp.pop %v3332
      %v3595 = vmul.f32 1.0, %v3594
      %v3596 = vrcp.pop %v3333
      %v3597 = vmul.f32 1.0, %v3596
      %v3598 = vrcp.pop %v3334
      %v3599 = vmul.f32 1.0, %v3598
      %v3600 = vrcp.pop %v3335
      %v3601 = vmul.f32 1.0, %v3600
      %v3602 = vrcp.pop %v3336
      %v3603 = vmul.f32 1.0, %v3602
      %v3604 = vrcp.pop %v3337
      %v3605 = vmul.f32 1.0, %v3604
      %v3606 = vrcp.pop %v3338
      %v3607 = vmul.f32 1.0, %v3606
      %v3608 = vrcp.pop %v3339
      %v3609 = vmul.f32 1.0, %v3608
      %v3610 = vrcp.pop %v3340
      %v3611 = vmul.f32 1.0, %v3610
      %v3612 = vrcp.pop %v3341
      %v3613 = vmul.f32 1.0, %v3612
      %v3614 = vrcp.pop %v3342
      %v3615 = vmul.f32 1.0, %v3614
      %v3616 = vrcp.pop %v3343
      %v3617 = vmul.f32 1.0, %v3616
      %v3618 = vrcp.pop %v3344
      %v3619 = vmul.f32 1.0, %v3618
      %v3620 = vrcp.pop %v3345
      %v3621 = vmul.f32 1.0, %v3620
      %v3622 = vrcp.pop %v3346
      %v3623 = vmul.f32 1.0, %v3622
      %v3624 = vrcp.pop %v3347
      %v3625 = vmul.f32 1.0, %v3624
      %v3626 = vrcp.pop %v3348
      %v3627 = vmul.f32 1.0, %v3626
      %v3628 = vrcp.pop %v3349
      %v3629 = vmul.f32 1.0, %v3628
      %v3630 = vrcp.pop %v3350
      %v3631 = vmul.f32 1.0, %v3630
      %v3632 = vrcp.pop %v3351
      %v3633 = vmul.f32 1.0, %v3632
      %v3634 = vrcp.pop %v3352
      %v3635 = vmul.f32 1.0, %v3634
      %v3636 = vrcp.pop %v3353
      %v3637 = vmul.f32 1.0, %v3636
      %v3638 = vrcp.pop %v3354
      %v3639 = vmul.f32 1.0, %v3638
      %v3640 = vrcp.pop %v3355
      %v3641 = vmul.f32 1.0, %v3640
      %v3642 = vrcp.pop %v3356
      %v3643 = vmul.f32 1.0, %v3642
      %v3644 = vrcp.pop %v3357
      %v3645 = vmul.f32 1.0, %v3644
      %v3646 = vrcp.pop %v3358
      %v3647 = vmul.f32 1.0, %v3646
      %v3648 = vrcp.pop %v3359
      %v3649 = vmul.f32 1.0, %v3648
      %v3650 = vrcp.pop %v3360
      %v3651 = vmul.f32 1.0, %v3650
      %v3652 = vrcp.pop %v3361
      %v3653 = vmul.f32 1.0, %v3652
      %v3654 = vrcp.pop %v3362
      %v3655 = vmul.f32 1.0, %v3654
      %v3656 = vrcp.pop %v3363
      %v3657 = vmul.f32 1.0, %v3656
      %v3658 = vrcp.pop %v3364
      %v3659 = vmul.f32 1.0, %v3658
      %v3660 = vrcp.pop %v3365
      %v3661 = vmul.f32 1.0, %v3660
      %v3662 = vrcp.pop %v3366
      %v3663 = vmul.f32 1.0, %v3662
      %v3664 = vrcp.pop %v3367
      %v3665 = vmul.f32 1.0, %v3664
      %v3666 = vrcp.pop %v3368
      %v3667 = vmul.f32 1.0, %v3666
      %v3668 = vrcp.pop %v3369
      %v3669 = vmul.f32 1.0, %v3668
      %v3670 = vrcp.pop %v3370
      %v3671 = vmul.f32 1.0, %v3670
      %v3672 = vrcp.pop %v3371
      %v3673 = vmul.f32 1.0, %v3672
      %v3674 = vrcp.pop %v3372
      %v3675 = vmul.f32 1.0, %v3674
      %v3676 = vrcp.pop %v3373
      %v3677 = vmul.f32 1.0, %v3676
      %v3678 = vrcp.pop %v3374
      %v3679 = vmul.f32 1.0, %v3678
      %v3680 = vrcp.pop %v3375
      %v3681 = vmul.f32 1.0, %v3680
      %v3682 = vrcp.pop %v3376
      %v3683 = vmul.f32 1.0, %v3682
      %v3684 = vrcp.pop %v3377
      %v3685 = vmul.f32 1.0, %v3684
      %v3686 = vrcp.pop %v3378
      %v3687 = vmul.f32 1.0, %v3686
      %v3688 = vrcp.pop %v3379
      %v3689 = vmul.f32 1.0, %v3688
      %v3690 = vrcp.pop %v3380
      %v3691 = vmul.f32 1.0, %v3690
      %v3692 = vrcp.pop %v3381
      %v3693 = vmul.f32 1.0, %v3692
      %v3694 = vrcp.pop %v3382
      %v3695 = vmul.f32 1.0, %v3694
      %v3696 = vrcp.pop %v3383
      %v3697 = vmul.f32 1.0, %v3696
      %v3698 = vrcp.pop %v3384
      %v3699 = vmul.f32 1.0, %v3698
      %v3700 = vrcp.pop %v3385
      %v3701 = vmul.f32 1.0, %v3700
      %v3702 = vrcp.pop %v3386
      %v3703 = vmul.f32 1.0, %v3702
      %v3704 = vrcp.pop %v3387
      %v3705 = vmul.f32 1.0, %v3704
      %v3706 = vrcp.pop %v3388
      %v3707 = vmul.f32 1.0, %v3706
      %v3708 = vrcp.pop %v3389
      %v3709 = vmul.f32 1.0, %v3708
      %v3710 = vrcp.pop %v3390
      %v3711 = vmul.f32 1.0, %v3710
      %v3712 = vrcp.pop %v3391
      %v3713 = vmul.f32 1.0, %v3712
      %v3714 = vrcp.pop %v3392
      %v3715 = vmul.f32 1.0, %v3714
      %v3716 = vrcp.pop %v3393
      %v3717 = vmul.f32 1.0, %v3716
      %v3718 = vrcp.pop %v3394
      %v3719 = vmul.f32 1.0, %v3718
      %v3720 = vrcp.pop %v3395
      %v3721 = vmul.f32 1.0, %v3720
      %v3722 = vrcp.pop %v3396
      %v3723 = vmul.f32 1.0, %v3722
      %v3724 = vrcp.pop %v3397
      %v3725 = vmul.f32 1.0, %v3724
      %v3726 = vrcp.pop %v3398
      %v3727 = vmul.f32 1.0, %v3726
      %v3728 = vrcp.pop %v3399
      %v3729 = vmul.f32 1.0, %v3728
      %v3730 = vrcp.pop %v3400
      %v3731 = vmul.f32 1.0, %v3730
      %v3732 = vrcp.pop %v3401
      %v3733 = vmul.f32 1.0, %v3732
      %v3734 = vrcp.pop %v3402
      %v3735 = vmul.f32 1.0, %v3734
      %v3736 = vrcp.pop %v3403
      %v3737 = vmul.f32 1.0, %v3736
      %v3738 = vrcp.pop %v3404
      %v3739 = vmul.f32 1.0, %v3738
      %v3740 = vrcp.pop %v3405
      %v3741 = vmul.f32 1.0, %v3740
      %v3742 = vrcp.pop %v3406
      %v3743 = vmul.f32 1.0, %v3742
      %v3744 = vrcp.pop %v3407
      %v3745 = vmul.f32 1.0, %v3744
      %v3746 = vrcp.pop %v3408
      %v3747 = vmul.f32 1.0, %v3746
      %v3748 = vrcp.pop %v3409
      %v3749 = vmul.f32 1.0, %v3748
      %v3750 = vrcp.pop %v3410
      %v3751 = vmul.f32 1.0, %v3750
      %v3752 = vrcp.pop %v3411
      %v3753 = vmul.f32 1.0, %v3752
      %v3754 = vrcp.pop %v3412
      %v3755 = vmul.f32 1.0, %v3754
      %v3756 = vrcp.pop %v3413
      %v3757 = vmul.f32 1.0, %v3756
      %v3758 = vrcp.pop %v3414
      %v3759 = vmul.f32 1.0, %v3758
      %v3760 = vrcp.pop %v3415
      %v3761 = vmul.f32 1.0, %v3760
      %v3762 = vrcp.pop %v3416
      %v3763 = vmul.f32 1.0, %v3762
      %v3764 = vrcp.pop %v3417
      %v3765 = vmul.f32 1.0, %v3764
      %v3766 = vrcp.pop %v3418
      %v3767 = vmul.f32 1.0, %v3766
      %v3768 = vrcp.pop %v3419
      %v3769 = vmul.f32 1.0, %v3768
      %v3770 = vrcp.pop %v3420
      %v3771 = vmul.f32 1.0, %v3770
      %v3772 = vrcp.pop %v3421
      %v3773 = vmul.f32 1.0, %v3772
      %v3774 = vrcp.pop %v3422
      %v3775 = vmul.f32 1.0, %v3774
      %v3776 = vrcp.pop %v3423
      %v3777 = vmul.f32 1.0, %v3776
      %v3778 = vrcp.pop %v3424
      %v3779 = vmul.f32 1.0, %v3778
      %v3780 = vrcp.pop %v3425
      %v3781 = vmul.f32 1.0, %v3780
      %v3782 = vrcp.pop %v3426
      %v3783 = vmul.f32 1.0, %v3782
      %v3784 = vrcp.pop %v3427
      %v3785 = vmul.f32 1.0, %v3784
      %v3786 = vrcp.pop %v3428
      %v3787 = vmul.f32 1.0, %v3786
      %v3788 = vrcp.pop %v3429
      %v3789 = vmul.f32 1.0, %v3788
      %v3790 = vrcp.pop %v3430
      %v3791 = vmul.f32 1.0, %v3790
      %v3792 = vrcp.pop %v3431
      %v3793 = vmul.f32 1.0, %v3792
      %v3794 = vrcp.pop %v3432
      %v3795 = vmul.f32 1.0, %v3794
      %v3796 = vrcp.pop %v3433
      %v3797 = vmul.f32 1.0, %v3796
      %v3798 = vrcp.pop %v3434
      %v3799 = vmul.f32 1.0, %v3798
      %v3800 = vrcp.pop %v3435
      %v3801 = vmul.f32 1.0, %v3800
      %v3802 = vrcp.pop %v3436
      %v3803 = vmul.f32 1.0, %v3802
      %v3804 = vrcp.pop %v3437
      %v3805 = vmul.f32 1.0, %v3804
      %v3806 = vrcp.pop %v3438
      %v3807 = vmul.f32 1.0, %v3806
      %v3808 = vrcp.pop %v3439
      %v3809 = vmul.f32 1.0, %v3808
      %v3810 = vrcp.pop %v3440
      %v3811 = vmul.f32 1.0, %v3810
      %v3812 = vrcp.pop %v3441
      %v3813 = vmul.f32 1.0, %v3812
      %v3814 = vrcp.pop %v3442
      %v3815 = vmul.f32 1.0, %v3814
      %v3816 = vrcp.pop %v3443
      %v3817 = vmul.f32 1.0, %v3816
      %v3818 = vrcp.pop %v3444
      %v3819 = vmul.f32 1.0, %v3818
      %v3820 = vrcp.pop %v3445
      %v3821 = vmul.f32 1.0, %v3820
      %v3822 = vrcp.pop %v3446
      %v3823 = vmul.f32 1.0, %v3822
      %v3824 = vrcp.pop %v3447
      %v3825 = vmul.f32 1.0, %v3824
      %v3826 = vrcp.pop %v3448
      %v3827 = vmul.f32 1.0, %v3826
      %v3828 = vrcp.pop %v3449
      %v3829 = vmul.f32 1.0, %v3828
      %v3830 = vrcp.pop %v3450
      %v3831 = vmul.f32 1.0, %v3830
      %v3832 = vrcp.pop %v3451
      %v3833 = vmul.f32 1.0, %v3832
      %v3834 = vrcp.pop %v3452
      %v3835 = vmul.f32 1.0, %v3834
      %v3836 = vrcp.pop %v3453
      %v3837 = vmul.f32 1.0, %v3836
      %v3838 = vrcp.pop %v3454
      %v3839 = vmul.f32 1.0, %v3838
      %v3840 = vrcp.pop %v3455
      %v3841 = vmul.f32 1.0, %v3840
      %v3842 = vrcp.pop %v3456
      %v3843 = vmul.f32 1.0, %v3842
      %v3844 = vrcp.pop %v3457
      %v3845 = vmul.f32 1.0, %v3844
      %v3846 = vrcp.pop %v3458
      %v3847 = vmul.f32 1.0, %v3846
      %v3848 = vrcp.pop %v3459
      %v3849 = vmul.f32 1.0, %v3848
      %v3850 = vrcp.pop %v3460
      %v3851 = vmul.f32 1.0, %v3850
      %v3852 = vrcp.pop %v3461
      %v3853 = vmul.f32 1.0, %v3852
      %v3854 = vrcp.pop %v3462
      %v3855 = vmul.f32 1.0, %v3854
      %v3856 = vrcp.pop %v3463
      %v3857 = vmul.f32 1.0, %v3856
      %v3858 = vrcp.pop %v3464
      %v3859 = vmul.f32 1.0, %v3858
      %v3860 = vrcp.pop %v3465
      %v3861 = vmul.f32 1.0, %v3860
      %v3862 = vrcp.pop %v3466
      %v3863 = vmul.f32 1.0, %v3862
      %v3864 = vrcp.pop %v3467
      %v3865 = vmul.f32 1.0, %v3864
      %v3866 = vrcp.pop %v3468
      %v3867 = vmul.f32 1.0, %v3866
      %v3868 = vrcp.pop %v3469
      %v3869 = vmul.f32 1.0, %v3868
      %v3870 = vrcp.pop %v3470
      %v3871 = vmul.f32 1.0, %v3870
      %v3872 = vrcp.pop %v3471
      %v3873 = vmul.f32 1.0, %v3872
      %v3874 = vrcp.pop %v3472
      %v3875 = vmul.f32 1.0, %v3874
      %v3876 = vrcp.pop %v3473
      %v3877 = vmul.f32 1.0, %v3876
      %v3878 = vrcp.pop %v3474
      %v3879 = vmul.f32 1.0, %v3878
      %v3880 = vrcp.pop %v3475
      %v3881 = vmul.f32 1.0, %v3880
      %v3882 = vrcp.pop %v3476
      %v3883 = vmul.f32 1.0, %v3882
      %v3884 = vrcp.pop %v3477
      %v3885 = vmul.f32 1.0, %v3884
      %v3886 = vrcp.pop %v3478
      %v3887 = vmul.f32 1.0, %v3886
      %v3888 = vrcp.pop %v3479
      %v3889 = vmul.f32 1.0, %v3888
      %v3890 = vrcp.pop %v3480
      %v3891 = vmul.f32 1.0, %v3890
      %v3892 = vrcp.pop %v3481
      %v3893 = vmul.f32 1.0, %v3892
      %v3894 = vrcp.pop %v3482
      %v3895 = vmul.f32 1.0, %v3894
      %v3896 = vrcp.pop %v3483
      %v3897 = vmul.f32 1.0, %v3896
      %v3898 = vrcp.pop %v3484
      %v3899 = vmul.f32 1.0, %v3898
      %v3900 = vrcp.pop %v3485
      %v3901 = vmul.f32 1.0, %v3900
      %v3902 = vrcp.pop %v3486
      %v3903 = vmul.f32 1.0, %v3902
      %v3904 = vrcp.pop %v3487
      %v3905 = vmul.f32 1.0, %v3904
      %v3906 = vrcp.pop %v3488
      %v3907 = vmul.f32 1.0, %v3906
      %v3908 = vrcp.pop %v3489
      %v3909 = vmul.f32 1.0, %v3908
      %v3910 = vrcp.pop %v3490
      %v3911 = vmul.f32 1.0, %v3910
      %v3912 = vrcp.pop %v3491
      %v3913 = vmul.f32 1.0, %v3912
      %v3914 = vrcp.pop %v3492
      %v3915 = vmul.f32 1.0, %v3914
      %v3916 = vrcp.pop %v3493
      %v3917 = vmul.f32 1.0, %v3916
      %v3918 = vrcp.pop %v3494
      %v3919 = vmul.f32 1.0, %v3918
      %v3920 = vrcp.pop %v3495
      %v3921 = vmul.f32 1.0, %v3920
      %v3922 = vrcp.pop %v3496
      %v3923 = vmul.f32 1.0, %v3922
      %v3924 = vrcp.pop %v3497
      %v3925 = vmul.f32 1.0, %v3924
      %v3926 = vrcp.pop %v3498
      %v3927 = vmul.f32 1.0, %v3926
      %v3928 = vrcp.pop %v3499
      %v3929 = vmul.f32 1.0, %v3928
      %v3930 = vrcp.pop %v3500
      %v3931 = vmul.f32 1.0, %v3930
      %v3932 = vrcp.pop %v3501
      %v3933 = vmul.f32 1.0, %v3932
      %v3934 = vrcp.pop %v3502
      %v3935 = vmul.f32 1.0, %v3934
      %v3936 = vrcp.pop %v3503
      %v3937 = vmul.f32 1.0, %v3936
      %v3938 = vrcp.pop %v3504
      %v3939 = vmul.f32 1.0, %v3938
      %v3940 = vrcp.pop %v3505
      %v3941 = vmul.f32 1.0, %v3940
      %v3942 = vrcp.pop %v3506
      %v3943 = vmul.f32 1.0, %v3942
      %v3944 = vrcp.pop %v3507
      %v3945 = vmul.f32 1.0, %v3944
      %v3946 = vrcp.pop %v3508
      %v3947 = vmul.f32 1.0, %v3946
      %v3948 = vrcp.pop %v3509
      %v3949 = vmul.f32 1.0, %v3948
      %v3950 = vrcp.pop %v3510
      %v3951 = vmul.f32 1.0, %v3950
      %v3952 = vrcp.pop %v3511
      %v3953 = vmul.f32 1.0, %v3952
      %v3954 = vrcp.pop %v3512
      %v3955 = vmul.f32 1.0, %v3954
      %v3956 = vrcp.pop %v3513
      %v3957 = vmul.f32 1.0, %v3956
      %v3958 = vrcp.pop %v3514
      %v3959 = vmul.f32 1.0, %v3958
      %v3960 = vrcp.pop %v3515
      %v3961 = vmul.f32 1.0, %v3960
      %v3962 = vrcp.pop %v3516
      %v3963 = vmul.f32 1.0, %v3962
      %v3964 = vrcp.pop %v3517
      %v3965 = vmul.f32 1.0, %v3964
      %v3966 = vrcp.pop %v3518
      %v3967 = vmul.f32 1.0, %v3966
      %v3968 = vrcp.pop %v3519
      %v3969 = vmul.f32 1.0, %v3968
      %v3970 = vrcp.pop %v3520
      %v3971 = vmul.f32 1.0, %v3970
      %v3972 = vrcp.pop %v3521
      %v3973 = vmul.f32 1.0, %v3972
      %v3974 = vrcp.pop %v3522
      %v3975 = vmul.f32 1.0, %v3974
      %v3976 = vrcp.pop %v3523
      %v3977 = vmul.f32 1.0, %v3976
      %v3978 = vrcp.pop %v3524
      %v3979 = vmul.f32 1.0, %v3978
      %v3980 = vrcp.pop %v3525
      %v3981 = vmul.f32 1.0, %v3980
      %v3982 = vrcp.pop %v3526
      %v3983 = vmul.f32 1.0, %v3982
      %v3984 = vrcp.pop %v3527
      %v3985 = vmul.f32 1.0, %v3984
      %v3986 = vrcp.pop %v3528
      %v3987 = vmul.f32 1.0, %v3986
      %v3988 = vrcp.pop %v3529
      %v3989 = vmul.f32 1.0, %v3988
      %v3990 = vrcp.pop %v3530
      %v3991 = vmul.f32 1.0, %v3990
      %v3992 = vrcp.pop %v3531
      %v3993 = vmul.f32 1.0, %v3992
      %v3994 = vrcp.pop %v3532
      %v3995 = vmul.f32 1.0, %v3994
      %v3996 = vrcp.pop %v3533
      %v3997 = vmul.f32 1.0, %v3996
      %v3998 = vrcp.pop %v3534
      %v3999 = vmul.f32 1.0, %v3998
      %v4000 = vrcp.pop %v3535
      %v4001 = vmul.f32 1.0, %v4000
      %v4002 = vrcp.pop %v3536
      %v4003 = vmul.f32 1.0, %v4002
      %v4004 = vrcp.pop %v3537
      %v4005 = vmul.f32 1.0, %v4004
      %v4006 = vrcp.pop %v3538
      %v4007 = vmul.f32 1.0, %v4006
      %v4008 = vrcp.pop %v3539
      %v4009 = vmul.f32 1.0, %v4008
      %v4010 = vrcp.pop %v3540
      %v4011 = vmul.f32 1.0, %v4010
      %v4012 = vrcp.pop %v3541
      %v4013 = vmul.f32 1.0, %v4012
      %v4014 = vrcp.pop %v3542
      %v4015 = vmul.f32 1.0, %v4014
      %v4016 = vrcp.pop %v3543
      %v4017 = vmul.f32 1.0, %v4016
      %v4018 = vrcp.pop %v3544
      %v4019 = vmul.f32 1.0, %v4018
      %v4020 = vrcp.pop %v3545
      %v4021 = vmul.f32 1.0, %v4020
      %v4022 = vrcp.pop %v3546
      %v4023 = vmul.f32 1.0, %v4022
      %v4024 = vrcp.pop %v3547
      %v4025 = vmul.f32 1.0, %v4024
      %v4026 = vrcp.pop %v3548
      %v4027 = vmul.f32 1.0, %v4026
      %v4028 = vrcp.pop %v3549
      %v4029 = vmul.f32 1.0, %v4028
      %v4030 = vrcp.pop %v3550
      %v4031 = vmul.f32 1.0, %v4030
      %v4032 = vrcp.pop %v3551
      %v4033 = vmul.f32 1.0, %v4032
      %v4034 = vrcp.pop %v3552
      %v4035 = vmul.f32 1.0, %v4034
      %v4036 = vrcp.pop %v3553
      %v4037 = vmul.f32 1.0, %v4036
      %v4038 = vrcp.pop %v3554
      %v4039 = vmul.f32 1.0, %v4038
      %v4040 = vrcp.pop %v3555
      %v4041 = vmul.f32 1.0, %v4040
      %v4042 = vrcp.pop %v3556
      %v4043 = vmul.f32 1.0, %v4042
      %v4044 = vrcp.pop %v3557
      %v4045 = vmul.f32 1.0, %v4044
      %v4046 = vrcp.pop %v3558
      %v4047 = vmul.f32 1.0, %v4046
      %v4048 = vrcp.pop %v3559
      %v4049 = vmul.f32 1.0, %v4048
      %v4050 = vrcp.pop %v3560
      %v4051 = vmul.f32 1.0, %v4050
      %v4052 = vrcp.pop %v3561
      %v4053 = vmul.f32 1.0, %v4052
      %v4054 = vrcp.pop %v3562
      %v4055 = vmul.f32 1.0, %v4054
      %v4056 = vrcp.pop %v3563
      %v4057 = vmul.f32 1.0, %v4056
      %v4058 = vrcp.pop %v3564
      %v4059 = vmul.f32 1.0, %v4058
      %v4060 = vrcp.pop %v3565
      %v4061 = vmul.f32 1.0, %v4060
      %v4062 = vrcp.pop %v3566
      %v4063 = vmul.f32 1.0, %v4062
      %v4064 = vrcp.pop %v3567
      %v4065 = vmul.f32 1.0, %v4064
      %v4066 = vrcp.pop %v3568
      %v4067 = vmul.f32 1.0, %v4066
      %v4068 = vrcp.pop %v3569
      %v4069 = vmul.f32 1.0, %v4068
      %v4070 = vrcp.pop %v3570
      %v4071 = vmul.f32 1.0, %v4070
      %v4072 = vrcp.pop %v3571
      %v4073 = vmul.f32 1.0, %v4072
      %v4074 = vrcp.pop %v3572
      %v4075 = vmul.f32 1.0, %v4074
      %v4076 = vrcp.pop %v3573
      %v4077 = vmul.f32 1.0, %v4076
      %v4078 = vrcp.pop %v3574
      %v4079 = vmul.f32 1.0, %v4078
      %v4080 = vrcp.pop %v3575
      %v4081 = vmul.f32 1.0, %v4080
      %v4082 = vrcp.pop %v3576
      %v4083 = vmul.f32 1.0, %v4082
      %v4084 = vrcp.pop %v3577
      %v4085 = vmul.f32 1.0, %v4084
      %v4086 = vrcp.pop %v3578
      %v4087 = vmul.f32 1.0, %v4086
      %v4088 = vrcp.pop %v3579
      %v4089 = vmul.f32 1.0, %v4088
      %v4090 = vrcp.pop %v3580
      %v4091 = vmul.f32 1.0, %v4090
      %v4092 = vrcp.pop %v3581
      %v4093 = vmul.f32 1.0, %v4092
      %4094 = vst [vmem:[%s201] sm:$0xff] %v3583
      %4095 = vst [vmem:[%s201 + $0x8] sm:$0xff] %v3585
      %4096 = vst [vmem:[%s201 + $0x10] sm:$0xff] %v3587
      %4097 = vst [vmem:[%s201 + $0x18] sm:$0xff] %v3589
      %4098 = vst [vmem:[%s201 + $0x20] sm:$0xff] %v3591
      %4099 = vst [vmem:[%s201 + $0x28] sm:$0xff] %v3593
      %4100 = vst [vmem:[%s201 + $0x30] sm:$0xff] %v3595
      %4101 = vst [vmem:[%s201 + $0x38] sm:$0xff] %v3597
      %4102 = vst [vmem:[%s201 + $0x40] sm:$0xff] %v3599
      %4103 = vst [vmem:[%s201 + $0x48] sm:$0xff] %v3601
      %4104 = vst [vmem:[%s201 + $0x50] sm:$0xff] %v3603
      %4105 = vst [vmem:[%s201 + $0x58] sm:$0xff] %v3605
      %4106 = vst [vmem:[%s201 + $0x60] sm:$0xff] %v3607
      %4107 = vst [vmem:[%s201 + $0x68] sm:$0xff] %v3609
      %4108 = vst [vmem:[%s201 + $0x70] sm:$0xff] %v3611
      %4109 = vst [vmem:[%s201 + $0x78] sm:$0xff] %v3613
      %4110 = vst [vmem:[%s201 + $0x80] sm:$0xff] %v3615
      %4111 = vst [vmem:[%s201 + $0x88] sm:$0xff] %v3617
      %4112 = vst [vmem:[%s201 + $0x90] sm:$0xff] %v3619
      %4113 = vst [vmem:[%s201 + $0x98] sm:$0xff] %v3621
      %4114 = vst [vmem:[%s201 + $0xa0] sm:$0xff] %v3623
      %4115 = vst [vmem:[%s201 + $0xa8] sm:$0xff] %v3625
      %4116 = vst [vmem:[%s201 + $0xb0] sm:$0xff] %v3627
      %4117 = vst [vmem:[%s201 + $0xb8] sm:$0xff] %v3629
      %4118 = vst [vmem:[%s201 + $0xc0] sm:$0xff] %v3631
      %4119 = vst [vmem:[%s201 + $0xc8] sm:$0xff] %v3633
      %4120 = vst [vmem:[%s201 + $0xd0] sm:$0xff] %v3635
      %4121 = vst [vmem:[%s201 + $0xd8] sm:$0xff] %v3637
      %4122 = vst [vmem:[%s201 + $0xe0] sm:$0xff] %v3639
      %4123 = vst [vmem:[%s201 + $0xe8] sm:$0xff] %v3641
      %4124 = vst [vmem:[%s201 + $0xf0] sm:$0xff] %v3643
      %4125 = vst [vmem:[%s201 + $0xf8] sm:$0xff] %v3645
      %4126 = vst [vmem:[%s201 + $0x100] sm:$0xff] %v3647
      %4127 = vst [vmem:[%s201 + $0x108] sm:$0xff] %v3649
      %4128 = vst [vmem:[%s201 + $0x110] sm:$0xff] %v3651
      %4129 = vst [vmem:[%s201 + $0x118] sm:$0xff] %v3653
      %4130 = vst [vmem:[%s201 + $0x120] sm:$0xff] %v3655
      %4131 = vst [vmem:[%s201 + $0x128] sm:$0xff] %v3657
      %4132 = vst [vmem:[%s201 + $0x130] sm:$0xff] %v3659
      %4133 = vst [vmem:[%s201 + $0x138] sm:$0xff] %v3661
      %4134 = vst [vmem:[%s201 + $0x140] sm:$0xff] %v3663
      %4135 = vst [vmem:[%s201 + $0x148] sm:$0xff] %v3665
      %4136 = vst [vmem:[%s201 + $0x150] sm:$0xff] %v3667
      %4137 = vst [vmem:[%s201 + $0x158] sm:$0xff] %v3669
      %4138 = vst [vmem:[%s201 + $0x160] sm:$0xff] %v3671
      %4139 = vst [vmem:[%s201 + $0x168] sm:$0xff] %v3673
      %4140 = vst [vmem:[%s201 + $0x170] sm:$0xff] %v3675
      %4141 = vst [vmem:[%s201 + $0x178] sm:$0xff] %v3677
      %4142 = vst [vmem:[%s201 + $0x180] sm:$0xff] %v3679
      %4143 = vst [vmem:[%s201 + $0x188] sm:$0xff] %v3681
      %4144 = vst [vmem:[%s201 + $0x190] sm:$0xff] %v3683
      %4145 = vst [vmem:[%s201 + $0x198] sm:$0xff] %v3685
      %4146 = vst [vmem:[%s201 + $0x1a0] sm:$0xff] %v3687
      %4147 = vst [vmem:[%s201 + $0x1a8] sm:$0xff] %v3689
      %4148 = vst [vmem:[%s201 + $0x1b0] sm:$0xff] %v3691
      %4149 = vst [vmem:[%s201 + $0x1b8] sm:$0xff] %v3693
      %4150 = vst [vmem:[%s201 + $0x1c0] sm:$0xff] %v3695
      %4151 = vst [vmem:[%s201 + $0x1c8] sm:$0xff] %v3697
      %4152 = vst [vmem:[%s201 + $0x1d0] sm:$0xff] %v3699
      %4153 = vst [vmem:[%s201 + $0x1d8] sm:$0xff] %v3701
      %4154 = vst [vmem:[%s201 + $0x1e0] sm:$0xff] %v3703
      %4155 = vst [vmem:[%s201 + $0x1e8] sm:$0xff] %v3705
      %4156 = vst [vmem:[%s201 + $0x1f0] sm:$0xff] %v3707
      %4157 = vst [vmem:[%s201 + $0x1f8] sm:$0xff] %v3709
      %4158 = vst [vmem:[%s201 + $0x200] sm:$0xff] %v3711
      %4159 = vst [vmem:[%s201 + $0x208] sm:$0xff] %v3713
      %4160 = vst [vmem:[%s201 + $0x210] sm:$0xff] %v3715
      %4161 = vst [vmem:[%s201 + $0x218] sm:$0xff] %v3717
      %4162 = vst [vmem:[%s201 + $0x220] sm:$0xff] %v3719
      %4163 = vst [vmem:[%s201 + $0x228] sm:$0xff] %v3721
      %4164 = vst [vmem:[%s201 + $0x230] sm:$0xff] %v3723
      %4165 = vst [vmem:[%s201 + $0x238] sm:$0xff] %v3725
      %4166 = vst [vmem:[%s201 + $0x240] sm:$0xff] %v3727
      %4167 = vst [vmem:[%s201 + $0x248] sm:$0xff] %v3729
      %4168 = vst [vmem:[%s201 + $0x250] sm:$0xff] %v3731
      %4169 = vst [vmem:[%s201 + $0x258] sm:$0xff] %v3733
      %4170 = vst [vmem:[%s201 + $0x260] sm:$0xff] %v3735
      %4171 = vst [vmem:[%s201 + $0x268] sm:$0xff] %v3737
      %4172 = vst [vmem:[%s201 + $0x270] sm:$0xff] %v3739
      %4173 = vst [vmem:[%s201 + $0x278] sm:$0xff] %v3741
      %4174 = vst [vmem:[%s201 + $0x280] sm:$0xff] %v3743
      %4175 = vst [vmem:[%s201 + $0x288] sm:$0xff] %v3745
      %4176 = vst [vmem:[%s201 + $0x290] sm:$0xff] %v3747
      %4177 = vst [vmem:[%s201 + $0x298] sm:$0xff] %v3749
      %4178 = vst [vmem:[%s201 + $0x2a0] sm:$0xff] %v3751
      %4179 = vst [vmem:[%s201 + $0x2a8] sm:$0xff] %v3753
      %4180 = vst [vmem:[%s201 + $0x2b0] sm:$0xff] %v3755
      %4181 = vst [vmem:[%s201 + $0x2b8] sm:$0xff] %v3757
      %4182 = vst [vmem:[%s201 + $0x2c0] sm:$0xff] %v3759
      %4183 = vst [vmem:[%s201 + $0x2c8] sm:$0xff] %v3761
      %4184 = vst [vmem:[%s201 + $0x2d0] sm:$0xff] %v3763
      %4185 = vst [vmem:[%s201 + $0x2d8] sm:$0xff] %v3765
      %4186 = vst [vmem:[%s201 + $0x2e0] sm:$0xff] %v3767
      %4187 = vst [vmem:[%s201 + $0x2e8] sm:$0xff] %v3769
      %4188 = vst [vmem:[%s201 + $0x2f0] sm:$0xff] %v3771
      %4189 = vst [vmem:[%s201 + $0x2f8] sm:$0xff] %v3773
      %4190 = vst [vmem:[%s201 + $0x300] sm:$0xff] %v3775
      %4191 = vst [vmem:[%s201 + $0x308] sm:$0xff] %v3777
      %4192 = vst [vmem:[%s201 + $0x310] sm:$0xff] %v3779
      %4193 = vst [vmem:[%s201 + $0x318] sm:$0xff] %v3781
      %4194 = vst [vmem:[%s201 + $0x320] sm:$0xff] %v3783
      %4195 = vst [vmem:[%s201 + $0x328] sm:$0xff] %v3785
      %4196 = vst [vmem:[%s201 + $0x330] sm:$0xff] %v3787
      %4197 = vst [vmem:[%s201 + $0x338] sm:$0xff] %v3789
      %4198 = vst [vmem:[%s201 + $0x340] sm:$0xff] %v3791
      %4199 = vst [vmem:[%s201 + $0x348] sm:$0xff] %v3793
      %4200 = vst [vmem:[%s201 + $0x350] sm:$0xff] %v3795
      %4201 = vst [vmem:[%s201 + $0x358] sm:$0xff] %v3797
      %4202 = vst [vmem:[%s201 + $0x360] sm:$0xff] %v3799
      %4203 = vst [vmem:[%s201 + $0x368] sm:$0xff] %v3801
      %4204 = vst [vmem:[%s201 + $0x370] sm:$0xff] %v3803
      %4205 = vst [vmem:[%s201 + $0x378] sm:$0xff] %v3805
      %4206 = vst [vmem:[%s201 + $0x380] sm:$0xff] %v3807
      %4207 = vst [vmem:[%s201 + $0x388] sm:$0xff] %v3809
      %4208 = vst [vmem:[%s201 + $0x390] sm:$0xff] %v3811
      %4209 = vst [vmem:[%s201 + $0x398] sm:$0xff] %v3813
      %4210 = vst [vmem:[%s201 + $0x3a0] sm:$0xff] %v3815
      %4211 = vst [vmem:[%s201 + $0x3a8] sm:$0xff] %v3817
      %4212 = vst [vmem:[%s201 + $0x3b0] sm:$0xff] %v3819
      %4213 = vst [vmem:[%s201 + $0x3b8] sm:$0xff] %v3821
      %4214 = vst [vmem:[%s201 + $0x3c0] sm:$0xff] %v3823
      %4215 = vst [vmem:[%s201 + $0x3c8] sm:$0xff] %v3825
      %4216 = vst [vmem:[%s201 + $0x3d0] sm:$0xff] %v3827
      %4217 = vst [vmem:[%s201 + $0x3d8] sm:$0xff] %v3829
      %4218 = vst [vmem:[%s201 + $0x3e0] sm:$0xff] %v3831
      %4219 = vst [vmem:[%s201 + $0x3e8] sm:$0xff] %v3833
      %4220 = vst [vmem:[%s201 + $0x3f0] sm:$0xff] %v3835
      %4221 = vst [vmem:[%s201 + $0x3f8] sm:$0xff] %v3837
      %4222 = vst [vmem:[%s201 + $0x400] sm:$0xff] %v3839
      %4223 = vst [vmem:[%s201 + $0x408] sm:$0xff] %v3841
      %4224 = vst [vmem:[%s201 + $0x410] sm:$0xff] %v3843
      %4225 = vst [vmem:[%s201 + $0x418] sm:$0xff] %v3845
      %4226 = vst [vmem:[%s201 + $0x420] sm:$0xff] %v3847
      %4227 = vst [vmem:[%s201 + $0x428] sm:$0xff] %v3849
      %4228 = vst [vmem:[%s201 + $0x430] sm:$0xff] %v3851
      %4229 = vst [vmem:[%s201 + $0x438] sm:$0xff] %v3853
      %4230 = vst [vmem:[%s201 + $0x440] sm:$0xff] %v3855
      %4231 = vst [vmem:[%s201 + $0x448] sm:$0xff] %v3857
      %4232 = vst [vmem:[%s201 + $0x450] sm:$0xff] %v3859
      %4233 = vst [vmem:[%s201 + $0x458] sm:$0xff] %v3861
      %4234 = vst [vmem:[%s201 + $0x460] sm:$0xff] %v3863
      %4235 = vst [vmem:[%s201 + $0x468] sm:$0xff] %v3865
      %4236 = vst [vmem:[%s201 + $0x470] sm:$0xff] %v3867
      %4237 = vst [vmem:[%s201 + $0x478] sm:$0xff] %v3869
      %4238 = vst [vmem:[%s201 + $0x480] sm:$0xff] %v3871
      %4239 = vst [vmem:[%s201 + $0x488] sm:$0xff] %v3873
      %4240 = vst [vmem:[%s201 + $0x490] sm:$0xff] %v3875
      %4241 = vst [vmem:[%s201 + $0x498] sm:$0xff] %v3877
      %4242 = vst [vmem:[%s201 + $0x4a0] sm:$0xff] %v3879
      %4243 = vst [vmem:[%s201 + $0x4a8] sm:$0xff] %v3881
      %4244 = vst [vmem:[%s201 + $0x4b0] sm:$0xff] %v3883
      %4245 = vst [vmem:[%s201 + $0x4b8] sm:$0xff] %v3885
      %4246 = vst [vmem:[%s201 + $0x4c0] sm:$0xff] %v3887
      %4247 = vst [vmem:[%s201 + $0x4c8] sm:$0xff] %v3889
      %4248 = vst [vmem:[%s201 + $0x4d0] sm:$0xff] %v3891
      %4249 = vst [vmem:[%s201 + $0x4d8] sm:$0xff] %v3893
      %4250 = vst [vmem:[%s201 + $0x4e0] sm:$0xff] %v3895
      %4251 = vst [vmem:[%s201 + $0x4e8] sm:$0xff] %v3897
      %4252 = vst [vmem:[%s201 + $0x4f0] sm:$0xff] %v3899
      %4253 = vst [vmem:[%s201 + $0x4f8] sm:$0xff] %v3901
      %4254 = vst [vmem:[%s201 + $0x500] sm:$0xff] %v3903
      %4255 = vst [vmem:[%s201 + $0x508] sm:$0xff] %v3905
      %4256 = vst [vmem:[%s201 + $0x510] sm:$0xff] %v3907
      %4257 = vst [vmem:[%s201 + $0x518] sm:$0xff] %v3909
      %4258 = vst [vmem:[%s201 + $0x520] sm:$0xff] %v3911
      %4259 = vst [vmem:[%s201 + $0x528] sm:$0xff] %v3913
      %4260 = vst [vmem:[%s201 + $0x530] sm:$0xff] %v3915
      %4261 = vst [vmem:[%s201 + $0x538] sm:$0xff] %v3917
      %4262 = vst [vmem:[%s201 + $0x540] sm:$0xff] %v3919
      %4263 = vst [vmem:[%s201 + $0x548] sm:$0xff] %v3921
      %4264 = vst [vmem:[%s201 + $0x550] sm:$0xff] %v3923
      %4265 = vst [vmem:[%s201 + $0x558] sm:$0xff] %v3925
      %4266 = vst [vmem:[%s201 + $0x560] sm:$0xff] %v3927
      %4267 = vst [vmem:[%s201 + $0x568] sm:$0xff] %v3929
      %4268 = vst [vmem:[%s201 + $0x570] sm:$0xff] %v3931
      %4269 = vst [vmem:[%s201 + $0x578] sm:$0xff] %v3933
      %4270 = vst [vmem:[%s201 + $0x580] sm:$0xff] %v3935
      %4271 = vst [vmem:[%s201 + $0x588] sm:$0xff] %v3937
      %4272 = vst [vmem:[%s201 + $0x590] sm:$0xff] %v3939
      %4273 = vst [vmem:[%s201 + $0x598] sm:$0xff] %v3941
      %4274 = vst [vmem:[%s201 + $0x5a0] sm:$0xff] %v3943
      %4275 = vst [vmem:[%s201 + $0x5a8] sm:$0xff] %v3945
      %4276 = vst [vmem:[%s201 + $0x5b0] sm:$0xff] %v3947
      %4277 = vst [vmem:[%s201 + $0x5b8] sm:$0xff] %v3949
      %4278 = vst [vmem:[%s201 + $0x5c0] sm:$0xff] %v3951
      %4279 = vst [vmem:[%s201 + $0x5c8] sm:$0xff] %v3953
      %4280 = vst [vmem:[%s201 + $0x5d0] sm:$0xff] %v3955
      %4281 = vst [vmem:[%s201 + $0x5d8] sm:$0xff] %v3957
      %4282 = vst [vmem:[%s201 + $0x5e0] sm:$0xff] %v3959
      %4283 = vst [vmem:[%s201 + $0x5e8] sm:$0xff] %v3961
      %4284 = vst [vmem:[%s201 + $0x5f0] sm:$0xff] %v3963
      %4285 = vst [vmem:[%s201 + $0x5f8] sm:$0xff] %v3965
      %4286 = vst [vmem:[%s201 + $0x600] sm:$0xff] %v3967
      %4287 = vst [vmem:[%s201 + $0x608] sm:$0xff] %v3969
      %4288 = vst [vmem:[%s201 + $0x610] sm:$0xff] %v3971
      %4289 = vst [vmem:[%s201 + $0x618] sm:$0xff] %v3973
      %4290 = vst [vmem:[%s201 + $0x620] sm:$0xff] %v3975
      %4291 = vst [vmem:[%s201 + $0x628] sm:$0xff] %v3977
      %4292 = vst [vmem:[%s201 + $0x630] sm:$0xff] %v3979
      %4293 = vst [vmem:[%s201 + $0x638] sm:$0xff] %v3981
      %4294 = vst [vmem:[%s201 + $0x640] sm:$0xff] %v3983
      %4295 = vst [vmem:[%s201 + $0x648] sm:$0xff] %v3985
      %4296 = vst [vmem:[%s201 + $0x650] sm:$0xff] %v3987
      %4297 = vst [vmem:[%s201 + $0x658] sm:$0xff] %v3989
      %4298 = vst [vmem:[%s201 + $0x660] sm:$0xff] %v3991
      %4299 = vst [vmem:[%s201 + $0x668] sm:$0xff] %v3993
      %4300 = vst [vmem:[%s201 + $0x670] sm:$0xff] %v3995
      %4301 = vst [vmem:[%s201 + $0x678] sm:$0xff] %v3997
      %4302 = vst [vmem:[%s201 + $0x680] sm:$0xff] %v3999
      %4303 = vst [vmem:[%s201 + $0x688] sm:$0xff] %v4001
      %4304 = vst [vmem:[%s201 + $0x690] sm:$0xff] %v4003
      %4305 = vst [vmem:[%s201 + $0x698] sm:$0xff] %v4005
      %4306 = vst [vmem:[%s201 + $0x6a0] sm:$0xff] %v4007
      %4307 = vst [vmem:[%s201 + $0x6a8] sm:$0xff] %v4009
      %4308 = vst [vmem:[%s201 + $0x6b0] sm:$0xff] %v4011
      %4309 = vst [vmem:[%s201 + $0x6b8] sm:$0xff] %v4013
      %4310 = vst [vmem:[%s201 + $0x6c0] sm:$0xff] %v4015
      %4311 = vst [vmem:[%s201 + $0x6c8] sm:$0xff] %v4017
      %4312 = vst [vmem:[%s201 + $0x6d0] sm:$0xff] %v4019
      %4313 = vst [vmem:[%s201 + $0x6d8] sm:$0xff] %v4021
      %4314 = vst [vmem:[%s201 + $0x6e0] sm:$0xff] %v4023
      %4315 = vst [vmem:[%s201 + $0x6e8] sm:$0xff] %v4025
      %4316 = vst [vmem:[%s201 + $0x6f0] sm:$0xff] %v4027
      %4317 = vst [vmem:[%s201 + $0x6f8] sm:$0xff] %v4029
      %4318 = vst [vmem:[%s201 + $0x700] sm:$0xff] %v4031
      %4319 = vst [vmem:[%s201 + $0x708] sm:$0xff] %v4033
      %4320 = vst [vmem:[%s201 + $0x710] sm:$0xff] %v4035
      %4321 = vst [vmem:[%s201 + $0x718] sm:$0xff] %v4037
      %4322 = vst [vmem:[%s201 + $0x720] sm:$0xff] %v4039
      %4323 = vst [vmem:[%s201 + $0x728] sm:$0xff] %v4041
      %4324 = vst [vmem:[%s201 + $0x730] sm:$0xff] %v4043
      %4325 = vst [vmem:[%s201 + $0x738] sm:$0xff] %v4045
      %4326 = vst [vmem:[%s201 + $0x740] sm:$0xff] %v4047
      %4327 = vst [vmem:[%s201 + $0x748] sm:$0xff] %v4049
      %4328 = vst [vmem:[%s201 + $0x750] sm:$0xff] %v4051
      %4329 = vst [vmem:[%s201 + $0x758] sm:$0xff] %v4053
      %4330 = vst [vmem:[%s201 + $0x760] sm:$0xff] %v4055
      %4331 = vst [vmem:[%s201 + $0x768] sm:$0xff] %v4057
      %4332 = vst [vmem:[%s201 + $0x770] sm:$0xff] %v4059
      %4333 = vst [vmem:[%s201 + $0x778] sm:$0xff] %v4061
      %4334 = vst [vmem:[%s201 + $0x780] sm:$0xff] %v4063
      %4335 = vst [vmem:[%s201 + $0x788] sm:$0xff] %v4065
      %4336 = vst [vmem:[%s201 + $0x790] sm:$0xff] %v4067
      %4337 = vst [vmem:[%s201 + $0x798] sm:$0xff] %v4069
      %4338 = vst [vmem:[%s201 + $0x7a0] sm:$0xff] %v4071
      %4339 = vst [vmem:[%s201 + $0x7a8] sm:$0xff] %v4073
      %4340 = vst [vmem:[%s201 + $0x7b0] sm:$0xff] %v4075
      %4341 = vst [vmem:[%s201 + $0x7b8] sm:$0xff] %v4077
      %4342 = vst [vmem:[%s201 + $0x7c0] sm:$0xff] %v4079
      %4343 = vst [vmem:[%s201 + $0x7c8] sm:$0xff] %v4081
      %4344 = vst [vmem:[%s201 + $0x7d0] sm:$0xff] %v4083
      %4345 = vst [vmem:[%s201 + $0x7d8] sm:$0xff] %v4085
      %4346 = vst [vmem:[%s201 + $0x7e0] sm:$0xff] %v4087
      %4347 = vst [vmem:[%s201 + $0x7e8] sm:$0xff] %v4089
      %4348 = vst [vmem:[%s201 + $0x7f0] sm:$0xff] %v4091
      %4349 = vst [vmem:[%s201 + $0x7f8] sm:$0xff] %v4093
      %s4350 = smul.u32 256, %s18
      %p4351 = scmp.lt.s32.totalorder %s17, 3
      %s4352 = scalar_select %p4351, %s17, 3
      %p4353 = scmp.lt.s32.totalorder %s4350, 255
      %s4354 = scalar_select %p4353, %s4350, 255
      %s4355 = smul.addr %s4352, 256
      %s4356 = sadd.s32 %s4354, %s4355
      %s4357 = smul.addr %s4356, 8
      %s4358 = scalar_lea.vmem %s2, %s4357
      // Predicated region
      $region29: #{generator_forward.13} parent=27 // pred_check
        %p4359 = pneg %p99
      $region30: #{generator_forward.13} parent=27 // pred_check_branch
        %4361 = sbr.rel (%p4359) target = $region32
      $region31: #{generator_forward.13} parent=27 // pred_region
        %s4362 = smul.u32 256, %s18
      $region32: #{generator_forward.13} parent=27 // pred_fallthru
        _
    $region28: #{generator_forward.13} parent=5 // pred_fallthru
      _
    %p4363 = scmp.le.s32.totalorder 2, %s8
    // Predicated region
    $region33: #{generator_forward.13} parent=5 // pred_check
      %p4364 = pneg %p4363
    $region34: #{generator_forward.13} parent=5 // pred_check_branch
      %4366 = sbr.rel (%p4364) target = $region36
    $region35: #{generator_forward.13} parent=5 // pred_region
      %s4367 = ssub.s32 %s8, 2
      // Predicated region
      $region37: #{generator_forward.13} parent=35 // pred_check
        %p4368 = pneg %p105
      $region38: #{generator_forward.13} parent=35 // pred_check_branch
        %4370 = sbr.rel (%p4368) target = $region40
      $region39: #{generator_forward.13} parent=35 // pred_region
        %s4371 = smul.u32 256, %s20
        %p4372 = scmp.lt.s32.totalorder %s19, 3
        %s4373 = scalar_select %p4372, %s19, 3
        %p4374 = scmp.lt.s32.totalorder %s4371, 255
        %s4375 = scalar_select %p4374, %s4371, 255
        %s4376 = smul.addr %s4373, 256
        %s4377 = sadd.s32 %s4375, %s4376
        %s4378 = smul.addr %s4377, 8
        %s4379 = scalar_lea.vmem %s2, %s4378
      $region40: #{generator_forward.13} parent=35 // pred_fallthru
        _
    $region36: #{generator_forward.13} parent=5 // pred_fallthru
      _
  $region6: #{generator_forward.13} parent=0 // loop_footer
    %s12 = sadd.s32 1, %s8
  $region7: #{generator_forward.13} parent=0 // loop_footer_branch
    %7 = sbr.rel target = $region3
  $region8: #{generator_forward.13} parent=0 // loop_exit
    _

</llo_original>
